<compile_context>
chip_gen: v7x
topology: tpu7x:2x2x1
jax: 0.10.0
libtpu: 0.0.40
codegen_flags: <defaults>
</compile_context>

<pallas_src>
import math
import jax
import jax.numpy as jnp
from jax import lax
from jax.experimental import pallas as pl
from jax.experimental.pallas import tpu as pltpu  # noqa: F401 (not needed without a grid)

# ----------------------------- configuration --------------------------------
B = 2               # batch
L = 64              # light-curve length (stride-1 extractor keeps seq len)
BL = B * L          # 128 rows after batch folding
D = 32              # args.encoder_dim
H = 4               # attention heads
HD = D // H         # head dim (RoPE dim)
HALF = HD // 2
FFN = 4 * D         # feed-forward hidden
FEAT = 7            # feature_dim
C = 3               # args.output_dim == num_classes
HID = 256           # classifier hidden
OUT_PAD = 128       # lane-dense padded logits width
NUM_LAYERS = 2
LN_EPS = 1e-5
BN_EPS = 1e-5


# ------------------------------- fused kernel --------------------------------
def fused_forward_kernel(
    im2col_ref, feat_ref,
    ext_w_ref, ext_b_ref, bn_scale_ref, bn_shift_ref,
    cosf_ref, sinf_ref, ropep_ref, headmask_ref,
    ln1g_ref, ln1b_ref, wq_ref, bq_ref, wk_ref, bk_ref, wv_ref, bv_ref,
    wo_ref, bo_ref, ln2g_ref, ln2b_ref, w1_ref, b1_ref, w2_ref, b2_ref,
    hw1_ref, hb1_ref, hw2_ref, hb2_ref,
    out_ref,
):
    bf16 = jnp.bfloat16

    def mm(a, b):                    # a @ b, f32 accumulation
        return lax.dot_general(a, b, (((1,), (0,)), ((), ())),
                               preferred_element_type=jnp.float32)

    def mm_t(a, b):                  # a @ b.T, f32 accumulation
        return lax.dot_general(a, b, (((1,), (1,)), ((), ())),
                               preferred_element_type=jnp.float32)

    def layer_norm(v, g, b):
        mu = jnp.mean(v, axis=-1, keepdims=True)
        var = jnp.mean((v - mu) ** 2, axis=-1, keepdims=True)
        return (v - mu) * lax.rsqrt(var + LN_EPS) * g + b

    # ---- extractor: Conv1d(1->D, k=3, pad=1) as one im2col matmul ----------
    y = mm(im2col_ref[...].astype(bf16), ext_w_ref[...]) + ext_b_ref[...]
    y = y * bn_scale_ref[...] + bn_shift_ref[...]           # BN (eval) folded
    x = y * jax.nn.sigmoid(y)                                # SiLU, f32 (B*L, D)

    cosf = cosf_ref[...]                                     # (B*L, D)
    sinf = sinf_ref[...]                                     # (B*L, D)
    ropep = ropep_ref[...]                                   # (D, D) bf16 ±1
    hm = headmask_ref[...]                                   # (H*L, D) bf16 0/1

    # ---- encoder layers: pre-LN MHSA (RoPE) + SiLU FFN, residuals -----------
    for l in range(NUM_LAYERS):
        xn = layer_norm(x, ln1g_ref[l], ln1b_ref[l])
        xnb = xn.astype(bf16)
        q = mm(xnb, wq_ref[l]) + bq_ref[l]       # (B*L, D); 1/sqrt(HD) folded in
        k = mm(xnb, wk_ref[l]) + bk_ref[l]
        v = mm(xnb, wv_ref[l]) + bv_ref[l]

        # full-width half-split RoPE: rotate_half(x) == x @ ropep (signed perm)
        q = q * cosf + mm(q.astype(bf16), ropep) * sinf
        k = k * cosf + mm(k.astype(bf16), ropep) * sinf

        qb, kb, vb = q.astype(bf16), k.astype(bf16), v.astype(bf16)

        attn_rows = []
        for b in range(B):                                   # static unroll
            qbb = qb[b * L:(b + 1) * L, :]                   # (L, D) aligned slice
            kbb = kb[b * L:(b + 1) * L, :]
            vbb = vb[b * L:(b + 1) * L, :]
            # block-diagonal stacked K / V: row h*L+l keeps only head-h columns
            k_bd = jnp.concatenate([kbb] * H, axis=0) * hm   # (H*L, D)
            v_bd = jnp.concatenate([vbb] * H, axis=0) * hm   # (H*L, D)
            s = mm_t(qbb, k_bd)                              # (L, H*L) all heads
            parts = []
            for h in range(H):                               # per-head softmax
                sh = s[:, h * L:(h + 1) * L]                 # (L, L) window
                sh = sh - jnp.max(sh, axis=-1, keepdims=True)
                eh = jnp.exp(sh)
                inv = pl.reciprocal(jnp.sum(eh, axis=-1, keepdims=True),
                                    approx=True)
                parts.append(eh * inv)
            p = jnp.concatenate(parts, axis=-1)              # (L, H*L)
            attn_rows.append(mm(p.astype(bf16), v_bd))       # (L, D) heads concat'd
        attn = jnp.concatenate(attn_rows, axis=0)            # (B*L, D)
        x = x + mm(attn.astype(bf16), wo_ref[l]) + bo_ref[l]

        xn2 = layer_norm(x, ln2g_ref[l], ln2b_ref[l])
        hdn = mm(xn2.astype(bf16), w1_ref[l]) + b1_ref[l]    # (B*L, FFN)
        hdn = hdn * jax.nn.sigmoid(hdn)                      # SiLU
        x = x + mm(hdn.astype(bf16), w2_ref[l]) + b2_ref[l]

    # ---- head: per-batch mean-pool, concat(features), Linear+ReLU, Linear ---
    pooled = jnp.concatenate(
        [jnp.sum(x[b * L:(b + 1) * L, :], axis=0, keepdims=True)
         for b in range(B)], axis=0) * (1.0 / L)             # (B, D)
    cat = jnp.concatenate([pooled, feat_ref[...]], axis=-1)  # (B, D+FEAT)
    h1 = mm(cat.astype(bf16), hw1_ref[...]) + hb1_ref[...]   # (B, HID)
    h1 = jnp.maximum(h1, 0.0)                                # ReLU
    # lane-dense padded store; real logits are lanes 0..C-1
    out_ref[...] = mm(h1.astype(bf16), hw2_ref[...]) + hb2_ref[...]   # (B, 128)


# --------------------------------- wrapper ------------------------------------
def forward(x, mask, features, params):
    # mirrors AstroConformerClassifier.forward (inference mode: dropout = id)
    x2 = x.reshape(x.shape[0], -1).astype(jnp.float32)
    m2 = mask.reshape(mask.shape[0], -1).astype(jnp.float32)
    xm = x2 * m2                                             # (B, L)
    xpad = jnp.pad(xm, ((0, 0), (1, 1)))                     # (B, L+2)
    im2col = jnp.stack([xpad[:, 0:L], xpad[:, 1:L + 1], xpad[:, 2:L + 2]],
                       axis=-1).reshape(BL, 3)               # (B*L, 3)
    feat = features.astype(jnp.float32)                      # (B, FEAT)

    ext = params["extractor"]
    head = params["head"]
    cosf, sinf, ropep, headmask = params["rope"]
    st = params["stacked"]

    args = [
        im2col, feat,
        ext["w"], ext["b"], ext["bn_scale"], ext["bn_shift"],
        cosf, sinf, ropep, headmask,
        st["ln1_g"], st["ln1_b"], st["wq"], st["bq"], st["wk"], st["bk"],
        st["wv"], st["bv"], st["wo"], st["bo"], st["ln2_g"], st["ln2_b"],
        st["w1"], st["b1"], st["w2"], st["b2"],
        head["w1"], head["b1"], head["w2"], head["b2"],
    ]

    # No grid: single invocation, every operand is one full-array VMEM block
    # (single-buffered, no per-step pipelining bookkeeping).
    out = pl.pallas_call(
        fused_forward_kernel,
        out_shape=jax.ShapeDtypeStruct((B, OUT_PAD), jnp.float32),
    )(*args)
    return out[:, :C]


# ---------------------------- deterministic init -------------------------------
def init_params(key):
    keys = iter(jax.random.split(key, 64))

    def rand(shape, scale=0.05):
        return (scale * jax.random.normal(next(keys), shape)).astype(jnp.float32)

    attn_scale = 1.0 / math.sqrt(HD)

    params = {
        "extractor": {
            "w": rand((3, D), 0.3).astype(jnp.bfloat16),
            "b": rand((1, D), 0.1),
            # BatchNorm1d (eval) folded: running_mean=0, running_var=1
            "bn_scale": (jnp.ones((1, D)) / jnp.sqrt(1.0 + BN_EPS)).astype(jnp.float32),
            "bn_shift": jnp.zeros((1, D), jnp.float32),
        }
    }

    # per-layer weights stacked along a leading layer axis (static-indexed)
    params["stacked"] = {
        "ln1_g": jnp.ones((NUM_LAYERS, 1, D), jnp.float32),
        "ln1_b": jnp.zeros((NUM_LAYERS, 1, D), jnp.float32),
        # attention 1/sqrt(HD) scale folded into wq / bq
        "wq": (rand((NUM_LAYERS, D, D)) * attn_scale).astype(jnp.bfloat16),
        "bq": rand((NUM_LAYERS, 1, D), 0.01) * attn_scale,
        "wk": rand((NUM_LAYERS, D, D)).astype(jnp.bfloat16),
        "bk": rand((NUM_LAYERS, 1, D), 0.01),
        "wv": rand((NUM_LAYERS, D, D)).astype(jnp.bfloat16),
        "bv": rand((NUM_LAYERS, 1, D), 0.01),
        "wo": rand((NUM_LAYERS, D, D)).astype(jnp.bfloat16),
        "bo": rand((NUM_LAYERS, 1, D), 0.01),
        "ln2_g": jnp.ones((NUM_LAYERS, 1, D), jnp.float32),
        "ln2_b": jnp.zeros((NUM_LAYERS, 1, D), jnp.float32),
        "w1": rand((NUM_LAYERS, D, FFN)).astype(jnp.bfloat16),
        "b1": rand((NUM_LAYERS, 1, FFN), 0.01),
        "w2": rand((NUM_LAYERS, FFN, D)).astype(jnp.bfloat16),
        "b2": rand((NUM_LAYERS, 1, D), 0.01),
    }

    # RoPE: batch-tiled (B*L, D) cos/sin tables + signed-permutation matrix
    # for the per-head half-split rotation (rotate_half(x) == x @ P).
    pos = jnp.arange(L, dtype=jnp.float32)[:, None]
    inv_freq = 1.0 / (10000.0 ** (jnp.arange(0, HD, 2, dtype=jnp.float32) / HD))
    ang = pos * inv_freq[None, :]                                  # (L, HALF)
    cos2 = jnp.concatenate([jnp.cos(ang), jnp.cos(ang)], axis=1)   # (L, HD)
    sin2 = jnp.concatenate([jnp.sin(ang), jnp.sin(ang)], axis=1)
    cosf = jnp.tile(jnp.tile(cos2, (1, H)), (B, 1)).astype(jnp.float32)  # (B*L, D)
    sinf = jnp.tile(jnp.tile(sin2, (1, H)), (B, 1)).astype(jnp.float32)
    ph = jnp.block([[jnp.zeros((HALF, HALF)), jnp.eye(HALF)],
                    [-jnp.eye(HALF), jnp.zeros((HALF, HALF))]])    # (HD, HD)
    ropep = jnp.kron(jnp.eye(H), ph).astype(jnp.bfloat16)          # (D, D)
    # block-diagonal head mask: row h*L+l keeps only head-h columns of K/V
    row_head = jnp.repeat(jnp.arange(H), L)                        # (H*L,)
    col_head = jnp.arange(D) // HD                                 # (D,)
    headmask = (row_head[:, None] == col_head[None, :]).astype(jnp.bfloat16)
    params["rope"] = (cosf, sinf, ropep, headmask)

    # classifier: merged Linear(D+7, 256) -> ReLU -> Linear(256, C)
    # (final projection lane-padded from C to OUT_PAD for a lane-dense store)
    w2 = jnp.zeros((HID, OUT_PAD), jnp.float32).at[:, :C].set(rand((HID, C)))
    b2 = jnp.zeros((1, OUT_PAD), jnp.float32).at[:, :C].set(rand((1, C), 0.01))
    params["head"] = {
        "w1": rand((D + FEAT, HID)).astype(jnp.bfloat16),
        "b1": rand((1, HID), 0.01),
        "w2": w2.astype(jnp.bfloat16),
        "b2": b2,
    }
    return params


# ------------------------------------ main -------------------------------------
if __name__ == "__main__":
    params = init_params(jax.random.PRNGKey(42))

    key = jax.random.PRNGKey(0)
    kx, km, kf = jax.random.split(key, 3)
    x = jax.random.normal(kx, (B, 1, L), dtype=jnp.float32)          # view(B,-1) inside
    mask = (jax.random.uniform(km, (B, 1, L)) > 0.1).astype(jnp.float32)
    features = jax.random.normal(kf, (B, FEAT), dtype=jnp.float32)

    logits = forward(x, mask, features, params)
    logits = jax.block_until_ready(logits)

    assert logits.shape == (B, C), logits.shape
    assert bool(jnp.all(jnp.isfinite(logits)))
    print("KERNEL_OK")
</pallas_src>

<mosaic_0001>
module attributes {stable_mosaic.version = 11 : i64} {
  func.func @fused_forward_kernel(%arg0: memref<128x3xf32, #tpu.memory_space<vmem>>, %arg1: memref<2x7xf32, #tpu.memory_space<vmem>>, %arg2: memref<3x32xbf16, #tpu.memory_space<vmem>>, %arg3: memref<1x32xf32, #tpu.memory_space<vmem>>, %arg4: memref<1x32xf32, #tpu.memory_space<vmem>>, %arg5: memref<1x32xf32, #tpu.memory_space<vmem>>, %arg6: memref<128x32xf32, #tpu.memory_space<vmem>>, %arg7: memref<128x32xf32, #tpu.memory_space<vmem>>, %arg8: memref<32x32xbf16, #tpu.memory_space<vmem>>, %arg9: memref<256x32xbf16, #tpu.memory_space<vmem>>, %arg10: memref<2x1x32xf32, #tpu.memory_space<vmem>>, %arg11: memref<2x1x32xf32, #tpu.memory_space<vmem>>, %arg12: memref<2x32x32xbf16, #tpu.memory_space<vmem>>, %arg13: memref<2x1x32xf32, #tpu.memory_space<vmem>>, %arg14: memref<2x32x32xbf16, #tpu.memory_space<vmem>>, %arg15: memref<2x1x32xf32, #tpu.memory_space<vmem>>, %arg16: memref<2x32x32xbf16, #tpu.memory_space<vmem>>, %arg17: memref<2x1x32xf32, #tpu.memory_space<vmem>>, %arg18: memref<2x32x32xbf16, #tpu.memory_space<vmem>>, %arg19: memref<2x1x32xf32, #tpu.memory_space<vmem>>, %arg20: memref<2x1x32xf32, #tpu.memory_space<vmem>>, %arg21: memref<2x1x32xf32, #tpu.memory_space<vmem>>, %arg22: memref<2x32x128xbf16, #tpu.memory_space<vmem>>, %arg23: memref<2x1x128xf32, #tpu.memory_space<vmem>>, %arg24: memref<2x128x32xbf16, #tpu.memory_space<vmem>>, %arg25: memref<2x1x32xf32, #tpu.memory_space<vmem>>, %arg26: memref<39x256xbf16, #tpu.memory_space<vmem>>, %arg27: memref<1x256xf32, #tpu.memory_space<vmem>>, %arg28: memref<256x128xbf16, #tpu.memory_space<vmem>>, %arg29: memref<1x128xf32, #tpu.memory_space<vmem>>, %arg30: memref<2x128xf32, #tpu.memory_space<vmem>>) attributes {dimension_semantics = [], scalar_prefetch = 0 : i64, scratch_operands = 0 : i64, tpu.core_type = #tpu.core_type<tc>} {
    %c0 = arith.constant 0 : index
    %c0_0 = arith.constant 0 : index
    %0 = vector.load %arg0[%c0, %c0_0] : memref<128x3xf32, #tpu.memory_space<vmem>>, vector<128x3xf32>
    %1 = arith.truncf %0 : vector<128x3xf32> to vector<128x3xbf16>
    %c0_1 = arith.constant 0 : index
    %c0_2 = arith.constant 0 : index
    %2 = vector.load %arg2[%c0_1, %c0_2] : memref<3x32xbf16, #tpu.memory_space<vmem>>, vector<3x32xbf16>
    %cst = arith.constant dense<0.000000e+00> : vector<128x32xf32>
    %3 = tpu.matmul %1, %2, %cst {dimension_numbers = #tpu.dot_dimension_numbers<[1], [0], [0], [1], [0, 0, 1, 1], [], []>} : vector<128x3xbf16>, vector<3x32xbf16>, vector<128x32xf32> -> vector<128x32xf32>
    %c0_3 = arith.constant 0 : index
    %c0_4 = arith.constant 0 : index
    %4 = vector.load %arg3[%c0_3, %c0_4] : memref<1x32xf32, #tpu.memory_space<vmem>>, vector<1x32xf32>
    %5 = vector.broadcast %4 : vector<1x32xf32> to vector<128x32xf32>
    %6 = arith.addf %3, %5 : vector<128x32xf32>
    %c0_5 = arith.constant 0 : index
    %c0_6 = arith.constant 0 : index
    %7 = vector.load %arg4[%c0_5, %c0_6] : memref<1x32xf32, #tpu.memory_space<vmem>>, vector<1x32xf32>
    %8 = vector.broadcast %7 : vector<1x32xf32> to vector<128x32xf32>
    %9 = arith.mulf %6, %8 : vector<128x32xf32>
    %c0_7 = arith.constant 0 : index
    %c0_8 = arith.constant 0 : index
    %10 = vector.load %arg5[%c0_7, %c0_8] : memref<1x32xf32, #tpu.memory_space<vmem>>, vector<1x32xf32>
    %11 = vector.broadcast %10 : vector<1x32xf32> to vector<128x32xf32>
    %12 = arith.addf %9, %11 : vector<128x32xf32>
    %13 = arith.negf %12 : vector<128x32xf32>
    %14 = math.exp %13 : vector<128x32xf32>
    %cst_9 = arith.constant 1.000000e+00 : f32
    %15 = vector.broadcast %cst_9 : f32 to vector<128x32xf32>
    %16 = arith.addf %15, %14 : vector<128x32xf32>
    %17 = arith.divf %15, %16 : vector<128x32xf32>
    %18 = arith.mulf %12, %17 : vector<128x32xf32>
    %c0_10 = arith.constant 0 : index
    %c0_11 = arith.constant 0 : index
    %19 = vector.load %arg6[%c0_10, %c0_11] : memref<128x32xf32, #tpu.memory_space<vmem>>, vector<128x32xf32>
    %c0_12 = arith.constant 0 : index
    %c0_13 = arith.constant 0 : index
    %20 = vector.load %arg7[%c0_12, %c0_13] : memref<128x32xf32, #tpu.memory_space<vmem>>, vector<128x32xf32>
    %c0_14 = arith.constant 0 : index
    %c0_15 = arith.constant 0 : index
    %21 = vector.load %arg8[%c0_14, %c0_15] : memref<32x32xbf16, #tpu.memory_space<vmem>>, vector<32x32xbf16>
    %c0_16 = arith.constant 0 : index
    %c0_17 = arith.constant 0 : index
    %22 = vector.load %arg9[%c0_16, %c0_17] : memref<256x32xbf16, #tpu.memory_space<vmem>>, vector<256x32xbf16>
    %c0_18 = arith.constant 0 : index
    %c0_19 = arith.constant 0 : index
    %c0_20 = arith.constant 0 : index
    %23 = vector.load %arg10[%c0_18, %c0_19, %c0_20] : memref<2x1x32xf32, #tpu.memory_space<vmem>>, vector<1x1x32xf32>
    %24 = vector.shape_cast %23 : vector<1x1x32xf32> to vector<1x32xf32>
    %c0_21 = arith.constant 0 : index
    %c0_22 = arith.constant 0 : index
    %c0_23 = arith.constant 0 : index
    %25 = vector.load %arg11[%c0_21, %c0_22, %c0_23] : memref<2x1x32xf32, #tpu.memory_space<vmem>>, vector<1x1x32xf32>
    %26 = vector.shape_cast %25 : vector<1x1x32xf32> to vector<1x32xf32>
    %cst_24 = arith.constant dense<0.000000e+00> : vector<128xf32>
    %27 = vector.multi_reduction <add>, %18, %cst_24 [1] : vector<128x32xf32> to vector<128xf32>
    %28 = vector.shape_cast %27 : vector<128xf32> to vector<128x1xf32>
    %cst_25 = arith.constant 3.200000e+01 : f32
    %29 = vector.broadcast %cst_25 : f32 to vector<128x1xf32>
    %30 = arith.divf %28, %29 : vector<128x1xf32>
    %31 = vector.broadcast %30 : vector<128x1xf32> to vector<128x32xf32>
    %32 = arith.subf %18, %31 : vector<128x32xf32>
    %33 = arith.mulf %32, %32 : vector<128x32xf32>
    %cst_26 = arith.constant dense<0.000000e+00> : vector<128xf32>
    %34 = vector.multi_reduction <add>, %33, %cst_26 [1] : vector<128x32xf32> to vector<128xf32>
    %35 = vector.shape_cast %34 : vector<128xf32> to vector<128x1xf32>
    %cst_27 = arith.constant 3.200000e+01 : f32
    %36 = vector.broadcast %cst_27 : f32 to vector<128x1xf32>
    %37 = arith.divf %35, %36 : vector<128x1xf32>
    %38 = vector.broadcast %30 : vector<128x1xf32> to vector<128x32xf32>
    %39 = arith.subf %18, %38 : vector<128x32xf32>
    %cst_28 = arith.constant 9.99999974E-6 : f32
    %40 = vector.broadcast %cst_28 : f32 to vector<128x1xf32>
    %41 = arith.addf %37, %40 : vector<128x1xf32>
    %42 = math.rsqrt %41 : vector<128x1xf32>
    %43 = vector.broadcast %42 : vector<128x1xf32> to vector<128x32xf32>
    %44 = arith.mulf %39, %43 : vector<128x32xf32>
    %45 = vector.broadcast %24 : vector<1x32xf32> to vector<128x32xf32>
    %46 = arith.mulf %44, %45 : vector<128x32xf32>
    %47 = vector.broadcast %26 : vector<1x32xf32> to vector<128x32xf32>
    %48 = arith.addf %46, %47 : vector<128x32xf32>
    %49 = arith.truncf %48 : vector<128x32xf32> to vector<128x32xbf16>
    %c0_29 = arith.constant 0 : index
    %c0_30 = arith.constant 0 : index
    %c0_31 = arith.constant 0 : index
    %50 = vector.load %arg12[%c0_29, %c0_30, %c0_31] : memref<2x32x32xbf16, #tpu.memory_space<vmem>>, vector<1x32x32xbf16>
    %51 = vector.shape_cast %50 : vector<1x32x32xbf16> to vector<32x32xbf16>
    %cst_32 = arith.constant dense<0.000000e+00> : vector<128x32xf32>
    %52 = tpu.matmul %49, %51, %cst_32 {dimension_numbers = #tpu.dot_dimension_numbers<[1], [0], [0], [1], [0, 0, 1, 1], [], []>} : vector<128x32xbf16>, vector<32x32xbf16>, vector<128x32xf32> -> vector<128x32xf32>
    %c0_33 = arith.constant 0 : index
    %c0_34 = arith.constant 0 : index
    %c0_35 = arith.constant 0 : index
    %53 = vector.load %arg13[%c0_33, %c0_34, %c0_35] : memref<2x1x32xf32, #tpu.memory_space<vmem>>, vector<1x1x32xf32>
    %54 = vector.shape_cast %53 : vector<1x1x32xf32> to vector<1x32xf32>
    %55 = vector.broadcast %54 : vector<1x32xf32> to vector<128x32xf32>
    %56 = arith.addf %52, %55 : vector<128x32xf32>
    %c0_36 = arith.constant 0 : index
    %c0_37 = arith.constant 0 : index
    %c0_38 = arith.constant 0 : index
    %57 = vector.load %arg14[%c0_36, %c0_37, %c0_38] : memref<2x32x32xbf16, #tpu.memory_space<vmem>>, vector<1x32x32xbf16>
    %58 = vector.shape_cast %57 : vector<1x32x32xbf16> to vector<32x32xbf16>
    %cst_39 = arith.constant dense<0.000000e+00> : vector<128x32xf32>
    %59 = tpu.matmul %49, %58, %cst_39 {dimension_numbers = #tpu.dot_dimension_numbers<[1], [0], [0], [1], [0, 0, 1, 1], [], []>} : vector<128x32xbf16>, vector<32x32xbf16>, vector<128x32xf32> -> vector<128x32xf32>
    %c0_40 = arith.constant 0 : index
    %c0_41 = arith.constant 0 : index
    %c0_42 = arith.constant 0 : index
    %60 = vector.load %arg15[%c0_40, %c0_41, %c0_42] : memref<2x1x32xf32, #tpu.memory_space<vmem>>, vector<1x1x32xf32>
    %61 = vector.shape_cast %60 : vector<1x1x32xf32> to vector<1x32xf32>
    %62 = vector.broadcast %61 : vector<1x32xf32> to vector<128x32xf32>
    %63 = arith.addf %59, %62 : vector<128x32xf32>
    %c0_43 = arith.constant 0 : index
    %c0_44 = arith.constant 0 : index
    %c0_45 = arith.constant 0 : index
    %64 = vector.load %arg16[%c0_43, %c0_44, %c0_45] : memref<2x32x32xbf16, #tpu.memory_space<vmem>>, vector<1x32x32xbf16>
    %65 = vector.shape_cast %64 : vector<1x32x32xbf16> to vector<32x32xbf16>
    %cst_46 = arith.constant dense<0.000000e+00> : vector<128x32xf32>
    %66 = tpu.matmul %49, %65, %cst_46 {dimension_numbers = #tpu.dot_dimension_numbers<[1], [0], [0], [1], [0, 0, 1, 1], [], []>} : vector<128x32xbf16>, vector<32x32xbf16>, vector<128x32xf32> -> vector<128x32xf32>
    %c0_47 = arith.constant 0 : index
    %c0_48 = arith.constant 0 : index
    %c0_49 = arith.constant 0 : index
    %67 = vector.load %arg17[%c0_47, %c0_48, %c0_49] : memref<2x1x32xf32, #tpu.memory_space<vmem>>, vector<1x1x32xf32>
    %68 = vector.shape_cast %67 : vector<1x1x32xf32> to vector<1x32xf32>
    %69 = vector.broadcast %68 : vector<1x32xf32> to vector<128x32xf32>
    %70 = arith.addf %66, %69 : vector<128x32xf32>
    %71 = arith.mulf %56, %19 : vector<128x32xf32>
    %72 = arith.truncf %56 : vector<128x32xf32> to vector<128x32xbf16>
    %cst_50 = arith.constant dense<0.000000e+00> : vector<128x32xf32>
    %73 = tpu.matmul %72, %21, %cst_50 {dimension_numbers = #tpu.dot_dimension_numbers<[1], [0], [0], [1], [0, 0, 1, 1], [], []>} : vector<128x32xbf16>, vector<32x32xbf16>, vector<128x32xf32> -> vector<128x32xf32>
    %74 = arith.mulf %73, %20 : vector<128x32xf32>
    %75 = arith.addf %71, %74 : vector<128x32xf32>
    %76 = arith.mulf %63, %19 : vector<128x32xf32>
    %77 = arith.truncf %63 : vector<128x32xf32> to vector<128x32xbf16>
    %cst_51 = arith.constant dense<0.000000e+00> : vector<128x32xf32>
    %78 = tpu.matmul %77, %21, %cst_51 {dimension_numbers = #tpu.dot_dimension_numbers<[1], [0], [0], [1], [0, 0, 1, 1], [], []>} : vector<128x32xbf16>, vector<32x32xbf16>, vector<128x32xf32> -> vector<128x32xf32>
    %79 = arith.mulf %78, %20 : vector<128x32xf32>
    %80 = arith.addf %76, %79 : vector<128x32xf32>
    %81 = arith.truncf %75 : vector<128x32xf32> to vector<128x32xbf16>
    %82 = arith.truncf %80 : vector<128x32xf32> to vector<128x32xbf16>
    %83 = arith.truncf %70 : vector<128x32xf32> to vector<128x32xbf16>
    %84 = vector.extract_strided_slice %81 {offsets = [0, 0], sizes = [64, 32], strides = [1, 1]} : vector<128x32xbf16> to vector<64x32xbf16>
    %85 = vector.extract_strided_slice %82 {offsets = [0, 0], sizes = [64, 32], strides = [1, 1]} : vector<128x32xbf16> to vector<64x32xbf16>
    %86 = vector.extract_strided_slice %83 {offsets = [0, 0], sizes = [64, 32], strides = [1, 1]} : vector<128x32xbf16> to vector<64x32xbf16>
    %87 = tpu.concatenate %85, %85, %85, %85 in 0 : vector<64x32xbf16>, vector<64x32xbf16>, vector<64x32xbf16>, vector<64x32xbf16> -> vector<256x32xbf16>
    %88 = arith.mulf %87, %22 : vector<256x32xbf16>
    %89 = tpu.concatenate %86, %86, %86, %86 in 0 : vector<64x32xbf16>, vector<64x32xbf16>, vector<64x32xbf16>, vector<64x32xbf16> -> vector<256x32xbf16>
    %90 = arith.mulf %89, %22 : vector<256x32xbf16>
    %cst_52 = arith.constant dense<0.000000e+00> : vector<64x256xf32>
    %91 = tpu.matmul %84, %88, %cst_52 {dimension_numbers = #tpu.dot_dimension_numbers<[1], [1], [0], [0], [0, 0, 1, 0], [], []>} : vector<64x32xbf16>, vector<256x32xbf16>, vector<64x256xf32> -> vector<64x256xf32>
    %92 = vector.extract_strided_slice %91 {offsets = [0, 0], sizes = [64, 64], strides = [1, 1]} : vector<64x256xf32> to vector<64x64xf32>
    %cst_53 = arith.constant dense<0xFF800000> : vector<64xf32>
    %93 = vector.multi_reduction <maximumf>, %92, %cst_53 [1] : vector<64x64xf32> to vector<64xf32>
    %94 = vector.shape_cast %93 : vector<64xf32> to vector<64x1xf32>
    %95 = vector.broadcast %94 : vector<64x1xf32> to vector<64x64xf32>
    %96 = arith.subf %92, %95 : vector<64x64xf32>
    %97 = math.exp %96 : vector<64x64xf32>
    %cst_54 = arith.constant dense<0.000000e+00> : vector<64xf32>
    %98 = vector.multi_reduction <add>, %97, %cst_54 [1] : vector<64x64xf32> to vector<64xf32>
    %99 = vector.shape_cast %98 : vector<64xf32> to vector<64x1xf32>
    %100 = tpu.reciprocal %99 {approx = true} : vector<64x1xf32> -> vector<64x1xf32>
    %101 = vector.broadcast %100 : vector<64x1xf32> to vector<64x64xf32>
    %102 = arith.mulf %97, %101 : vector<64x64xf32>
    %103 = vector.extract_strided_slice %91 {offsets = [0, 64], sizes = [64, 64], strides = [1, 1]} : vector<64x256xf32> to vector<64x64xf32>
    %cst_55 = arith.constant dense<0xFF800000> : vector<64xf32>
    %104 = vector.multi_reduction <maximumf>, %103, %cst_55 [1] : vector<64x64xf32> to vector<64xf32>
    %105 = vector.shape_cast %104 : vector<64xf32> to vector<64x1xf32>
    %106 = vector.broadcast %105 : vector<64x1xf32> to vector<64x64xf32>
    %107 = arith.subf %103, %106 : vector<64x64xf32>
    %108 = math.exp %107 : vector<64x64xf32>
    %cst_56 = arith.constant dense<0.000000e+00> : vector<64xf32>
    %109 = vector.multi_reduction <add>, %108, %cst_56 [1] : vector<64x64xf32> to vector<64xf32>
    %110 = vector.shape_cast %109 : vector<64xf32> to vector<64x1xf32>
    %111 = tpu.reciprocal %110 {approx = true} : vector<64x1xf32> -> vector<64x1xf32>
    %112 = vector.broadcast %111 : vector<64x1xf32> to vector<64x64xf32>
    %113 = arith.mulf %108, %112 : vector<64x64xf32>
    %114 = vector.extract_strided_slice %91 {offsets = [0, 128], sizes = [64, 64], strides = [1, 1]} : vector<64x256xf32> to vector<64x64xf32>
    %cst_57 = arith.constant dense<0xFF800000> : vector<64xf32>
    %115 = vector.multi_reduction <maximumf>, %114, %cst_57 [1] : vector<64x64xf32> to vector<64xf32>
    %116 = vector.shape_cast %115 : vector<64xf32> to vector<64x1xf32>
    %117 = vector.broadcast %116 : vector<64x1xf32> to vector<64x64xf32>
    %118 = arith.subf %114, %117 : vector<64x64xf32>
    %119 = math.exp %118 : vector<64x64xf32>
    %cst_58 = arith.constant dense<0.000000e+00> : vector<64xf32>
    %120 = vector.multi_reduction <add>, %119, %cst_58 [1] : vector<64x64xf32> to vector<64xf32>
    %121 = vector.shape_cast %120 : vector<64xf32> to vector<64x1xf32>
    %122 = tpu.reciprocal %121 {approx = true} : vector<64x1xf32> -> vector<64x1xf32>
    %123 = vector.broadcast %122 : vector<64x1xf32> to vector<64x64xf32>
    %124 = arith.mulf %119, %123 : vector<64x64xf32>
    %125 = vector.extract_strided_slice %91 {offsets = [0, 192], sizes = [64, 64], strides = [1, 1]} : vector<64x256xf32> to vector<64x64xf32>
    %cst_59 = arith.constant dense<0xFF800000> : vector<64xf32>
    %126 = vector.multi_reduction <maximumf>, %125, %cst_59 [1] : vector<64x64xf32> to vector<64xf32>
    %127 = vector.shape_cast %126 : vector<64xf32> to vector<64x1xf32>
    %128 = vector.broadcast %127 : vector<64x1xf32> to vector<64x64xf32>
    %129 = arith.subf %125, %128 : vector<64x64xf32>
    %130 = math.exp %129 : vector<64x64xf32>
    %cst_60 = arith.constant dense<0.000000e+00> : vector<64xf32>
    %131 = vector.multi_reduction <add>, %130, %cst_60 [1] : vector<64x64xf32> to vector<64xf32>
    %132 = vector.shape_cast %131 : vector<64xf32> to vector<64x1xf32>
    %133 = tpu.reciprocal %132 {approx = true} : vector<64x1xf32> -> vector<64x1xf32>
    %134 = vector.broadcast %133 : vector<64x1xf32> to vector<64x64xf32>
    %135 = arith.mulf %130, %134 : vector<64x64xf32>
    %136 = tpu.concatenate %102, %113, %124, %135 in 1 : vector<64x64xf32>, vector<64x64xf32>, vector<64x64xf32>, vector<64x64xf32> -> vector<64x256xf32>
    %137 = arith.truncf %136 : vector<64x256xf32> to vector<64x256xbf16>
    %cst_61 = arith.constant dense<0.000000e+00> : vector<64x32xf32>
    %138 = tpu.matmul %137, %90, %cst_61 {dimension_numbers = #tpu.dot_dimension_numbers<[1], [0], [0], [1], [0, 0, 1, 1], [], []>} : vector<64x256xbf16>, vector<256x32xbf16>, vector<64x32xf32> -> vector<64x32xf32>
    %139 = vector.extract_strided_slice %81 {offsets = [64, 0], sizes = [64, 32], strides = [1, 1]} : vector<128x32xbf16> to vector<64x32xbf16>
    %140 = vector.extract_strided_slice %82 {offsets = [64, 0], sizes = [64, 32], strides = [1, 1]} : vector<128x32xbf16> to vector<64x32xbf16>
    %141 = vector.extract_strided_slice %83 {offsets = [64, 0], sizes = [64, 32], strides = [1, 1]} : vector<128x32xbf16> to vector<64x32xbf16>
    %142 = tpu.concatenate %140, %140, %140, %140 in 0 : vector<64x32xbf16>, vector<64x32xbf16>, vector<64x32xbf16>, vector<64x32xbf16> -> vector<256x32xbf16>
    %143 = arith.mulf %142, %22 : vector<256x32xbf16>
    %144 = tpu.concatenate %141, %141, %141, %141 in 0 : vector<64x32xbf16>, vector<64x32xbf16>, vector<64x32xbf16>, vector<64x32xbf16> -> vector<256x32xbf16>
    %145 = arith.mulf %144, %22 : vector<256x32xbf16>
    %cst_62 = arith.constant dense<0.000000e+00> : vector<64x256xf32>
    %146 = tpu.matmul %139, %143, %cst_62 {dimension_numbers = #tpu.dot_dimension_numbers<[1], [1], [0], [0], [0, 0, 1, 0], [], []>} : vector<64x32xbf16>, vector<256x32xbf16>, vector<64x256xf32> -> vector<64x256xf32>
    %147 = vector.extract_strided_slice %146 {offsets = [0, 0], sizes = [64, 64], strides = [1, 1]} : vector<64x256xf32> to vector<64x64xf32>
    %cst_63 = arith.constant dense<0xFF800000> : vector<64xf32>
    %148 = vector.multi_reduction <maximumf>, %147, %cst_63 [1] : vector<64x64xf32> to vector<64xf32>
    %149 = vector.shape_cast %148 : vector<64xf32> to vector<64x1xf32>
    %150 = vector.broadcast %149 : vector<64x1xf32> to vector<64x64xf32>
    %151 = arith.subf %147, %150 : vector<64x64xf32>
    %152 = math.exp %151 : vector<64x64xf32>
    %cst_64 = arith.constant dense<0.000000e+00> : vector<64xf32>
    %153 = vector.multi_reduction <add>, %152, %cst_64 [1] : vector<64x64xf32> to vector<64xf32>
    %154 = vector.shape_cast %153 : vector<64xf32> to vector<64x1xf32>
    %155 = tpu.reciprocal %154 {approx = true} : vector<64x1xf32> -> vector<64x1xf32>
    %156 = vector.broadcast %155 : vector<64x1xf32> to vector<64x64xf32>
    %157 = arith.mulf %152, %156 : vector<64x64xf32>
    %158 = vector.extract_strided_slice %146 {offsets = [0, 64], sizes = [64, 64], strides = [1, 1]} : vector<64x256xf32> to vector<64x64xf32>
    %cst_65 = arith.constant dense<0xFF800000> : vector<64xf32>
    %159 = vector.multi_reduction <maximumf>, %158, %cst_65 [1] : vector<64x64xf32> to vector<64xf32>
    %160 = vector.shape_cast %159 : vector<64xf32> to vector<64x1xf32>
    %161 = vector.broadcast %160 : vector<64x1xf32> to vector<64x64xf32>
    %162 = arith.subf %158, %161 : vector<64x64xf32>
    %163 = math.exp %162 : vector<64x64xf32>
    %cst_66 = arith.constant dense<0.000000e+00> : vector<64xf32>
    %164 = vector.multi_reduction <add>, %163, %cst_66 [1] : vector<64x64xf32> to vector<64xf32>
    %165 = vector.shape_cast %164 : vector<64xf32> to vector<64x1xf32>
    %166 = tpu.reciprocal %165 {approx = true} : vector<64x1xf32> -> vector<64x1xf32>
    %167 = vector.broadcast %166 : vector<64x1xf32> to vector<64x64xf32>
    %168 = arith.mulf %163, %167 : vector<64x64xf32>
    %169 = vector.extract_strided_slice %146 {offsets = [0, 128], sizes = [64, 64], strides = [1, 1]} : vector<64x256xf32> to vector<64x64xf32>
    %cst_67 = arith.constant dense<0xFF800000> : vector<64xf32>
    %170 = vector.multi_reduction <maximumf>, %169, %cst_67 [1] : vector<64x64xf32> to vector<64xf32>
    %171 = vector.shape_cast %170 : vector<64xf32> to vector<64x1xf32>
    %172 = vector.broadcast %171 : vector<64x1xf32> to vector<64x64xf32>
    %173 = arith.subf %169, %172 : vector<64x64xf32>
    %174 = math.exp %173 : vector<64x64xf32>
    %cst_68 = arith.constant dense<0.000000e+00> : vector<64xf32>
    %175 = vector.multi_reduction <add>, %174, %cst_68 [1] : vector<64x64xf32> to vector<64xf32>
    %176 = vector.shape_cast %175 : vector<64xf32> to vector<64x1xf32>
    %177 = tpu.reciprocal %176 {approx = true} : vector<64x1xf32> -> vector<64x1xf32>
    %178 = vector.broadcast %177 : vector<64x1xf32> to vector<64x64xf32>
    %179 = arith.mulf %174, %178 : vector<64x64xf32>
    %180 = vector.extract_strided_slice %146 {offsets = [0, 192], sizes = [64, 64], strides = [1, 1]} : vector<64x256xf32> to vector<64x64xf32>
    %cst_69 = arith.constant dense<0xFF800000> : vector<64xf32>
    %181 = vector.multi_reduction <maximumf>, %180, %cst_69 [1] : vector<64x64xf32> to vector<64xf32>
    %182 = vector.shape_cast %181 : vector<64xf32> to vector<64x1xf32>
    %183 = vector.broadcast %182 : vector<64x1xf32> to vector<64x64xf32>
    %184 = arith.subf %180, %183 : vector<64x64xf32>
    %185 = math.exp %184 : vector<64x64xf32>
    %cst_70 = arith.constant dense<0.000000e+00> : vector<64xf32>
    %186 = vector.multi_reduction <add>, %185, %cst_70 [1] : vector<64x64xf32> to vector<64xf32>
    %187 = vector.shape_cast %186 : vector<64xf32> to vector<64x1xf32>
    %188 = tpu.reciprocal %187 {approx = true} : vector<64x1xf32> -> vector<64x1xf32>
    %189 = vector.broadcast %188 : vector<64x1xf32> to vector<64x64xf32>
    %190 = arith.mulf %185, %189 : vector<64x64xf32>
    %191 = tpu.concatenate %157, %168, %179, %190 in 1 : vector<64x64xf32>, vector<64x64xf32>, vector<64x64xf32>, vector<64x64xf32> -> vector<64x256xf32>
    %192 = arith.truncf %191 : vector<64x256xf32> to vector<64x256xbf16>
    %cst_71 = arith.constant dense<0.000000e+00> : vector<64x32xf32>
    %193 = tpu.matmul %192, %145, %cst_71 {dimension_numbers = #tpu.dot_dimension_numbers<[1], [0], [0], [1], [0, 0, 1, 1], [], []>} : vector<64x256xbf16>, vector<256x32xbf16>, vector<64x32xf32> -> vector<64x32xf32>
    %194 = tpu.concatenate %138, %193 in 0 : vector<64x32xf32>, vector<64x32xf32> -> vector<128x32xf32>
    %195 = arith.truncf %194 : vector<128x32xf32> to vector<128x32xbf16>
    %c0_72 = arith.constant 0 : index
    %c0_73 = arith.constant 0 : index
    %c0_74 = arith.constant 0 : index
    %196 = vector.load %arg18[%c0_72, %c0_73, %c0_74] : memref<2x32x32xbf16, #tpu.memory_space<vmem>>, vector<1x32x32xbf16>
    %197 = vector.shape_cast %196 : vector<1x32x32xbf16> to vector<32x32xbf16>
    %cst_75 = arith.constant dense<0.000000e+00> : vector<128x32xf32>
    %198 = tpu.matmul %195, %197, %cst_75 {dimension_numbers = #tpu.dot_dimension_numbers<[1], [0], [0], [1], [0, 0, 1, 1], [], []>} : vector<128x32xbf16>, vector<32x32xbf16>, vector<128x32xf32> -> vector<128x32xf32>
    %199 = arith.addf %18, %198 : vector<128x32xf32>
    %c0_76 = arith.constant 0 : index
    %c0_77 = arith.constant 0 : index
    %c0_78 = arith.constant 0 : index
    %200 = vector.load %arg19[%c0_76, %c0_77, %c0_78] : memref<2x1x32xf32, #tpu.memory_space<vmem>>, vector<1x1x32xf32>
    %201 = vector.shape_cast %200 : vector<1x1x32xf32> to vector<1x32xf32>
    %202 = vector.broadcast %201 : vector<1x32xf32> to vector<128x32xf32>
    %203 = arith.addf %199, %202 : vector<128x32xf32>
    %c0_79 = arith.constant 0 : index
    %c0_80 = arith.constant 0 : index
    %c0_81 = arith.constant 0 : index
    %204 = vector.load %arg20[%c0_79, %c0_80, %c0_81] : memref<2x1x32xf32, #tpu.memory_space<vmem>>, vector<1x1x32xf32>
    %205 = vector.shape_cast %204 : vector<1x1x32xf32> to vector<1x32xf32>
    %c0_82 = arith.constant 0 : index
    %c0_83 = arith.constant 0 : index
    %c0_84 = arith.constant 0 : index
    %206 = vector.load %arg21[%c0_82, %c0_83, %c0_84] : memref<2x1x32xf32, #tpu.memory_space<vmem>>, vector<1x1x32xf32>
    %207 = vector.shape_cast %206 : vector<1x1x32xf32> to vector<1x32xf32>
    %cst_85 = arith.constant dense<0.000000e+00> : vector<128xf32>
    %208 = vector.multi_reduction <add>, %203, %cst_85 [1] : vector<128x32xf32> to vector<128xf32>
    %209 = vector.shape_cast %208 : vector<128xf32> to vector<128x1xf32>
    %cst_86 = arith.constant 3.200000e+01 : f32
    %210 = vector.broadcast %cst_86 : f32 to vector<128x1xf32>
    %211 = arith.divf %209, %210 : vector<128x1xf32>
    %212 = vector.broadcast %211 : vector<128x1xf32> to vector<128x32xf32>
    %213 = arith.subf %203, %212 : vector<128x32xf32>
    %214 = arith.mulf %213, %213 : vector<128x32xf32>
    %cst_87 = arith.constant dense<0.000000e+00> : vector<128xf32>
    %215 = vector.multi_reduction <add>, %214, %cst_87 [1] : vector<128x32xf32> to vector<128xf32>
    %216 = vector.shape_cast %215 : vector<128xf32> to vector<128x1xf32>
    %cst_88 = arith.constant 3.200000e+01 : f32
    %217 = vector.broadcast %cst_88 : f32 to vector<128x1xf32>
    %218 = arith.divf %216, %217 : vector<128x1xf32>
    %219 = vector.broadcast %211 : vector<128x1xf32> to vector<128x32xf32>
    %220 = arith.subf %203, %219 : vector<128x32xf32>
    %cst_89 = arith.constant 9.99999974E-6 : f32
    %221 = vector.broadcast %cst_89 : f32 to vector<128x1xf32>
    %222 = arith.addf %218, %221 : vector<128x1xf32>
    %223 = math.rsqrt %222 : vector<128x1xf32>
    %224 = vector.broadcast %223 : vector<128x1xf32> to vector<128x32xf32>
    %225 = arith.mulf %220, %224 : vector<128x32xf32>
    %226 = vector.broadcast %205 : vector<1x32xf32> to vector<128x32xf32>
    %227 = arith.mulf %225, %226 : vector<128x32xf32>
    %228 = vector.broadcast %207 : vector<1x32xf32> to vector<128x32xf32>
    %229 = arith.addf %227, %228 : vector<128x32xf32>
    %230 = arith.truncf %229 : vector<128x32xf32> to vector<128x32xbf16>
    %c0_90 = arith.constant 0 : index
    %c0_91 = arith.constant 0 : index
    %c0_92 = arith.constant 0 : index
    %231 = vector.load %arg22[%c0_90, %c0_91, %c0_92] : memref<2x32x128xbf16, #tpu.memory_space<vmem>>, vector<1x32x128xbf16>
    %232 = vector.shape_cast %231 : vector<1x32x128xbf16> to vector<32x128xbf16>
    %cst_93 = arith.constant dense<0.000000e+00> : vector<128x128xf32>
    %233 = tpu.matmul %230, %232, %cst_93 {dimension_numbers = #tpu.dot_dimension_numbers<[1], [0], [0], [1], [0, 0, 1, 1], [], []>} : vector<128x32xbf16>, vector<32x128xbf16>, vector<128x128xf32> -> vector<128x128xf32>
    %c0_94 = arith.constant 0 : index
    %c0_95 = arith.constant 0 : index
    %c0_96 = arith.constant 0 : index
    %234 = vector.load %arg23[%c0_94, %c0_95, %c0_96] : memref<2x1x128xf32, #tpu.memory_space<vmem>>, vector<1x1x128xf32>
    %235 = vector.shape_cast %234 : vector<1x1x128xf32> to vector<1x128xf32>
    %236 = vector.broadcast %235 : vector<1x128xf32> to vector<128x128xf32>
    %237 = arith.addf %233, %236 : vector<128x128xf32>
    %238 = arith.negf %237 : vector<128x128xf32>
    %239 = math.exp %238 : vector<128x128xf32>
    %cst_97 = arith.constant 1.000000e+00 : f32
    %240 = vector.broadcast %cst_97 : f32 to vector<128x128xf32>
    %241 = arith.addf %240, %239 : vector<128x128xf32>
    %242 = arith.divf %240, %241 : vector<128x128xf32>
    %243 = arith.mulf %237, %242 : vector<128x128xf32>
    %244 = arith.truncf %243 : vector<128x128xf32> to vector<128x128xbf16>
    %c0_98 = arith.constant 0 : index
    %c0_99 = arith.constant 0 : index
    %c0_100 = arith.constant 0 : index
    %245 = vector.load %arg24[%c0_98, %c0_99, %c0_100] : memref<2x128x32xbf16, #tpu.memory_space<vmem>>, vector<1x128x32xbf16>
    %246 = vector.shape_cast %245 : vector<1x128x32xbf16> to vector<128x32xbf16>
    %cst_101 = arith.constant dense<0.000000e+00> : vector<128x32xf32>
    %247 = tpu.matmul %244, %246, %cst_101 {dimension_numbers = #tpu.dot_dimension_numbers<[1], [0], [0], [1], [0, 0, 1, 1], [], []>} : vector<128x128xbf16>, vector<128x32xbf16>, vector<128x32xf32> -> vector<128x32xf32>
    %248 = arith.addf %203, %247 : vector<128x32xf32>
    %c0_102 = arith.constant 0 : index
    %c0_103 = arith.constant 0 : index
    %c0_104 = arith.constant 0 : index
    %249 = vector.load %arg25[%c0_102, %c0_103, %c0_104] : memref<2x1x32xf32, #tpu.memory_space<vmem>>, vector<1x1x32xf32>
    %250 = vector.shape_cast %249 : vector<1x1x32xf32> to vector<1x32xf32>
    %251 = vector.broadcast %250 : vector<1x32xf32> to vector<128x32xf32>
    %252 = arith.addf %248, %251 : vector<128x32xf32>
    %c1 = arith.constant 1 : index
    %c0_105 = arith.constant 0 : index
    %c0_106 = arith.constant 0 : index
    %253 = vector.load %arg10[%c1, %c0_105, %c0_106] : memref<2x1x32xf32, #tpu.memory_space<vmem>>, vector<1x1x32xf32>
    %254 = vector.shape_cast %253 : vector<1x1x32xf32> to vector<1x32xf32>
    %c1_107 = arith.constant 1 : index
    %c0_108 = arith.constant 0 : index
    %c0_109 = arith.constant 0 : index
    %255 = vector.load %arg11[%c1_107, %c0_108, %c0_109] : memref<2x1x32xf32, #tpu.memory_space<vmem>>, vector<1x1x32xf32>
    %256 = vector.shape_cast %255 : vector<1x1x32xf32> to vector<1x32xf32>
    %cst_110 = arith.constant dense<0.000000e+00> : vector<128xf32>
    %257 = vector.multi_reduction <add>, %252, %cst_110 [1] : vector<128x32xf32> to vector<128xf32>
    %258 = vector.shape_cast %257 : vector<128xf32> to vector<128x1xf32>
    %cst_111 = arith.constant 3.200000e+01 : f32
    %259 = vector.broadcast %cst_111 : f32 to vector<128x1xf32>
    %260 = arith.divf %258, %259 : vector<128x1xf32>
    %261 = vector.broadcast %260 : vector<128x1xf32> to vector<128x32xf32>
    %262 = arith.subf %252, %261 : vector<128x32xf32>
    %263 = arith.mulf %262, %262 : vector<128x32xf32>
    %cst_112 = arith.constant dense<0.000000e+00> : vector<128xf32>
    %264 = vector.multi_reduction <add>, %263, %cst_112 [1] : vector<128x32xf32> to vector<128xf32>
    %265 = vector.shape_cast %264 : vector<128xf32> to vector<128x1xf32>
    %cst_113 = arith.constant 3.200000e+01 : f32
    %266 = vector.broadcast %cst_113 : f32 to vector<128x1xf32>
    %267 = arith.divf %265, %266 : vector<128x1xf32>
    %268 = vector.broadcast %260 : vector<128x1xf32> to vector<128x32xf32>
    %269 = arith.subf %252, %268 : vector<128x32xf32>
    %cst_114 = arith.constant 9.99999974E-6 : f32
    %270 = vector.broadcast %cst_114 : f32 to vector<128x1xf32>
    %271 = arith.addf %267, %270 : vector<128x1xf32>
    %272 = math.rsqrt %271 : vector<128x1xf32>
    %273 = vector.broadcast %272 : vector<128x1xf32> to vector<128x32xf32>
    %274 = arith.mulf %269, %273 : vector<128x32xf32>
    %275 = vector.broadcast %254 : vector<1x32xf32> to vector<128x32xf32>
    %276 = arith.mulf %274, %275 : vector<128x32xf32>
    %277 = vector.broadcast %256 : vector<1x32xf32> to vector<128x32xf32>
    %278 = arith.addf %276, %277 : vector<128x32xf32>
    %279 = arith.truncf %278 : vector<128x32xf32> to vector<128x32xbf16>
    %c1_115 = arith.constant 1 : index
    %c0_116 = arith.constant 0 : index
    %c0_117 = arith.constant 0 : index
    %280 = vector.load %arg12[%c1_115, %c0_116, %c0_117] : memref<2x32x32xbf16, #tpu.memory_space<vmem>>, vector<1x32x32xbf16>
    %281 = vector.shape_cast %280 : vector<1x32x32xbf16> to vector<32x32xbf16>
    %cst_118 = arith.constant dense<0.000000e+00> : vector<128x32xf32>
    %282 = tpu.matmul %279, %281, %cst_118 {dimension_numbers = #tpu.dot_dimension_numbers<[1], [0], [0], [1], [0, 0, 1, 1], [], []>} : vector<128x32xbf16>, vector<32x32xbf16>, vector<128x32xf32> -> vector<128x32xf32>
    %c1_119 = arith.constant 1 : index
    %c0_120 = arith.constant 0 : index
    %c0_121 = arith.constant 0 : index
    %283 = vector.load %arg13[%c1_119, %c0_120, %c0_121] : memref<2x1x32xf32, #tpu.memory_space<vmem>>, vector<1x1x32xf32>
    %284 = vector.shape_cast %283 : vector<1x1x32xf32> to vector<1x32xf32>
    %285 = vector.broadcast %284 : vector<1x32xf32> to vector<128x32xf32>
    %286 = arith.addf %282, %285 : vector<128x32xf32>
    %c1_122 = arith.constant 1 : index
    %c0_123 = arith.constant 0 : index
    %c0_124 = arith.constant 0 : index
    %287 = vector.load %arg14[%c1_122, %c0_123, %c0_124] : memref<2x32x32xbf16, #tpu.memory_space<vmem>>, vector<1x32x32xbf16>
    %288 = vector.shape_cast %287 : vector<1x32x32xbf16> to vector<32x32xbf16>
    %cst_125 = arith.constant dense<0.000000e+00> : vector<128x32xf32>
    %289 = tpu.matmul %279, %288, %cst_125 {dimension_numbers = #tpu.dot_dimension_numbers<[1], [0], [0], [1], [0, 0, 1, 1], [], []>} : vector<128x32xbf16>, vector<32x32xbf16>, vector<128x32xf32> -> vector<128x32xf32>
    %c1_126 = arith.constant 1 : index
    %c0_127 = arith.constant 0 : index
    %c0_128 = arith.constant 0 : index
    %290 = vector.load %arg15[%c1_126, %c0_127, %c0_128] : memref<2x1x32xf32, #tpu.memory_space<vmem>>, vector<1x1x32xf32>
    %291 = vector.shape_cast %290 : vector<1x1x32xf32> to vector<1x32xf32>
    %292 = vector.broadcast %291 : vector<1x32xf32> to vector<128x32xf32>
    %293 = arith.addf %289, %292 : vector<128x32xf32>
    %c1_129 = arith.constant 1 : index
    %c0_130 = arith.constant 0 : index
    %c0_131 = arith.constant 0 : index
    %294 = vector.load %arg16[%c1_129, %c0_130, %c0_131] : memref<2x32x32xbf16, #tpu.memory_space<vmem>>, vector<1x32x32xbf16>
    %295 = vector.shape_cast %294 : vector<1x32x32xbf16> to vector<32x32xbf16>
    %cst_132 = arith.constant dense<0.000000e+00> : vector<128x32xf32>
    %296 = tpu.matmul %279, %295, %cst_132 {dimension_numbers = #tpu.dot_dimension_numbers<[1], [0], [0], [1], [0, 0, 1, 1], [], []>} : vector<128x32xbf16>, vector<32x32xbf16>, vector<128x32xf32> -> vector<128x32xf32>
    %c1_133 = arith.constant 1 : index
    %c0_134 = arith.constant 0 : index
    %c0_135 = arith.constant 0 : index
    %297 = vector.load %arg17[%c1_133, %c0_134, %c0_135] : memref<2x1x32xf32, #tpu.memory_space<vmem>>, vector<1x1x32xf32>
    %298 = vector.shape_cast %297 : vector<1x1x32xf32> to vector<1x32xf32>
    %299 = vector.broadcast %298 : vector<1x32xf32> to vector<128x32xf32>
    %300 = arith.addf %296, %299 : vector<128x32xf32>
    %301 = arith.mulf %286, %19 : vector<128x32xf32>
    %302 = arith.truncf %286 : vector<128x32xf32> to vector<128x32xbf16>
    %cst_136 = arith.constant dense<0.000000e+00> : vector<128x32xf32>
    %303 = tpu.matmul %302, %21, %cst_136 {dimension_numbers = #tpu.dot_dimension_numbers<[1], [0], [0], [1], [0, 0, 1, 1], [], []>} : vector<128x32xbf16>, vector<32x32xbf16>, vector<128x32xf32> -> vector<128x32xf32>
    %304 = arith.mulf %303, %20 : vector<128x32xf32>
    %305 = arith.addf %301, %304 : vector<128x32xf32>
    %306 = arith.mulf %293, %19 : vector<128x32xf32>
    %307 = arith.truncf %293 : vector<128x32xf32> to vector<128x32xbf16>
    %cst_137 = arith.constant dense<0.000000e+00> : vector<128x32xf32>
    %308 = tpu.matmul %307, %21, %cst_137 {dimension_numbers = #tpu.dot_dimension_numbers<[1], [0], [0], [1], [0, 0, 1, 1], [], []>} : vector<128x32xbf16>, vector<32x32xbf16>, vector<128x32xf32> -> vector<128x32xf32>
    %309 = arith.mulf %308, %20 : vector<128x32xf32>
    %310 = arith.addf %306, %309 : vector<128x32xf32>
    %311 = arith.truncf %305 : vector<128x32xf32> to vector<128x32xbf16>
    %312 = arith.truncf %310 : vector<128x32xf32> to vector<128x32xbf16>
    %313 = arith.truncf %300 : vector<128x32xf32> to vector<128x32xbf16>
    %314 = vector.extract_strided_slice %311 {offsets = [0, 0], sizes = [64, 32], strides = [1, 1]} : vector<128x32xbf16> to vector<64x32xbf16>
    %315 = vector.extract_strided_slice %312 {offsets = [0, 0], sizes = [64, 32], strides = [1, 1]} : vector<128x32xbf16> to vector<64x32xbf16>
    %316 = vector.extract_strided_slice %313 {offsets = [0, 0], sizes = [64, 32], strides = [1, 1]} : vector<128x32xbf16> to vector<64x32xbf16>
    %317 = tpu.concatenate %315, %315, %315, %315 in 0 : vector<64x32xbf16>, vector<64x32xbf16>, vector<64x32xbf16>, vector<64x32xbf16> -> vector<256x32xbf16>
    %318 = arith.mulf %317, %22 : vector<256x32xbf16>
    %319 = tpu.concatenate %316, %316, %316, %316 in 0 : vector<64x32xbf16>, vector<64x32xbf16>, vector<64x32xbf16>, vector<64x32xbf16> -> vector<256x32xbf16>
    %320 = arith.mulf %319, %22 : vector<256x32xbf16>
    %cst_138 = arith.constant dense<0.000000e+00> : vector<64x256xf32>
    %321 = tpu.matmul %314, %318, %cst_138 {dimension_numbers = #tpu.dot_dimension_numbers<[1], [1], [0], [0], [0, 0, 1, 0], [], []>} : vector<64x32xbf16>, vector<256x32xbf16>, vector<64x256xf32> -> vector<64x256xf32>
    %322 = vector.extract_strided_slice %321 {offsets = [0, 0], sizes = [64, 64], strides = [1, 1]} : vector<64x256xf32> to vector<64x64xf32>
    %cst_139 = arith.constant dense<0xFF800000> : vector<64xf32>
    %323 = vector.multi_reduction <maximumf>, %322, %cst_139 [1] : vector<64x64xf32> to vector<64xf32>
    %324 = vector.shape_cast %323 : vector<64xf32> to vector<64x1xf32>
    %325 = vector.broadcast %324 : vector<64x1xf32> to vector<64x64xf32>
    %326 = arith.subf %322, %325 : vector<64x64xf32>
    %327 = math.exp %326 : vector<64x64xf32>
    %cst_140 = arith.constant dense<0.000000e+00> : vector<64xf32>
    %328 = vector.multi_reduction <add>, %327, %cst_140 [1] : vector<64x64xf32> to vector<64xf32>
    %329 = vector.shape_cast %328 : vector<64xf32> to vector<64x1xf32>
    %330 = tpu.reciprocal %329 {approx = true} : vector<64x1xf32> -> vector<64x1xf32>
    %331 = vector.broadcast %330 : vector<64x1xf32> to vector<64x64xf32>
    %332 = arith.mulf %327, %331 : vector<64x64xf32>
    %333 = vector.extract_strided_slice %321 {offsets = [0, 64], sizes = [64, 64], strides = [1, 1]} : vector<64x256xf32> to vector<64x64xf32>
    %cst_141 = arith.constant dense<0xFF800000> : vector<64xf32>
    %334 = vector.multi_reduction <maximumf>, %333, %cst_141 [1] : vector<64x64xf32> to vector<64xf32>
    %335 = vector.shape_cast %334 : vector<64xf32> to vector<64x1xf32>
    %336 = vector.broadcast %335 : vector<64x1xf32> to vector<64x64xf32>
    %337 = arith.subf %333, %336 : vector<64x64xf32>
    %338 = math.exp %337 : vector<64x64xf32>
    %cst_142 = arith.constant dense<0.000000e+00> : vector<64xf32>
    %339 = vector.multi_reduction <add>, %338, %cst_142 [1] : vector<64x64xf32> to vector<64xf32>
    %340 = vector.shape_cast %339 : vector<64xf32> to vector<64x1xf32>
    %341 = tpu.reciprocal %340 {approx = true} : vector<64x1xf32> -> vector<64x1xf32>
    %342 = vector.broadcast %341 : vector<64x1xf32> to vector<64x64xf32>
    %343 = arith.mulf %338, %342 : vector<64x64xf32>
    %344 = vector.extract_strided_slice %321 {offsets = [0, 128], sizes = [64, 64], strides = [1, 1]} : vector<64x256xf32> to vector<64x64xf32>
    %cst_143 = arith.constant dense<0xFF800000> : vector<64xf32>
    %345 = vector.multi_reduction <maximumf>, %344, %cst_143 [1] : vector<64x64xf32> to vector<64xf32>
    %346 = vector.shape_cast %345 : vector<64xf32> to vector<64x1xf32>
    %347 = vector.broadcast %346 : vector<64x1xf32> to vector<64x64xf32>
    %348 = arith.subf %344, %347 : vector<64x64xf32>
    %349 = math.exp %348 : vector<64x64xf32>
    %cst_144 = arith.constant dense<0.000000e+00> : vector<64xf32>
    %350 = vector.multi_reduction <add>, %349, %cst_144 [1] : vector<64x64xf32> to vector<64xf32>
    %351 = vector.shape_cast %350 : vector<64xf32> to vector<64x1xf32>
    %352 = tpu.reciprocal %351 {approx = true} : vector<64x1xf32> -> vector<64x1xf32>
    %353 = vector.broadcast %352 : vector<64x1xf32> to vector<64x64xf32>
    %354 = arith.mulf %349, %353 : vector<64x64xf32>
    %355 = vector.extract_strided_slice %321 {offsets = [0, 192], sizes = [64, 64], strides = [1, 1]} : vector<64x256xf32> to vector<64x64xf32>
    %cst_145 = arith.constant dense<0xFF800000> : vector<64xf32>
    %356 = vector.multi_reduction <maximumf>, %355, %cst_145 [1] : vector<64x64xf32> to vector<64xf32>
    %357 = vector.shape_cast %356 : vector<64xf32> to vector<64x1xf32>
    %358 = vector.broadcast %357 : vector<64x1xf32> to vector<64x64xf32>
    %359 = arith.subf %355, %358 : vector<64x64xf32>
    %360 = math.exp %359 : vector<64x64xf32>
    %cst_146 = arith.constant dense<0.000000e+00> : vector<64xf32>
    %361 = vector.multi_reduction <add>, %360, %cst_146 [1] : vector<64x64xf32> to vector<64xf32>
    %362 = vector.shape_cast %361 : vector<64xf32> to vector<64x1xf32>
    %363 = tpu.reciprocal %362 {approx = true} : vector<64x1xf32> -> vector<64x1xf32>
    %364 = vector.broadcast %363 : vector<64x1xf32> to vector<64x64xf32>
    %365 = arith.mulf %360, %364 : vector<64x64xf32>
    %366 = tpu.concatenate %332, %343, %354, %365 in 1 : vector<64x64xf32>, vector<64x64xf32>, vector<64x64xf32>, vector<64x64xf32> -> vector<64x256xf32>
    %367 = arith.truncf %366 : vector<64x256xf32> to vector<64x256xbf16>
    %cst_147 = arith.constant dense<0.000000e+00> : vector<64x32xf32>
    %368 = tpu.matmul %367, %320, %cst_147 {dimension_numbers = #tpu.dot_dimension_numbers<[1], [0], [0], [1], [0, 0, 1, 1], [], []>} : vector<64x256xbf16>, vector<256x32xbf16>, vector<64x32xf32> -> vector<64x32xf32>
    %369 = vector.extract_strided_slice %311 {offsets = [64, 0], sizes = [64, 32], strides = [1, 1]} : vector<128x32xbf16> to vector<64x32xbf16>
    %370 = vector.extract_strided_slice %312 {offsets = [64, 0], sizes = [64, 32], strides = [1, 1]} : vector<128x32xbf16> to vector<64x32xbf16>
    %371 = vector.extract_strided_slice %313 {offsets = [64, 0], sizes = [64, 32], strides = [1, 1]} : vector<128x32xbf16> to vector<64x32xbf16>
    %372 = tpu.concatenate %370, %370, %370, %370 in 0 : vector<64x32xbf16>, vector<64x32xbf16>, vector<64x32xbf16>, vector<64x32xbf16> -> vector<256x32xbf16>
    %373 = arith.mulf %372, %22 : vector<256x32xbf16>
    %374 = tpu.concatenate %371, %371, %371, %371 in 0 : vector<64x32xbf16>, vector<64x32xbf16>, vector<64x32xbf16>, vector<64x32xbf16> -> vector<256x32xbf16>
    %375 = arith.mulf %374, %22 : vector<256x32xbf16>
    %cst_148 = arith.constant dense<0.000000e+00> : vector<64x256xf32>
    %376 = tpu.matmul %369, %373, %cst_148 {dimension_numbers = #tpu.dot_dimension_numbers<[1], [1], [0], [0], [0, 0, 1, 0], [], []>} : vector<64x32xbf16>, vector<256x32xbf16>, vector<64x256xf32> -> vector<64x256xf32>
    %377 = vector.extract_strided_slice %376 {offsets = [0, 0], sizes = [64, 64], strides = [1, 1]} : vector<64x256xf32> to vector<64x64xf32>
    %cst_149 = arith.constant dense<0xFF800000> : vector<64xf32>
    %378 = vector.multi_reduction <maximumf>, %377, %cst_149 [1] : vector<64x64xf32> to vector<64xf32>
    %379 = vector.shape_cast %378 : vector<64xf32> to vector<64x1xf32>
    %380 = vector.broadcast %379 : vector<64x1xf32> to vector<64x64xf32>
    %381 = arith.subf %377, %380 : vector<64x64xf32>
    %382 = math.exp %381 : vector<64x64xf32>
    %cst_150 = arith.constant dense<0.000000e+00> : vector<64xf32>
    %383 = vector.multi_reduction <add>, %382, %cst_150 [1] : vector<64x64xf32> to vector<64xf32>
    %384 = vector.shape_cast %383 : vector<64xf32> to vector<64x1xf32>
    %385 = tpu.reciprocal %384 {approx = true} : vector<64x1xf32> -> vector<64x1xf32>
    %386 = vector.broadcast %385 : vector<64x1xf32> to vector<64x64xf32>
    %387 = arith.mulf %382, %386 : vector<64x64xf32>
    %388 = vector.extract_strided_slice %376 {offsets = [0, 64], sizes = [64, 64], strides = [1, 1]} : vector<64x256xf32> to vector<64x64xf32>
    %cst_151 = arith.constant dense<0xFF800000> : vector<64xf32>
    %389 = vector.multi_reduction <maximumf>, %388, %cst_151 [1] : vector<64x64xf32> to vector<64xf32>
    %390 = vector.shape_cast %389 : vector<64xf32> to vector<64x1xf32>
    %391 = vector.broadcast %390 : vector<64x1xf32> to vector<64x64xf32>
    %392 = arith.subf %388, %391 : vector<64x64xf32>
    %393 = math.exp %392 : vector<64x64xf32>
    %cst_152 = arith.constant dense<0.000000e+00> : vector<64xf32>
    %394 = vector.multi_reduction <add>, %393, %cst_152 [1] : vector<64x64xf32> to vector<64xf32>
    %395 = vector.shape_cast %394 : vector<64xf32> to vector<64x1xf32>
    %396 = tpu.reciprocal %395 {approx = true} : vector<64x1xf32> -> vector<64x1xf32>
    %397 = vector.broadcast %396 : vector<64x1xf32> to vector<64x64xf32>
    %398 = arith.mulf %393, %397 : vector<64x64xf32>
    %399 = vector.extract_strided_slice %376 {offsets = [0, 128], sizes = [64, 64], strides = [1, 1]} : vector<64x256xf32> to vector<64x64xf32>
    %cst_153 = arith.constant dense<0xFF800000> : vector<64xf32>
    %400 = vector.multi_reduction <maximumf>, %399, %cst_153 [1] : vector<64x64xf32> to vector<64xf32>
    %401 = vector.shape_cast %400 : vector<64xf32> to vector<64x1xf32>
    %402 = vector.broadcast %401 : vector<64x1xf32> to vector<64x64xf32>
    %403 = arith.subf %399, %402 : vector<64x64xf32>
    %404 = math.exp %403 : vector<64x64xf32>
    %cst_154 = arith.constant dense<0.000000e+00> : vector<64xf32>
    %405 = vector.multi_reduction <add>, %404, %cst_154 [1] : vector<64x64xf32> to vector<64xf32>
    %406 = vector.shape_cast %405 : vector<64xf32> to vector<64x1xf32>
    %407 = tpu.reciprocal %406 {approx = true} : vector<64x1xf32> -> vector<64x1xf32>
    %408 = vector.broadcast %407 : vector<64x1xf32> to vector<64x64xf32>
    %409 = arith.mulf %404, %408 : vector<64x64xf32>
    %410 = vector.extract_strided_slice %376 {offsets = [0, 192], sizes = [64, 64], strides = [1, 1]} : vector<64x256xf32> to vector<64x64xf32>
    %cst_155 = arith.constant dense<0xFF800000> : vector<64xf32>
    %411 = vector.multi_reduction <maximumf>, %410, %cst_155 [1] : vector<64x64xf32> to vector<64xf32>
    %412 = vector.shape_cast %411 : vector<64xf32> to vector<64x1xf32>
    %413 = vector.broadcast %412 : vector<64x1xf32> to vector<64x64xf32>
    %414 = arith.subf %410, %413 : vector<64x64xf32>
    %415 = math.exp %414 : vector<64x64xf32>
    %cst_156 = arith.constant dense<0.000000e+00> : vector<64xf32>
    %416 = vector.multi_reduction <add>, %415, %cst_156 [1] : vector<64x64xf32> to vector<64xf32>
    %417 = vector.shape_cast %416 : vector<64xf32> to vector<64x1xf32>
    %418 = tpu.reciprocal %417 {approx = true} : vector<64x1xf32> -> vector<64x1xf32>
    %419 = vector.broadcast %418 : vector<64x1xf32> to vector<64x64xf32>
    %420 = arith.mulf %415, %419 : vector<64x64xf32>
    %421 = tpu.concatenate %387, %398, %409, %420 in 1 : vector<64x64xf32>, vector<64x64xf32>, vector<64x64xf32>, vector<64x64xf32> -> vector<64x256xf32>
    %422 = arith.truncf %421 : vector<64x256xf32> to vector<64x256xbf16>
    %cst_157 = arith.constant dense<0.000000e+00> : vector<64x32xf32>
    %423 = tpu.matmul %422, %375, %cst_157 {dimension_numbers = #tpu.dot_dimension_numbers<[1], [0], [0], [1], [0, 0, 1, 1], [], []>} : vector<64x256xbf16>, vector<256x32xbf16>, vector<64x32xf32> -> vector<64x32xf32>
    %424 = tpu.concatenate %368, %423 in 0 : vector<64x32xf32>, vector<64x32xf32> -> vector<128x32xf32>
    %425 = arith.truncf %424 : vector<128x32xf32> to vector<128x32xbf16>
    %c1_158 = arith.constant 1 : index
    %c0_159 = arith.constant 0 : index
    %c0_160 = arith.constant 0 : index
    %426 = vector.load %arg18[%c1_158, %c0_159, %c0_160] : memref<2x32x32xbf16, #tpu.memory_space<vmem>>, vector<1x32x32xbf16>
    %427 = vector.shape_cast %426 : vector<1x32x32xbf16> to vector<32x32xbf16>
    %cst_161 = arith.constant dense<0.000000e+00> : vector<128x32xf32>
    %428 = tpu.matmul %425, %427, %cst_161 {dimension_numbers = #tpu.dot_dimension_numbers<[1], [0], [0], [1], [0, 0, 1, 1], [], []>} : vector<128x32xbf16>, vector<32x32xbf16>, vector<128x32xf32> -> vector<128x32xf32>
    %429 = arith.addf %252, %428 : vector<128x32xf32>
    %c1_162 = arith.constant 1 : index
    %c0_163 = arith.constant 0 : index
    %c0_164 = arith.constant 0 : index
    %430 = vector.load %arg19[%c1_162, %c0_163, %c0_164] : memref<2x1x32xf32, #tpu.memory_space<vmem>>, vector<1x1x32xf32>
    %431 = vector.shape_cast %430 : vector<1x1x32xf32> to vector<1x32xf32>
    %432 = vector.broadcast %431 : vector<1x32xf32> to vector<128x32xf32>
    %433 = arith.addf %429, %432 : vector<128x32xf32>
    %c1_165 = arith.constant 1 : index
    %c0_166 = arith.constant 0 : index
    %c0_167 = arith.constant 0 : index
    %434 = vector.load %arg20[%c1_165, %c0_166, %c0_167] : memref<2x1x32xf32, #tpu.memory_space<vmem>>, vector<1x1x32xf32>
    %435 = vector.shape_cast %434 : vector<1x1x32xf32> to vector<1x32xf32>
    %c1_168 = arith.constant 1 : index
    %c0_169 = arith.constant 0 : index
    %c0_170 = arith.constant 0 : index
    %436 = vector.load %arg21[%c1_168, %c0_169, %c0_170] : memref<2x1x32xf32, #tpu.memory_space<vmem>>, vector<1x1x32xf32>
    %437 = vector.shape_cast %436 : vector<1x1x32xf32> to vector<1x32xf32>
    %cst_171 = arith.constant dense<0.000000e+00> : vector<128xf32>
    %438 = vector.multi_reduction <add>, %433, %cst_171 [1] : vector<128x32xf32> to vector<128xf32>
    %439 = vector.shape_cast %438 : vector<128xf32> to vector<128x1xf32>
    %cst_172 = arith.constant 3.200000e+01 : f32
    %440 = vector.broadcast %cst_172 : f32 to vector<128x1xf32>
    %441 = arith.divf %439, %440 : vector<128x1xf32>
    %442 = vector.broadcast %441 : vector<128x1xf32> to vector<128x32xf32>
    %443 = arith.subf %433, %442 : vector<128x32xf32>
    %444 = arith.mulf %443, %443 : vector<128x32xf32>
    %cst_173 = arith.constant dense<0.000000e+00> : vector<128xf32>
    %445 = vector.multi_reduction <add>, %444, %cst_173 [1] : vector<128x32xf32> to vector<128xf32>
    %446 = vector.shape_cast %445 : vector<128xf32> to vector<128x1xf32>
    %cst_174 = arith.constant 3.200000e+01 : f32
    %447 = vector.broadcast %cst_174 : f32 to vector<128x1xf32>
    %448 = arith.divf %446, %447 : vector<128x1xf32>
    %449 = vector.broadcast %441 : vector<128x1xf32> to vector<128x32xf32>
    %450 = arith.subf %433, %449 : vector<128x32xf32>
    %cst_175 = arith.constant 9.99999974E-6 : f32
    %451 = vector.broadcast %cst_175 : f32 to vector<128x1xf32>
    %452 = arith.addf %448, %451 : vector<128x1xf32>
    %453 = math.rsqrt %452 : vector<128x1xf32>
    %454 = vector.broadcast %453 : vector<128x1xf32> to vector<128x32xf32>
    %455 = arith.mulf %450, %454 : vector<128x32xf32>
    %456 = vector.broadcast %435 : vector<1x32xf32> to vector<128x32xf32>
    %457 = arith.mulf %455, %456 : vector<128x32xf32>
    %458 = vector.broadcast %437 : vector<1x32xf32> to vector<128x32xf32>
    %459 = arith.addf %457, %458 : vector<128x32xf32>
    %460 = arith.truncf %459 : vector<128x32xf32> to vector<128x32xbf16>
    %c1_176 = arith.constant 1 : index
    %c0_177 = arith.constant 0 : index
    %c0_178 = arith.constant 0 : index
    %461 = vector.load %arg22[%c1_176, %c0_177, %c0_178] : memref<2x32x128xbf16, #tpu.memory_space<vmem>>, vector<1x32x128xbf16>
    %462 = vector.shape_cast %461 : vector<1x32x128xbf16> to vector<32x128xbf16>
    %cst_179 = arith.constant dense<0.000000e+00> : vector<128x128xf32>
    %463 = tpu.matmul %460, %462, %cst_179 {dimension_numbers = #tpu.dot_dimension_numbers<[1], [0], [0], [1], [0, 0, 1, 1], [], []>} : vector<128x32xbf16>, vector<32x128xbf16>, vector<128x128xf32> -> vector<128x128xf32>
    %c1_180 = arith.constant 1 : index
    %c0_181 = arith.constant 0 : index
    %c0_182 = arith.constant 0 : index
    %464 = vector.load %arg23[%c1_180, %c0_181, %c0_182] : memref<2x1x128xf32, #tpu.memory_space<vmem>>, vector<1x1x128xf32>
    %465 = vector.shape_cast %464 : vector<1x1x128xf32> to vector<1x128xf32>
    %466 = vector.broadcast %465 : vector<1x128xf32> to vector<128x128xf32>
    %467 = arith.addf %463, %466 : vector<128x128xf32>
    %468 = arith.negf %467 : vector<128x128xf32>
    %469 = math.exp %468 : vector<128x128xf32>
    %cst_183 = arith.constant 1.000000e+00 : f32
    %470 = vector.broadcast %cst_183 : f32 to vector<128x128xf32>
    %471 = arith.addf %470, %469 : vector<128x128xf32>
    %472 = arith.divf %470, %471 : vector<128x128xf32>
    %473 = arith.mulf %467, %472 : vector<128x128xf32>
    %474 = arith.truncf %473 : vector<128x128xf32> to vector<128x128xbf16>
    %c1_184 = arith.constant 1 : index
    %c0_185 = arith.constant 0 : index
    %c0_186 = arith.constant 0 : index
    %475 = vector.load %arg24[%c1_184, %c0_185, %c0_186] : memref<2x128x32xbf16, #tpu.memory_space<vmem>>, vector<1x128x32xbf16>
    %476 = vector.shape_cast %475 : vector<1x128x32xbf16> to vector<128x32xbf16>
    %cst_187 = arith.constant dense<0.000000e+00> : vector<128x32xf32>
    %477 = tpu.matmul %474, %476, %cst_187 {dimension_numbers = #tpu.dot_dimension_numbers<[1], [0], [0], [1], [0, 0, 1, 1], [], []>} : vector<128x128xbf16>, vector<128x32xbf16>, vector<128x32xf32> -> vector<128x32xf32>
    %478 = arith.addf %433, %477 : vector<128x32xf32>
    %c1_188 = arith.constant 1 : index
    %c0_189 = arith.constant 0 : index
    %c0_190 = arith.constant 0 : index
    %479 = vector.load %arg25[%c1_188, %c0_189, %c0_190] : memref<2x1x32xf32, #tpu.memory_space<vmem>>, vector<1x1x32xf32>
    %480 = vector.shape_cast %479 : vector<1x1x32xf32> to vector<1x32xf32>
    %481 = vector.broadcast %480 : vector<1x32xf32> to vector<128x32xf32>
    %482 = arith.addf %478, %481 : vector<128x32xf32>
    %483 = vector.extract_strided_slice %482 {offsets = [0, 0], sizes = [64, 32], strides = [1, 1]} : vector<128x32xf32> to vector<64x32xf32>
    %cst_191 = arith.constant dense<0.000000e+00> : vector<32xf32>
    %484 = vector.multi_reduction <add>, %483, %cst_191 [0] : vector<64x32xf32> to vector<32xf32>
    %485 = vector.shape_cast %484 : vector<32xf32> to vector<1x32xf32>
    %486 = vector.extract_strided_slice %482 {offsets = [64, 0], sizes = [64, 32], strides = [1, 1]} : vector<128x32xf32> to vector<64x32xf32>
    %cst_192 = arith.constant dense<0.000000e+00> : vector<32xf32>
    %487 = vector.multi_reduction <add>, %486, %cst_192 [0] : vector<64x32xf32> to vector<32xf32>
    %488 = vector.shape_cast %487 : vector<32xf32> to vector<1x32xf32>
    %489 = tpu.concatenate %485, %488 in 0 : vector<1x32xf32>, vector<1x32xf32> -> vector<2x32xf32>
    %cst_193 = arith.constant 1.562500e-02 : f32
    %490 = vector.broadcast %cst_193 : f32 to vector<2x32xf32>
    %491 = arith.mulf %489, %490 : vector<2x32xf32>
    %c0_194 = arith.constant 0 : index
    %c0_195 = arith.constant 0 : index
    %492 = vector.load %arg1[%c0_194, %c0_195] : memref<2x7xf32, #tpu.memory_space<vmem>>, vector<2x7xf32>
    %493 = tpu.concatenate %491, %492 in 1 : vector<2x32xf32>, vector<2x7xf32> -> vector<2x39xf32>
    %494 = arith.truncf %493 : vector<2x39xf32> to vector<2x39xbf16>
    %c0_196 = arith.constant 0 : index
    %c0_197 = arith.constant 0 : index
    %495 = vector.load %arg26[%c0_196, %c0_197] : memref<39x256xbf16, #tpu.memory_space<vmem>>, vector<39x256xbf16>
    %cst_198 = arith.constant dense<0.000000e+00> : vector<2x256xf32>
    %496 = tpu.matmul %494, %495, %cst_198 {dimension_numbers = #tpu.dot_dimension_numbers<[1], [0], [0], [1], [0, 0, 1, 1], [], []>} : vector<2x39xbf16>, vector<39x256xbf16>, vector<2x256xf32> -> vector<2x256xf32>
    %c0_199 = arith.constant 0 : index
    %c0_200 = arith.constant 0 : index
    %497 = vector.load %arg27[%c0_199, %c0_200] : memref<1x256xf32, #tpu.memory_space<vmem>>, vector<1x256xf32>
    %498 = vector.broadcast %497 : vector<1x256xf32> to vector<2x256xf32>
    %499 = arith.addf %496, %498 : vector<2x256xf32>
    %cst_201 = arith.constant 0.000000e+00 : f32
    %500 = vector.broadcast %cst_201 : f32 to vector<2x256xf32>
    %501 = arith.maximumf %499, %500 : vector<2x256xf32>
    %502 = arith.truncf %501 : vector<2x256xf32> to vector<2x256xbf16>
    %c0_202 = arith.constant 0 : index
    %c0_203 = arith.constant 0 : index
    %503 = vector.load %arg28[%c0_202, %c0_203] : memref<256x128xbf16, #tpu.memory_space<vmem>>, vector<256x128xbf16>
    %cst_204 = arith.constant dense<0.000000e+00> : vector<2x128xf32>
    %504 = tpu.matmul %502, %503, %cst_204 {dimension_numbers = #tpu.dot_dimension_numbers<[1], [0], [0], [1], [0, 0, 1, 1], [], []>} : vector<2x256xbf16>, vector<256x128xbf16>, vector<2x128xf32> -> vector<2x128xf32>
    %c0_205 = arith.constant 0 : index
    %c0_206 = arith.constant 0 : index
    %505 = vector.load %arg29[%c0_205, %c0_206] : memref<1x128xf32, #tpu.memory_space<vmem>>, vector<1x128xf32>
    %506 = vector.broadcast %505 : vector<1x128xf32> to vector<2x128xf32>
    %507 = arith.addf %504, %506 : vector<2x128xf32>
    %c0_207 = arith.constant 0 : index
    %c0_208 = arith.constant 0 : index
    %508 = vector.load %arg30[%c0_207, %c0_208] : memref<2x128xf32, #tpu.memory_space<vmem>>, vector<2x128xf32>
    tpu.vector_store %arg30[%c0_207, %c0_208], %507 {strides = array<i32>} : memref<2x128xf32, #tpu.memory_space<vmem>>, vector<2x128xf32>,
    return
  }
}

</mosaic_0001>

<llo_original>
// kernel: tpu_custom_call.1
$region0: #{tpu_custom_call.1}
  #allocation0 [shape = 'u32[]', space=smem, size = 0x4, offset = 0x4, fixed_abs, tag = 'smem constant byte address 0x4 - core index']
  #allocation1 [shape = 'u32[144,128]{1,0:T(1,128)}', space=vmem, size = 0x12000, scoped, tag = 'internal scratch']
  %s0 = inlined_call_operand.smem [shape: u32[31], index: -1, kind: input, shape index: {}]
  %s1 = sld [smem:[%s0]]
  %s2 = scalar_lea.smem %s0, 1
  %s3 = sld [smem:[%s2]]
  %s4 = scalar_lea.smem %s0, 2
  %s5 = sld [smem:[%s4]]
  %s6 = scalar_lea.smem %s0, 3
  %s7 = sld [smem:[%s6]]
  %s8 = scalar_lea.smem %s0, 4
  %s9 = sld [smem:[%s8]]
  %s10 = scalar_lea.smem %s0, 5
  %s11 = sld [smem:[%s10]]
  %s12 = scalar_lea.smem %s0, 6
  %s13 = sld [smem:[%s12]]
  %s14 = scalar_lea.smem %s0, 7
  %s15 = sld [smem:[%s14]]
  %s16 = scalar_lea.smem %s0, 8
  %s17 = sld [smem:[%s16]]
  %s18 = scalar_lea.smem %s0, 9
  %s19 = sld [smem:[%s18]]
  %s20 = scalar_lea.smem %s0, 10
  %s21 = sld [smem:[%s20]]
  %s22 = scalar_lea.smem %s0, 11
  %s23 = sld [smem:[%s22]]
  %s24 = scalar_lea.smem %s0, 12
  %s25 = sld [smem:[%s24]]
  %s26 = scalar_lea.smem %s0, 13
  %s27 = sld [smem:[%s26]]
  %s28 = scalar_lea.smem %s0, 14
  %s29 = sld [smem:[%s28]]
  %s30 = scalar_lea.smem %s0, 15
  %s31 = sld [smem:[%s30]]
  %s32 = scalar_lea.smem %s0, 16
  %s33 = sld [smem:[%s32]]
  %s34 = scalar_lea.smem %s0, 17
  %s35 = sld [smem:[%s34]]
  %s36 = scalar_lea.smem %s0, 18
  %s37 = sld [smem:[%s36]]
  %s38 = scalar_lea.smem %s0, 19
  %s39 = sld [smem:[%s38]]
  %s40 = scalar_lea.smem %s0, 20
  %s41 = sld [smem:[%s40]]
  %s42 = scalar_lea.smem %s0, 21
  %s43 = sld [smem:[%s42]]
  %s44 = scalar_lea.smem %s0, 22
  %s45 = sld [smem:[%s44]]
  %s46 = scalar_lea.smem %s0, 23
  %s47 = sld [smem:[%s46]]
  %s48 = scalar_lea.smem %s0, 24
  %s49 = sld [smem:[%s48]]
  %s50 = scalar_lea.smem %s0, 25
  %s51 = sld [smem:[%s50]]
  %s52 = scalar_lea.smem %s0, 26
  %s53 = sld [smem:[%s52]]
  %s54 = scalar_lea.smem %s0, 27
  %s55 = sld [smem:[%s54]]
  %s56 = scalar_lea.smem %s0, 28
  %s57 = sld [smem:[%s56]]
  %s58 = scalar_lea.smem %s0, 29
  %s59 = sld [smem:[%s58]]
  %s60 = scalar_lea.smem %s0, 30
  %s61 = sld [smem:[%s60]]
  %s62 = sld [smem:[#allocation0]]
  $region130: #{tpu_custom_call.1} parent=0
    _
  %s64 = ssub.s32 1, %s62
  %s65 = scalar_select 0, %s64, %s62
  $region1: #{tpu_custom_call.1} parent=0
    #allocation2 [shape = 'u8[1024]{0}', space=vmem, size = 0x400, scoped, tag = 'output window, operand 0, single buffered']
    #allocation3 [shape = 's32[1]{0}', space=sflag, size = 0x4, scoped, tag = 'scoped memory for tpu_custom_call.1']
    %66 = vsyncpa [#allocation3], 0
    // Predicated region
    $region2: #{tpu_custom_call.1} parent=1 // pred_check
      _
    $region3: #{tpu_custom_call.1} parent=1 // pred_check_branch
      %68 = sbr.rel (0) target = $region5
    $region4: #{tpu_custom_call.1} parent=1 // pred_region
      _
    $region5: #{tpu_custom_call.1} parent=1 // pred_fallthru
      _
    // Predicated region
    $region6: #{tpu_custom_call.1} parent=1 // pred_check
      _
    $region7: #{tpu_custom_call.1} parent=1 // pred_check_branch
      %70 = sbr.rel (0) target = $region9
    $region8: #{tpu_custom_call.1} parent=1 // pred_region
      _
    $region9: #{tpu_custom_call.1} parent=1 // pred_fallthru
      _
    // Predicated region
    $region10: #{tpu_custom_call.1} parent=1 // pred_check
      _
    $region11: #{tpu_custom_call.1} parent=1 // pred_check_branch
      %72 = sbr.rel (0) target = $region13
    $region12: #{tpu_custom_call.1} parent=1 // pred_region
      _
    $region13: #{tpu_custom_call.1} parent=1 // pred_fallthru
      _
    // Predicated region
    $region14: #{tpu_custom_call.1} parent=1 // pred_check
      _
    $region15: #{tpu_custom_call.1} parent=1 // pred_check_branch
      %74 = sbr.rel (0) target = $region17
    $region16: #{tpu_custom_call.1} parent=1 // pred_region
      _
    $region17: #{tpu_custom_call.1} parent=1 // pred_fallthru
      _
    // Predicated region
    $region18: #{tpu_custom_call.1} parent=1 // pred_check
      _
    $region19: #{tpu_custom_call.1} parent=1 // pred_check_branch
      %76 = sbr.rel (0) target = $region21
    $region20: #{tpu_custom_call.1} parent=1 // pred_region
      _
    $region21: #{tpu_custom_call.1} parent=1 // pred_fallthru
      _
    // Predicated region
    $region22: #{tpu_custom_call.1} parent=1 // pred_check
      _
    $region23: #{tpu_custom_call.1} parent=1 // pred_check_branch
      %78 = sbr.rel (0) target = $region25
    $region24: #{tpu_custom_call.1} parent=1 // pred_region
      _
    $region25: #{tpu_custom_call.1} parent=1 // pred_fallthru
      _
    // Predicated region
    $region26: #{tpu_custom_call.1} parent=1 // pred_check
      _
    $region27: #{tpu_custom_call.1} parent=1 // pred_check_branch
      %80 = sbr.rel (0) target = $region29
    $region28: #{tpu_custom_call.1} parent=1 // pred_region
      _
    $region29: #{tpu_custom_call.1} parent=1 // pred_fallthru
      _
    // Predicated region
    $region30: #{tpu_custom_call.1} parent=1 // pred_check
      _
    $region31: #{tpu_custom_call.1} parent=1 // pred_check_branch
      %82 = sbr.rel (0) target = $region33
    $region32: #{tpu_custom_call.1} parent=1 // pred_region
      _
    $region33: #{tpu_custom_call.1} parent=1 // pred_fallthru
      _
    // Predicated region
    $region34: #{tpu_custom_call.1} parent=1 // pred_check
      _
    $region35: #{tpu_custom_call.1} parent=1 // pred_check_branch
      %84 = sbr.rel (0) target = $region37
    $region36: #{tpu_custom_call.1} parent=1 // pred_region
      _
    $region37: #{tpu_custom_call.1} parent=1 // pred_fallthru
      _
    // Predicated region
    $region38: #{tpu_custom_call.1} parent=1 // pred_check
      _
    $region39: #{tpu_custom_call.1} parent=1 // pred_check_branch
      %86 = sbr.rel (0) target = $region41
    $region40: #{tpu_custom_call.1} parent=1 // pred_region
      _
    $region41: #{tpu_custom_call.1} parent=1 // pred_fallthru
      _
    // Predicated region
    $region42: #{tpu_custom_call.1} parent=1 // pred_check
      _
    $region43: #{tpu_custom_call.1} parent=1 // pred_check_branch
      %88 = sbr.rel (0) target = $region45
    $region44: #{tpu_custom_call.1} parent=1 // pred_region
      _
    $region45: #{tpu_custom_call.1} parent=1 // pred_fallthru
      _
    // Predicated region
    $region46: #{tpu_custom_call.1} parent=1 // pred_check
      _
    $region47: #{tpu_custom_call.1} parent=1 // pred_check_branch
      %90 = sbr.rel (0) target = $region49
    $region48: #{tpu_custom_call.1} parent=1 // pred_region
      _
    $region49: #{tpu_custom_call.1} parent=1 // pred_fallthru
      _
    // Predicated region
    $region50: #{tpu_custom_call.1} parent=1 // pred_check
      _
    $region51: #{tpu_custom_call.1} parent=1 // pred_check_branch
      %92 = sbr.rel (0) target = $region53
    $region52: #{tpu_custom_call.1} parent=1 // pred_region
      _
    $region53: #{tpu_custom_call.1} parent=1 // pred_fallthru
      _
    // Predicated region
    $region54: #{tpu_custom_call.1} parent=1 // pred_check
      _
    $region55: #{tpu_custom_call.1} parent=1 // pred_check_branch
      %94 = sbr.rel (0) target = $region57
    $region56: #{tpu_custom_call.1} parent=1 // pred_region
      _
    $region57: #{tpu_custom_call.1} parent=1 // pred_fallthru
      _
    // Predicated region
    $region58: #{tpu_custom_call.1} parent=1 // pred_check
      _
    $region59: #{tpu_custom_call.1} parent=1 // pred_check_branch
      %96 = sbr.rel (0) target = $region61
    $region60: #{tpu_custom_call.1} parent=1 // pred_region
      _
    $region61: #{tpu_custom_call.1} parent=1 // pred_fallthru
      _
    // Predicated region
    $region62: #{tpu_custom_call.1} parent=1 // pred_check
      _
    $region63: #{tpu_custom_call.1} parent=1 // pred_check_branch
      %98 = sbr.rel (0) target = $region65
    $region64: #{tpu_custom_call.1} parent=1 // pred_region
      _
    $region65: #{tpu_custom_call.1} parent=1 // pred_fallthru
      _
    // Predicated region
    $region66: #{tpu_custom_call.1} parent=1 // pred_check
      _
    $region67: #{tpu_custom_call.1} parent=1 // pred_check_branch
      %100 = sbr.rel (0) target = $region69
    $region68: #{tpu_custom_call.1} parent=1 // pred_region
      _
    $region69: #{tpu_custom_call.1} parent=1 // pred_fallthru
      _
    // Predicated region
    $region70: #{tpu_custom_call.1} parent=1 // pred_check
      _
    $region71: #{tpu_custom_call.1} parent=1 // pred_check_branch
      %102 = sbr.rel (0) target = $region73
    $region72: #{tpu_custom_call.1} parent=1 // pred_region
      _
    $region73: #{tpu_custom_call.1} parent=1 // pred_fallthru
      _
    // Predicated region
    $region74: #{tpu_custom_call.1} parent=1 // pred_check
      _
    $region75: #{tpu_custom_call.1} parent=1 // pred_check_branch
      %104 = sbr.rel (0) target = $region77
    $region76: #{tpu_custom_call.1} parent=1 // pred_region
      _
    $region77: #{tpu_custom_call.1} parent=1 // pred_fallthru
      _
    // Predicated region
    $region78: #{tpu_custom_call.1} parent=1 // pred_check
      _
    $region79: #{tpu_custom_call.1} parent=1 // pred_check_branch
      %106 = sbr.rel (0) target = $region81
    $region80: #{tpu_custom_call.1} parent=1 // pred_region
      _
    $region81: #{tpu_custom_call.1} parent=1 // pred_fallthru
      _
    // Predicated region
    $region82: #{tpu_custom_call.1} parent=1 // pred_check
      _
    $region83: #{tpu_custom_call.1} parent=1 // pred_check_branch
      %108 = sbr.rel (0) target = $region85
    $region84: #{tpu_custom_call.1} parent=1 // pred_region
      _
    $region85: #{tpu_custom_call.1} parent=1 // pred_fallthru
      _
    // Predicated region
    $region86: #{tpu_custom_call.1} parent=1 // pred_check
      _
    $region87: #{tpu_custom_call.1} parent=1 // pred_check_branch
      %110 = sbr.rel (0) target = $region89
    $region88: #{tpu_custom_call.1} parent=1 // pred_region
      _
    $region89: #{tpu_custom_call.1} parent=1 // pred_fallthru
      _
    // Predicated region
    $region90: #{tpu_custom_call.1} parent=1 // pred_check
      _
    $region91: #{tpu_custom_call.1} parent=1 // pred_check_branch
      %112 = sbr.rel (0) target = $region93
    $region92: #{tpu_custom_call.1} parent=1 // pred_region
      _
    $region93: #{tpu_custom_call.1} parent=1 // pred_fallthru
      _
    // Predicated region
    $region94: #{tpu_custom_call.1} parent=1 // pred_check
      _
    $region95: #{tpu_custom_call.1} parent=1 // pred_check_branch
      %114 = sbr.rel (0) target = $region97
    $region96: #{tpu_custom_call.1} parent=1 // pred_region
      _
    $region97: #{tpu_custom_call.1} parent=1 // pred_fallthru
      _
    // Predicated region
    $region98: #{tpu_custom_call.1} parent=1 // pred_check
      _
    $region99: #{tpu_custom_call.1} parent=1 // pred_check_branch
      %116 = sbr.rel (0) target = $region101
    $region100: #{tpu_custom_call.1} parent=1 // pred_region
      _
    $region101: #{tpu_custom_call.1} parent=1 // pred_fallthru
      _
    // Predicated region
    $region102: #{tpu_custom_call.1} parent=1 // pred_check
      _
    $region103: #{tpu_custom_call.1} parent=1 // pred_check_branch
      %118 = sbr.rel (0) target = $region105
    $region104: #{tpu_custom_call.1} parent=1 // pred_region
      _
    $region105: #{tpu_custom_call.1} parent=1 // pred_fallthru
      _
    // Predicated region
    $region106: #{tpu_custom_call.1} parent=1 // pred_check
      _
    $region107: #{tpu_custom_call.1} parent=1 // pred_check_branch
      %120 = sbr.rel (0) target = $region109
    $region108: #{tpu_custom_call.1} parent=1 // pred_region
      _
    $region109: #{tpu_custom_call.1} parent=1 // pred_fallthru
      _
    // Predicated region
    $region110: #{tpu_custom_call.1} parent=1 // pred_check
      _
    $region111: #{tpu_custom_call.1} parent=1 // pred_check_branch
      %122 = sbr.rel (0) target = $region113
    $region112: #{tpu_custom_call.1} parent=1 // pred_region
      _
    $region113: #{tpu_custom_call.1} parent=1 // pred_fallthru
      _
    // Predicated region
    $region114: #{tpu_custom_call.1} parent=1 // pred_check
      _
    $region115: #{tpu_custom_call.1} parent=1 // pred_check_branch
      %124 = sbr.rel (0) target = $region117
    $region116: #{tpu_custom_call.1} parent=1 // pred_region
      _
    $region117: #{tpu_custom_call.1} parent=1 // pred_fallthru
      _
    // Predicated region
    $region118: #{tpu_custom_call.1} parent=1 // pred_check
      _
    $region119: #{tpu_custom_call.1} parent=1 // pred_check_branch
      %126 = sbr.rel (0) target = $region121
    $region120: #{tpu_custom_call.1} parent=1 // pred_region
      _
    $region121: #{tpu_custom_call.1} parent=1 // pred_fallthru
      _
    %v128 = vld [vmem:[%s1] sm:$0xff]
    %v129 = vld [vmem:[%s1 + $0x8] sm:$0xff]
    %v130 = vld [vmem:[%s1 + $0x10] sm:$0xff]
    %v131 = vld [vmem:[%s1 + $0x18] sm:$0xff]
    %v132 = vld [vmem:[%s1 + $0x20] sm:$0xff]
    %v133 = vld [vmem:[%s1 + $0x28] sm:$0xff]
    %v134 = vld [vmem:[%s1 + $0x30] sm:$0xff]
    %v135 = vld [vmem:[%s1 + $0x38] sm:$0xff]
    %v136 = vld [vmem:[%s1 + $0x40] sm:$0xff]
    %v137 = vld [vmem:[%s1 + $0x48] sm:$0xff]
    %v138 = vld [vmem:[%s1 + $0x50] sm:$0xff]
    %v139 = vld [vmem:[%s1 + $0x58] sm:$0xff]
    %v140 = vld [vmem:[%s1 + $0x60] sm:$0xff]
    %v141 = vld [vmem:[%s1 + $0x68] sm:$0xff]
    %v142 = vld [vmem:[%s1 + $0x70] sm:$0xff]
    %v143 = vld [vmem:[%s1 + $0x78] sm:$0xff]
    %v144 = vpack.c.bf16 %v129, %v128
    %v145 = vpack.c.bf16 %v131, %v130
    %v146 = vpack.c.bf16 %v133, %v132
    %v147 = vpack.c.bf16 %v135, %v134
    %v148 = vpack.c.bf16 %v137, %v136
    %v149 = vpack.c.bf16 %v139, %v138
    %v150 = vpack.c.bf16 %v141, %v140
    %v151 = vpack.c.bf16 %v143, %v142
    %v152 = vld [vmem:[%s5] sm:$0x3]
    %v153 = vld [vmem:[%s7] sm:$0x1]
    %v155 = vlaneseq
    %v156 = vshrl.u32 %v155, 7
    %v157 = vsub.s32 0, %v156
    %v158 = vrot.slane %v153, %v157
    %vm160 = vcmask 23552
    %v162 = vsel %vm160, %v144, 0
    %v165 = vsel %vm160, %v145, 0
    %v168 = vsel %vm160, %v146, 0
    %v171 = vsel %vm160, %v147, 0
    %v174 = vsel %vm160, %v148, 0
    %v177 = vsel %vm160, %v149, 0
    %v180 = vsel %vm160, %v150, 0
    %v183 = vsel %vm160, %v151, 0
    %vm185 = vcmask 1040384
    %vm186 = vcmask 1041408
    %v187 = vsel %vm185, 4294967295, 65535
    %v188 = vsel %vm186, %v187, 0
    %v190 = vand.u32 %v152, %v188
    %192 = vmatprep.subr.bf16.mxu0 0
    %193 = vmatpush1.bf16.msra.mxu0 %v190
    %194 = vmatprep.subr.bf16.mxu0 0
    %195 = vmatpush1.bf16.msra.mxu0 0
    %196 = vmatprep.subr.bf16.mxu0 0
    %197 = vmatpush1.bf16.msra.mxu0 0
    %198 = vmatprep.subr.bf16.mxu0 0
    %199 = vmatpush1.bf16.msra.mxu0 0
    %200 = vmatprep.subr.bf16.mxu0 0
    %201 = vmatpush1.bf16.msra.mxu0 0
    %202 = vmatprep.subr.bf16.mxu0 0
    %203 = vmatpush1.bf16.msra.mxu0 0
    %204 = vmatprep.subr.bf16.mxu0 0
    %205 = vmatpush1.bf16.msra.mxu0 0
    %206 = vmatprep.subr.bf16.mxu0 0
    %207 = vmatpush1.bf16.msra.mxu0 0
    %208 = vmatprep.subr.bf16.mxu0 0
    %209 = vmatpush1.bf16.msra.mxu0 0
    %210 = vmatprep.subr.bf16.mxu0 0
    %211 = vmatpush1.bf16.msra.mxu0 0
    %212 = vmatprep.subr.bf16.mxu0 0
    %213 = vmatpush1.bf16.msra.mxu0 0
    %214 = vmatprep.subr.bf16.mxu0 0
    %215 = vmatpush1.bf16.msra.mxu0 0
    %216 = vmatprep.subr.bf16.mxu0 0
    %217 = vmatpush1.bf16.msra.mxu0 0
    %218 = vmatprep.subr.bf16.mxu0 0
    %219 = vmatpush1.bf16.msra.mxu0 0
    %220 = vmatprep.subr.bf16.mxu0 0
    %221 = vmatpush1.bf16.msra.mxu0 0
    %222 = vmatprep.subr.bf16.mxu0 0
    %223 = vmatpush1.bf16.msra.mxu0 0
    %224 = vmatprep.mubr.bf16.mxu0 0
    %225 = vmatmul.mubr.bf16.gmra.mrb[0].mxu0 %v162
    %v226 = vpop.f32.mrb[0].mxu0
    %v227 = vadd.f32 %v158, %v226
    %v228 = vpop.f32.mrb[0].mxu0
    %v229 = vpop.f32.mrb[0].mxu0
    %v230 = vadd.f32 %v158, %v229
    %v231 = vpop.f32.mrb[0].mxu0
    %232 = vmatprep.mubr.bf16.mxu0 0
    %233 = vmatmul.mubr.bf16.gmra.mrb[0].mxu0 %v165
    %v234 = vpop.f32.mrb[0].mxu0
    %v235 = vadd.f32 %v158, %v234
    %v236 = vpop.f32.mrb[0].mxu0
    %v237 = vpop.f32.mrb[0].mxu0
    %v238 = vadd.f32 %v158, %v237
    %v239 = vpop.f32.mrb[0].mxu0
    %240 = vmatprep.mubr.bf16.mxu0 0
    %241 = vmatmul.mubr.bf16.gmra.mrb[0].mxu0 %v168
    %v242 = vpop.f32.mrb[0].mxu0
    %v243 = vadd.f32 %v158, %v242
    %v244 = vpop.f32.mrb[0].mxu0
    %v245 = vpop.f32.mrb[0].mxu0
    %v246 = vadd.f32 %v158, %v245
    %v247 = vpop.f32.mrb[0].mxu0
    %248 = vmatprep.mubr.bf16.mxu0 0
    %249 = vmatmul.mubr.bf16.gmra.mrb[0].mxu0 %v171
    %v250 = vpop.f32.mrb[0].mxu0
    %v251 = vadd.f32 %v158, %v250
    %v252 = vpop.f32.mrb[0].mxu0
    %v253 = vpop.f32.mrb[0].mxu0
    %v254 = vadd.f32 %v158, %v253
    %v255 = vpop.f32.mrb[0].mxu0
    %256 = vmatprep.mubr.bf16.mxu0 0
    %257 = vmatmul.mubr.bf16.gmra.mrb[0].mxu0 %v174
    %v258 = vpop.f32.mrb[0].mxu0
    %v259 = vadd.f32 %v158, %v258
    %v260 = vpop.f32.mrb[0].mxu0
    %v261 = vpop.f32.mrb[0].mxu0
    %v262 = vadd.f32 %v158, %v261
    %v263 = vpop.f32.mrb[0].mxu0
    %264 = vmatprep.mubr.bf16.mxu0 0
    %265 = vmatmul.mubr.bf16.gmra.mrb[0].mxu0 %v177
    %v266 = vpop.f32.mrb[0].mxu0
    %v267 = vadd.f32 %v158, %v266
    %v268 = vpop.f32.mrb[0].mxu0
    %v269 = vpop.f32.mrb[0].mxu0
    %v270 = vadd.f32 %v158, %v269
    %v271 = vpop.f32.mrb[0].mxu0
    %272 = vmatprep.mubr.bf16.mxu0 0
    %273 = vmatmul.mubr.bf16.gmra.mrb[0].mxu0 %v180
    %v274 = vpop.f32.mrb[0].mxu0
    %v275 = vadd.f32 %v158, %v274
    %v276 = vpop.f32.mrb[0].mxu0
    %v277 = vpop.f32.mrb[0].mxu0
    %v278 = vadd.f32 %v158, %v277
    %v279 = vpop.f32.mrb[0].mxu0
    %280 = vmatprep.mubr.bf16.mxu0 0
    %281 = vmatmul.mubr.bf16.gmra.mrb[0].mxu0 %v183
    %v282 = vpop.f32.mrb[0].mxu0
    %v283 = vadd.f32 %v158, %v282
    %v284 = vpop.f32.mrb[0].mxu0
    %v285 = vpop.f32.mrb[0].mxu0
    %v286 = vadd.f32 %v158, %v285
    %v287 = vpop.f32.mrb[0].mxu0
    %288 = vdwg.mxu0
    %v289 = vld [vmem:[%s9] sm:$0x1]
    %v291 = vlaneseq
    %v292 = vshrl.u32 %v291, 7
    %v293 = vsub.s32 0, %v292
    %v294 = vrot.slane %v289, %v293
    %v296 = vmul.f32 %v227, %v294
    %v297 = vmul.f32 %v230, %v294
    %v298 = vmul.f32 %v235, %v294
    %v299 = vmul.f32 %v238, %v294
    %v300 = vmul.f32 %v243, %v294
    %v301 = vmul.f32 %v246, %v294
    %v302 = vmul.f32 %v251, %v294
    %v303 = vmul.f32 %v254, %v294
    %v304 = vmul.f32 %v259, %v294
    %v305 = vmul.f32 %v262, %v294
    %v306 = vmul.f32 %v267, %v294
    %v307 = vmul.f32 %v270, %v294
    %v308 = vmul.f32 %v275, %v294
    %v309 = vmul.f32 %v278, %v294
    %v310 = vmul.f32 %v283, %v294
    %v311 = vmul.f32 %v286, %v294
    %v312 = vld [vmem:[%s11] sm:$0x1]
    %v314 = vlaneseq
    %v315 = vshrl.u32 %v314, 7
    %v316 = vsub.s32 0, %v315
    %v317 = vrot.slane %v312, %v316
    %v319 = vadd.f32 %v296, %v317
    %v320 = vadd.f32 %v297, %v317
    %v321 = vadd.f32 %v298, %v317
    %v322 = vadd.f32 %v299, %v317
    %v323 = vadd.f32 %v300, %v317
    %v324 = vadd.f32 %v301, %v317
    %v325 = vadd.f32 %v302, %v317
    %v326 = vadd.f32 %v303, %v317
    %v327 = vadd.f32 %v304, %v317
    %v328 = vadd.f32 %v305, %v317
    %v329 = vadd.f32 %v306, %v317
    %v330 = vadd.f32 %v307, %v317
    %v331 = vadd.f32 %v308, %v317
    %v332 = vadd.f32 %v309, %v317
    %v333 = vadd.f32 %v310, %v317
    %v334 = vadd.f32 %v311, %v317
    %v335 = vxor.u32 %v319, 2147483648
    %v336 = vxor.u32 %v320, 2147483648
    %v337 = vxor.u32 %v321, 2147483648
    %v338 = vxor.u32 %v322, 2147483648
    %v339 = vxor.u32 %v323, 2147483648
    %v340 = vxor.u32 %v324, 2147483648
    %v341 = vxor.u32 %v325, 2147483648
    %v342 = vxor.u32 %v326, 2147483648
    %v343 = vxor.u32 %v327, 2147483648
    %v344 = vxor.u32 %v328, 2147483648
    %v345 = vxor.u32 %v329, 2147483648
    %v346 = vxor.u32 %v330, 2147483648
    %v347 = vxor.u32 %v331, 2147483648
    %v348 = vxor.u32 %v332, 2147483648
    %v349 = vxor.u32 %v333, 2147483648
    %v350 = vxor.u32 %v334, 2147483648
    %v351 = vmul.f32 %v335, 1.442695
    %v352 = vpow.pop %v351
    %v353 = vmul.f32 %v336, 1.442695
    %v354 = vpow.pop %v353
    %v355 = vmul.f32 %v337, 1.442695
    %v356 = vpow.pop %v355
    %v357 = vmul.f32 %v338, 1.442695
    %v358 = vpow.pop %v357
    %v359 = vmul.f32 %v339, 1.442695
    %v360 = vpow.pop %v359
    %v361 = vmul.f32 %v340, 1.442695
    %v362 = vpow.pop %v361
    %v363 = vmul.f32 %v341, 1.442695
    %v364 = vpow.pop %v363
    %v365 = vmul.f32 %v342, 1.442695
    %v366 = vpow.pop %v365
    %v367 = vmul.f32 %v343, 1.442695
    %v368 = vpow.pop %v367
    %v369 = vmul.f32 %v344, 1.442695
    %v370 = vpow.pop %v369
    %v371 = vmul.f32 %v345, 1.442695
    %v372 = vpow.pop %v371
    %v373 = vmul.f32 %v346, 1.442695
    %v374 = vpow.pop %v373
    %v375 = vmul.f32 %v347, 1.442695
    %v376 = vpow.pop %v375
    %v377 = vmul.f32 %v348, 1.442695
    %v378 = vpow.pop %v377
    %v379 = vmul.f32 %v349, 1.442695
    %v380 = vpow.pop %v379
    %v381 = vmul.f32 %v350, 1.442695
    %v382 = vpow.pop %v381
    %v383 = vadd.f32 %v352, 1.0
    %v384 = vadd.f32 %v354, 1.0
    %v385 = vadd.f32 %v356, 1.0
    %v386 = vadd.f32 %v358, 1.0
    %v387 = vadd.f32 %v360, 1.0
    %v388 = vadd.f32 %v362, 1.0
    %v389 = vadd.f32 %v364, 1.0
    %v390 = vadd.f32 %v366, 1.0
    %v391 = vadd.f32 %v368, 1.0
    %v392 = vadd.f32 %v370, 1.0
    %v393 = vadd.f32 %v372, 1.0
    %v394 = vadd.f32 %v374, 1.0
    %v395 = vadd.f32 %v376, 1.0
    %v396 = vadd.f32 %v378, 1.0
    %v397 = vadd.f32 %v380, 1.0
    %v398 = vadd.f32 %v382, 1.0
    %v399 = vrcp.pop %v383
    %v400 = vmul.f32 1.0, %v399
    %v401 = vrcp.pop %v384
    %v402 = vmul.f32 1.0, %v401
    %v403 = vrcp.pop %v385
    %v404 = vmul.f32 1.0, %v403
    %v405 = vrcp.pop %v386
    %v406 = vmul.f32 1.0, %v405
    %v407 = vrcp.pop %v387
    %v408 = vmul.f32 1.0, %v407
    %v409 = vrcp.pop %v388
    %v410 = vmul.f32 1.0, %v409
    %v411 = vrcp.pop %v389
    %v412 = vmul.f32 1.0, %v411
    %v413 = vrcp.pop %v390
    %v414 = vmul.f32 1.0, %v413
    %v415 = vrcp.pop %v391
    %v416 = vmul.f32 1.0, %v415
    %v417 = vrcp.pop %v392
    %v418 = vmul.f32 1.0, %v417
    %v419 = vrcp.pop %v393
    %v420 = vmul.f32 1.0, %v419
    %v421 = vrcp.pop %v394
    %v422 = vmul.f32 1.0, %v421
    %v423 = vrcp.pop %v395
    %v424 = vmul.f32 1.0, %v423
    %v425 = vrcp.pop %v396
    %v426 = vmul.f32 1.0, %v425
    %v427 = vrcp.pop %v397
    %v428 = vmul.f32 1.0, %v427
    %v429 = vrcp.pop %v398
    %v430 = vmul.f32 1.0, %v429
    %v431 = vmul.f32 %v319, %v400
    %v432 = vmul.f32 %v320, %v402
    %v433 = vmul.f32 %v321, %v404
    %v434 = vmul.f32 %v322, %v406
    %v435 = vmul.f32 %v323, %v408
    %v436 = vmul.f32 %v324, %v410
    %v437 = vmul.f32 %v325, %v412
    %v438 = vmul.f32 %v326, %v414
    %v439 = vmul.f32 %v327, %v416
    %v440 = vmul.f32 %v328, %v418
    %v441 = vmul.f32 %v329, %v420
    %v442 = vmul.f32 %v330, %v422
    %v443 = vmul.f32 %v331, %v424
    %v444 = vmul.f32 %v332, %v426
    %v445 = vmul.f32 %v333, %v428
    %v446 = vmul.f32 %v334, %v430
    %v447 = vld [vmem:[%s13] sm:$0xff]
    %v448 = vld [vmem:[%s13 + $0x8] sm:$0xff]
    %v449 = vld [vmem:[%s13 + $0x10] sm:$0xff]
    %v450 = vld [vmem:[%s13 + $0x18] sm:$0xff]
    %v451 = vld [vmem:[%s13 + $0x20] sm:$0xff]
    %v452 = vld [vmem:[%s13 + $0x28] sm:$0xff]
    %v453 = vld [vmem:[%s13 + $0x30] sm:$0xff]
    %v454 = vld [vmem:[%s13 + $0x38] sm:$0xff]
    %v455 = vld [vmem:[%s13 + $0x40] sm:$0xff]
    %v456 = vld [vmem:[%s13 + $0x48] sm:$0xff]
    %v457 = vld [vmem:[%s13 + $0x50] sm:$0xff]
    %v458 = vld [vmem:[%s13 + $0x58] sm:$0xff]
    %v459 = vld [vmem:[%s13 + $0x60] sm:$0xff]
    %v460 = vld [vmem:[%s13 + $0x68] sm:$0xff]
    %v461 = vld [vmem:[%s13 + $0x70] sm:$0xff]
    %v462 = vld [vmem:[%s13 + $0x78] sm:$0xff]
    %v463 = vld [vmem:[%s15] sm:$0xff]
    %v464 = vld [vmem:[%s15 + $0x8] sm:$0xff]
    %v465 = vld [vmem:[%s15 + $0x10] sm:$0xff]
    %v466 = vld [vmem:[%s15 + $0x18] sm:$0xff]
    %v467 = vld [vmem:[%s15 + $0x20] sm:$0xff]
    %v468 = vld [vmem:[%s15 + $0x28] sm:$0xff]
    %v469 = vld [vmem:[%s15 + $0x30] sm:$0xff]
    %v470 = vld [vmem:[%s15 + $0x38] sm:$0xff]
    %v471 = vld [vmem:[%s15 + $0x40] sm:$0xff]
    %v472 = vld [vmem:[%s15 + $0x48] sm:$0xff]
    %v473 = vld [vmem:[%s15 + $0x50] sm:$0xff]
    %v474 = vld [vmem:[%s15 + $0x58] sm:$0xff]
    %v475 = vld [vmem:[%s15 + $0x60] sm:$0xff]
    %v476 = vld [vmem:[%s15 + $0x68] sm:$0xff]
    %v477 = vld [vmem:[%s15 + $0x70] sm:$0xff]
    %v478 = vld [vmem:[%s15 + $0x78] sm:$0xff]
    %v479 = vld [vmem:[%s17] sm:$0xf]
    %v480 = vld [vmem:[%s17 + $0x4] sm:$0xf]
    %v481 = vld [vmem:[%s17 + $0x8] sm:$0xf]
    %v482 = vld [vmem:[%s17 + $0xc] sm:$0xf]
    %v483 = vld [vmem:[%s19] sm:$0xf]
    %v484 = vld [vmem:[%s19 + $0x4] sm:$0xf]
    %v485 = vld [vmem:[%s19 + $0x8] sm:$0xf]
    %v486 = vld [vmem:[%s19 + $0xc] sm:$0xf]
    %v487 = vld [vmem:[%s19 + $0x10] sm:$0xf]
    %v488 = vld [vmem:[%s19 + $0x14] sm:$0xf]
    %v489 = vld [vmem:[%s19 + $0x18] sm:$0xf]
    %v490 = vld [vmem:[%s19 + $0x1c] sm:$0xf]
    %v491 = vld [vmem:[%s19 + $0x20] sm:$0xf]
    %v492 = vld [vmem:[%s19 + $0x24] sm:$0xf]
    %v493 = vld [vmem:[%s19 + $0x28] sm:$0xf]
    %v494 = vld [vmem:[%s19 + $0x2c] sm:$0xf]
    %v495 = vld [vmem:[%s19 + $0x30] sm:$0xf]
    %v496 = vld [vmem:[%s19 + $0x34] sm:$0xf]
    %v497 = vld [vmem:[%s19 + $0x38] sm:$0xf]
    %v498 = vld [vmem:[%s19 + $0x3c] sm:$0xf]
    %v499 = vld [vmem:[%s19 + $0x40] sm:$0xf]
    %v500 = vld [vmem:[%s19 + $0x44] sm:$0xf]
    %v501 = vld [vmem:[%s19 + $0x48] sm:$0xf]
    %v502 = vld [vmem:[%s19 + $0x4c] sm:$0xf]
    %v503 = vld [vmem:[%s19 + $0x50] sm:$0xf]
    %v504 = vld [vmem:[%s19 + $0x54] sm:$0xf]
    %v505 = vld [vmem:[%s19 + $0x58] sm:$0xf]
    %v506 = vld [vmem:[%s19 + $0x5c] sm:$0xf]
    %v507 = vld [vmem:[%s19 + $0x60] sm:$0xf]
    %v508 = vld [vmem:[%s19 + $0x64] sm:$0xf]
    %v509 = vld [vmem:[%s19 + $0x68] sm:$0xf]
    %v510 = vld [vmem:[%s19 + $0x6c] sm:$0xf]
    %v511 = vld [vmem:[%s19 + $0x70] sm:$0xf]
    %v512 = vld [vmem:[%s19 + $0x74] sm:$0xf]
    %v513 = vld [vmem:[%s19 + $0x78] sm:$0xf]
    %v514 = vld [vmem:[%s19 + $0x7c] sm:$0xf]
    %v515 = vld [vmem:[%s21] sm:$0x1]
    %v516 = vld [vmem:[%s23] sm:$0x1]
    %vm517 = vcmask 261120
    %v518 = vsel %vm517, %v431, 0.0
    %519 = vadd.xlane.f32.xlu0 %v518
    %v520 = vpop.xlane.xlu0 %519
    %v521 = vsel %vm517, %v432, 0.0
    %522 = vadd.xlane.f32.xlu0 %v521
    %v523 = vpop.xlane.xlu0 %522
    %v524 = vsel %vm517, %v433, 0.0
    %525 = vadd.xlane.f32.xlu0 %v524
    %v526 = vpop.xlane.xlu0 %525
    %v527 = vsel %vm517, %v434, 0.0
    %528 = vadd.xlane.f32.xlu0 %v527
    %v529 = vpop.xlane.xlu0 %528
    %v530 = vsel %vm517, %v435, 0.0
    %531 = vadd.xlane.f32.xlu0 %v530
    %v532 = vpop.xlane.xlu0 %531
    %v533 = vsel %vm517, %v436, 0.0
    %534 = vadd.xlane.f32.xlu0 %v533
    %v535 = vpop.xlane.xlu0 %534
    %v536 = vsel %vm517, %v437, 0.0
    %537 = vadd.xlane.f32.xlu0 %v536
    %v538 = vpop.xlane.xlu0 %537
    %v539 = vsel %vm517, %v438, 0.0
    %540 = vadd.xlane.f32.xlu0 %v539
    %v541 = vpop.xlane.xlu0 %540
    %v542 = vsel %vm517, %v439, 0.0
    %543 = vadd.xlane.f32.xlu0 %v542
    %v544 = vpop.xlane.xlu0 %543
    %v545 = vsel %vm517, %v440, 0.0
    %546 = vadd.xlane.f32.xlu0 %v545
    %v547 = vpop.xlane.xlu0 %546
    %v548 = vsel %vm517, %v441, 0.0
    %549 = vadd.xlane.f32.xlu0 %v548
    %v550 = vpop.xlane.xlu0 %549
    %v551 = vsel %vm517, %v442, 0.0
    %552 = vadd.xlane.f32.xlu0 %v551
    %v553 = vpop.xlane.xlu0 %552
    %v554 = vsel %vm517, %v443, 0.0
    %555 = vadd.xlane.f32.xlu0 %v554
    %v556 = vpop.xlane.xlu0 %555
    %v557 = vsel %vm517, %v444, 0.0
    %558 = vadd.xlane.f32.xlu0 %v557
    %v559 = vpop.xlane.xlu0 %558
    %v560 = vsel %vm517, %v445, 0.0
    %561 = vadd.xlane.f32.xlu0 %v560
    %v562 = vpop.xlane.xlu0 %561
    %v563 = vsel %vm517, %v446, 0.0
    %564 = vadd.xlane.f32.xlu0 %v563
    %v565 = vpop.xlane.xlu0 %564
    %v566 = vrcp.pop 32.0
    %v567 = vmul.f32 %v520, %v566
    %v568 = vmul.f32 %v523, %v566
    %v569 = vmul.f32 %v526, %v566
    %v570 = vmul.f32 %v529, %v566
    %v571 = vmul.f32 %v532, %v566
    %v572 = vmul.f32 %v535, %v566
    %v573 = vmul.f32 %v538, %v566
    %v574 = vmul.f32 %v541, %v566
    %v575 = vmul.f32 %v544, %v566
    %v576 = vmul.f32 %v547, %v566
    %v577 = vmul.f32 %v550, %v566
    %v578 = vmul.f32 %v553, %v566
    %v579 = vmul.f32 %v556, %v566
    %v580 = vmul.f32 %v559, %v566
    %v581 = vmul.f32 %v562, %v566
    %v582 = vmul.f32 %v565, %v566
    %v583 = vsub.f32 %v431, %v567
    %v584 = vsub.f32 %v432, %v568
    %v585 = vsub.f32 %v433, %v569
    %v586 = vsub.f32 %v434, %v570
    %v587 = vsub.f32 %v435, %v571
    %v588 = vsub.f32 %v436, %v572
    %v589 = vsub.f32 %v437, %v573
    %v590 = vsub.f32 %v438, %v574
    %v591 = vsub.f32 %v439, %v575
    %v592 = vsub.f32 %v440, %v576
    %v593 = vsub.f32 %v441, %v577
    %v594 = vsub.f32 %v442, %v578
    %v595 = vsub.f32 %v443, %v579
    %v596 = vsub.f32 %v444, %v580
    %v597 = vsub.f32 %v445, %v581
    %v598 = vsub.f32 %v446, %v582
    %v599 = vmul.f32 %v583, %v583
    %v600 = vmul.f32 %v584, %v584
    %v601 = vmul.f32 %v585, %v585
    %v602 = vmul.f32 %v586, %v586
    %v603 = vmul.f32 %v587, %v587
    %v604 = vmul.f32 %v588, %v588
    %v605 = vmul.f32 %v589, %v589
    %v606 = vmul.f32 %v590, %v590
    %v607 = vmul.f32 %v591, %v591
    %v608 = vmul.f32 %v592, %v592
    %v609 = vmul.f32 %v593, %v593
    %v610 = vmul.f32 %v594, %v594
    %v611 = vmul.f32 %v595, %v595
    %v612 = vmul.f32 %v596, %v596
    %v613 = vmul.f32 %v597, %v597
    %v614 = vmul.f32 %v598, %v598
    %v615 = vsel %vm517, %v599, 0.0
    %616 = vadd.xlane.f32.xlu0 %v615
    %v617 = vpop.xlane.xlu0 %616
    %v618 = vsel %vm517, %v600, 0.0
    %619 = vadd.xlane.f32.xlu0 %v618
    %v620 = vpop.xlane.xlu0 %619
    %v621 = vsel %vm517, %v601, 0.0
    %622 = vadd.xlane.f32.xlu0 %v621
    %v623 = vpop.xlane.xlu0 %622
    %v624 = vsel %vm517, %v602, 0.0
    %625 = vadd.xlane.f32.xlu0 %v624
    %v626 = vpop.xlane.xlu0 %625
    %v627 = vsel %vm517, %v603, 0.0
    %628 = vadd.xlane.f32.xlu0 %v627
    %v629 = vpop.xlane.xlu0 %628
    %v630 = vsel %vm517, %v604, 0.0
    %631 = vadd.xlane.f32.xlu0 %v630
    %v632 = vpop.xlane.xlu0 %631
    %v633 = vsel %vm517, %v605, 0.0
    %634 = vadd.xlane.f32.xlu0 %v633
    %v635 = vpop.xlane.xlu0 %634
    %v636 = vsel %vm517, %v606, 0.0
    %637 = vadd.xlane.f32.xlu0 %v636
    %v638 = vpop.xlane.xlu0 %637
    %v639 = vsel %vm517, %v607, 0.0
    %640 = vadd.xlane.f32.xlu0 %v639
    %v641 = vpop.xlane.xlu0 %640
    %v642 = vsel %vm517, %v608, 0.0
    %643 = vadd.xlane.f32.xlu0 %v642
    %v644 = vpop.xlane.xlu0 %643
    %v645 = vsel %vm517, %v609, 0.0
    %646 = vadd.xlane.f32.xlu0 %v645
    %v647 = vpop.xlane.xlu0 %646
    %v648 = vsel %vm517, %v610, 0.0
    %649 = vadd.xlane.f32.xlu0 %v648
    %v650 = vpop.xlane.xlu0 %649
    %v651 = vsel %vm517, %v611, 0.0
    %652 = vadd.xlane.f32.xlu0 %v651
    %v653 = vpop.xlane.xlu0 %652
    %v654 = vsel %vm517, %v612, 0.0
    %655 = vadd.xlane.f32.xlu0 %v654
    %v656 = vpop.xlane.xlu0 %655
    %v657 = vsel %vm517, %v613, 0.0
    %658 = vadd.xlane.f32.xlu0 %v657
    %v659 = vpop.xlane.xlu0 %658
    %v660 = vsel %vm517, %v614, 0.0
    %661 = vadd.xlane.f32.xlu0 %v660
    %v662 = vpop.xlane.xlu0 %661
    %v663 = vmul.f32 %v617, %v566
    %v664 = vmul.f32 %v620, %v566
    %v665 = vmul.f32 %v623, %v566
    %v666 = vmul.f32 %v626, %v566
    %v667 = vmul.f32 %v629, %v566
    %v668 = vmul.f32 %v632, %v566
    %v669 = vmul.f32 %v635, %v566
    %v670 = vmul.f32 %v638, %v566
    %v671 = vmul.f32 %v641, %v566
    %v672 = vmul.f32 %v644, %v566
    %v673 = vmul.f32 %v647, %v566
    %v674 = vmul.f32 %v650, %v566
    %v675 = vmul.f32 %v653, %v566
    %v676 = vmul.f32 %v656, %v566
    %v677 = vmul.f32 %v659, %v566
    %v678 = vmul.f32 %v662, %v566
    %v679 = vadd.f32 %v663, 1e-05
    %v680 = vadd.f32 %v664, 1e-05
    %v681 = vadd.f32 %v665, 1e-05
    %v682 = vadd.f32 %v666, 1e-05
    %v683 = vadd.f32 %v667, 1e-05
    %v684 = vadd.f32 %v668, 1e-05
    %v685 = vadd.f32 %v669, 1e-05
    %v686 = vadd.f32 %v670, 1e-05
    %v687 = vadd.f32 %v671, 1e-05
    %v688 = vadd.f32 %v672, 1e-05
    %v689 = vadd.f32 %v673, 1e-05
    %v690 = vadd.f32 %v674, 1e-05
    %v691 = vadd.f32 %v675, 1e-05
    %v692 = vadd.f32 %v676, 1e-05
    %v693 = vadd.f32 %v677, 1e-05
    %v694 = vadd.f32 %v678, 1e-05
    %v695 = vrsqrt.pop %v679
    %v696 = vrsqrt.pop %v680
    %v697 = vrsqrt.pop %v681
    %v698 = vrsqrt.pop %v682
    %v699 = vrsqrt.pop %v683
    %v700 = vrsqrt.pop %v684
    %v701 = vrsqrt.pop %v685
    %v702 = vrsqrt.pop %v686
    %v703 = vrsqrt.pop %v687
    %v704 = vrsqrt.pop %v688
    %v705 = vrsqrt.pop %v689
    %v706 = vrsqrt.pop %v690
    %v707 = vrsqrt.pop %v691
    %v708 = vrsqrt.pop %v692
    %v709 = vrsqrt.pop %v693
    %v710 = vrsqrt.pop %v694
    %v711 = vmul.f32 %v583, %v695
    %v712 = vmul.f32 %v584, %v696
    %v713 = vmul.f32 %v585, %v697
    %v714 = vmul.f32 %v586, %v698
    %v715 = vmul.f32 %v587, %v699
    %v716 = vmul.f32 %v588, %v700
    %v717 = vmul.f32 %v589, %v701
    %v718 = vmul.f32 %v590, %v702
    %v719 = vmul.f32 %v591, %v703
    %v720 = vmul.f32 %v592, %v704
    %v721 = vmul.f32 %v593, %v705
    %v722 = vmul.f32 %v594, %v706
    %v723 = vmul.f32 %v595, %v707
    %v724 = vmul.f32 %v596, %v708
    %v725 = vmul.f32 %v597, %v709
    %v726 = vmul.f32 %v598, %v710
    %v728 = vlaneseq
    %v729 = vshrl.u32 %v728, 7
    %v730 = vsub.s32 0, %v729
    %v731 = vrot.slane %v515, %v730
    %v733 = vmul.f32 %v711, %v731
    %v734 = vmul.f32 %v712, %v731
    %v735 = vmul.f32 %v713, %v731
    %v736 = vmul.f32 %v714, %v731
    %v737 = vmul.f32 %v715, %v731
    %v738 = vmul.f32 %v716, %v731
    %v739 = vmul.f32 %v717, %v731
    %v740 = vmul.f32 %v718, %v731
    %v741 = vmul.f32 %v719, %v731
    %v742 = vmul.f32 %v720, %v731
    %v743 = vmul.f32 %v721, %v731
    %v744 = vmul.f32 %v722, %v731
    %v745 = vmul.f32 %v723, %v731
    %v746 = vmul.f32 %v724, %v731
    %v747 = vmul.f32 %v725, %v731
    %v748 = vmul.f32 %v726, %v731
    %v750 = vlaneseq
    %v751 = vshrl.u32 %v750, 7
    %v752 = vsub.s32 0, %v751
    %v753 = vrot.slane %v516, %v752
    %v755 = vadd.f32 %v733, %v753
    %v756 = vadd.f32 %v734, %v753
    %v757 = vadd.f32 %v735, %v753
    %v758 = vadd.f32 %v736, %v753
    %v759 = vadd.f32 %v737, %v753
    %v760 = vadd.f32 %v738, %v753
    %v761 = vadd.f32 %v739, %v753
    %v762 = vadd.f32 %v740, %v753
    %v763 = vadd.f32 %v741, %v753
    %v764 = vadd.f32 %v742, %v753
    %v765 = vadd.f32 %v743, %v753
    %v766 = vadd.f32 %v744, %v753
    %v767 = vadd.f32 %v745, %v753
    %v768 = vadd.f32 %v746, %v753
    %v769 = vadd.f32 %v747, %v753
    %v770 = vadd.f32 %v748, %v753
    %v771 = vpack.c.bf16 %v756, %v755
    %v772 = vpack.c.bf16 %v758, %v757
    %v773 = vpack.c.bf16 %v760, %v759
    %v774 = vpack.c.bf16 %v762, %v761
    %v775 = vpack.c.bf16 %v764, %v763
    %v776 = vpack.c.bf16 %v766, %v765
    %v777 = vpack.c.bf16 %v768, %v767
    %v778 = vpack.c.bf16 %v770, %v769
    %v779 = vld [vmem:[%s25] sm:$0xf]
    %v780 = vld [vmem:[%s25 + $0x4] sm:$0xf]
    %v781 = vld [vmem:[%s25 + $0x8] sm:$0xf]
    %v782 = vld [vmem:[%s25 + $0xc] sm:$0xf]
    %v783 = vld [vmem:[%s27] sm:$0x1]
    %v785 = vlaneseq
    %v786 = vshrl.u32 %v785, 7
    %v787 = vsub.s32 0, %v786
    %v788 = vrot.slane %v783, %v787
    %v794 = vunpack.c.l.b16 %v779
    %v795 = vunpack.c.l.b16 %v780
    %v796 = vunpack.c.l.b16 %v781
    %v797 = vunpack.c.l.b16 %v782
    %v798 = vpack.c.b16 %v795, %v794
    %v799 = vpack.c.b16 %v797, %v796
    %v803 = vsel %vm517, %v771, 0
    %v806 = vsel %vm517, %v772, 0
    %v809 = vsel %vm517, %v773, 0
    %v812 = vsel %vm517, %v774, 0
    %v815 = vsel %vm517, %v775, 0
    %v818 = vsel %vm517, %v776, 0
    %v821 = vsel %vm517, %v777, 0
    %v824 = vsel %vm517, %v778, 0
    %826 = vmatprep.subr.bf16.mxu0 0
    %827 = vmatpush1.bf16.msra.mxu0 %v798
    %828 = vmatprep.subr.bf16.mxu0 0
    %829 = vmatpush1.bf16.msra.mxu0 %v799
    %830 = vmatprep.subr.bf16.mxu0 0
    %831 = vmatpush1.bf16.msra.mxu0 0
    %832 = vmatprep.subr.bf16.mxu0 0
    %833 = vmatpush1.bf16.msra.mxu0 0
    %834 = vmatprep.subr.bf16.mxu0 0
    %835 = vmatpush1.bf16.msra.mxu0 0
    %836 = vmatprep.subr.bf16.mxu0 0
    %837 = vmatpush1.bf16.msra.mxu0 0
    %838 = vmatprep.subr.bf16.mxu0 0
    %839 = vmatpush1.bf16.msra.mxu0 0
    %840 = vmatprep.subr.bf16.mxu0 0
    %841 = vmatpush1.bf16.msra.mxu0 0
    %842 = vmatprep.subr.bf16.mxu0 0
    %843 = vmatpush1.bf16.msra.mxu0 0
    %844 = vmatprep.subr.bf16.mxu0 0
    %845 = vmatpush1.bf16.msra.mxu0 0
    %846 = vmatprep.subr.bf16.mxu0 0
    %847 = vmatpush1.bf16.msra.mxu0 0
    %848 = vmatprep.subr.bf16.mxu0 0
    %849 = vmatpush1.bf16.msra.mxu0 0
    %850 = vmatprep.subr.bf16.mxu0 0
    %851 = vmatpush1.bf16.msra.mxu0 0
    %852 = vmatprep.subr.bf16.mxu0 0
    %853 = vmatpush1.bf16.msra.mxu0 0
    %854 = vmatprep.subr.bf16.mxu0 0
    %855 = vmatpush1.bf16.msra.mxu0 0
    %856 = vmatprep.subr.bf16.mxu0 0
    %857 = vmatpush1.bf16.msra.mxu0 0
    %858 = vmatprep.mubr.bf16.mxu0 0
    %859 = vmatmul.mubr.bf16.gmra.mrb[0].mxu0 %v803
    %v860 = vpop.f32.mrb[0].mxu0
    %v861 = vadd.f32 %v788, %v860
    %v862 = vpop.f32.mrb[0].mxu0
    %v863 = vpop.f32.mrb[0].mxu0
    %v864 = vadd.f32 %v788, %v863
    %v865 = vpop.f32.mrb[0].mxu0
    %866 = vmatprep.mubr.bf16.mxu0 0
    %867 = vmatmul.mubr.bf16.gmra.mrb[0].mxu0 %v806
    %v868 = vpop.f32.mrb[0].mxu0
    %v869 = vadd.f32 %v788, %v868
    %v870 = vpop.f32.mrb[0].mxu0
    %v871 = vpop.f32.mrb[0].mxu0
    %v872 = vadd.f32 %v788, %v871
    %v873 = vpop.f32.mrb[0].mxu0
    %874 = vmatprep.mubr.bf16.mxu0 0
    %875 = vmatmul.mubr.bf16.gmra.mrb[0].mxu0 %v809
    %v876 = vpop.f32.mrb[0].mxu0
    %v877 = vadd.f32 %v788, %v876
    %v878 = vpop.f32.mrb[0].mxu0
    %v879 = vpop.f32.mrb[0].mxu0
    %v880 = vadd.f32 %v788, %v879
    %v881 = vpop.f32.mrb[0].mxu0
    %882 = vmatprep.mubr.bf16.mxu0 0
    %883 = vmatmul.mubr.bf16.gmra.mrb[0].mxu0 %v812
    %v884 = vpop.f32.mrb[0].mxu0
    %v885 = vadd.f32 %v788, %v884
    %v886 = vpop.f32.mrb[0].mxu0
    %v887 = vpop.f32.mrb[0].mxu0
    %v888 = vadd.f32 %v788, %v887
    %v889 = vpop.f32.mrb[0].mxu0
    %890 = vmatprep.mubr.bf16.mxu0 0
    %891 = vmatmul.mubr.bf16.gmra.mrb[0].mxu0 %v815
    %v892 = vpop.f32.mrb[0].mxu0
    %v893 = vadd.f32 %v788, %v892
    %v894 = vpop.f32.mrb[0].mxu0
    %v895 = vpop.f32.mrb[0].mxu0
    %v896 = vadd.f32 %v788, %v895
    %v897 = vpop.f32.mrb[0].mxu0
    %898 = vmatprep.mubr.bf16.mxu0 0
    %899 = vmatmul.mubr.bf16.gmra.mrb[0].mxu0 %v818
    %v900 = vpop.f32.mrb[0].mxu0
    %v901 = vadd.f32 %v788, %v900
    %v902 = vpop.f32.mrb[0].mxu0
    %v903 = vpop.f32.mrb[0].mxu0
    %v904 = vadd.f32 %v788, %v903
    %v905 = vpop.f32.mrb[0].mxu0
    %906 = vmatprep.mubr.bf16.mxu0 0
    %907 = vmatmul.mubr.bf16.gmra.mrb[0].mxu0 %v821
    %v908 = vpop.f32.mrb[0].mxu0
    %v909 = vadd.f32 %v788, %v908
    %v910 = vpop.f32.mrb[0].mxu0
    %v911 = vpop.f32.mrb[0].mxu0
    %v912 = vadd.f32 %v788, %v911
    %v913 = vpop.f32.mrb[0].mxu0
    %914 = vmatprep.mubr.bf16.mxu0 0
    %915 = vmatmul.mubr.bf16.gmra.mrb[0].mxu0 %v824
    %v916 = vpop.f32.mrb[0].mxu0
    %v917 = vadd.f32 %v788, %v916
    %v918 = vpop.f32.mrb[0].mxu0
    %v919 = vpop.f32.mrb[0].mxu0
    %v920 = vadd.f32 %v788, %v919
    %v921 = vpop.f32.mrb[0].mxu0
    %922 = vdwg.mxu0
    %v923 = vld [vmem:[%s29] sm:$0xf]
    %v924 = vld [vmem:[%s29 + $0x4] sm:$0xf]
    %v925 = vld [vmem:[%s29 + $0x8] sm:$0xf]
    %v926 = vld [vmem:[%s29 + $0xc] sm:$0xf]
    %v927 = vld [vmem:[%s31] sm:$0x1]
    %v929 = vlaneseq
    %v930 = vshrl.u32 %v929, 7
    %v931 = vsub.s32 0, %v930
    %v932 = vrot.slane %v927, %v931
    %v938 = vunpack.c.l.b16 %v923
    %v939 = vunpack.c.l.b16 %v924
    %v940 = vunpack.c.l.b16 %v925
    %v941 = vunpack.c.l.b16 %v926
    %v942 = vpack.c.b16 %v939, %v938
    %v943 = vpack.c.b16 %v941, %v940
    %946 = vmatprep.subr.bf16.mxu0 0
    %947 = vmatpush1.bf16.msra.mxu0 %v942
    %948 = vmatprep.subr.bf16.mxu0 0
    %949 = vmatpush1.bf16.msra.mxu0 %v943
    %950 = vmatprep.subr.bf16.mxu0 0
    %951 = vmatpush1.bf16.msra.mxu0 0
    %952 = vmatprep.subr.bf16.mxu0 0
    %953 = vmatpush1.bf16.msra.mxu0 0
    %954 = vmatprep.subr.bf16.mxu0 0
    %955 = vmatpush1.bf16.msra.mxu0 0
    %956 = vmatprep.subr.bf16.mxu0 0
    %957 = vmatpush1.bf16.msra.mxu0 0
    %958 = vmatprep.subr.bf16.mxu0 0
    %959 = vmatpush1.bf16.msra.mxu0 0
    %960 = vmatprep.subr.bf16.mxu0 0
    %961 = vmatpush1.bf16.msra.mxu0 0
    %962 = vmatprep.subr.bf16.mxu0 0
    %963 = vmatpush1.bf16.msra.mxu0 0
    %964 = vmatprep.subr.bf16.mxu0 0
    %965 = vmatpush1.bf16.msra.mxu0 0
    %966 = vmatprep.subr.bf16.mxu0 0
    %967 = vmatpush1.bf16.msra.mxu0 0
    %968 = vmatprep.subr.bf16.mxu0 0
    %969 = vmatpush1.bf16.msra.mxu0 0
    %970 = vmatprep.subr.bf16.mxu0 0
    %971 = vmatpush1.bf16.msra.mxu0 0
    %972 = vmatprep.subr.bf16.mxu0 0
    %973 = vmatpush1.bf16.msra.mxu0 0
    %974 = vmatprep.subr.bf16.mxu0 0
    %975 = vmatpush1.bf16.msra.mxu0 0
    %976 = vmatprep.subr.bf16.mxu0 0
    %977 = vmatpush1.bf16.msra.mxu0 0
    %978 = vmatprep.mubr.bf16.mxu0 0
    %979 = vmatmul.mubr.bf16.gmra.mrb[0].mxu0 %v803
    %v980 = vpop.f32.mrb[0].mxu0
    %v981 = vadd.f32 %v932, %v980
    %v982 = vpop.f32.mrb[0].mxu0
    %v983 = vpop.f32.mrb[0].mxu0
    %v984 = vadd.f32 %v932, %v983
    %v985 = vpop.f32.mrb[0].mxu0
    %986 = vmatprep.mubr.bf16.mxu0 0
    %987 = vmatmul.mubr.bf16.gmra.mrb[0].mxu0 %v806
    %v988 = vpop.f32.mrb[0].mxu0
    %v989 = vadd.f32 %v932, %v988
    %v990 = vpop.f32.mrb[0].mxu0
    %v991 = vpop.f32.mrb[0].mxu0
    %v992 = vadd.f32 %v932, %v991
    %v993 = vpop.f32.mrb[0].mxu0
    %994 = vmatprep.mubr.bf16.mxu0 0
    %995 = vmatmul.mubr.bf16.gmra.mrb[0].mxu0 %v809
    %v996 = vpop.f32.mrb[0].mxu0
    %v997 = vadd.f32 %v932, %v996
    %v998 = vpop.f32.mrb[0].mxu0
    %v999 = vpop.f32.mrb[0].mxu0
    %v1000 = vadd.f32 %v932, %v999
    %v1001 = vpop.f32.mrb[0].mxu0
    %1002 = vmatprep.mubr.bf16.mxu0 0
    %1003 = vmatmul.mubr.bf16.gmra.mrb[0].mxu0 %v812
    %v1004 = vpop.f32.mrb[0].mxu0
    %v1005 = vadd.f32 %v932, %v1004
    %v1006 = vpop.f32.mrb[0].mxu0
    %v1007 = vpop.f32.mrb[0].mxu0
    %v1008 = vadd.f32 %v932, %v1007
    %v1009 = vpop.f32.mrb[0].mxu0
    %1010 = vmatprep.mubr.bf16.mxu0 0
    %1011 = vmatmul.mubr.bf16.gmra.mrb[0].mxu0 %v815
    %v1012 = vpop.f32.mrb[0].mxu0
    %v1013 = vadd.f32 %v932, %v1012
    %v1014 = vpop.f32.mrb[0].mxu0
    %v1015 = vpop.f32.mrb[0].mxu0
    %v1016 = vadd.f32 %v932, %v1015
    %v1017 = vpop.f32.mrb[0].mxu0
    %1018 = vmatprep.mubr.bf16.mxu0 0
    %1019 = vmatmul.mubr.bf16.gmra.mrb[0].mxu0 %v818
    %v1020 = vpop.f32.mrb[0].mxu0
    %v1021 = vadd.f32 %v932, %v1020
    %v1022 = vpop.f32.mrb[0].mxu0
    %v1023 = vpop.f32.mrb[0].mxu0
    %v1024 = vadd.f32 %v932, %v1023
    %v1025 = vpop.f32.mrb[0].mxu0
    %1026 = vmatprep.mubr.bf16.mxu0 0
    %1027 = vmatmul.mubr.bf16.gmra.mrb[0].mxu0 %v821
    %v1028 = vpop.f32.mrb[0].mxu0
    %v1029 = vadd.f32 %v932, %v1028
    %v1030 = vpop.f32.mrb[0].mxu0
    %v1031 = vpop.f32.mrb[0].mxu0
    %v1032 = vadd.f32 %v932, %v1031
    %v1033 = vpop.f32.mrb[0].mxu0
    %1034 = vmatprep.mubr.bf16.mxu0 0
    %1035 = vmatmul.mubr.bf16.gmra.mrb[0].mxu0 %v824
    %v1036 = vpop.f32.mrb[0].mxu0
    %v1037 = vadd.f32 %v932, %v1036
    %v1038 = vpop.f32.mrb[0].mxu0
    %v1039 = vpop.f32.mrb[0].mxu0
    %v1040 = vadd.f32 %v932, %v1039
    %v1041 = vpop.f32.mrb[0].mxu0
    %1042 = vdwg.mxu0
    %v1043 = vld [vmem:[%s33] sm:$0xf]
    %v1044 = vld [vmem:[%s33 + $0x4] sm:$0xf]
    %v1045 = vld [vmem:[%s33 + $0x8] sm:$0xf]
    %v1046 = vld [vmem:[%s33 + $0xc] sm:$0xf]
    %v1047 = vld [vmem:[%s35] sm:$0x1]
    %v1049 = vlaneseq
    %v1050 = vshrl.u32 %v1049, 7
    %v1051 = vsub.s32 0, %v1050
    %v1052 = vrot.slane %v1047, %v1051
    %v1058 = vunpack.c.l.b16 %v1043
    %v1059 = vunpack.c.l.b16 %v1044
    %v1060 = vunpack.c.l.b16 %v1045
    %v1061 = vunpack.c.l.b16 %v1046
    %v1062 = vpack.c.b16 %v1059, %v1058
    %v1063 = vpack.c.b16 %v1061, %v1060
    %1066 = vmatprep.subr.bf16.mxu0 0
    %1067 = vmatpush1.bf16.msra.mxu0 %v1062
    %1068 = vmatprep.subr.bf16.mxu0 0
    %1069 = vmatpush1.bf16.msra.mxu0 %v1063
    %1070 = vmatprep.subr.bf16.mxu0 0
    %1071 = vmatpush1.bf16.msra.mxu0 0
    %1072 = vmatprep.subr.bf16.mxu0 0
    %1073 = vmatpush1.bf16.msra.mxu0 0
    %1074 = vmatprep.subr.bf16.mxu0 0
    %1075 = vmatpush1.bf16.msra.mxu0 0
    %1076 = vmatprep.subr.bf16.mxu0 0
    %1077 = vmatpush1.bf16.msra.mxu0 0
    %1078 = vmatprep.subr.bf16.mxu0 0
    %1079 = vmatpush1.bf16.msra.mxu0 0
    %1080 = vmatprep.subr.bf16.mxu0 0
    %1081 = vmatpush1.bf16.msra.mxu0 0
    %1082 = vmatprep.subr.bf16.mxu0 0
    %1083 = vmatpush1.bf16.msra.mxu0 0
    %1084 = vmatprep.subr.bf16.mxu0 0
    %1085 = vmatpush1.bf16.msra.mxu0 0
    %1086 = vmatprep.subr.bf16.mxu0 0
    %1087 = vmatpush1.bf16.msra.mxu0 0
    %1088 = vmatprep.subr.bf16.mxu0 0
    %1089 = vmatpush1.bf16.msra.mxu0 0
    %1090 = vmatprep.subr.bf16.mxu0 0
    %1091 = vmatpush1.bf16.msra.mxu0 0
    %1092 = vmatprep.subr.bf16.mxu0 0
    %1093 = vmatpush1.bf16.msra.mxu0 0
    %1094 = vmatprep.subr.bf16.mxu0 0
    %1095 = vmatpush1.bf16.msra.mxu0 0
    %1096 = vmatprep.subr.bf16.mxu0 0
    %1097 = vmatpush1.bf16.msra.mxu0 0
    %1098 = vmatprep.mubr.bf16.mxu0 0
    %1099 = vmatmul.mubr.bf16.gmra.mrb[0].mxu0 %v803
    %v1100 = vpop.f32.mrb[0].mxu0
    %v1101 = vadd.f32 %v1052, %v1100
    %v1102 = vpop.f32.mrb[0].mxu0
    %v1103 = vpop.f32.mrb[0].mxu0
    %v1104 = vadd.f32 %v1052, %v1103
    %v1105 = vpop.f32.mrb[0].mxu0
    %1106 = vmatprep.mubr.bf16.mxu0 0
    %1107 = vmatmul.mubr.bf16.gmra.mrb[0].mxu0 %v806
    %v1108 = vpop.f32.mrb[0].mxu0
    %v1109 = vadd.f32 %v1052, %v1108
    %v1110 = vpop.f32.mrb[0].mxu0
    %v1111 = vpop.f32.mrb[0].mxu0
    %v1112 = vadd.f32 %v1052, %v1111
    %v1113 = vpop.f32.mrb[0].mxu0
    %1114 = vmatprep.mubr.bf16.mxu0 0
    %1115 = vmatmul.mubr.bf16.gmra.mrb[0].mxu0 %v809
    %v1116 = vpop.f32.mrb[0].mxu0
    %v1117 = vadd.f32 %v1052, %v1116
    %v1118 = vpop.f32.mrb[0].mxu0
    %v1119 = vpop.f32.mrb[0].mxu0
    %v1120 = vadd.f32 %v1052, %v1119
    %v1121 = vpop.f32.mrb[0].mxu0
    %1122 = vmatprep.mubr.bf16.mxu0 0
    %1123 = vmatmul.mubr.bf16.gmra.mrb[0].mxu0 %v812
    %v1124 = vpop.f32.mrb[0].mxu0
    %v1125 = vadd.f32 %v1052, %v1124
    %v1126 = vpop.f32.mrb[0].mxu0
    %v1127 = vpop.f32.mrb[0].mxu0
    %v1128 = vadd.f32 %v1052, %v1127
    %v1129 = vpop.f32.mrb[0].mxu0
    %1130 = vmatprep.mubr.bf16.mxu0 0
    %1131 = vmatmul.mubr.bf16.gmra.mrb[0].mxu0 %v815
    %v1132 = vpop.f32.mrb[0].mxu0
    %v1133 = vadd.f32 %v1052, %v1132
    %v1134 = vpop.f32.mrb[0].mxu0
    %v1135 = vpop.f32.mrb[0].mxu0
    %v1136 = vadd.f32 %v1052, %v1135
    %v1137 = vpop.f32.mrb[0].mxu0
    %1138 = vmatprep.mubr.bf16.mxu0 0
    %1139 = vmatmul.mubr.bf16.gmra.mrb[0].mxu0 %v818
    %v1140 = vpop.f32.mrb[0].mxu0
    %v1141 = vadd.f32 %v1052, %v1140
    %v1142 = vpop.f32.mrb[0].mxu0
    %v1143 = vpop.f32.mrb[0].mxu0
    %v1144 = vadd.f32 %v1052, %v1143
    %v1145 = vpop.f32.mrb[0].mxu0
    %1146 = vmatprep.mubr.bf16.mxu0 0
    %1147 = vmatmul.mubr.bf16.gmra.mrb[0].mxu0 %v821
    %v1148 = vpop.f32.mrb[0].mxu0
    %v1149 = vadd.f32 %v1052, %v1148
    %v1150 = vpop.f32.mrb[0].mxu0
    %v1151 = vpop.f32.mrb[0].mxu0
    %v1152 = vadd.f32 %v1052, %v1151
    %v1153 = vpop.f32.mrb[0].mxu0
    %1154 = vmatprep.mubr.bf16.mxu0 0
    %1155 = vmatmul.mubr.bf16.gmra.mrb[0].mxu0 %v824
    %v1156 = vpop.f32.mrb[0].mxu0
    %v1157 = vadd.f32 %v1052, %v1156
    %v1158 = vpop.f32.mrb[0].mxu0
    %v1159 = vpop.f32.mrb[0].mxu0
    %v1160 = vadd.f32 %v1052, %v1159
    %v1161 = vpop.f32.mrb[0].mxu0
    %1162 = vdwg.mxu0
    %v1163 = vmul.f32 %v861, %v447
    %v1164 = vmul.f32 %v864, %v448
    %v1165 = vmul.f32 %v869, %v449
    %v1166 = vmul.f32 %v872, %v450
    %v1167 = vmul.f32 %v877, %v451
    %v1168 = vmul.f32 %v880, %v452
    %v1169 = vmul.f32 %v885, %v453
    %v1170 = vmul.f32 %v888, %v454
    %v1171 = vmul.f32 %v893, %v455
    %v1172 = vmul.f32 %v896, %v456
    %v1173 = vmul.f32 %v901, %v457
    %v1174 = vmul.f32 %v904, %v458
    %v1175 = vmul.f32 %v909, %v459
    %v1176 = vmul.f32 %v912, %v460
    %v1177 = vmul.f32 %v917, %v461
    %v1178 = vmul.f32 %v920, %v462
    %v1179 = vpack.c.bf16 %v864, %v861
    %v1180 = vpack.c.bf16 %v872, %v869
    %v1181 = vpack.c.bf16 %v880, %v877
    %v1182 = vpack.c.bf16 %v888, %v885
    %v1183 = vpack.c.bf16 %v896, %v893
    %v1184 = vpack.c.bf16 %v904, %v901
    %v1185 = vpack.c.bf16 %v912, %v909
    %v1186 = vpack.c.bf16 %v920, %v917
    %v1191 = vunpack.c.l.b16 %v479
    %v1192 = vunpack.c.l.b16 %v480
    %v1193 = vunpack.c.l.b16 %v481
    %v1194 = vunpack.c.l.b16 %v482
    %v1195 = vpack.c.b16 %v1192, %v1191
    %v1196 = vpack.c.b16 %v1194, %v1193
    %v1200 = vsel %vm517, %v1179, 0
    %v1203 = vsel %vm517, %v1180, 0
    %v1206 = vsel %vm517, %v1181, 0
    %v1209 = vsel %vm517, %v1182, 0
    %v1212 = vsel %vm517, %v1183, 0
    %v1215 = vsel %vm517, %v1184, 0
    %v1218 = vsel %vm517, %v1185, 0
    %v1221 = vsel %vm517, %v1186, 0
    %1223 = vmatprep.subr.bf16.mxu0 0
    %1224 = vmatpush1.bf16.msra.mxu0 %v1195
    %1225 = vmatprep.subr.bf16.mxu0 0
    %1226 = vmatpush1.bf16.msra.mxu0 %v1196
    %1227 = vmatprep.subr.bf16.mxu0 0
    %1228 = vmatpush1.bf16.msra.mxu0 0
    %1229 = vmatprep.subr.bf16.mxu0 0
    %1230 = vmatpush1.bf16.msra.mxu0 0
    %1231 = vmatprep.subr.bf16.mxu0 0
    %1232 = vmatpush1.bf16.msra.mxu0 0
    %1233 = vmatprep.subr.bf16.mxu0 0
    %1234 = vmatpush1.bf16.msra.mxu0 0
    %1235 = vmatprep.subr.bf16.mxu0 0
    %1236 = vmatpush1.bf16.msra.mxu0 0
    %1237 = vmatprep.subr.bf16.mxu0 0
    %1238 = vmatpush1.bf16.msra.mxu0 0
    %1239 = vmatprep.subr.bf16.mxu0 0
    %1240 = vmatpush1.bf16.msra.mxu0 0
    %1241 = vmatprep.subr.bf16.mxu0 0
    %1242 = vmatpush1.bf16.msra.mxu0 0
    %1243 = vmatprep.subr.bf16.mxu0 0
    %1244 = vmatpush1.bf16.msra.mxu0 0
    %1245 = vmatprep.subr.bf16.mxu0 0
    %1246 = vmatpush1.bf16.msra.mxu0 0
    %1247 = vmatprep.subr.bf16.mxu0 0
    %1248 = vmatpush1.bf16.msra.mxu0 0
    %1249 = vmatprep.subr.bf16.mxu0 0
    %1250 = vmatpush1.bf16.msra.mxu0 0
    %1251 = vmatprep.subr.bf16.mxu0 0
    %1252 = vmatpush1.bf16.msra.mxu0 0
    %1253 = vmatprep.subr.bf16.mxu0 0
    %1254 = vmatpush1.bf16.msra.mxu0 0
    %1255 = vmatprep.mubr.bf16.mxu0 0
    %1256 = vmatmul.mubr.bf16.gmra.mrb[0].mxu0 %v1200
    %v1257 = vpop.f32.mrb[0].mxu0
    %v1258 = vadd.f32 0.0, %v1257
    %v1259 = vpop.f32.mrb[0].mxu0
    %v1260 = vpop.f32.mrb[0].mxu0
    %v1261 = vadd.f32 0.0, %v1260
    %v1262 = vpop.f32.mrb[0].mxu0
    %1263 = vmatprep.mubr.bf16.mxu0 0
    %1264 = vmatmul.mubr.bf16.gmra.mrb[0].mxu0 %v1203
    %v1265 = vpop.f32.mrb[0].mxu0
    %v1266 = vadd.f32 0.0, %v1265
    %v1267 = vpop.f32.mrb[0].mxu0
    %v1268 = vpop.f32.mrb[0].mxu0
    %v1269 = vadd.f32 0.0, %v1268
    %v1270 = vpop.f32.mrb[0].mxu0
    %1271 = vmatprep.mubr.bf16.mxu0 0
    %1272 = vmatmul.mubr.bf16.gmra.mrb[0].mxu0 %v1206
    %v1273 = vpop.f32.mrb[0].mxu0
    %v1274 = vadd.f32 0.0, %v1273
    %v1275 = vpop.f32.mrb[0].mxu0
    %v1276 = vpop.f32.mrb[0].mxu0
    %v1277 = vadd.f32 0.0, %v1276
    %v1278 = vpop.f32.mrb[0].mxu0
    %1279 = vmatprep.mubr.bf16.mxu0 0
    %1280 = vmatmul.mubr.bf16.gmra.mrb[0].mxu0 %v1209
    %v1281 = vpop.f32.mrb[0].mxu0
    %v1282 = vadd.f32 0.0, %v1281
    %v1283 = vpop.f32.mrb[0].mxu0
    %v1284 = vpop.f32.mrb[0].mxu0
    %v1285 = vadd.f32 0.0, %v1284
    %v1286 = vpop.f32.mrb[0].mxu0
    %1287 = vmatprep.mubr.bf16.mxu0 0
    %1288 = vmatmul.mubr.bf16.gmra.mrb[0].mxu0 %v1212
    %v1289 = vpop.f32.mrb[0].mxu0
    %v1290 = vadd.f32 0.0, %v1289
    %v1291 = vpop.f32.mrb[0].mxu0
    %v1292 = vpop.f32.mrb[0].mxu0
    %v1293 = vadd.f32 0.0, %v1292
    %v1294 = vpop.f32.mrb[0].mxu0
    %1295 = vmatprep.mubr.bf16.mxu0 0
    %1296 = vmatmul.mubr.bf16.gmra.mrb[0].mxu0 %v1215
    %v1297 = vpop.f32.mrb[0].mxu0
    %v1298 = vadd.f32 0.0, %v1297
    %v1299 = vpop.f32.mrb[0].mxu0
    %v1300 = vpop.f32.mrb[0].mxu0
    %v1301 = vadd.f32 0.0, %v1300
    %v1302 = vpop.f32.mrb[0].mxu0
    %1303 = vmatprep.mubr.bf16.mxu0 0
    %1304 = vmatmul.mubr.bf16.gmra.mrb[0].mxu0 %v1218
    %v1305 = vpop.f32.mrb[0].mxu0
    %v1306 = vadd.f32 0.0, %v1305
    %v1307 = vpop.f32.mrb[0].mxu0
    %v1308 = vpop.f32.mrb[0].mxu0
    %v1309 = vadd.f32 0.0, %v1308
    %v1310 = vpop.f32.mrb[0].mxu0
    %1311 = vmatprep.mubr.bf16.mxu0 0
    %1312 = vmatmul.mubr.bf16.gmra.mrb[0].mxu0 %v1221
    %v1313 = vpop.f32.mrb[0].mxu0
    %v1314 = vadd.f32 0.0, %v1313
    %v1315 = vpop.f32.mrb[0].mxu0
    %v1316 = vpop.f32.mrb[0].mxu0
    %v1317 = vadd.f32 0.0, %v1316
    %v1318 = vpop.f32.mrb[0].mxu0
    %1319 = vdwg.mxu0
    %v1320 = vmul.f32 %v1258, %v463
    %v1321 = vmul.f32 %v1261, %v464
    %v1322 = vmul.f32 %v1266, %v465
    %v1323 = vmul.f32 %v1269, %v466
    %v1324 = vmul.f32 %v1274, %v467
    %v1325 = vmul.f32 %v1277, %v468
    %v1326 = vmul.f32 %v1282, %v469
    %v1327 = vmul.f32 %v1285, %v470
    %v1328 = vmul.f32 %v1290, %v471
    %v1329 = vmul.f32 %v1293, %v472
    %v1330 = vmul.f32 %v1298, %v473
    %v1331 = vmul.f32 %v1301, %v474
    %v1332 = vmul.f32 %v1306, %v475
    %v1333 = vmul.f32 %v1309, %v476
    %v1334 = vmul.f32 %v1314, %v477
    %v1335 = vmul.f32 %v1317, %v478
    %v1336 = vadd.f32 %v1163, %v1320
    %v1337 = vadd.f32 %v1164, %v1321
    %v1338 = vadd.f32 %v1165, %v1322
    %v1339 = vadd.f32 %v1166, %v1323
    %v1340 = vadd.f32 %v1167, %v1324
    %v1341 = vadd.f32 %v1168, %v1325
    %v1342 = vadd.f32 %v1169, %v1326
    %v1343 = vadd.f32 %v1170, %v1327
    %v1344 = vadd.f32 %v1171, %v1328
    %v1345 = vadd.f32 %v1172, %v1329
    %v1346 = vadd.f32 %v1173, %v1330
    %v1347 = vadd.f32 %v1174, %v1331
    %v1348 = vadd.f32 %v1175, %v1332
    %v1349 = vadd.f32 %v1176, %v1333
    %v1350 = vadd.f32 %v1177, %v1334
    %v1351 = vadd.f32 %v1178, %v1335
    %v1352 = vmul.f32 %v981, %v447
    %v1353 = vmul.f32 %v984, %v448
    %v1354 = vmul.f32 %v989, %v449
    %v1355 = vmul.f32 %v992, %v450
    %v1356 = vmul.f32 %v997, %v451
    %v1357 = vmul.f32 %v1000, %v452
    %v1358 = vmul.f32 %v1005, %v453
    %v1359 = vmul.f32 %v1008, %v454
    %v1360 = vmul.f32 %v1013, %v455
    %v1361 = vmul.f32 %v1016, %v456
    %v1362 = vmul.f32 %v1021, %v457
    %v1363 = vmul.f32 %v1024, %v458
    %v1364 = vmul.f32 %v1029, %v459
    %v1365 = vmul.f32 %v1032, %v460
    %v1366 = vmul.f32 %v1037, %v461
    %v1367 = vmul.f32 %v1040, %v462
    %v1368 = vpack.c.bf16 %v984, %v981
    %v1369 = vpack.c.bf16 %v992, %v989
    %v1370 = vpack.c.bf16 %v1000, %v997
    %v1371 = vpack.c.bf16 %v1008, %v1005
    %v1372 = vpack.c.bf16 %v1016, %v1013
    %v1373 = vpack.c.bf16 %v1024, %v1021
    %v1374 = vpack.c.bf16 %v1032, %v1029
    %v1375 = vpack.c.bf16 %v1040, %v1037
    %v1377 = vsel %vm517, %v1368, 0
    %v1380 = vsel %vm517, %v1369, 0
    %v1383 = vsel %vm517, %v1370, 0
    %v1386 = vsel %vm517, %v1371, 0
    %v1389 = vsel %vm517, %v1372, 0
    %v1392 = vsel %vm517, %v1373, 0
    %v1395 = vsel %vm517, %v1374, 0
    %v1398 = vsel %vm517, %v1375, 0
    %1400 = vmatprep.subr.bf16.mxu0 0
    %1401 = vmatpush1.bf16.msra.mxu0 %v1195
    %1402 = vmatprep.subr.bf16.mxu0 0
    %1403 = vmatpush1.bf16.msra.mxu0 %v1196
    %1404 = vmatprep.subr.bf16.mxu0 0
    %1405 = vmatpush1.bf16.msra.mxu0 0
    %1406 = vmatprep.subr.bf16.mxu0 0
    %1407 = vmatpush1.bf16.msra.mxu0 0
    %1408 = vmatprep.subr.bf16.mxu0 0
    %1409 = vmatpush1.bf16.msra.mxu0 0
    %1410 = vmatprep.subr.bf16.mxu0 0
    %1411 = vmatpush1.bf16.msra.mxu0 0
    %1412 = vmatprep.subr.bf16.mxu0 0
    %1413 = vmatpush1.bf16.msra.mxu0 0
    %1414 = vmatprep.subr.bf16.mxu0 0
    %1415 = vmatpush1.bf16.msra.mxu0 0
    %1416 = vmatprep.subr.bf16.mxu0 0
    %1417 = vmatpush1.bf16.msra.mxu0 0
    %1418 = vmatprep.subr.bf16.mxu0 0
    %1419 = vmatpush1.bf16.msra.mxu0 0
    %1420 = vmatprep.subr.bf16.mxu0 0
    %1421 = vmatpush1.bf16.msra.mxu0 0
    %1422 = vmatprep.subr.bf16.mxu0 0
    %1423 = vmatpush1.bf16.msra.mxu0 0
    %1424 = vmatprep.subr.bf16.mxu0 0
    %1425 = vmatpush1.bf16.msra.mxu0 0
    %1426 = vmatprep.subr.bf16.mxu0 0
    %1427 = vmatpush1.bf16.msra.mxu0 0
    %1428 = vmatprep.subr.bf16.mxu0 0
    %1429 = vmatpush1.bf16.msra.mxu0 0
    %1430 = vmatprep.subr.bf16.mxu0 0
    %1431 = vmatpush1.bf16.msra.mxu0 0
    %1432 = vmatprep.mubr.bf16.mxu0 0
    %1433 = vmatmul.mubr.bf16.gmra.mrb[0].mxu0 %v1377
    %v1434 = vpop.f32.mrb[0].mxu0
    %v1435 = vadd.f32 0.0, %v1434
    %v1436 = vpop.f32.mrb[0].mxu0
    %v1437 = vpop.f32.mrb[0].mxu0
    %v1438 = vadd.f32 0.0, %v1437
    %v1439 = vpop.f32.mrb[0].mxu0
    %1440 = vmatprep.mubr.bf16.mxu0 0
    %1441 = vmatmul.mubr.bf16.gmra.mrb[0].mxu0 %v1380
    %v1442 = vpop.f32.mrb[0].mxu0
    %v1443 = vadd.f32 0.0, %v1442
    %v1444 = vpop.f32.mrb[0].mxu0
    %v1445 = vpop.f32.mrb[0].mxu0
    %v1446 = vadd.f32 0.0, %v1445
    %v1447 = vpop.f32.mrb[0].mxu0
    %1448 = vmatprep.mubr.bf16.mxu0 0
    %1449 = vmatmul.mubr.bf16.gmra.mrb[0].mxu0 %v1383
    %v1450 = vpop.f32.mrb[0].mxu0
    %v1451 = vadd.f32 0.0, %v1450
    %v1452 = vpop.f32.mrb[0].mxu0
    %v1453 = vpop.f32.mrb[0].mxu0
    %v1454 = vadd.f32 0.0, %v1453
    %v1455 = vpop.f32.mrb[0].mxu0
    %1456 = vmatprep.mubr.bf16.mxu0 0
    %1457 = vmatmul.mubr.bf16.gmra.mrb[0].mxu0 %v1386
    %v1458 = vpop.f32.mrb[0].mxu0
    %v1459 = vadd.f32 0.0, %v1458
    %v1460 = vpop.f32.mrb[0].mxu0
    %v1461 = vpop.f32.mrb[0].mxu0
    %v1462 = vadd.f32 0.0, %v1461
    %v1463 = vpop.f32.mrb[0].mxu0
    %1464 = vmatprep.mubr.bf16.mxu0 0
    %1465 = vmatmul.mubr.bf16.gmra.mrb[0].mxu0 %v1389
    %v1466 = vpop.f32.mrb[0].mxu0
    %v1467 = vadd.f32 0.0, %v1466
    %v1468 = vpop.f32.mrb[0].mxu0
    %v1469 = vpop.f32.mrb[0].mxu0
    %v1470 = vadd.f32 0.0, %v1469
    %v1471 = vpop.f32.mrb[0].mxu0
    %1472 = vmatprep.mubr.bf16.mxu0 0
    %1473 = vmatmul.mubr.bf16.gmra.mrb[0].mxu0 %v1392
    %v1474 = vpop.f32.mrb[0].mxu0
    %v1475 = vadd.f32 0.0, %v1474
    %v1476 = vpop.f32.mrb[0].mxu0
    %v1477 = vpop.f32.mrb[0].mxu0
    %v1478 = vadd.f32 0.0, %v1477
    %v1479 = vpop.f32.mrb[0].mxu0
    %1480 = vmatprep.mubr.bf16.mxu0 0
    %1481 = vmatmul.mubr.bf16.gmra.mrb[0].mxu0 %v1395
    %v1482 = vpop.f32.mrb[0].mxu0
    %v1483 = vadd.f32 0.0, %v1482
    %v1484 = vpop.f32.mrb[0].mxu0
    %v1485 = vpop.f32.mrb[0].mxu0
    %v1486 = vadd.f32 0.0, %v1485
    %v1487 = vpop.f32.mrb[0].mxu0
    %1488 = vmatprep.mubr.bf16.mxu0 0
    %1489 = vmatmul.mubr.bf16.gmra.mrb[0].mxu0 %v1398
    %v1490 = vpop.f32.mrb[0].mxu0
    %v1491 = vadd.f32 0.0, %v1490
    %v1492 = vpop.f32.mrb[0].mxu0
    %v1493 = vpop.f32.mrb[0].mxu0
    %v1494 = vadd.f32 0.0, %v1493
    %v1495 = vpop.f32.mrb[0].mxu0
    %1496 = vdwg.mxu0
    %v1497 = vmul.f32 %v1435, %v463
    %v1498 = vmul.f32 %v1438, %v464
    %v1499 = vmul.f32 %v1443, %v465
    %v1500 = vmul.f32 %v1446, %v466
    %v1501 = vmul.f32 %v1451, %v467
    %v1502 = vmul.f32 %v1454, %v468
    %v1503 = vmul.f32 %v1459, %v469
    %v1504 = vmul.f32 %v1462, %v470
    %v1505 = vmul.f32 %v1467, %v471
    %v1506 = vmul.f32 %v1470, %v472
    %v1507 = vmul.f32 %v1475, %v473
    %v1508 = vmul.f32 %v1478, %v474
    %v1509 = vmul.f32 %v1483, %v475
    %v1510 = vmul.f32 %v1486, %v476
    %v1511 = vmul.f32 %v1491, %v477
    %v1512 = vmul.f32 %v1494, %v478
    %v1513 = vadd.f32 %v1352, %v1497
    %v1514 = vadd.f32 %v1353, %v1498
    %v1515 = vadd.f32 %v1354, %v1499
    %v1516 = vadd.f32 %v1355, %v1500
    %v1517 = vadd.f32 %v1356, %v1501
    %v1518 = vadd.f32 %v1357, %v1502
    %v1519 = vadd.f32 %v1358, %v1503
    %v1520 = vadd.f32 %v1359, %v1504
    %v1521 = vadd.f32 %v1360, %v1505
    %v1522 = vadd.f32 %v1361, %v1506
    %v1523 = vadd.f32 %v1362, %v1507
    %v1524 = vadd.f32 %v1363, %v1508
    %v1525 = vadd.f32 %v1364, %v1509
    %v1526 = vadd.f32 %v1365, %v1510
    %v1527 = vadd.f32 %v1366, %v1511
    %v1528 = vadd.f32 %v1367, %v1512
    %v1529 = vpack.c.bf16 %v1337, %v1336
    %v1530 = vpack.c.bf16 %v1339, %v1338
    %v1531 = vpack.c.bf16 %v1341, %v1340
    %v1532 = vpack.c.bf16 %v1343, %v1342
    %v1533 = vpack.c.bf16 %v1345, %v1344
    %v1534 = vpack.c.bf16 %v1347, %v1346
    %v1535 = vpack.c.bf16 %v1349, %v1348
    %v1536 = vpack.c.bf16 %v1351, %v1350
    %v1537 = vpack.c.bf16 %v1514, %v1513
    %v1538 = vpack.c.bf16 %v1516, %v1515
    %v1539 = vpack.c.bf16 %v1518, %v1517
    %v1540 = vpack.c.bf16 %v1520, %v1519
    %v1541 = vpack.c.bf16 %v1522, %v1521
    %v1542 = vpack.c.bf16 %v1524, %v1523
    %v1543 = vpack.c.bf16 %v1526, %v1525
    %v1544 = vpack.c.bf16 %v1528, %v1527
    %v1545 = vpack.c.bf16 %v1104, %v1101
    %v1546 = vpack.c.bf16 %v1112, %v1109
    %v1547 = vpack.c.bf16 %v1120, %v1117
    %v1548 = vpack.c.bf16 %v1128, %v1125
    %v1549 = vpack.c.bf16 %v1136, %v1133
    %v1550 = vpack.c.bf16 %v1144, %v1141
    %v1551 = vpack.c.bf16 %v1152, %v1149
    %v1552 = vpack.c.bf16 %v1160, %v1157
    %v1585 = vunpack.c.l.b16 %v483
    %v1586 = vunpack.c.l.b16 %v484
    %v1587 = vunpack.c.l.b16 %v485
    %v1588 = vunpack.c.l.b16 %v486
    %v1589 = vunpack.c.l.b16 %v487
    %v1590 = vunpack.c.l.b16 %v488
    %v1591 = vunpack.c.l.b16 %v489
    %v1592 = vunpack.c.l.b16 %v490
    %v1593 = vunpack.c.l.b16 %v491
    %v1594 = vunpack.c.l.b16 %v492
    %v1595 = vunpack.c.l.b16 %v493
    %v1596 = vunpack.c.l.b16 %v494
    %v1597 = vunpack.c.l.b16 %v495
    %v1598 = vunpack.c.l.b16 %v496
    %v1599 = vunpack.c.l.b16 %v497
    %v1600 = vunpack.c.l.b16 %v498
    %v1601 = vunpack.c.l.b16 %v499
    %v1602 = vunpack.c.l.b16 %v500
    %v1603 = vunpack.c.l.b16 %v501
    %v1604 = vunpack.c.l.b16 %v502
    %v1605 = vunpack.c.l.b16 %v503
    %v1606 = vunpack.c.l.b16 %v504
    %v1607 = vunpack.c.l.b16 %v505
    %v1608 = vunpack.c.l.b16 %v506
    %v1609 = vunpack.c.l.b16 %v507
    %v1610 = vunpack.c.l.b16 %v508
    %v1611 = vunpack.c.l.b16 %v509
    %v1612 = vunpack.c.l.b16 %v510
    %v1613 = vunpack.c.l.b16 %v511
    %v1614 = vunpack.c.l.b16 %v512
    %v1615 = vunpack.c.l.b16 %v513
    %v1616 = vunpack.c.l.b16 %v514
    %v1617 = vpack.c.b16 %v1586, %v1585
    %v1618 = vpack.c.b16 %v1588, %v1587
    %v1619 = vpack.c.b16 %v1590, %v1589
    %v1620 = vpack.c.b16 %v1592, %v1591
    %v1621 = vpack.c.b16 %v1594, %v1593
    %v1622 = vpack.c.b16 %v1596, %v1595
    %v1623 = vpack.c.b16 %v1598, %v1597
    %v1624 = vpack.c.b16 %v1600, %v1599
    %v1625 = vpack.c.b16 %v1602, %v1601
    %v1626 = vpack.c.b16 %v1604, %v1603
    %v1627 = vpack.c.b16 %v1606, %v1605
    %v1628 = vpack.c.b16 %v1608, %v1607
    %v1629 = vpack.c.b16 %v1610, %v1609
    %v1630 = vpack.c.b16 %v1612, %v1611
    %v1631 = vpack.c.b16 %v1614, %v1613
    %v1632 = vpack.c.b16 %v1616, %v1615
    %v1649 = vmul.bf16 %v1537, %v1617
    %v1650 = vmul.bf16 %v1538, %v1618
    %v1651 = vmul.bf16 %v1539, %v1619
    %v1652 = vmul.bf16 %v1540, %v1620
    %v1653 = vmul.bf16 %v1537, %v1621
    %v1654 = vmul.bf16 %v1538, %v1622
    %v1655 = vmul.bf16 %v1539, %v1623
    %v1656 = vmul.bf16 %v1540, %v1624
    %v1657 = vmul.bf16 %v1537, %v1625
    %v1658 = vmul.bf16 %v1538, %v1626
    %v1659 = vmul.bf16 %v1539, %v1627
    %v1660 = vmul.bf16 %v1540, %v1628
    %v1661 = vmul.bf16 %v1537, %v1629
    %v1662 = vmul.bf16 %v1538, %v1630
    %v1663 = vmul.bf16 %v1539, %v1631
    %v1664 = vmul.bf16 %v1540, %v1632
    %v1665 = vmul.bf16 %v1545, %v1617
    %v1666 = vmul.bf16 %v1546, %v1618
    %v1667 = vmul.bf16 %v1547, %v1619
    %v1668 = vmul.bf16 %v1548, %v1620
    %v1669 = vmul.bf16 %v1545, %v1621
    %v1670 = vmul.bf16 %v1546, %v1622
    %v1671 = vmul.bf16 %v1547, %v1623
    %v1672 = vmul.bf16 %v1548, %v1624
    %v1673 = vmul.bf16 %v1545, %v1625
    %v1674 = vmul.bf16 %v1546, %v1626
    %v1675 = vmul.bf16 %v1547, %v1627
    %v1676 = vmul.bf16 %v1548, %v1628
    %v1677 = vmul.bf16 %v1545, %v1629
    %v1678 = vmul.bf16 %v1546, %v1630
    %v1679 = vmul.bf16 %v1547, %v1631
    %v1680 = vmul.bf16 %v1548, %v1632
    %v1682 = vsel %vm517, %v1529, 0
    %v1685 = vsel %vm517, %v1530, 0
    %v1688 = vsel %vm517, %v1531, 0
    %v1691 = vsel %vm517, %v1532, 0
    %v1694 = vsel %vm517, %v1649, 0
    %v1697 = vsel %vm517, %v1650, 0
    %v1700 = vsel %vm517, %v1651, 0
    %v1703 = vsel %vm517, %v1652, 0
    %v1706 = vsel %vm517, %v1653, 0
    %v1709 = vsel %vm517, %v1654, 0
    %v1712 = vsel %vm517, %v1655, 0
    %v1715 = vsel %vm517, %v1656, 0
    %v1718 = vsel %vm517, %v1657, 0
    %v1721 = vsel %vm517, %v1658, 0
    %v1724 = vsel %vm517, %v1659, 0
    %v1727 = vsel %vm517, %v1660, 0
    %v1730 = vsel %vm517, %v1661, 0
    %v1733 = vsel %vm517, %v1662, 0
    %v1736 = vsel %vm517, %v1663, 0
    %v1739 = vsel %vm517, %v1664, 0
    %1741 = vmatprep.subr.bf16.mxu0 0
    %1742 = vmatpush1.bf16.xpose.msra.mxu0 %v1694
    %1743 = vmatprep.subr.bf16.mxu0 0
    %1744 = vmatpush1.bf16.xpose.msra.mxu0 %v1697
    %1745 = vmatprep.subr.bf16.mxu0 0
    %1746 = vmatpush1.bf16.xpose.msra.mxu0 %v1700
    %1747 = vmatprep.subr.bf16.mxu0 0
    %1748 = vmatpush1.bf16.xpose.msra.mxu0 %v1703
    %1749 = vmatprep.subr.bf16.mxu0 0
    %1750 = vmatpush1.bf16.xpose.msra.mxu0 %v1706
    %1751 = vmatprep.subr.bf16.mxu0 0
    %1752 = vmatpush1.bf16.xpose.msra.mxu0 %v1709
    %1753 = vmatprep.subr.bf16.mxu0 0
    %1754 = vmatpush1.bf16.xpose.msra.mxu0 %v1712
    %1755 = vmatprep.subr.bf16.mxu0 0
    %1756 = vmatpush1.bf16.xpose.msra.mxu0 %v1715
    %1757 = vmatprep.subr.bf16.mxu0 0
    %1758 = vmatpush1.bf16.xpose.msra.mxu0 %v1718
    %1759 = vmatprep.subr.bf16.mxu0 0
    %1760 = vmatpush1.bf16.xpose.msra.mxu0 %v1721
    %1761 = vmatprep.subr.bf16.mxu0 0
    %1762 = vmatpush1.bf16.xpose.msra.mxu0 %v1724
    %1763 = vmatprep.subr.bf16.mxu0 0
    %1764 = vmatpush1.bf16.xpose.msra.mxu0 %v1727
    %1765 = vmatprep.subr.bf16.mxu0 0
    %1766 = vmatpush1.bf16.xpose.msra.mxu0 %v1730
    %1767 = vmatprep.subr.bf16.mxu0 0
    %1768 = vmatpush1.bf16.xpose.msra.mxu0 %v1733
    %1769 = vmatprep.subr.bf16.mxu0 0
    %1770 = vmatpush1.bf16.xpose.msra.mxu0 %v1736
    %1771 = vmatprep.subr.bf16.mxu0 0
    %1772 = vmatpush1.bf16.xpose.msra.mxu0 %v1739
    %1773 = vmatprep.mubr.bf16.mxu0 0
    %1774 = vmatmul.mubr.bf16.gmra.mrb[0].mxu0 %v1682
    %v1775 = vpop.f32.mrb[0].mxu0
    %v1776 = vadd.f32 0.0, %v1775
    %v1777 = vpop.f32.mrb[0].mxu0
    %v1778 = vadd.f32 0.0, %v1777
    %v1779 = vpop.f32.mrb[0].mxu0
    %v1780 = vadd.f32 0.0, %v1779
    %v1781 = vpop.f32.mrb[0].mxu0
    %v1782 = vadd.f32 0.0, %v1781
    %1783 = vmatprep.mubr.bf16.mxu0 0
    %1784 = vmatmul.mubr.bf16.gmra.mrb[0].mxu0 %v1685
    %v1785 = vpop.f32.mrb[0].mxu0
    %v1786 = vadd.f32 0.0, %v1785
    %v1787 = vpop.f32.mrb[0].mxu0
    %v1788 = vadd.f32 0.0, %v1787
    %v1789 = vpop.f32.mrb[0].mxu0
    %v1790 = vadd.f32 0.0, %v1789
    %v1791 = vpop.f32.mrb[0].mxu0
    %v1792 = vadd.f32 0.0, %v1791
    %1793 = vmatprep.mubr.bf16.mxu0 0
    %1794 = vmatmul.mubr.bf16.gmra.mrb[0].mxu0 %v1688
    %v1795 = vpop.f32.mrb[0].mxu0
    %v1796 = vadd.f32 0.0, %v1795
    %v1797 = vpop.f32.mrb[0].mxu0
    %v1798 = vadd.f32 0.0, %v1797
    %v1799 = vpop.f32.mrb[0].mxu0
    %v1800 = vadd.f32 0.0, %v1799
    %v1801 = vpop.f32.mrb[0].mxu0
    %v1802 = vadd.f32 0.0, %v1801
    %1803 = vmatprep.mubr.bf16.mxu0 0
    %1804 = vmatmul.mubr.bf16.gmra.mrb[0].mxu0 %v1691
    %v1805 = vpop.f32.mrb[0].mxu0
    %v1806 = vadd.f32 0.0, %v1805
    %v1807 = vpop.f32.mrb[0].mxu0
    %v1808 = vadd.f32 0.0, %v1807
    %v1809 = vpop.f32.mrb[0].mxu0
    %v1810 = vadd.f32 0.0, %v1809
    %v1811 = vpop.f32.mrb[0].mxu0
    %v1812 = vadd.f32 0.0, %v1811
    %1813 = vdwg.mxu0
    %vm1814 = vcmask 523264
    %v1815 = vsel %vm1814, %v1776, -inf
    %1816 = vmax.xlane.f32.xlu0 %v1815
    %v1817 = vpop.xlane.xlu0 %1816
    %v1818 = vsel %vm1814, %v1780, -inf
    %1819 = vmax.xlane.f32.xlu0 %v1818
    %v1820 = vpop.xlane.xlu0 %1819
    %v1821 = vsel %vm1814, %v1786, -inf
    %1822 = vmax.xlane.f32.xlu0 %v1821
    %v1823 = vpop.xlane.xlu0 %1822
    %v1824 = vsel %vm1814, %v1790, -inf
    %1825 = vmax.xlane.f32.xlu0 %v1824
    %v1826 = vpop.xlane.xlu0 %1825
    %v1827 = vsel %vm1814, %v1796, -inf
    %1828 = vmax.xlane.f32.xlu0 %v1827
    %v1829 = vpop.xlane.xlu0 %1828
    %v1830 = vsel %vm1814, %v1800, -inf
    %1831 = vmax.xlane.f32.xlu0 %v1830
    %v1832 = vpop.xlane.xlu0 %1831
    %v1833 = vsel %vm1814, %v1806, -inf
    %1834 = vmax.xlane.f32.xlu0 %v1833
    %v1835 = vpop.xlane.xlu0 %1834
    %v1836 = vsel %vm1814, %v1810, -inf
    %1837 = vmax.xlane.f32.xlu0 %v1836
    %v1838 = vpop.xlane.xlu0 %1837
    %v1839 = vsub.f32 %v1776, %v1817
    %v1840 = vsub.f32 %v1780, %v1820
    %v1841 = vsub.f32 %v1786, %v1823
    %v1842 = vsub.f32 %v1790, %v1826
    %v1843 = vsub.f32 %v1796, %v1829
    %v1844 = vsub.f32 %v1800, %v1832
    %v1845 = vsub.f32 %v1806, %v1835
    %v1846 = vsub.f32 %v1810, %v1838
    %v1847 = vmul.f32 %v1839, 1.442695
    %v1848 = vpow.pop %v1847
    %v1849 = vmul.f32 %v1840, 1.442695
    %v1850 = vpow.pop %v1849
    %v1851 = vmul.f32 %v1841, 1.442695
    %v1852 = vpow.pop %v1851
    %v1853 = vmul.f32 %v1842, 1.442695
    %v1854 = vpow.pop %v1853
    %v1855 = vmul.f32 %v1843, 1.442695
    %v1856 = vpow.pop %v1855
    %v1857 = vmul.f32 %v1844, 1.442695
    %v1858 = vpow.pop %v1857
    %v1859 = vmul.f32 %v1845, 1.442695
    %v1860 = vpow.pop %v1859
    %v1861 = vmul.f32 %v1846, 1.442695
    %v1862 = vpow.pop %v1861
    %v1863 = vsel %vm1814, %v1848, 0.0
    %1864 = vadd.xlane.f32.xlu0 %v1863
    %v1865 = vpop.xlane.xlu0 %1864
    %v1866 = vsel %vm1814, %v1850, 0.0
    %1867 = vadd.xlane.f32.xlu0 %v1866
    %v1868 = vpop.xlane.xlu0 %1867
    %v1869 = vsel %vm1814, %v1852, 0.0
    %1870 = vadd.xlane.f32.xlu0 %v1869
    %v1871 = vpop.xlane.xlu0 %1870
    %v1872 = vsel %vm1814, %v1854, 0.0
    %1873 = vadd.xlane.f32.xlu0 %v1872
    %v1874 = vpop.xlane.xlu0 %1873
    %v1875 = vsel %vm1814, %v1856, 0.0
    %1876 = vadd.xlane.f32.xlu0 %v1875
    %v1877 = vpop.xlane.xlu0 %1876
    %v1878 = vsel %vm1814, %v1858, 0.0
    %1879 = vadd.xlane.f32.xlu0 %v1878
    %v1880 = vpop.xlane.xlu0 %1879
    %v1881 = vsel %vm1814, %v1860, 0.0
    %1882 = vadd.xlane.f32.xlu0 %v1881
    %v1883 = vpop.xlane.xlu0 %1882
    %v1884 = vsel %vm1814, %v1862, 0.0
    %1885 = vadd.xlane.f32.xlu0 %v1884
    %v1886 = vpop.xlane.xlu0 %1885
    %v1887 = vrcp.pop %v1865
    %v1888 = vrcp.pop %v1868
    %v1889 = vrcp.pop %v1871
    %v1890 = vrcp.pop %v1874
    %v1891 = vrcp.pop %v1877
    %v1892 = vrcp.pop %v1880
    %v1893 = vrcp.pop %v1883
    %v1894 = vrcp.pop %v1886
    %v1895 = vmul.f32 %v1848, %v1887
    %v1896 = vmul.f32 %v1850, %v1888
    %v1897 = vmul.f32 %v1852, %v1889
    %v1898 = vmul.f32 %v1854, %v1890
    %v1899 = vmul.f32 %v1856, %v1891
    %v1900 = vmul.f32 %v1858, %v1892
    %v1901 = vmul.f32 %v1860, %v1893
    %v1902 = vmul.f32 %v1862, %v1894
    %vm1903 = vcmask 1048064
    %v1904 = vsel %vm1903, %v1776, -inf
    %1905 = vmax.xlane.f32.xlu0 %v1904
    %v1906 = vpop.xlane.xlu0 %1905
    %v1907 = vsel %vm1903, %v1780, -inf
    %1908 = vmax.xlane.f32.xlu0 %v1907
    %v1909 = vpop.xlane.xlu0 %1908
    %v1910 = vsel %vm1903, %v1786, -inf
    %1911 = vmax.xlane.f32.xlu0 %v1910
    %v1912 = vpop.xlane.xlu0 %1911
    %v1913 = vsel %vm1903, %v1790, -inf
    %1914 = vmax.xlane.f32.xlu0 %v1913
    %v1915 = vpop.xlane.xlu0 %1914
    %v1916 = vsel %vm1903, %v1796, -inf
    %1917 = vmax.xlane.f32.xlu0 %v1916
    %v1918 = vpop.xlane.xlu0 %1917
    %v1919 = vsel %vm1903, %v1800, -inf
    %1920 = vmax.xlane.f32.xlu0 %v1919
    %v1921 = vpop.xlane.xlu0 %1920
    %v1922 = vsel %vm1903, %v1806, -inf
    %1923 = vmax.xlane.f32.xlu0 %v1922
    %v1924 = vpop.xlane.xlu0 %1923
    %v1925 = vsel %vm1903, %v1810, -inf
    %1926 = vmax.xlane.f32.xlu0 %v1925
    %v1927 = vpop.xlane.xlu0 %1926
    %v1928 = vsub.f32 %v1776, %v1906
    %v1929 = vsub.f32 %v1780, %v1909
    %v1930 = vsub.f32 %v1786, %v1912
    %v1931 = vsub.f32 %v1790, %v1915
    %v1932 = vsub.f32 %v1796, %v1918
    %v1933 = vsub.f32 %v1800, %v1921
    %v1934 = vsub.f32 %v1806, %v1924
    %v1935 = vsub.f32 %v1810, %v1927
    %v1936 = vmul.f32 %v1928, 1.442695
    %v1937 = vpow.pop %v1936
    %v1938 = vmul.f32 %v1929, 1.442695
    %v1939 = vpow.pop %v1938
    %v1940 = vmul.f32 %v1930, 1.442695
    %v1941 = vpow.pop %v1940
    %v1942 = vmul.f32 %v1931, 1.442695
    %v1943 = vpow.pop %v1942
    %v1944 = vmul.f32 %v1932, 1.442695
    %v1945 = vpow.pop %v1944
    %v1946 = vmul.f32 %v1933, 1.442695
    %v1947 = vpow.pop %v1946
    %v1948 = vmul.f32 %v1934, 1.442695
    %v1949 = vpow.pop %v1948
    %v1950 = vmul.f32 %v1935, 1.442695
    %v1951 = vpow.pop %v1950
    %1960 = vrot.lane.b32.xlu0 %v1937, 64
    %v1961 = vpop.permute.xlu0 %1960
    %1962 = vrot.lane.b32.xlu0 %v1939, 64
    %v1963 = vpop.permute.xlu0 %1962
    %1964 = vrot.lane.b32.xlu0 %v1941, 64
    %v1965 = vpop.permute.xlu0 %1964
    %1966 = vrot.lane.b32.xlu0 %v1943, 64
    %v1967 = vpop.permute.xlu0 %1966
    %1968 = vrot.lane.b32.xlu0 %v1945, 64
    %v1969 = vpop.permute.xlu0 %1968
    %1970 = vrot.lane.b32.xlu0 %v1947, 64
    %v1971 = vpop.permute.xlu0 %1970
    %1972 = vrot.lane.b32.xlu0 %v1949, 64
    %v1973 = vpop.permute.xlu0 %1972
    %1974 = vrot.lane.b32.xlu0 %v1951, 64
    %v1975 = vpop.permute.xlu0 %1974
    %v1984 = vsel %vm1814, %v1961, 0.0
    %1985 = vadd.xlane.f32.xlu0 %v1984
    %v1986 = vpop.xlane.xlu0 %1985
    %v1987 = vsel %vm1814, %v1963, 0.0
    %1988 = vadd.xlane.f32.xlu0 %v1987
    %v1989 = vpop.xlane.xlu0 %1988
    %v1990 = vsel %vm1814, %v1965, 0.0
    %1991 = vadd.xlane.f32.xlu0 %v1990
    %v1992 = vpop.xlane.xlu0 %1991
    %v1993 = vsel %vm1814, %v1967, 0.0
    %1994 = vadd.xlane.f32.xlu0 %v1993
    %v1995 = vpop.xlane.xlu0 %1994
    %v1996 = vsel %vm1814, %v1969, 0.0
    %1997 = vadd.xlane.f32.xlu0 %v1996
    %v1998 = vpop.xlane.xlu0 %1997
    %v1999 = vsel %vm1814, %v1971, 0.0
    %2000 = vadd.xlane.f32.xlu0 %v1999
    %v2001 = vpop.xlane.xlu0 %2000
    %v2002 = vsel %vm1814, %v1973, 0.0
    %2003 = vadd.xlane.f32.xlu0 %v2002
    %v2004 = vpop.xlane.xlu0 %2003
    %v2005 = vsel %vm1814, %v1975, 0.0
    %2006 = vadd.xlane.f32.xlu0 %v2005
    %v2007 = vpop.xlane.xlu0 %2006
    %v2008 = vrcp.pop %v1986
    %v2009 = vrcp.pop %v1989
    %v2010 = vrcp.pop %v1992
    %v2011 = vrcp.pop %v1995
    %v2012 = vrcp.pop %v1998
    %v2013 = vrcp.pop %v2001
    %v2014 = vrcp.pop %v2004
    %v2015 = vrcp.pop %v2007
    %v2016 = vmul.f32 %v1937, %v2008
    %v2017 = vmul.f32 %v1939, %v2009
    %v2018 = vmul.f32 %v1941, %v2010
    %v2019 = vmul.f32 %v1943, %v2011
    %v2020 = vmul.f32 %v1945, %v2012
    %v2021 = vmul.f32 %v1947, %v2013
    %v2022 = vmul.f32 %v1949, %v2014
    %v2023 = vmul.f32 %v1951, %v2015
    %v2024 = vsel %vm1814, %v1778, -inf
    %2025 = vmax.xlane.f32.xlu0 %v2024
    %v2026 = vpop.xlane.xlu0 %2025
    %v2027 = vsel %vm1814, %v1782, -inf
    %2028 = vmax.xlane.f32.xlu0 %v2027
    %v2029 = vpop.xlane.xlu0 %2028
    %v2030 = vsel %vm1814, %v1788, -inf
    %2031 = vmax.xlane.f32.xlu0 %v2030
    %v2032 = vpop.xlane.xlu0 %2031
    %v2033 = vsel %vm1814, %v1792, -inf
    %2034 = vmax.xlane.f32.xlu0 %v2033
    %v2035 = vpop.xlane.xlu0 %2034
    %v2036 = vsel %vm1814, %v1798, -inf
    %2037 = vmax.xlane.f32.xlu0 %v2036
    %v2038 = vpop.xlane.xlu0 %2037
    %v2039 = vsel %vm1814, %v1802, -inf
    %2040 = vmax.xlane.f32.xlu0 %v2039
    %v2041 = vpop.xlane.xlu0 %2040
    %v2042 = vsel %vm1814, %v1808, -inf
    %2043 = vmax.xlane.f32.xlu0 %v2042
    %v2044 = vpop.xlane.xlu0 %2043
    %v2045 = vsel %vm1814, %v1812, -inf
    %2046 = vmax.xlane.f32.xlu0 %v2045
    %v2047 = vpop.xlane.xlu0 %2046
    %v2048 = vsub.f32 %v1778, %v2026
    %v2049 = vsub.f32 %v1782, %v2029
    %v2050 = vsub.f32 %v1788, %v2032
    %v2051 = vsub.f32 %v1792, %v2035
    %v2052 = vsub.f32 %v1798, %v2038
    %v2053 = vsub.f32 %v1802, %v2041
    %v2054 = vsub.f32 %v1808, %v2044
    %v2055 = vsub.f32 %v1812, %v2047
    %v2056 = vmul.f32 %v2048, 1.442695
    %v2057 = vpow.pop %v2056
    %v2058 = vmul.f32 %v2049, 1.442695
    %v2059 = vpow.pop %v2058
    %v2060 = vmul.f32 %v2050, 1.442695
    %v2061 = vpow.pop %v2060
    %v2062 = vmul.f32 %v2051, 1.442695
    %v2063 = vpow.pop %v2062
    %v2064 = vmul.f32 %v2052, 1.442695
    %v2065 = vpow.pop %v2064
    %v2066 = vmul.f32 %v2053, 1.442695
    %v2067 = vpow.pop %v2066
    %v2068 = vmul.f32 %v2054, 1.442695
    %v2069 = vpow.pop %v2068
    %v2070 = vmul.f32 %v2055, 1.442695
    %v2071 = vpow.pop %v2070
    %v2072 = vsel %vm1814, %v2057, 0.0
    %2073 = vadd.xlane.f32.xlu0 %v2072
    %v2074 = vpop.xlane.xlu0 %2073
    %v2075 = vsel %vm1814, %v2059, 0.0
    %2076 = vadd.xlane.f32.xlu0 %v2075
    %v2077 = vpop.xlane.xlu0 %2076
    %v2078 = vsel %vm1814, %v2061, 0.0
    %2079 = vadd.xlane.f32.xlu0 %v2078
    %v2080 = vpop.xlane.xlu0 %2079
    %v2081 = vsel %vm1814, %v2063, 0.0
    %2082 = vadd.xlane.f32.xlu0 %v2081
    %v2083 = vpop.xlane.xlu0 %2082
    %v2084 = vsel %vm1814, %v2065, 0.0
    %2085 = vadd.xlane.f32.xlu0 %v2084
    %v2086 = vpop.xlane.xlu0 %2085
    %v2087 = vsel %vm1814, %v2067, 0.0
    %2088 = vadd.xlane.f32.xlu0 %v2087
    %v2089 = vpop.xlane.xlu0 %2088
    %v2090 = vsel %vm1814, %v2069, 0.0
    %2091 = vadd.xlane.f32.xlu0 %v2090
    %v2092 = vpop.xlane.xlu0 %2091
    %v2093 = vsel %vm1814, %v2071, 0.0
    %2094 = vadd.xlane.f32.xlu0 %v2093
    %v2095 = vpop.xlane.xlu0 %2094
    %v2096 = vrcp.pop %v2074
    %v2097 = vrcp.pop %v2077
    %v2098 = vrcp.pop %v2080
    %v2099 = vrcp.pop %v2083
    %v2100 = vrcp.pop %v2086
    %v2101 = vrcp.pop %v2089
    %v2102 = vrcp.pop %v2092
    %v2103 = vrcp.pop %v2095
    %v2104 = vmul.f32 %v2057, %v2096
    %v2105 = vmul.f32 %v2059, %v2097
    %v2106 = vmul.f32 %v2061, %v2098
    %v2107 = vmul.f32 %v2063, %v2099
    %v2108 = vmul.f32 %v2065, %v2100
    %v2109 = vmul.f32 %v2067, %v2101
    %v2110 = vmul.f32 %v2069, %v2102
    %v2111 = vmul.f32 %v2071, %v2103
    %v2112 = vsel %vm1903, %v1778, -inf
    %2113 = vmax.xlane.f32.xlu0 %v2112
    %v2114 = vpop.xlane.xlu0 %2113
    %v2115 = vsel %vm1903, %v1782, -inf
    %2116 = vmax.xlane.f32.xlu0 %v2115
    %v2117 = vpop.xlane.xlu0 %2116
    %v2118 = vsel %vm1903, %v1788, -inf
    %2119 = vmax.xlane.f32.xlu0 %v2118
    %v2120 = vpop.xlane.xlu0 %2119
    %v2121 = vsel %vm1903, %v1792, -inf
    %2122 = vmax.xlane.f32.xlu0 %v2121
    %v2123 = vpop.xlane.xlu0 %2122
    %v2124 = vsel %vm1903, %v1798, -inf
    %2125 = vmax.xlane.f32.xlu0 %v2124
    %v2126 = vpop.xlane.xlu0 %2125
    %v2127 = vsel %vm1903, %v1802, -inf
    %2128 = vmax.xlane.f32.xlu0 %v2127
    %v2129 = vpop.xlane.xlu0 %2128
    %v2130 = vsel %vm1903, %v1808, -inf
    %2131 = vmax.xlane.f32.xlu0 %v2130
    %v2132 = vpop.xlane.xlu0 %2131
    %v2133 = vsel %vm1903, %v1812, -inf
    %2134 = vmax.xlane.f32.xlu0 %v2133
    %v2135 = vpop.xlane.xlu0 %2134
    %v2136 = vsub.f32 %v1778, %v2114
    %v2137 = vsub.f32 %v1782, %v2117
    %v2138 = vsub.f32 %v1788, %v2120
    %v2139 = vsub.f32 %v1792, %v2123
    %v2140 = vsub.f32 %v1798, %v2126
    %v2141 = vsub.f32 %v1802, %v2129
    %v2142 = vsub.f32 %v1808, %v2132
    %v2143 = vsub.f32 %v1812, %v2135
    %v2144 = vmul.f32 %v2136, 1.442695
    %v2145 = vpow.pop %v2144
    %v2146 = vmul.f32 %v2137, 1.442695
    %v2147 = vpow.pop %v2146
    %v2148 = vmul.f32 %v2138, 1.442695
    %v2149 = vpow.pop %v2148
    %v2150 = vmul.f32 %v2139, 1.442695
    %v2151 = vpow.pop %v2150
    %v2152 = vmul.f32 %v2140, 1.442695
    %v2153 = vpow.pop %v2152
    %v2154 = vmul.f32 %v2141, 1.442695
    %v2155 = vpow.pop %v2154
    %v2156 = vmul.f32 %v2142, 1.442695
    %v2157 = vpow.pop %v2156
    %v2158 = vmul.f32 %v2143, 1.442695
    %v2159 = vpow.pop %v2158
    %2168 = vrot.lane.b32.xlu0 %v2145, 64
    %v2169 = vpop.permute.xlu0 %2168
    %2170 = vrot.lane.b32.xlu0 %v2147, 64
    %v2171 = vpop.permute.xlu0 %2170
    %2172 = vrot.lane.b32.xlu0 %v2149, 64
    %v2173 = vpop.permute.xlu0 %2172
    %2174 = vrot.lane.b32.xlu0 %v2151, 64
    %v2175 = vpop.permute.xlu0 %2174
    %2176 = vrot.lane.b32.xlu0 %v2153, 64
    %v2177 = vpop.permute.xlu0 %2176
    %2178 = vrot.lane.b32.xlu0 %v2155, 64
    %v2179 = vpop.permute.xlu0 %2178
    %2180 = vrot.lane.b32.xlu0 %v2157, 64
    %v2181 = vpop.permute.xlu0 %2180
    %2182 = vrot.lane.b32.xlu0 %v2159, 64
    %v2183 = vpop.permute.xlu0 %2182
    %v2192 = vsel %vm1814, %v2169, 0.0
    %2193 = vadd.xlane.f32.xlu0 %v2192
    %v2194 = vpop.xlane.xlu0 %2193
    %v2195 = vsel %vm1814, %v2171, 0.0
    %2196 = vadd.xlane.f32.xlu0 %v2195
    %v2197 = vpop.xlane.xlu0 %2196
    %v2198 = vsel %vm1814, %v2173, 0.0
    %2199 = vadd.xlane.f32.xlu0 %v2198
    %v2200 = vpop.xlane.xlu0 %2199
    %v2201 = vsel %vm1814, %v2175, 0.0
    %2202 = vadd.xlane.f32.xlu0 %v2201
    %v2203 = vpop.xlane.xlu0 %2202
    %v2204 = vsel %vm1814, %v2177, 0.0
    %2205 = vadd.xlane.f32.xlu0 %v2204
    %v2206 = vpop.xlane.xlu0 %2205
    %v2207 = vsel %vm1814, %v2179, 0.0
    %2208 = vadd.xlane.f32.xlu0 %v2207
    %v2209 = vpop.xlane.xlu0 %2208
    %v2210 = vsel %vm1814, %v2181, 0.0
    %2211 = vadd.xlane.f32.xlu0 %v2210
    %v2212 = vpop.xlane.xlu0 %2211
    %v2213 = vsel %vm1814, %v2183, 0.0
    %2214 = vadd.xlane.f32.xlu0 %v2213
    %v2215 = vpop.xlane.xlu0 %2214
    %v2216 = vrcp.pop %v2194
    %v2217 = vrcp.pop %v2197
    %v2218 = vrcp.pop %v2200
    %v2219 = vrcp.pop %v2203
    %v2220 = vrcp.pop %v2206
    %v2221 = vrcp.pop %v2209
    %v2222 = vrcp.pop %v2212
    %v2223 = vrcp.pop %v2215
    %v2224 = vmul.f32 %v2145, %v2216
    %v2225 = vmul.f32 %v2147, %v2217
    %v2226 = vmul.f32 %v2149, %v2218
    %v2227 = vmul.f32 %v2151, %v2219
    %v2228 = vmul.f32 %v2153, %v2220
    %v2229 = vmul.f32 %v2155, %v2221
    %v2230 = vmul.f32 %v2157, %v2222
    %v2231 = vmul.f32 %v2159, %v2223
    %v2232 = vsel %vm1814, %v1895, %v2016
    %v2233 = vsel %vm1814, %v1896, %v2017
    %v2234 = vsel %vm1814, %v1897, %v2018
    %v2235 = vsel %vm1814, %v1898, %v2019
    %v2236 = vsel %vm1814, %v1899, %v2020
    %v2237 = vsel %vm1814, %v1900, %v2021
    %v2238 = vsel %vm1814, %v1901, %v2022
    %v2239 = vsel %vm1814, %v1902, %v2023
    %v2240 = vsel %vm1814, %v2104, %v2224
    %v2241 = vsel %vm1814, %v2105, %v2225
    %v2242 = vsel %vm1814, %v2106, %v2226
    %v2243 = vsel %vm1814, %v2107, %v2227
    %v2244 = vsel %vm1814, %v2108, %v2228
    %v2245 = vsel %vm1814, %v2109, %v2229
    %v2246 = vsel %vm1814, %v2110, %v2230
    %v2247 = vsel %vm1814, %v2111, %v2231
    %v2248 = vpack.c.bf16 %v2233, %v2232
    %v2249 = vpack.c.bf16 %v2241, %v2240
    %v2250 = vpack.c.bf16 %v2235, %v2234
    %v2251 = vpack.c.bf16 %v2243, %v2242
    %v2252 = vpack.c.bf16 %v2237, %v2236
    %v2253 = vpack.c.bf16 %v2245, %v2244
    %v2254 = vpack.c.bf16 %v2239, %v2238
    %v2255 = vpack.c.bf16 %v2247, %v2246
    %2256 = vmatprep.subr.bf16.mxu0 0
    %2257 = vmatpush1.bf16.msra.mxu0 %v1665
    %2258 = vmatprep.subr.bf16.mxu0 0
    %2259 = vmatpush1.bf16.msra.mxu0 %v1666
    %2260 = vmatprep.subr.bf16.mxu0 0
    %2261 = vmatpush1.bf16.msra.mxu0 %v1667
    %2262 = vmatprep.subr.bf16.mxu0 0
    %2263 = vmatpush1.bf16.msra.mxu0 %v1668
    %2264 = vmatprep.subr.bf16.mxu0 0
    %2265 = vmatpush1.bf16.msra.mxu0 %v1669
    %2266 = vmatprep.subr.bf16.mxu0 0
    %2267 = vmatpush1.bf16.msra.mxu0 %v1670
    %2268 = vmatprep.subr.bf16.mxu0 0
    %2269 = vmatpush1.bf16.msra.mxu0 %v1671
    %2270 = vmatprep.subr.bf16.mxu0 0
    %2271 = vmatpush1.bf16.msra.mxu0 %v1672
    %2272 = vmatprep.subr.bf16.mxu0 0
    %2273 = vmatpush1.bf16.msra.mxu0 %v1673
    %2274 = vmatprep.subr.bf16.mxu0 0
    %2275 = vmatpush1.bf16.msra.mxu0 %v1674
    %2276 = vmatprep.subr.bf16.mxu0 0
    %2277 = vmatpush1.bf16.msra.mxu0 %v1675
    %2278 = vmatprep.subr.bf16.mxu0 0
    %2279 = vmatpush1.bf16.msra.mxu0 %v1676
    %2280 = vmatprep.subr.bf16.mxu0 0
    %2281 = vmatpush1.bf16.msra.mxu0 %v1677
    %2282 = vmatprep.subr.bf16.mxu0 0
    %2283 = vmatpush1.bf16.msra.mxu0 %v1678
    %2284 = vmatprep.subr.bf16.mxu0 0
    %2285 = vmatpush1.bf16.msra.mxu0 %v1679
    %2286 = vmatprep.subr.bf16.mxu0 0
    %2287 = vmatpush1.bf16.msra.mxu0 %v1680
    %2288 = vmatprep.mubr.bf16.mxu0 %v2249
    %2289 = vmatmul.mubr.bf16.gmra.mrb[0].mxu0 %v2248
    %v2290 = vpop.f32.mrb[0].mxu0
    %v2291 = vadd.f32 0.0, %v2290
    %v2292 = vpop.f32.mrb[0].mxu0
    %v2293 = vpop.f32.mrb[0].mxu0
    %v2294 = vadd.f32 0.0, %v2293
    %v2295 = vpop.f32.mrb[0].mxu0
    %2296 = vmatprep.mubr.bf16.mxu0 %v2251
    %2297 = vmatmul.mubr.bf16.gmra.mrb[0].mxu0 %v2250
    %v2298 = vpop.f32.mrb[0].mxu0
    %v2299 = vadd.f32 0.0, %v2298
    %v2300 = vpop.f32.mrb[0].mxu0
    %v2301 = vpop.f32.mrb[0].mxu0
    %v2302 = vadd.f32 0.0, %v2301
    %v2303 = vpop.f32.mrb[0].mxu0
    %2304 = vmatprep.mubr.bf16.mxu0 %v2253
    %2305 = vmatmul.mubr.bf16.gmra.mrb[0].mxu0 %v2252
    %v2306 = vpop.f32.mrb[0].mxu0
    %v2307 = vadd.f32 0.0, %v2306
    %v2308 = vpop.f32.mrb[0].mxu0
    %v2309 = vpop.f32.mrb[0].mxu0
    %v2310 = vadd.f32 0.0, %v2309
    %v2311 = vpop.f32.mrb[0].mxu0
    %2312 = vmatprep.mubr.bf16.mxu0 %v2255
    %2313 = vmatmul.mubr.bf16.gmra.mrb[0].mxu0 %v2254
    %v2314 = vpop.f32.mrb[0].mxu0
    %v2315 = vadd.f32 0.0, %v2314
    %v2316 = vpop.f32.mrb[0].mxu0
    %v2317 = vpop.f32.mrb[0].mxu0
    %v2318 = vadd.f32 0.0, %v2317
    %v2319 = vpop.f32.mrb[0].mxu0
    %2320 = vdwg.mxu0
    %v2321 = vmul.bf16 %v1541, %v1617
    %v2322 = vmul.bf16 %v1542, %v1618
    %v2323 = vmul.bf16 %v1543, %v1619
    %v2324 = vmul.bf16 %v1544, %v1620
    %v2325 = vmul.bf16 %v1541, %v1621
    %v2326 = vmul.bf16 %v1542, %v1622
    %v2327 = vmul.bf16 %v1543, %v1623
    %v2328 = vmul.bf16 %v1544, %v1624
    %v2329 = vmul.bf16 %v1541, %v1625
    %v2330 = vmul.bf16 %v1542, %v1626
    %v2331 = vmul.bf16 %v1543, %v1627
    %v2332 = vmul.bf16 %v1544, %v1628
    %v2333 = vmul.bf16 %v1541, %v1629
    %v2334 = vmul.bf16 %v1542, %v1630
    %v2335 = vmul.bf16 %v1543, %v1631
    %v2336 = vmul.bf16 %v1544, %v1632
    %v2337 = vmul.bf16 %v1549, %v1617
    %v2338 = vmul.bf16 %v1550, %v1618
    %v2339 = vmul.bf16 %v1551, %v1619
    %v2340 = vmul.bf16 %v1552, %v1620
    %v2341 = vmul.bf16 %v1549, %v1621
    %v2342 = vmul.bf16 %v1550, %v1622
    %v2343 = vmul.bf16 %v1551, %v1623
    %v2344 = vmul.bf16 %v1552, %v1624
    %v2345 = vmul.bf16 %v1549, %v1625
    %v2346 = vmul.bf16 %v1550, %v1626
    %v2347 = vmul.bf16 %v1551, %v1627
    %v2348 = vmul.bf16 %v1552, %v1628
    %v2349 = vmul.bf16 %v1549, %v1629
    %v2350 = vmul.bf16 %v1550, %v1630
    %v2351 = vmul.bf16 %v1551, %v1631
    %v2352 = vmul.bf16 %v1552, %v1632
    %v2354 = vsel %vm517, %v1533, 0
    %v2357 = vsel %vm517, %v1534, 0
    %v2360 = vsel %vm517, %v1535, 0
    %v2363 = vsel %vm517, %v1536, 0
    %v2366 = vsel %vm517, %v2321, 0
    %v2369 = vsel %vm517, %v2322, 0
    %v2372 = vsel %vm517, %v2323, 0
    %v2375 = vsel %vm517, %v2324, 0
    %v2378 = vsel %vm517, %v2325, 0
    %v2381 = vsel %vm517, %v2326, 0
    %v2384 = vsel %vm517, %v2327, 0
    %v2387 = vsel %vm517, %v2328, 0
    %v2390 = vsel %vm517, %v2329, 0
    %v2393 = vsel %vm517, %v2330, 0
    %v2396 = vsel %vm517, %v2331, 0
    %v2399 = vsel %vm517, %v2332, 0
    %v2402 = vsel %vm517, %v2333, 0
    %v2405 = vsel %vm517, %v2334, 0
    %v2408 = vsel %vm517, %v2335, 0
    %v2411 = vsel %vm517, %v2336, 0
    %2413 = vmatprep.subr.bf16.mxu0 0
    %2414 = vmatpush1.bf16.xpose.msra.mxu0 %v2366
    %2415 = vmatprep.subr.bf16.mxu0 0
    %2416 = vmatpush1.bf16.xpose.msra.mxu0 %v2369
    %2417 = vmatprep.subr.bf16.mxu0 0
    %2418 = vmatpush1.bf16.xpose.msra.mxu0 %v2372
    %2419 = vmatprep.subr.bf16.mxu0 0
    %2420 = vmatpush1.bf16.xpose.msra.mxu0 %v2375
    %2421 = vmatprep.subr.bf16.mxu0 0
    %2422 = vmatpush1.bf16.xpose.msra.mxu0 %v2378
    %2423 = vmatprep.subr.bf16.mxu0 0
    %2424 = vmatpush1.bf16.xpose.msra.mxu0 %v2381
    %2425 = vmatprep.subr.bf16.mxu0 0
    %2426 = vmatpush1.bf16.xpose.msra.mxu0 %v2384
    %2427 = vmatprep.subr.bf16.mxu0 0
    %2428 = vmatpush1.bf16.xpose.msra.mxu0 %v2387
    %2429 = vmatprep.subr.bf16.mxu0 0
    %2430 = vmatpush1.bf16.xpose.msra.mxu0 %v2390
    %2431 = vmatprep.subr.bf16.mxu0 0
    %2432 = vmatpush1.bf16.xpose.msra.mxu0 %v2393
    %2433 = vmatprep.subr.bf16.mxu0 0
    %2434 = vmatpush1.bf16.xpose.msra.mxu0 %v2396
    %2435 = vmatprep.subr.bf16.mxu0 0
    %2436 = vmatpush1.bf16.xpose.msra.mxu0 %v2399
    %2437 = vmatprep.subr.bf16.mxu0 0
    %2438 = vmatpush1.bf16.xpose.msra.mxu0 %v2402
    %2439 = vmatprep.subr.bf16.mxu0 0
    %2440 = vmatpush1.bf16.xpose.msra.mxu0 %v2405
    %2441 = vmatprep.subr.bf16.mxu0 0
    %2442 = vmatpush1.bf16.xpose.msra.mxu0 %v2408
    %2443 = vmatprep.subr.bf16.mxu0 0
    %2444 = vmatpush1.bf16.xpose.msra.mxu0 %v2411
    %2445 = vmatprep.mubr.bf16.mxu0 0
    %2446 = vmatmul.mubr.bf16.gmra.mrb[0].mxu0 %v2354
    %v2447 = vpop.f32.mrb[0].mxu0
    %v2448 = vadd.f32 0.0, %v2447
    %v2449 = vpop.f32.mrb[0].mxu0
    %v2450 = vadd.f32 0.0, %v2449
    %v2451 = vpop.f32.mrb[0].mxu0
    %v2452 = vadd.f32 0.0, %v2451
    %v2453 = vpop.f32.mrb[0].mxu0
    %v2454 = vadd.f32 0.0, %v2453
    %2455 = vmatprep.mubr.bf16.mxu0 0
    %2456 = vmatmul.mubr.bf16.gmra.mrb[0].mxu0 %v2357
    %v2457 = vpop.f32.mrb[0].mxu0
    %v2458 = vadd.f32 0.0, %v2457
    %v2459 = vpop.f32.mrb[0].mxu0
    %v2460 = vadd.f32 0.0, %v2459
    %v2461 = vpop.f32.mrb[0].mxu0
    %v2462 = vadd.f32 0.0, %v2461
    %v2463 = vpop.f32.mrb[0].mxu0
    %v2464 = vadd.f32 0.0, %v2463
    %2465 = vmatprep.mubr.bf16.mxu0 0
    %2466 = vmatmul.mubr.bf16.gmra.mrb[0].mxu0 %v2360
    %v2467 = vpop.f32.mrb[0].mxu0
    %v2468 = vadd.f32 0.0, %v2467
    %v2469 = vpop.f32.mrb[0].mxu0
    %v2470 = vadd.f32 0.0, %v2469
    %v2471 = vpop.f32.mrb[0].mxu0
    %v2472 = vadd.f32 0.0, %v2471
    %v2473 = vpop.f32.mrb[0].mxu0
    %v2474 = vadd.f32 0.0, %v2473
    %2475 = vmatprep.mubr.bf16.mxu0 0
    %2476 = vmatmul.mubr.bf16.gmra.mrb[0].mxu0 %v2363
    %v2477 = vpop.f32.mrb[0].mxu0
    %v2478 = vadd.f32 0.0, %v2477
    %v2479 = vpop.f32.mrb[0].mxu0
    %v2480 = vadd.f32 0.0, %v2479
    %v2481 = vpop.f32.mrb[0].mxu0
    %v2482 = vadd.f32 0.0, %v2481
    %v2483 = vpop.f32.mrb[0].mxu0
    %v2484 = vadd.f32 0.0, %v2483
    %2485 = vdwg.mxu0
    %v2486 = vsel %vm1814, %v2448, -inf
    %2487 = vmax.xlane.f32.xlu0 %v2486
    %v2488 = vpop.xlane.xlu0 %2487
    %v2489 = vsel %vm1814, %v2452, -inf
    %2490 = vmax.xlane.f32.xlu0 %v2489
    %v2491 = vpop.xlane.xlu0 %2490
    %v2492 = vsel %vm1814, %v2458, -inf
    %2493 = vmax.xlane.f32.xlu0 %v2492
    %v2494 = vpop.xlane.xlu0 %2493
    %v2495 = vsel %vm1814, %v2462, -inf
    %2496 = vmax.xlane.f32.xlu0 %v2495
    %v2497 = vpop.xlane.xlu0 %2496
    %v2498 = vsel %vm1814, %v2468, -inf
    %2499 = vmax.xlane.f32.xlu0 %v2498
    %v2500 = vpop.xlane.xlu0 %2499
    %v2501 = vsel %vm1814, %v2472, -inf
    %2502 = vmax.xlane.f32.xlu0 %v2501
    %v2503 = vpop.xlane.xlu0 %2502
    %v2504 = vsel %vm1814, %v2478, -inf
    %2505 = vmax.xlane.f32.xlu0 %v2504
    %v2506 = vpop.xlane.xlu0 %2505
    %v2507 = vsel %vm1814, %v2482, -inf
    %2508 = vmax.xlane.f32.xlu0 %v2507
    %v2509 = vpop.xlane.xlu0 %2508
    %v2510 = vsub.f32 %v2448, %v2488
    %v2511 = vsub.f32 %v2452, %v2491
    %v2512 = vsub.f32 %v2458, %v2494
    %v2513 = vsub.f32 %v2462, %v2497
    %v2514 = vsub.f32 %v2468, %v2500
    %v2515 = vsub.f32 %v2472, %v2503
    %v2516 = vsub.f32 %v2478, %v2506
    %v2517 = vsub.f32 %v2482, %v2509
    %v2518 = vmul.f32 %v2510, 1.442695
    %v2519 = vpow.pop %v2518
    %v2520 = vmul.f32 %v2511, 1.442695
    %v2521 = vpow.pop %v2520
    %v2522 = vmul.f32 %v2512, 1.442695
    %v2523 = vpow.pop %v2522
    %v2524 = vmul.f32 %v2513, 1.442695
    %v2525 = vpow.pop %v2524
    %v2526 = vmul.f32 %v2514, 1.442695
    %v2527 = vpow.pop %v2526
    %v2528 = vmul.f32 %v2515, 1.442695
    %v2529 = vpow.pop %v2528
    %v2530 = vmul.f32 %v2516, 1.442695
    %v2531 = vpow.pop %v2530
    %v2532 = vmul.f32 %v2517, 1.442695
    %v2533 = vpow.pop %v2532
    %v2534 = vsel %vm1814, %v2519, 0.0
    %2535 = vadd.xlane.f32.xlu0 %v2534
    %v2536 = vpop.xlane.xlu0 %2535
    %v2537 = vsel %vm1814, %v2521, 0.0
    %2538 = vadd.xlane.f32.xlu0 %v2537
    %v2539 = vpop.xlane.xlu0 %2538
    %v2540 = vsel %vm1814, %v2523, 0.0
    %2541 = vadd.xlane.f32.xlu0 %v2540
    %v2542 = vpop.xlane.xlu0 %2541
    %v2543 = vsel %vm1814, %v2525, 0.0
    %2544 = vadd.xlane.f32.xlu0 %v2543
    %v2545 = vpop.xlane.xlu0 %2544
    %v2546 = vsel %vm1814, %v2527, 0.0
    %2547 = vadd.xlane.f32.xlu0 %v2546
    %v2548 = vpop.xlane.xlu0 %2547
    %v2549 = vsel %vm1814, %v2529, 0.0
    %2550 = vadd.xlane.f32.xlu0 %v2549
    %v2551 = vpop.xlane.xlu0 %2550
    %v2552 = vsel %vm1814, %v2531, 0.0
    %2553 = vadd.xlane.f32.xlu0 %v2552
    %v2554 = vpop.xlane.xlu0 %2553
    %v2555 = vsel %vm1814, %v2533, 0.0
    %2556 = vadd.xlane.f32.xlu0 %v2555
    %v2557 = vpop.xlane.xlu0 %2556
    %v2558 = vrcp.pop %v2536
    %v2559 = vrcp.pop %v2539
    %v2560 = vrcp.pop %v2542
    %v2561 = vrcp.pop %v2545
    %v2562 = vrcp.pop %v2548
    %v2563 = vrcp.pop %v2551
    %v2564 = vrcp.pop %v2554
    %v2565 = vrcp.pop %v2557
    %v2566 = vmul.f32 %v2519, %v2558
    %v2567 = vmul.f32 %v2521, %v2559
    %v2568 = vmul.f32 %v2523, %v2560
    %v2569 = vmul.f32 %v2525, %v2561
    %v2570 = vmul.f32 %v2527, %v2562
    %v2571 = vmul.f32 %v2529, %v2563
    %v2572 = vmul.f32 %v2531, %v2564
    %v2573 = vmul.f32 %v2533, %v2565
    %v2574 = vsel %vm1903, %v2448, -inf
    %2575 = vmax.xlane.f32.xlu0 %v2574
    %v2576 = vpop.xlane.xlu0 %2575
    %v2577 = vsel %vm1903, %v2452, -inf
    %2578 = vmax.xlane.f32.xlu0 %v2577
    %v2579 = vpop.xlane.xlu0 %2578
    %v2580 = vsel %vm1903, %v2458, -inf
    %2581 = vmax.xlane.f32.xlu0 %v2580
    %v2582 = vpop.xlane.xlu0 %2581
    %v2583 = vsel %vm1903, %v2462, -inf
    %2584 = vmax.xlane.f32.xlu0 %v2583
    %v2585 = vpop.xlane.xlu0 %2584
    %v2586 = vsel %vm1903, %v2468, -inf
    %2587 = vmax.xlane.f32.xlu0 %v2586
    %v2588 = vpop.xlane.xlu0 %2587
    %v2589 = vsel %vm1903, %v2472, -inf
    %2590 = vmax.xlane.f32.xlu0 %v2589
    %v2591 = vpop.xlane.xlu0 %2590
    %v2592 = vsel %vm1903, %v2478, -inf
    %2593 = vmax.xlane.f32.xlu0 %v2592
    %v2594 = vpop.xlane.xlu0 %2593
    %v2595 = vsel %vm1903, %v2482, -inf
    %2596 = vmax.xlane.f32.xlu0 %v2595
    %v2597 = vpop.xlane.xlu0 %2596
    %v2598 = vsub.f32 %v2448, %v2576
    %v2599 = vsub.f32 %v2452, %v2579
    %v2600 = vsub.f32 %v2458, %v2582
    %v2601 = vsub.f32 %v2462, %v2585
    %v2602 = vsub.f32 %v2468, %v2588
    %v2603 = vsub.f32 %v2472, %v2591
    %v2604 = vsub.f32 %v2478, %v2594
    %v2605 = vsub.f32 %v2482, %v2597
    %v2606 = vmul.f32 %v2598, 1.442695
    %v2607 = vpow.pop %v2606
    %v2608 = vmul.f32 %v2599, 1.442695
    %v2609 = vpow.pop %v2608
    %v2610 = vmul.f32 %v2600, 1.442695
    %v2611 = vpow.pop %v2610
    %v2612 = vmul.f32 %v2601, 1.442695
    %v2613 = vpow.pop %v2612
    %v2614 = vmul.f32 %v2602, 1.442695
    %v2615 = vpow.pop %v2614
    %v2616 = vmul.f32 %v2603, 1.442695
    %v2617 = vpow.pop %v2616
    %v2618 = vmul.f32 %v2604, 1.442695
    %v2619 = vpow.pop %v2618
    %v2620 = vmul.f32 %v2605, 1.442695
    %v2621 = vpow.pop %v2620
    %2630 = vrot.lane.b32.xlu0 %v2607, 64
    %v2631 = vpop.permute.xlu0 %2630
    %2632 = vrot.lane.b32.xlu0 %v2609, 64
    %v2633 = vpop.permute.xlu0 %2632
    %2634 = vrot.lane.b32.xlu0 %v2611, 64
    %v2635 = vpop.permute.xlu0 %2634
    %2636 = vrot.lane.b32.xlu0 %v2613, 64
    %v2637 = vpop.permute.xlu0 %2636
    %2638 = vrot.lane.b32.xlu0 %v2615, 64
    %v2639 = vpop.permute.xlu0 %2638
    %2640 = vrot.lane.b32.xlu0 %v2617, 64
    %v2641 = vpop.permute.xlu0 %2640
    %2642 = vrot.lane.b32.xlu0 %v2619, 64
    %v2643 = vpop.permute.xlu0 %2642
    %2644 = vrot.lane.b32.xlu0 %v2621, 64
    %v2645 = vpop.permute.xlu0 %2644
    %v2654 = vsel %vm1814, %v2631, 0.0
    %2655 = vadd.xlane.f32.xlu0 %v2654
    %v2656 = vpop.xlane.xlu0 %2655
    %v2657 = vsel %vm1814, %v2633, 0.0
    %2658 = vadd.xlane.f32.xlu0 %v2657
    %v2659 = vpop.xlane.xlu0 %2658
    %v2660 = vsel %vm1814, %v2635, 0.0
    %2661 = vadd.xlane.f32.xlu0 %v2660
    %v2662 = vpop.xlane.xlu0 %2661
    %v2663 = vsel %vm1814, %v2637, 0.0
    %2664 = vadd.xlane.f32.xlu0 %v2663
    %v2665 = vpop.xlane.xlu0 %2664
    %v2666 = vsel %vm1814, %v2639, 0.0
    %2667 = vadd.xlane.f32.xlu0 %v2666
    %v2668 = vpop.xlane.xlu0 %2667
    %v2669 = vsel %vm1814, %v2641, 0.0
    %2670 = vadd.xlane.f32.xlu0 %v2669
    %v2671 = vpop.xlane.xlu0 %2670
    %v2672 = vsel %vm1814, %v2643, 0.0
    %2673 = vadd.xlane.f32.xlu0 %v2672
    %v2674 = vpop.xlane.xlu0 %2673
    %v2675 = vsel %vm1814, %v2645, 0.0
    %2676 = vadd.xlane.f32.xlu0 %v2675
    %v2677 = vpop.xlane.xlu0 %2676
    %v2678 = vrcp.pop %v2656
    %v2679 = vrcp.pop %v2659
    %v2680 = vrcp.pop %v2662
    %v2681 = vrcp.pop %v2665
    %v2682 = vrcp.pop %v2668
    %v2683 = vrcp.pop %v2671
    %v2684 = vrcp.pop %v2674
    %v2685 = vrcp.pop %v2677
    %v2686 = vmul.f32 %v2607, %v2678
    %v2687 = vmul.f32 %v2609, %v2679
    %v2688 = vmul.f32 %v2611, %v2680
    %v2689 = vmul.f32 %v2613, %v2681
    %v2690 = vmul.f32 %v2615, %v2682
    %v2691 = vmul.f32 %v2617, %v2683
    %v2692 = vmul.f32 %v2619, %v2684
    %v2693 = vmul.f32 %v2621, %v2685
    %v2694 = vsel %vm1814, %v2450, -inf
    %2695 = vmax.xlane.f32.xlu0 %v2694
    %v2696 = vpop.xlane.xlu0 %2695
    %v2697 = vsel %vm1814, %v2454, -inf
    %2698 = vmax.xlane.f32.xlu0 %v2697
    %v2699 = vpop.xlane.xlu0 %2698
    %v2700 = vsel %vm1814, %v2460, -inf
    %2701 = vmax.xlane.f32.xlu0 %v2700
    %v2702 = vpop.xlane.xlu0 %2701
    %v2703 = vsel %vm1814, %v2464, -inf
    %2704 = vmax.xlane.f32.xlu0 %v2703
    %v2705 = vpop.xlane.xlu0 %2704
    %v2706 = vsel %vm1814, %v2470, -inf
    %2707 = vmax.xlane.f32.xlu0 %v2706
    %v2708 = vpop.xlane.xlu0 %2707
    %v2709 = vsel %vm1814, %v2474, -inf
    %2710 = vmax.xlane.f32.xlu0 %v2709
    %v2711 = vpop.xlane.xlu0 %2710
    %v2712 = vsel %vm1814, %v2480, -inf
    %2713 = vmax.xlane.f32.xlu0 %v2712
    %v2714 = vpop.xlane.xlu0 %2713
    %v2715 = vsel %vm1814, %v2484, -inf
    %2716 = vmax.xlane.f32.xlu0 %v2715
    %v2717 = vpop.xlane.xlu0 %2716
    %v2718 = vsub.f32 %v2450, %v2696
    %v2719 = vsub.f32 %v2454, %v2699
    %v2720 = vsub.f32 %v2460, %v2702
    %v2721 = vsub.f32 %v2464, %v2705
    %v2722 = vsub.f32 %v2470, %v2708
    %v2723 = vsub.f32 %v2474, %v2711
    %v2724 = vsub.f32 %v2480, %v2714
    %v2725 = vsub.f32 %v2484, %v2717
    %v2726 = vmul.f32 %v2718, 1.442695
    %v2727 = vpow.pop %v2726
    %v2728 = vmul.f32 %v2719, 1.442695
    %v2729 = vpow.pop %v2728
    %v2730 = vmul.f32 %v2720, 1.442695
    %v2731 = vpow.pop %v2730
    %v2732 = vmul.f32 %v2721, 1.442695
    %v2733 = vpow.pop %v2732
    %v2734 = vmul.f32 %v2722, 1.442695
    %v2735 = vpow.pop %v2734
    %v2736 = vmul.f32 %v2723, 1.442695
    %v2737 = vpow.pop %v2736
    %v2738 = vmul.f32 %v2724, 1.442695
    %v2739 = vpow.pop %v2738
    %v2740 = vmul.f32 %v2725, 1.442695
    %v2741 = vpow.pop %v2740
    %v2742 = vsel %vm1814, %v2727, 0.0
    %2743 = vadd.xlane.f32.xlu0 %v2742
    %v2744 = vpop.xlane.xlu0 %2743
    %v2745 = vsel %vm1814, %v2729, 0.0
    %2746 = vadd.xlane.f32.xlu0 %v2745
    %v2747 = vpop.xlane.xlu0 %2746
    %v2748 = vsel %vm1814, %v2731, 0.0
    %2749 = vadd.xlane.f32.xlu0 %v2748
    %v2750 = vpop.xlane.xlu0 %2749
    %v2751 = vsel %vm1814, %v2733, 0.0
    %2752 = vadd.xlane.f32.xlu0 %v2751
    %v2753 = vpop.xlane.xlu0 %2752
    %v2754 = vsel %vm1814, %v2735, 0.0
    %2755 = vadd.xlane.f32.xlu0 %v2754
    %v2756 = vpop.xlane.xlu0 %2755
    %v2757 = vsel %vm1814, %v2737, 0.0
    %2758 = vadd.xlane.f32.xlu0 %v2757
    %v2759 = vpop.xlane.xlu0 %2758
    %v2760 = vsel %vm1814, %v2739, 0.0
    %2761 = vadd.xlane.f32.xlu0 %v2760
    %v2762 = vpop.xlane.xlu0 %2761
    %v2763 = vsel %vm1814, %v2741, 0.0
    %2764 = vadd.xlane.f32.xlu0 %v2763
    %v2765 = vpop.xlane.xlu0 %2764
    %v2766 = vrcp.pop %v2744
    %v2767 = vrcp.pop %v2747
    %v2768 = vrcp.pop %v2750
    %v2769 = vrcp.pop %v2753
    %v2770 = vrcp.pop %v2756
    %v2771 = vrcp.pop %v2759
    %v2772 = vrcp.pop %v2762
    %v2773 = vrcp.pop %v2765
    %v2774 = vmul.f32 %v2727, %v2766
    %v2775 = vmul.f32 %v2729, %v2767
    %v2776 = vmul.f32 %v2731, %v2768
    %v2777 = vmul.f32 %v2733, %v2769
    %v2778 = vmul.f32 %v2735, %v2770
    %v2779 = vmul.f32 %v2737, %v2771
    %v2780 = vmul.f32 %v2739, %v2772
    %v2781 = vmul.f32 %v2741, %v2773
    %v2782 = vsel %vm1903, %v2450, -inf
    %2783 = vmax.xlane.f32.xlu0 %v2782
    %v2784 = vpop.xlane.xlu0 %2783
    %v2785 = vsel %vm1903, %v2454, -inf
    %2786 = vmax.xlane.f32.xlu0 %v2785
    %v2787 = vpop.xlane.xlu0 %2786
    %v2788 = vsel %vm1903, %v2460, -inf
    %2789 = vmax.xlane.f32.xlu0 %v2788
    %v2790 = vpop.xlane.xlu0 %2789
    %v2791 = vsel %vm1903, %v2464, -inf
    %2792 = vmax.xlane.f32.xlu0 %v2791
    %v2793 = vpop.xlane.xlu0 %2792
    %v2794 = vsel %vm1903, %v2470, -inf
    %2795 = vmax.xlane.f32.xlu0 %v2794
    %v2796 = vpop.xlane.xlu0 %2795
    %v2797 = vsel %vm1903, %v2474, -inf
    %2798 = vmax.xlane.f32.xlu0 %v2797
    %v2799 = vpop.xlane.xlu0 %2798
    %v2800 = vsel %vm1903, %v2480, -inf
    %2801 = vmax.xlane.f32.xlu0 %v2800
    %v2802 = vpop.xlane.xlu0 %2801
    %v2803 = vsel %vm1903, %v2484, -inf
    %2804 = vmax.xlane.f32.xlu0 %v2803
    %v2805 = vpop.xlane.xlu0 %2804
    %v2806 = vsub.f32 %v2450, %v2784
    %v2807 = vsub.f32 %v2454, %v2787
    %v2808 = vsub.f32 %v2460, %v2790
    %v2809 = vsub.f32 %v2464, %v2793
    %v2810 = vsub.f32 %v2470, %v2796
    %v2811 = vsub.f32 %v2474, %v2799
    %v2812 = vsub.f32 %v2480, %v2802
    %v2813 = vsub.f32 %v2484, %v2805
    %v2814 = vmul.f32 %v2806, 1.442695
    %v2815 = vpow.pop %v2814
    %v2816 = vmul.f32 %v2807, 1.442695
    %v2817 = vpow.pop %v2816
    %v2818 = vmul.f32 %v2808, 1.442695
    %v2819 = vpow.pop %v2818
    %v2820 = vmul.f32 %v2809, 1.442695
    %v2821 = vpow.pop %v2820
    %v2822 = vmul.f32 %v2810, 1.442695
    %v2823 = vpow.pop %v2822
    %v2824 = vmul.f32 %v2811, 1.442695
    %v2825 = vpow.pop %v2824
    %v2826 = vmul.f32 %v2812, 1.442695
    %v2827 = vpow.pop %v2826
    %v2828 = vmul.f32 %v2813, 1.442695
    %v2829 = vpow.pop %v2828
    %2838 = vrot.lane.b32.xlu0 %v2815, 64
    %v2839 = vpop.permute.xlu0 %2838
    %2840 = vrot.lane.b32.xlu0 %v2817, 64
    %v2841 = vpop.permute.xlu0 %2840
    %2842 = vrot.lane.b32.xlu0 %v2819, 64
    %v2843 = vpop.permute.xlu0 %2842
    %2844 = vrot.lane.b32.xlu0 %v2821, 64
    %v2845 = vpop.permute.xlu0 %2844
    %2846 = vrot.lane.b32.xlu0 %v2823, 64
    %v2847 = vpop.permute.xlu0 %2846
    %2848 = vrot.lane.b32.xlu0 %v2825, 64
    %v2849 = vpop.permute.xlu0 %2848
    %2850 = vrot.lane.b32.xlu0 %v2827, 64
    %v2851 = vpop.permute.xlu0 %2850
    %2852 = vrot.lane.b32.xlu0 %v2829, 64
    %v2853 = vpop.permute.xlu0 %2852
    %v2862 = vsel %vm1814, %v2839, 0.0
    %2863 = vadd.xlane.f32.xlu0 %v2862
    %v2864 = vpop.xlane.xlu0 %2863
    %v2865 = vsel %vm1814, %v2841, 0.0
    %2866 = vadd.xlane.f32.xlu0 %v2865
    %v2867 = vpop.xlane.xlu0 %2866
    %v2868 = vsel %vm1814, %v2843, 0.0
    %2869 = vadd.xlane.f32.xlu0 %v2868
    %v2870 = vpop.xlane.xlu0 %2869
    %v2871 = vsel %vm1814, %v2845, 0.0
    %2872 = vadd.xlane.f32.xlu0 %v2871
    %v2873 = vpop.xlane.xlu0 %2872
    %v2874 = vsel %vm1814, %v2847, 0.0
    %2875 = vadd.xlane.f32.xlu0 %v2874
    %v2876 = vpop.xlane.xlu0 %2875
    %v2877 = vsel %vm1814, %v2849, 0.0
    %2878 = vadd.xlane.f32.xlu0 %v2877
    %v2879 = vpop.xlane.xlu0 %2878
    %v2880 = vsel %vm1814, %v2851, 0.0
    %2881 = vadd.xlane.f32.xlu0 %v2880
    %v2882 = vpop.xlane.xlu0 %2881
    %v2883 = vsel %vm1814, %v2853, 0.0
    %2884 = vadd.xlane.f32.xlu0 %v2883
    %v2885 = vpop.xlane.xlu0 %2884
    %v2886 = vrcp.pop %v2864
    %v2887 = vrcp.pop %v2867
    %v2888 = vrcp.pop %v2870
    %v2889 = vrcp.pop %v2873
    %v2890 = vrcp.pop %v2876
    %v2891 = vrcp.pop %v2879
    %v2892 = vrcp.pop %v2882
    %v2893 = vrcp.pop %v2885
    %v2894 = vmul.f32 %v2815, %v2886
    %v2895 = vmul.f32 %v2817, %v2887
    %v2896 = vmul.f32 %v2819, %v2888
    %v2897 = vmul.f32 %v2821, %v2889
    %v2898 = vmul.f32 %v2823, %v2890
    %v2899 = vmul.f32 %v2825, %v2891
    %v2900 = vmul.f32 %v2827, %v2892
    %v2901 = vmul.f32 %v2829, %v2893
    %v2902 = vsel %vm1814, %v2566, %v2686
    %v2903 = vsel %vm1814, %v2567, %v2687
    %v2904 = vsel %vm1814, %v2568, %v2688
    %v2905 = vsel %vm1814, %v2569, %v2689
    %v2906 = vsel %vm1814, %v2570, %v2690
    %v2907 = vsel %vm1814, %v2571, %v2691
    %v2908 = vsel %vm1814, %v2572, %v2692
    %v2909 = vsel %vm1814, %v2573, %v2693
    %v2910 = vsel %vm1814, %v2774, %v2894
    %v2911 = vsel %vm1814, %v2775, %v2895
    %v2912 = vsel %vm1814, %v2776, %v2896
    %v2913 = vsel %vm1814, %v2777, %v2897
    %v2914 = vsel %vm1814, %v2778, %v2898
    %v2915 = vsel %vm1814, %v2779, %v2899
    %v2916 = vsel %vm1814, %v2780, %v2900
    %v2917 = vsel %vm1814, %v2781, %v2901
    %v2918 = vpack.c.bf16 %v2903, %v2902
    %v2919 = vpack.c.bf16 %v2911, %v2910
    %v2920 = vpack.c.bf16 %v2905, %v2904
    %v2921 = vpack.c.bf16 %v2913, %v2912
    %v2922 = vpack.c.bf16 %v2907, %v2906
    %v2923 = vpack.c.bf16 %v2915, %v2914
    %v2924 = vpack.c.bf16 %v2909, %v2908
    %v2925 = vpack.c.bf16 %v2917, %v2916
    %2926 = vmatprep.subr.bf16.mxu0 0
    %2927 = vmatpush1.bf16.msra.mxu0 %v2337
    %2928 = vmatprep.subr.bf16.mxu0 0
    %2929 = vmatpush1.bf16.msra.mxu0 %v2338
    %2930 = vmatprep.subr.bf16.mxu0 0
    %2931 = vmatpush1.bf16.msra.mxu0 %v2339
    %2932 = vmatprep.subr.bf16.mxu0 0
    %2933 = vmatpush1.bf16.msra.mxu0 %v2340
    %2934 = vmatprep.subr.bf16.mxu0 0
    %2935 = vmatpush1.bf16.msra.mxu0 %v2341
    %2936 = vmatprep.subr.bf16.mxu0 0
    %2937 = vmatpush1.bf16.msra.mxu0 %v2342
    %2938 = vmatprep.subr.bf16.mxu0 0
    %2939 = vmatpush1.bf16.msra.mxu0 %v2343
    %2940 = vmatprep.subr.bf16.mxu0 0
    %2941 = vmatpush1.bf16.msra.mxu0 %v2344
    %2942 = vmatprep.subr.bf16.mxu0 0
    %2943 = vmatpush1.bf16.msra.mxu0 %v2345
    %2944 = vmatprep.subr.bf16.mxu0 0
    %2945 = vmatpush1.bf16.msra.mxu0 %v2346
    %2946 = vmatprep.subr.bf16.mxu0 0
    %2947 = vmatpush1.bf16.msra.mxu0 %v2347
    %2948 = vmatprep.subr.bf16.mxu0 0
    %2949 = vmatpush1.bf16.msra.mxu0 %v2348
    %2950 = vmatprep.subr.bf16.mxu0 0
    %2951 = vmatpush1.bf16.msra.mxu0 %v2349
    %2952 = vmatprep.subr.bf16.mxu0 0
    %2953 = vmatpush1.bf16.msra.mxu0 %v2350
    %2954 = vmatprep.subr.bf16.mxu0 0
    %2955 = vmatpush1.bf16.msra.mxu0 %v2351
    %2956 = vmatprep.subr.bf16.mxu0 0
    %2957 = vmatpush1.bf16.msra.mxu0 %v2352
    %2958 = vmatprep.mubr.bf16.mxu0 %v2919
    %2959 = vmatmul.mubr.bf16.gmra.mrb[0].mxu0 %v2918
    %v2960 = vpop.f32.mrb[0].mxu0
    %v2961 = vadd.f32 0.0, %v2960
    %v2962 = vpop.f32.mrb[0].mxu0
    %v2963 = vpop.f32.mrb[0].mxu0
    %v2964 = vadd.f32 0.0, %v2963
    %v2965 = vpop.f32.mrb[0].mxu0
    %2966 = vmatprep.mubr.bf16.mxu0 %v2921
    %2967 = vmatmul.mubr.bf16.gmra.mrb[0].mxu0 %v2920
    %v2968 = vpop.f32.mrb[0].mxu0
    %v2969 = vadd.f32 0.0, %v2968
    %v2970 = vpop.f32.mrb[0].mxu0
    %v2971 = vpop.f32.mrb[0].mxu0
    %v2972 = vadd.f32 0.0, %v2971
    %v2973 = vpop.f32.mrb[0].mxu0
    %2974 = vmatprep.mubr.bf16.mxu0 %v2923
    %2975 = vmatmul.mubr.bf16.gmra.mrb[0].mxu0 %v2922
    %v2976 = vpop.f32.mrb[0].mxu0
    %v2977 = vadd.f32 0.0, %v2976
    %v2978 = vpop.f32.mrb[0].mxu0
    %v2979 = vpop.f32.mrb[0].mxu0
    %v2980 = vadd.f32 0.0, %v2979
    %v2981 = vpop.f32.mrb[0].mxu0
    %2982 = vmatprep.mubr.bf16.mxu0 %v2925
    %2983 = vmatmul.mubr.bf16.gmra.mrb[0].mxu0 %v2924
    %v2984 = vpop.f32.mrb[0].mxu0
    %v2985 = vadd.f32 0.0, %v2984
    %v2986 = vpop.f32.mrb[0].mxu0
    %v2987 = vpop.f32.mrb[0].mxu0
    %v2988 = vadd.f32 0.0, %v2987
    %v2989 = vpop.f32.mrb[0].mxu0
    %2990 = vdwg.mxu0
    %v2991 = vpack.c.bf16 %v2294, %v2291
    %v2992 = vpack.c.bf16 %v2302, %v2299
    %v2993 = vpack.c.bf16 %v2310, %v2307
    %v2994 = vpack.c.bf16 %v2318, %v2315
    %v2995 = vpack.c.bf16 %v2964, %v2961
    %v2996 = vpack.c.bf16 %v2972, %v2969
    %v2997 = vpack.c.bf16 %v2980, %v2977
    %v2998 = vpack.c.bf16 %v2988, %v2985
    %v2999 = vld [vmem:[%s37] sm:$0xf]
    %v3000 = vld [vmem:[%s37 + $0x4] sm:$0xf]
    %v3001 = vld [vmem:[%s37 + $0x8] sm:$0xf]
    %v3002 = vld [vmem:[%s37 + $0xc] sm:$0xf]
    %v3007 = vunpack.c.l.b16 %v2999
    %v3008 = vunpack.c.l.b16 %v3000
    %v3009 = vunpack.c.l.b16 %v3001
    %v3010 = vunpack.c.l.b16 %v3002
    %v3011 = vpack.c.b16 %v3008, %v3007
    %v3012 = vpack.c.b16 %v3010, %v3009
    %v3016 = vsel %vm517, %v2991, 0
    %v3019 = vsel %vm517, %v2992, 0
    %v3022 = vsel %vm517, %v2993, 0
    %v3025 = vsel %vm517, %v2994, 0
    %v3028 = vsel %vm517, %v2995, 0
    %v3031 = vsel %vm517, %v2996, 0
    %v3034 = vsel %vm517, %v2997, 0
    %v3037 = vsel %vm517, %v2998, 0
    %3039 = vmatprep.subr.bf16.mxu0 0
    %3040 = vmatpush1.bf16.msra.mxu0 %v3011
    %3041 = vmatprep.subr.bf16.mxu0 0
    %3042 = vmatpush1.bf16.msra.mxu0 %v3012
    %3043 = vmatprep.subr.bf16.mxu0 0
    %3044 = vmatpush1.bf16.msra.mxu0 0
    %3045 = vmatprep.subr.bf16.mxu0 0
    %3046 = vmatpush1.bf16.msra.mxu0 0
    %3047 = vmatprep.subr.bf16.mxu0 0
    %3048 = vmatpush1.bf16.msra.mxu0 0
    %3049 = vmatprep.subr.bf16.mxu0 0
    %3050 = vmatpush1.bf16.msra.mxu0 0
    %3051 = vmatprep.subr.bf16.mxu0 0
    %3052 = vmatpush1.bf16.msra.mxu0 0
    %3053 = vmatprep.subr.bf16.mxu0 0
    %3054 = vmatpush1.bf16.msra.mxu0 0
    %3055 = vmatprep.subr.bf16.mxu0 0
    %3056 = vmatpush1.bf16.msra.mxu0 0
    %3057 = vmatprep.subr.bf16.mxu0 0
    %3058 = vmatpush1.bf16.msra.mxu0 0
    %3059 = vmatprep.subr.bf16.mxu0 0
    %3060 = vmatpush1.bf16.msra.mxu0 0
    %3061 = vmatprep.subr.bf16.mxu0 0
    %3062 = vmatpush1.bf16.msra.mxu0 0
    %3063 = vmatprep.subr.bf16.mxu0 0
    %3064 = vmatpush1.bf16.msra.mxu0 0
    %3065 = vmatprep.subr.bf16.mxu0 0
    %3066 = vmatpush1.bf16.msra.mxu0 0
    %3067 = vmatprep.subr.bf16.mxu0 0
    %3068 = vmatpush1.bf16.msra.mxu0 0
    %3069 = vmatprep.subr.bf16.mxu0 0
    %3070 = vmatpush1.bf16.msra.mxu0 0
    %3071 = vmatprep.mubr.bf16.mxu0 0
    %3072 = vmatmul.mubr.bf16.gmra.mrb[0].mxu0 %v3016
    %v3073 = vpop.f32.mrb[0].mxu0
    %v3074 = vadd.f32 0.0, %v3073
    %v3075 = vpop.f32.mrb[0].mxu0
    %v3076 = vpop.f32.mrb[0].mxu0
    %v3077 = vadd.f32 0.0, %v3076
    %v3078 = vpop.f32.mrb[0].mxu0
    %3079 = vmatprep.mubr.bf16.mxu0 0
    %3080 = vmatmul.mubr.bf16.gmra.mrb[0].mxu0 %v3019
    %v3081 = vpop.f32.mrb[0].mxu0
    %v3082 = vadd.f32 0.0, %v3081
    %v3083 = vpop.f32.mrb[0].mxu0
    %v3084 = vpop.f32.mrb[0].mxu0
    %v3085 = vadd.f32 0.0, %v3084
    %v3086 = vpop.f32.mrb[0].mxu0
    %3087 = vmatprep.mubr.bf16.mxu0 0
    %3088 = vmatmul.mubr.bf16.gmra.mrb[0].mxu0 %v3022
    %v3089 = vpop.f32.mrb[0].mxu0
    %v3090 = vadd.f32 0.0, %v3089
    %v3091 = vpop.f32.mrb[0].mxu0
    %v3092 = vpop.f32.mrb[0].mxu0
    %v3093 = vadd.f32 0.0, %v3092
    %v3094 = vpop.f32.mrb[0].mxu0
    %3095 = vmatprep.mubr.bf16.mxu0 0
    %3096 = vmatmul.mubr.bf16.gmra.mrb[0].mxu0 %v3025
    %v3097 = vpop.f32.mrb[0].mxu0
    %v3098 = vadd.f32 0.0, %v3097
    %v3099 = vpop.f32.mrb[0].mxu0
    %v3100 = vpop.f32.mrb[0].mxu0
    %v3101 = vadd.f32 0.0, %v3100
    %v3102 = vpop.f32.mrb[0].mxu0
    %3103 = vmatprep.mubr.bf16.mxu0 0
    %3104 = vmatmul.mubr.bf16.gmra.mrb[0].mxu0 %v3028
    %v3105 = vpop.f32.mrb[0].mxu0
    %v3106 = vadd.f32 0.0, %v3105
    %v3107 = vpop.f32.mrb[0].mxu0
    %v3108 = vpop.f32.mrb[0].mxu0
    %v3109 = vadd.f32 0.0, %v3108
    %v3110 = vpop.f32.mrb[0].mxu0
    %3111 = vmatprep.mubr.bf16.mxu0 0
    %3112 = vmatmul.mubr.bf16.gmra.mrb[0].mxu0 %v3031
    %v3113 = vpop.f32.mrb[0].mxu0
    %v3114 = vadd.f32 0.0, %v3113
    %v3115 = vpop.f32.mrb[0].mxu0
    %v3116 = vpop.f32.mrb[0].mxu0
    %v3117 = vadd.f32 0.0, %v3116
    %v3118 = vpop.f32.mrb[0].mxu0
    %3119 = vmatprep.mubr.bf16.mxu0 0
    %3120 = vmatmul.mubr.bf16.gmra.mrb[0].mxu0 %v3034
    %v3121 = vpop.f32.mrb[0].mxu0
    %v3122 = vadd.f32 0.0, %v3121
    %v3123 = vpop.f32.mrb[0].mxu0
    %v3124 = vpop.f32.mrb[0].mxu0
    %v3125 = vadd.f32 0.0, %v3124
    %v3126 = vpop.f32.mrb[0].mxu0
    %3127 = vmatprep.mubr.bf16.mxu0 0
    %3128 = vmatmul.mubr.bf16.gmra.mrb[0].mxu0 %v3037
    %v3129 = vpop.f32.mrb[0].mxu0
    %v3130 = vadd.f32 0.0, %v3129
    %v3131 = vpop.f32.mrb[0].mxu0
    %v3132 = vpop.f32.mrb[0].mxu0
    %v3133 = vadd.f32 0.0, %v3132
    %v3134 = vpop.f32.mrb[0].mxu0
    %3135 = vdwg.mxu0
    %v3136 = vadd.f32 %v431, %v3074
    %v3137 = vadd.f32 %v432, %v3077
    %v3138 = vadd.f32 %v433, %v3082
    %v3139 = vadd.f32 %v434, %v3085
    %v3140 = vadd.f32 %v435, %v3090
    %v3141 = vadd.f32 %v436, %v3093
    %v3142 = vadd.f32 %v437, %v3098
    %v3143 = vadd.f32 %v438, %v3101
    %v3144 = vadd.f32 %v439, %v3106
    %v3145 = vadd.f32 %v440, %v3109
    %v3146 = vadd.f32 %v441, %v3114
    %v3147 = vadd.f32 %v442, %v3117
    %v3148 = vadd.f32 %v443, %v3122
    %v3149 = vadd.f32 %v444, %v3125
    %v3150 = vadd.f32 %v445, %v3130
    %v3151 = vadd.f32 %v446, %v3133
    %v3152 = vld [vmem:[%s39] sm:$0x1]
    %v3154 = vlaneseq
    %v3155 = vshrl.u32 %v3154, 7
    %v3156 = vsub.s32 0, %v3155
    %v3157 = vrot.slane %v3152, %v3156
    %v3159 = vadd.f32 %v3136, %v3157
    %v3160 = vadd.f32 %v3137, %v3157
    %v3161 = vadd.f32 %v3138, %v3157
    %v3162 = vadd.f32 %v3139, %v3157
    %v3163 = vadd.f32 %v3140, %v3157
    %v3164 = vadd.f32 %v3141, %v3157
    %v3165 = vadd.f32 %v3142, %v3157
    %v3166 = vadd.f32 %v3143, %v3157
    %v3167 = vadd.f32 %v3144, %v3157
    %v3168 = vadd.f32 %v3145, %v3157
    %v3169 = vadd.f32 %v3146, %v3157
    %v3170 = vadd.f32 %v3147, %v3157
    %v3171 = vadd.f32 %v3148, %v3157
    %v3172 = vadd.f32 %v3149, %v3157
    %v3173 = vadd.f32 %v3150, %v3157
    %v3174 = vadd.f32 %v3151, %v3157
    %v3175 = vld [vmem:[%s41] sm:$0x1]
    %v3176 = vld [vmem:[%s43] sm:$0x1]
    %v3177 = vsel %vm517, %v3159, 0.0
    %3178 = vadd.xlane.f32.xlu0 %v3177
    %v3179 = vpop.xlane.xlu0 %3178
    %v3180 = vsel %vm517, %v3160, 0.0
    %3181 = vadd.xlane.f32.xlu0 %v3180
    %v3182 = vpop.xlane.xlu0 %3181
    %v3183 = vsel %vm517, %v3161, 0.0
    %3184 = vadd.xlane.f32.xlu0 %v3183
    %v3185 = vpop.xlane.xlu0 %3184
    %v3186 = vsel %vm517, %v3162, 0.0
    %3187 = vadd.xlane.f32.xlu0 %v3186
    %v3188 = vpop.xlane.xlu0 %3187
    %v3189 = vsel %vm517, %v3163, 0.0
    %3190 = vadd.xlane.f32.xlu0 %v3189
    %v3191 = vpop.xlane.xlu0 %3190
    %v3192 = vsel %vm517, %v3164, 0.0
    %3193 = vadd.xlane.f32.xlu0 %v3192
    %v3194 = vpop.xlane.xlu0 %3193
    %v3195 = vsel %vm517, %v3165, 0.0
    %3196 = vadd.xlane.f32.xlu0 %v3195
    %v3197 = vpop.xlane.xlu0 %3196
    %v3198 = vsel %vm517, %v3166, 0.0
    %3199 = vadd.xlane.f32.xlu0 %v3198
    %v3200 = vpop.xlane.xlu0 %3199
    %v3201 = vsel %vm517, %v3167, 0.0
    %3202 = vadd.xlane.f32.xlu0 %v3201
    %v3203 = vpop.xlane.xlu0 %3202
    %v3204 = vsel %vm517, %v3168, 0.0
    %3205 = vadd.xlane.f32.xlu0 %v3204
    %v3206 = vpop.xlane.xlu0 %3205
    %v3207 = vsel %vm517, %v3169, 0.0
    %3208 = vadd.xlane.f32.xlu0 %v3207
    %v3209 = vpop.xlane.xlu0 %3208
    %v3210 = vsel %vm517, %v3170, 0.0
    %3211 = vadd.xlane.f32.xlu0 %v3210
    %v3212 = vpop.xlane.xlu0 %3211
    %v3213 = vsel %vm517, %v3171, 0.0
    %3214 = vadd.xlane.f32.xlu0 %v3213
    %v3215 = vpop.xlane.xlu0 %3214
    %v3216 = vsel %vm517, %v3172, 0.0
    %3217 = vadd.xlane.f32.xlu0 %v3216
    %v3218 = vpop.xlane.xlu0 %3217
    %v3219 = vsel %vm517, %v3173, 0.0
    %3220 = vadd.xlane.f32.xlu0 %v3219
    %v3221 = vpop.xlane.xlu0 %3220
    %v3222 = vsel %vm517, %v3174, 0.0
    %3223 = vadd.xlane.f32.xlu0 %v3222
    %v3224 = vpop.xlane.xlu0 %3223
    %v3225 = vmul.f32 %v3179, %v566
    %v3226 = vmul.f32 %v3182, %v566
    %v3227 = vmul.f32 %v3185, %v566
    %v3228 = vmul.f32 %v3188, %v566
    %v3229 = vmul.f32 %v3191, %v566
    %v3230 = vmul.f32 %v3194, %v566
    %v3231 = vmul.f32 %v3197, %v566
    %v3232 = vmul.f32 %v3200, %v566
    %v3233 = vmul.f32 %v3203, %v566
    %v3234 = vmul.f32 %v3206, %v566
    %v3235 = vmul.f32 %v3209, %v566
    %v3236 = vmul.f32 %v3212, %v566
    %v3237 = vmul.f32 %v3215, %v566
    %v3238 = vmul.f32 %v3218, %v566
    %v3239 = vmul.f32 %v3221, %v566
    %v3240 = vmul.f32 %v3224, %v566
    %v3241 = vsub.f32 %v3159, %v3225
    %v3242 = vsub.f32 %v3160, %v3226
    %v3243 = vsub.f32 %v3161, %v3227
    %v3244 = vsub.f32 %v3162, %v3228
    %v3245 = vsub.f32 %v3163, %v3229
    %v3246 = vsub.f32 %v3164, %v3230
    %v3247 = vsub.f32 %v3165, %v3231
    %v3248 = vsub.f32 %v3166, %v3232
    %v3249 = vsub.f32 %v3167, %v3233
    %v3250 = vsub.f32 %v3168, %v3234
    %v3251 = vsub.f32 %v3169, %v3235
    %v3252 = vsub.f32 %v3170, %v3236
    %v3253 = vsub.f32 %v3171, %v3237
    %v3254 = vsub.f32 %v3172, %v3238
    %v3255 = vsub.f32 %v3173, %v3239
    %v3256 = vsub.f32 %v3174, %v3240
    %v3257 = vmul.f32 %v3241, %v3241
    %v3258 = vmul.f32 %v3242, %v3242
    %v3259 = vmul.f32 %v3243, %v3243
    %v3260 = vmul.f32 %v3244, %v3244
    %v3261 = vmul.f32 %v3245, %v3245
    %v3262 = vmul.f32 %v3246, %v3246
    %v3263 = vmul.f32 %v3247, %v3247
    %v3264 = vmul.f32 %v3248, %v3248
    %v3265 = vmul.f32 %v3249, %v3249
    %v3266 = vmul.f32 %v3250, %v3250
    %v3267 = vmul.f32 %v3251, %v3251
    %v3268 = vmul.f32 %v3252, %v3252
    %v3269 = vmul.f32 %v3253, %v3253
    %v3270 = vmul.f32 %v3254, %v3254
    %v3271 = vmul.f32 %v3255, %v3255
    %v3272 = vmul.f32 %v3256, %v3256
    %v3273 = vsel %vm517, %v3257, 0.0
    %3274 = vadd.xlane.f32.xlu0 %v3273
    %v3275 = vpop.xlane.xlu0 %3274
    %v3276 = vsel %vm517, %v3258, 0.0
    %3277 = vadd.xlane.f32.xlu0 %v3276
    %v3278 = vpop.xlane.xlu0 %3277
    %v3279 = vsel %vm517, %v3259, 0.0
    %3280 = vadd.xlane.f32.xlu0 %v3279
    %v3281 = vpop.xlane.xlu0 %3280
    %v3282 = vsel %vm517, %v3260, 0.0
    %3283 = vadd.xlane.f32.xlu0 %v3282
    %v3284 = vpop.xlane.xlu0 %3283
    %v3285 = vsel %vm517, %v3261, 0.0
    %3286 = vadd.xlane.f32.xlu0 %v3285
    %v3287 = vpop.xlane.xlu0 %3286
    %v3288 = vsel %vm517, %v3262, 0.0
    %3289 = vadd.xlane.f32.xlu0 %v3288
    %v3290 = vpop.xlane.xlu0 %3289
    %v3291 = vsel %vm517, %v3263, 0.0
    %3292 = vadd.xlane.f32.xlu0 %v3291
    %v3293 = vpop.xlane.xlu0 %3292
    %v3294 = vsel %vm517, %v3264, 0.0
    %3295 = vadd.xlane.f32.xlu0 %v3294
    %v3296 = vpop.xlane.xlu0 %3295
    %v3297 = vsel %vm517, %v3265, 0.0
    %3298 = vadd.xlane.f32.xlu0 %v3297
    %v3299 = vpop.xlane.xlu0 %3298
    %v3300 = vsel %vm517, %v3266, 0.0
    %3301 = vadd.xlane.f32.xlu0 %v3300
    %v3302 = vpop.xlane.xlu0 %3301
    %v3303 = vsel %vm517, %v3267, 0.0
    %3304 = vadd.xlane.f32.xlu0 %v3303
    %v3305 = vpop.xlane.xlu0 %3304
    %v3306 = vsel %vm517, %v3268, 0.0
    %3307 = vadd.xlane.f32.xlu0 %v3306
    %v3308 = vpop.xlane.xlu0 %3307
    %v3309 = vsel %vm517, %v3269, 0.0
    %3310 = vadd.xlane.f32.xlu0 %v3309
    %v3311 = vpop.xlane.xlu0 %3310
    %v3312 = vsel %vm517, %v3270, 0.0
    %3313 = vadd.xlane.f32.xlu0 %v3312
    %v3314 = vpop.xlane.xlu0 %3313
    %v3315 = vsel %vm517, %v3271, 0.0
    %3316 = vadd.xlane.f32.xlu0 %v3315
    %v3317 = vpop.xlane.xlu0 %3316
    %v3318 = vsel %vm517, %v3272, 0.0
    %3319 = vadd.xlane.f32.xlu0 %v3318
    %v3320 = vpop.xlane.xlu0 %3319
    %v3321 = vmul.f32 %v3275, %v566
    %v3322 = vmul.f32 %v3278, %v566
    %v3323 = vmul.f32 %v3281, %v566
    %v3324 = vmul.f32 %v3284, %v566
    %v3325 = vmul.f32 %v3287, %v566
    %v3326 = vmul.f32 %v3290, %v566
    %v3327 = vmul.f32 %v3293, %v566
    %v3328 = vmul.f32 %v3296, %v566
    %v3329 = vmul.f32 %v3299, %v566
    %v3330 = vmul.f32 %v3302, %v566
    %v3331 = vmul.f32 %v3305, %v566
    %v3332 = vmul.f32 %v3308, %v566
    %v3333 = vmul.f32 %v3311, %v566
    %v3334 = vmul.f32 %v3314, %v566
    %v3335 = vmul.f32 %v3317, %v566
    %v3336 = vmul.f32 %v3320, %v566
    %v3337 = vadd.f32 %v3321, 1e-05
    %v3338 = vadd.f32 %v3322, 1e-05
    %v3339 = vadd.f32 %v3323, 1e-05
    %v3340 = vadd.f32 %v3324, 1e-05
    %v3341 = vadd.f32 %v3325, 1e-05
    %v3342 = vadd.f32 %v3326, 1e-05
    %v3343 = vadd.f32 %v3327, 1e-05
    %v3344 = vadd.f32 %v3328, 1e-05
    %v3345 = vadd.f32 %v3329, 1e-05
    %v3346 = vadd.f32 %v3330, 1e-05
    %v3347 = vadd.f32 %v3331, 1e-05
    %v3348 = vadd.f32 %v3332, 1e-05
    %v3349 = vadd.f32 %v3333, 1e-05
    %v3350 = vadd.f32 %v3334, 1e-05
    %v3351 = vadd.f32 %v3335, 1e-05
    %v3352 = vadd.f32 %v3336, 1e-05
    %v3353 = vrsqrt.pop %v3337
    %v3354 = vrsqrt.pop %v3338
    %v3355 = vrsqrt.pop %v3339
    %v3356 = vrsqrt.pop %v3340
    %v3357 = vrsqrt.pop %v3341
    %v3358 = vrsqrt.pop %v3342
    %v3359 = vrsqrt.pop %v3343
    %v3360 = vrsqrt.pop %v3344
    %v3361 = vrsqrt.pop %v3345
    %v3362 = vrsqrt.pop %v3346
    %v3363 = vrsqrt.pop %v3347
    %v3364 = vrsqrt.pop %v3348
    %v3365 = vrsqrt.pop %v3349
    %v3366 = vrsqrt.pop %v3350
    %v3367 = vrsqrt.pop %v3351
    %v3368 = vrsqrt.pop %v3352
    %v3369 = vmul.f32 %v3241, %v3353
    %v3370 = vmul.f32 %v3242, %v3354
    %v3371 = vmul.f32 %v3243, %v3355
    %v3372 = vmul.f32 %v3244, %v3356
    %v3373 = vmul.f32 %v3245, %v3357
    %v3374 = vmul.f32 %v3246, %v3358
    %v3375 = vmul.f32 %v3247, %v3359
    %v3376 = vmul.f32 %v3248, %v3360
    %v3377 = vmul.f32 %v3249, %v3361
    %v3378 = vmul.f32 %v3250, %v3362
    %v3379 = vmul.f32 %v3251, %v3363
    %v3380 = vmul.f32 %v3252, %v3364
    %v3381 = vmul.f32 %v3253, %v3365
    %v3382 = vmul.f32 %v3254, %v3366
    %v3383 = vmul.f32 %v3255, %v3367
    %v3384 = vmul.f32 %v3256, %v3368
    %v3386 = vlaneseq
    %v3387 = vshrl.u32 %v3386, 7
    %v3388 = vsub.s32 0, %v3387
    %v3389 = vrot.slane %v3175, %v3388
    %v3391 = vmul.f32 %v3369, %v3389
    %v3392 = vmul.f32 %v3370, %v3389
    %v3393 = vmul.f32 %v3371, %v3389
    %v3394 = vmul.f32 %v3372, %v3389
    %v3395 = vmul.f32 %v3373, %v3389
    %v3396 = vmul.f32 %v3374, %v3389
    %v3397 = vmul.f32 %v3375, %v3389
    %v3398 = vmul.f32 %v3376, %v3389
    %v3399 = vmul.f32 %v3377, %v3389
    %v3400 = vmul.f32 %v3378, %v3389
    %v3401 = vmul.f32 %v3379, %v3389
    %v3402 = vmul.f32 %v3380, %v3389
    %v3403 = vmul.f32 %v3381, %v3389
    %v3404 = vmul.f32 %v3382, %v3389
    %v3405 = vmul.f32 %v3383, %v3389
    %v3406 = vmul.f32 %v3384, %v3389
    %v3408 = vlaneseq
    %v3409 = vshrl.u32 %v3408, 7
    %v3410 = vsub.s32 0, %v3409
    %v3411 = vrot.slane %v3176, %v3410
    %v3413 = vadd.f32 %v3391, %v3411
    %v3414 = vadd.f32 %v3392, %v3411
    %v3415 = vadd.f32 %v3393, %v3411
    %v3416 = vadd.f32 %v3394, %v3411
    %v3417 = vadd.f32 %v3395, %v3411
    %v3418 = vadd.f32 %v3396, %v3411
    %v3419 = vadd.f32 %v3397, %v3411
    %v3420 = vadd.f32 %v3398, %v3411
    %v3421 = vadd.f32 %v3399, %v3411
    %v3422 = vadd.f32 %v3400, %v3411
    %v3423 = vadd.f32 %v3401, %v3411
    %v3424 = vadd.f32 %v3402, %v3411
    %v3425 = vadd.f32 %v3403, %v3411
    %v3426 = vadd.f32 %v3404, %v3411
    %v3427 = vadd.f32 %v3405, %v3411
    %v3428 = vadd.f32 %v3406, %v3411
    %v3429 = vpack.c.bf16 %v3414, %v3413
    %v3430 = vpack.c.bf16 %v3416, %v3415
    %v3431 = vpack.c.bf16 %v3418, %v3417
    %v3432 = vpack.c.bf16 %v3420, %v3419
    %v3433 = vpack.c.bf16 %v3422, %v3421
    %v3434 = vpack.c.bf16 %v3424, %v3423
    %v3435 = vpack.c.bf16 %v3426, %v3425
    %v3436 = vpack.c.bf16 %v3428, %v3427
    %v3437 = vld [vmem:[%s45] sm:$0xf]
    %v3438 = vld [vmem:[%s45 + $0x4] sm:$0xf]
    %v3439 = vld [vmem:[%s45 + $0x8] sm:$0xf]
    %v3440 = vld [vmem:[%s45 + $0xc] sm:$0xf]
    %v3441 = vld [vmem:[%s47] sm:$0x1]
    %v3443 = vlaneseq
    %v3444 = vshrl.u32 %v3443, 7
    %v3445 = vsub.s32 0, %v3444
    %v3446 = vrot.slane %v3441, %v3445
    %v3452 = vunpack.c.l.b16 %v3437
    %v3453 = vunpack.c.l.b16 %v3438
    %v3454 = vunpack.c.l.b16 %v3439
    %v3455 = vunpack.c.l.b16 %v3440
    %v3456 = vpack.c.b16 %v3453, %v3452
    %v3457 = vpack.c.b16 %v3455, %v3454
    %v3461 = vsel %vm517, %v3429, 0
    %v3464 = vsel %vm517, %v3430, 0
    %v3467 = vsel %vm517, %v3431, 0
    %v3470 = vsel %vm517, %v3432, 0
    %v3473 = vsel %vm517, %v3433, 0
    %v3476 = vsel %vm517, %v3434, 0
    %v3479 = vsel %vm517, %v3435, 0
    %v3482 = vsel %vm517, %v3436, 0
    %3484 = vmatprep.subr.bf16.mxu0 0
    %3485 = vmatpush1.bf16.msra.mxu0 %v3456
    %3486 = vmatprep.subr.bf16.mxu0 0
    %3487 = vmatpush1.bf16.msra.mxu0 %v3457
    %3488 = vmatprep.subr.bf16.mxu0 0
    %3489 = vmatpush1.bf16.msra.mxu0 0
    %3490 = vmatprep.subr.bf16.mxu0 0
    %3491 = vmatpush1.bf16.msra.mxu0 0
    %3492 = vmatprep.subr.bf16.mxu0 0
    %3493 = vmatpush1.bf16.msra.mxu0 0
    %3494 = vmatprep.subr.bf16.mxu0 0
    %3495 = vmatpush1.bf16.msra.mxu0 0
    %3496 = vmatprep.subr.bf16.mxu0 0
    %3497 = vmatpush1.bf16.msra.mxu0 0
    %3498 = vmatprep.subr.bf16.mxu0 0
    %3499 = vmatpush1.bf16.msra.mxu0 0
    %3500 = vmatprep.subr.bf16.mxu0 0
    %3501 = vmatpush1.bf16.msra.mxu0 0
    %3502 = vmatprep.subr.bf16.mxu0 0
    %3503 = vmatpush1.bf16.msra.mxu0 0
    %3504 = vmatprep.subr.bf16.mxu0 0
    %3505 = vmatpush1.bf16.msra.mxu0 0
    %3506 = vmatprep.subr.bf16.mxu0 0
    %3507 = vmatpush1.bf16.msra.mxu0 0
    %3508 = vmatprep.subr.bf16.mxu0 0
    %3509 = vmatpush1.bf16.msra.mxu0 0
    %3510 = vmatprep.subr.bf16.mxu0 0
    %3511 = vmatpush1.bf16.msra.mxu0 0
    %3512 = vmatprep.subr.bf16.mxu0 0
    %3513 = vmatpush1.bf16.msra.mxu0 0
    %3514 = vmatprep.subr.bf16.mxu0 0
    %3515 = vmatpush1.bf16.msra.mxu0 0
    %3516 = vmatprep.mubr.bf16.mxu0 0
    %3517 = vmatmul.mubr.bf16.gmra.mrb[0].mxu0 %v3461
    %v3518 = vpop.f32.mrb[0].mxu0
    %v3519 = vadd.f32 %v3446, %v3518
    %v3520 = vpop.f32.mrb[0].mxu0
    %v3521 = vpop.f32.mrb[0].mxu0
    %v3522 = vadd.f32 %v3446, %v3521
    %v3523 = vpop.f32.mrb[0].mxu0
    %3524 = vmatprep.mubr.bf16.mxu0 0
    %3525 = vmatmul.mubr.bf16.gmra.mrb[0].mxu0 %v3464
    %v3526 = vpop.f32.mrb[0].mxu0
    %v3527 = vadd.f32 %v3446, %v3526
    %v3528 = vpop.f32.mrb[0].mxu0
    %v3529 = vpop.f32.mrb[0].mxu0
    %v3530 = vadd.f32 %v3446, %v3529
    %v3531 = vpop.f32.mrb[0].mxu0
    %3532 = vmatprep.mubr.bf16.mxu0 0
    %3533 = vmatmul.mubr.bf16.gmra.mrb[0].mxu0 %v3467
    %v3534 = vpop.f32.mrb[0].mxu0
    %v3535 = vadd.f32 %v3446, %v3534
    %v3536 = vpop.f32.mrb[0].mxu0
    %v3537 = vpop.f32.mrb[0].mxu0
    %v3538 = vadd.f32 %v3446, %v3537
    %v3539 = vpop.f32.mrb[0].mxu0
    %3540 = vmatprep.mubr.bf16.mxu0 0
    %3541 = vmatmul.mubr.bf16.gmra.mrb[0].mxu0 %v3470
    %v3542 = vpop.f32.mrb[0].mxu0
    %v3543 = vadd.f32 %v3446, %v3542
    %v3544 = vpop.f32.mrb[0].mxu0
    %v3545 = vpop.f32.mrb[0].mxu0
    %v3546 = vadd.f32 %v3446, %v3545
    %v3547 = vpop.f32.mrb[0].mxu0
    %3548 = vmatprep.mubr.bf16.mxu0 0
    %3549 = vmatmul.mubr.bf16.gmra.mrb[0].mxu0 %v3473
    %v3550 = vpop.f32.mrb[0].mxu0
    %v3551 = vadd.f32 %v3446, %v3550
    %v3552 = vpop.f32.mrb[0].mxu0
    %v3553 = vpop.f32.mrb[0].mxu0
    %v3554 = vadd.f32 %v3446, %v3553
    %v3555 = vpop.f32.mrb[0].mxu0
    %3556 = vmatprep.mubr.bf16.mxu0 0
    %3557 = vmatmul.mubr.bf16.gmra.mrb[0].mxu0 %v3476
    %v3558 = vpop.f32.mrb[0].mxu0
    %v3559 = vadd.f32 %v3446, %v3558
    %v3560 = vpop.f32.mrb[0].mxu0
    %v3561 = vpop.f32.mrb[0].mxu0
    %v3562 = vadd.f32 %v3446, %v3561
    %v3563 = vpop.f32.mrb[0].mxu0
    %3564 = vmatprep.mubr.bf16.mxu0 0
    %3565 = vmatmul.mubr.bf16.gmra.mrb[0].mxu0 %v3479
    %v3566 = vpop.f32.mrb[0].mxu0
    %v3567 = vadd.f32 %v3446, %v3566
    %v3568 = vpop.f32.mrb[0].mxu0
    %v3569 = vpop.f32.mrb[0].mxu0
    %v3570 = vadd.f32 %v3446, %v3569
    %v3571 = vpop.f32.mrb[0].mxu0
    %3572 = vmatprep.mubr.bf16.mxu0 0
    %3573 = vmatmul.mubr.bf16.gmra.mrb[0].mxu0 %v3482
    %v3574 = vpop.f32.mrb[0].mxu0
    %v3575 = vadd.f32 %v3446, %v3574
    %v3576 = vpop.f32.mrb[0].mxu0
    %v3577 = vpop.f32.mrb[0].mxu0
    %v3578 = vadd.f32 %v3446, %v3577
    %v3579 = vpop.f32.mrb[0].mxu0
    %3580 = vdwg.mxu0
    %v3581 = vxor.u32 %v3519, 2147483648
    %v3582 = vxor.u32 %v3522, 2147483648
    %v3583 = vxor.u32 %v3527, 2147483648
    %v3584 = vxor.u32 %v3530, 2147483648
    %v3585 = vxor.u32 %v3535, 2147483648
    %v3586 = vxor.u32 %v3538, 2147483648
    %v3587 = vxor.u32 %v3543, 2147483648
    %v3588 = vxor.u32 %v3546, 2147483648
    %v3589 = vxor.u32 %v3551, 2147483648
    %v3590 = vxor.u32 %v3554, 2147483648
    %v3591 = vxor.u32 %v3559, 2147483648
    %v3592 = vxor.u32 %v3562, 2147483648
    %v3593 = vxor.u32 %v3567, 2147483648
    %v3594 = vxor.u32 %v3570, 2147483648
    %v3595 = vxor.u32 %v3575, 2147483648
    %v3596 = vxor.u32 %v3578, 2147483648
    %v3597 = vmul.f32 %v3581, 1.442695
    %v3598 = vpow.pop %v3597
    %v3599 = vmul.f32 %v3582, 1.442695
    %v3600 = vpow.pop %v3599
    %v3601 = vmul.f32 %v3583, 1.442695
    %v3602 = vpow.pop %v3601
    %v3603 = vmul.f32 %v3584, 1.442695
    %v3604 = vpow.pop %v3603
    %v3605 = vmul.f32 %v3585, 1.442695
    %v3606 = vpow.pop %v3605
    %v3607 = vmul.f32 %v3586, 1.442695
    %v3608 = vpow.pop %v3607
    %v3609 = vmul.f32 %v3587, 1.442695
    %v3610 = vpow.pop %v3609
    %v3611 = vmul.f32 %v3588, 1.442695
    %v3612 = vpow.pop %v3611
    %v3613 = vmul.f32 %v3589, 1.442695
    %v3614 = vpow.pop %v3613
    %v3615 = vmul.f32 %v3590, 1.442695
    %v3616 = vpow.pop %v3615
    %v3617 = vmul.f32 %v3591, 1.442695
    %v3618 = vpow.pop %v3617
    %v3619 = vmul.f32 %v3592, 1.442695
    %v3620 = vpow.pop %v3619
    %v3621 = vmul.f32 %v3593, 1.442695
    %v3622 = vpow.pop %v3621
    %v3623 = vmul.f32 %v3594, 1.442695
    %v3624 = vpow.pop %v3623
    %v3625 = vmul.f32 %v3595, 1.442695
    %v3626 = vpow.pop %v3625
    %v3627 = vmul.f32 %v3596, 1.442695
    %v3628 = vpow.pop %v3627
    %v3629 = vadd.f32 %v3598, 1.0
    %v3630 = vadd.f32 %v3600, 1.0
    %v3631 = vadd.f32 %v3602, 1.0
    %v3632 = vadd.f32 %v3604, 1.0
    %v3633 = vadd.f32 %v3606, 1.0
    %v3634 = vadd.f32 %v3608, 1.0
    %v3635 = vadd.f32 %v3610, 1.0
    %v3636 = vadd.f32 %v3612, 1.0
    %v3637 = vadd.f32 %v3614, 1.0
    %v3638 = vadd.f32 %v3616, 1.0
    %v3639 = vadd.f32 %v3618, 1.0
    %v3640 = vadd.f32 %v3620, 1.0
    %v3641 = vadd.f32 %v3622, 1.0
    %v3642 = vadd.f32 %v3624, 1.0
    %v3643 = vadd.f32 %v3626, 1.0
    %v3644 = vadd.f32 %v3628, 1.0
    %v3645 = vrcp.pop %v3629
    %v3646 = vmul.f32 1.0, %v3645
    %v3647 = vrcp.pop %v3630
    %v3648 = vmul.f32 1.0, %v3647
    %v3649 = vrcp.pop %v3631
    %v3650 = vmul.f32 1.0, %v3649
    %v3651 = vrcp.pop %v3632
    %v3652 = vmul.f32 1.0, %v3651
    %v3653 = vrcp.pop %v3633
    %v3654 = vmul.f32 1.0, %v3653
    %v3655 = vrcp.pop %v3634
    %v3656 = vmul.f32 1.0, %v3655
    %v3657 = vrcp.pop %v3635
    %v3658 = vmul.f32 1.0, %v3657
    %v3659 = vrcp.pop %v3636
    %v3660 = vmul.f32 1.0, %v3659
    %v3661 = vrcp.pop %v3637
    %v3662 = vmul.f32 1.0, %v3661
    %v3663 = vrcp.pop %v3638
    %v3664 = vmul.f32 1.0, %v3663
    %v3665 = vrcp.pop %v3639
    %v3666 = vmul.f32 1.0, %v3665
    %v3667 = vrcp.pop %v3640
    %v3668 = vmul.f32 1.0, %v3667
    %v3669 = vrcp.pop %v3641
    %v3670 = vmul.f32 1.0, %v3669
    %v3671 = vrcp.pop %v3642
    %v3672 = vmul.f32 1.0, %v3671
    %v3673 = vrcp.pop %v3643
    %v3674 = vmul.f32 1.0, %v3673
    %v3675 = vrcp.pop %v3644
    %v3676 = vmul.f32 1.0, %v3675
    %v3677 = vmul.f32 %v3519, %v3646
    %v3678 = vmul.f32 %v3522, %v3648
    %v3679 = vmul.f32 %v3527, %v3650
    %v3680 = vmul.f32 %v3530, %v3652
    %v3681 = vmul.f32 %v3535, %v3654
    %v3682 = vmul.f32 %v3538, %v3656
    %v3683 = vmul.f32 %v3543, %v3658
    %v3684 = vmul.f32 %v3546, %v3660
    %v3685 = vmul.f32 %v3551, %v3662
    %v3686 = vmul.f32 %v3554, %v3664
    %v3687 = vmul.f32 %v3559, %v3666
    %v3688 = vmul.f32 %v3562, %v3668
    %v3689 = vmul.f32 %v3567, %v3670
    %v3690 = vmul.f32 %v3570, %v3672
    %v3691 = vmul.f32 %v3575, %v3674
    %v3692 = vmul.f32 %v3578, %v3676
    %v3693 = vpack.c.bf16 %v3678, %v3677
    %v3694 = vpack.c.bf16 %v3680, %v3679
    %v3695 = vpack.c.bf16 %v3682, %v3681
    %v3696 = vpack.c.bf16 %v3684, %v3683
    %v3697 = vpack.c.bf16 %v3686, %v3685
    %v3698 = vpack.c.bf16 %v3688, %v3687
    %v3699 = vpack.c.bf16 %v3690, %v3689
    %v3700 = vpack.c.bf16 %v3692, %v3691
    %v3701 = vld [vmem:[%s49] sm:$0xf]
    %v3702 = vld [vmem:[%s49 + $0x4] sm:$0xf]
    %v3703 = vld [vmem:[%s49 + $0x8] sm:$0xf]
    %v3704 = vld [vmem:[%s49 + $0xc] sm:$0xf]
    %v3705 = vld [vmem:[%s49 + $0x10] sm:$0xf]
    %v3706 = vld [vmem:[%s49 + $0x14] sm:$0xf]
    %v3707 = vld [vmem:[%s49 + $0x18] sm:$0xf]
    %v3708 = vld [vmem:[%s49 + $0x1c] sm:$0xf]
    %v3709 = vld [vmem:[%s49 + $0x20] sm:$0xf]
    %v3710 = vld [vmem:[%s49 + $0x24] sm:$0xf]
    %v3711 = vld [vmem:[%s49 + $0x28] sm:$0xf]
    %v3712 = vld [vmem:[%s49 + $0x2c] sm:$0xf]
    %v3713 = vld [vmem:[%s49 + $0x30] sm:$0xf]
    %v3714 = vld [vmem:[%s49 + $0x34] sm:$0xf]
    %v3715 = vld [vmem:[%s49 + $0x38] sm:$0xf]
    %v3716 = vld [vmem:[%s49 + $0x3c] sm:$0xf]
    %v3733 = vunpack.c.l.b16 %v3701
    %v3734 = vunpack.c.l.b16 %v3702
    %v3735 = vunpack.c.l.b16 %v3703
    %v3736 = vunpack.c.l.b16 %v3704
    %v3737 = vunpack.c.l.b16 %v3705
    %v3738 = vunpack.c.l.b16 %v3706
    %v3739 = vunpack.c.l.b16 %v3707
    %v3740 = vunpack.c.l.b16 %v3708
    %v3741 = vunpack.c.l.b16 %v3709
    %v3742 = vunpack.c.l.b16 %v3710
    %v3743 = vunpack.c.l.b16 %v3711
    %v3744 = vunpack.c.l.b16 %v3712
    %v3745 = vunpack.c.l.b16 %v3713
    %v3746 = vunpack.c.l.b16 %v3714
    %v3747 = vunpack.c.l.b16 %v3715
    %v3748 = vunpack.c.l.b16 %v3716
    %v3749 = vpack.c.b16 %v3734, %v3733
    %v3750 = vpack.c.b16 %v3736, %v3735
    %v3751 = vpack.c.b16 %v3738, %v3737
    %v3752 = vpack.c.b16 %v3740, %v3739
    %v3753 = vpack.c.b16 %v3742, %v3741
    %v3754 = vpack.c.b16 %v3744, %v3743
    %v3755 = vpack.c.b16 %v3746, %v3745
    %v3756 = vpack.c.b16 %v3748, %v3747
    %3765 = vmatprep.subr.bf16.mxu0 0
    %3766 = vmatpush1.bf16.msra.mxu0 %v3749
    %3767 = vmatprep.subr.bf16.mxu0 0
    %3768 = vmatpush1.bf16.msra.mxu0 %v3750
    %3769 = vmatprep.subr.bf16.mxu0 0
    %3770 = vmatpush1.bf16.msra.mxu0 %v3751
    %3771 = vmatprep.subr.bf16.mxu0 0
    %3772 = vmatpush1.bf16.msra.mxu0 %v3752
    %3773 = vmatprep.subr.bf16.mxu0 0
    %3774 = vmatpush1.bf16.msra.mxu0 %v3753
    %3775 = vmatprep.subr.bf16.mxu0 0
    %3776 = vmatpush1.bf16.msra.mxu0 %v3754
    %3777 = vmatprep.subr.bf16.mxu0 0
    %3778 = vmatpush1.bf16.msra.mxu0 %v3755
    %3779 = vmatprep.subr.bf16.mxu0 0
    %3780 = vmatpush1.bf16.msra.mxu0 %v3756
    %3781 = vmatprep.subr.bf16.mxu0 0
    %3782 = vmatpush1.bf16.msra.mxu0 0
    %3783 = vmatprep.subr.bf16.mxu0 0
    %3784 = vmatpush1.bf16.msra.mxu0 0
    %3785 = vmatprep.subr.bf16.mxu0 0
    %3786 = vmatpush1.bf16.msra.mxu0 0
    %3787 = vmatprep.subr.bf16.mxu0 0
    %3788 = vmatpush1.bf16.msra.mxu0 0
    %3789 = vmatprep.subr.bf16.mxu0 0
    %3790 = vmatpush1.bf16.msra.mxu0 0
    %3791 = vmatprep.subr.bf16.mxu0 0
    %3792 = vmatpush1.bf16.msra.mxu0 0
    %3793 = vmatprep.subr.bf16.mxu0 0
    %3794 = vmatpush1.bf16.msra.mxu0 0
    %3795 = vmatprep.subr.bf16.mxu0 0
    %3796 = vmatpush1.bf16.msra.mxu0 0
    %3797 = vmatprep.mubr.bf16.mxu0 0
    %3798 = vmatmul.mubr.bf16.gmra.mrb[0].mxu0 %v3693
    %v3799 = vpop.f32.mrb[0].mxu0
    %v3800 = vadd.f32 0.0, %v3799
    %v3801 = vpop.f32.mrb[0].mxu0
    %v3802 = vpop.f32.mrb[0].mxu0
    %v3803 = vadd.f32 0.0, %v3802
    %v3804 = vpop.f32.mrb[0].mxu0
    %3805 = vmatprep.mubr.bf16.mxu0 0
    %3806 = vmatmul.mubr.bf16.gmra.mrb[0].mxu0 %v3694
    %v3807 = vpop.f32.mrb[0].mxu0
    %v3808 = vadd.f32 0.0, %v3807
    %v3809 = vpop.f32.mrb[0].mxu0
    %v3810 = vpop.f32.mrb[0].mxu0
    %v3811 = vadd.f32 0.0, %v3810
    %v3812 = vpop.f32.mrb[0].mxu0
    %3813 = vmatprep.mubr.bf16.mxu0 0
    %3814 = vmatmul.mubr.bf16.gmra.mrb[0].mxu0 %v3695
    %v3815 = vpop.f32.mrb[0].mxu0
    %v3816 = vadd.f32 0.0, %v3815
    %v3817 = vpop.f32.mrb[0].mxu0
    %v3818 = vpop.f32.mrb[0].mxu0
    %v3819 = vadd.f32 0.0, %v3818
    %v3820 = vpop.f32.mrb[0].mxu0
    %3821 = vmatprep.mubr.bf16.mxu0 0
    %3822 = vmatmul.mubr.bf16.gmra.mrb[0].mxu0 %v3696
    %v3823 = vpop.f32.mrb[0].mxu0
    %v3824 = vadd.f32 0.0, %v3823
    %v3825 = vpop.f32.mrb[0].mxu0
    %v3826 = vpop.f32.mrb[0].mxu0
    %v3827 = vadd.f32 0.0, %v3826
    %v3828 = vpop.f32.mrb[0].mxu0
    %3829 = vmatprep.mubr.bf16.mxu0 0
    %3830 = vmatmul.mubr.bf16.gmra.mrb[0].mxu0 %v3697
    %v3831 = vpop.f32.mrb[0].mxu0
    %v3832 = vadd.f32 0.0, %v3831
    %v3833 = vpop.f32.mrb[0].mxu0
    %v3834 = vpop.f32.mrb[0].mxu0
    %v3835 = vadd.f32 0.0, %v3834
    %v3836 = vpop.f32.mrb[0].mxu0
    %3837 = vmatprep.mubr.bf16.mxu0 0
    %3838 = vmatmul.mubr.bf16.gmra.mrb[0].mxu0 %v3698
    %v3839 = vpop.f32.mrb[0].mxu0
    %v3840 = vadd.f32 0.0, %v3839
    %v3841 = vpop.f32.mrb[0].mxu0
    %v3842 = vpop.f32.mrb[0].mxu0
    %v3843 = vadd.f32 0.0, %v3842
    %v3844 = vpop.f32.mrb[0].mxu0
    %3845 = vmatprep.mubr.bf16.mxu0 0
    %3846 = vmatmul.mubr.bf16.gmra.mrb[0].mxu0 %v3699
    %v3847 = vpop.f32.mrb[0].mxu0
    %v3848 = vadd.f32 0.0, %v3847
    %v3849 = vpop.f32.mrb[0].mxu0
    %v3850 = vpop.f32.mrb[0].mxu0
    %v3851 = vadd.f32 0.0, %v3850
    %v3852 = vpop.f32.mrb[0].mxu0
    %3853 = vmatprep.mubr.bf16.mxu0 0
    %3854 = vmatmul.mubr.bf16.gmra.mrb[0].mxu0 %v3700
    %v3855 = vpop.f32.mrb[0].mxu0
    %v3856 = vadd.f32 0.0, %v3855
    %v3857 = vpop.f32.mrb[0].mxu0
    %v3858 = vpop.f32.mrb[0].mxu0
    %v3859 = vadd.f32 0.0, %v3858
    %v3860 = vpop.f32.mrb[0].mxu0
    %3861 = vdwg.mxu0
    %v3862 = vadd.f32 %v3159, %v3800
    %v3863 = vadd.f32 %v3160, %v3803
    %v3864 = vadd.f32 %v3161, %v3808
    %v3865 = vadd.f32 %v3162, %v3811
    %v3866 = vadd.f32 %v3163, %v3816
    %v3867 = vadd.f32 %v3164, %v3819
    %v3868 = vadd.f32 %v3165, %v3824
    %v3869 = vadd.f32 %v3166, %v3827
    %v3870 = vadd.f32 %v3167, %v3832
    %v3871 = vadd.f32 %v3168, %v3835
    %v3872 = vadd.f32 %v3169, %v3840
    %v3873 = vadd.f32 %v3170, %v3843
    %v3874 = vadd.f32 %v3171, %v3848
    %v3875 = vadd.f32 %v3172, %v3851
    %v3876 = vadd.f32 %v3173, %v3856
    %v3877 = vadd.f32 %v3174, %v3859
    %v3878 = vld [vmem:[%s51] sm:$0x1]
    %v3880 = vlaneseq
    %v3881 = vshrl.u32 %v3880, 7
    %v3882 = vsub.s32 0, %v3881
    %v3883 = vrot.slane %v3878, %v3882
    %v3885 = vadd.f32 %v3862, %v3883
    %v3886 = vadd.f32 %v3863, %v3883
    %v3887 = vadd.f32 %v3864, %v3883
    %v3888 = vadd.f32 %v3865, %v3883
    %v3889 = vadd.f32 %v3866, %v3883
    %v3890 = vadd.f32 %v3867, %v3883
    %v3891 = vadd.f32 %v3868, %v3883
    %v3892 = vadd.f32 %v3869, %v3883
    %v3893 = vadd.f32 %v3870, %v3883
    %v3894 = vadd.f32 %v3871, %v3883
    %v3895 = vadd.f32 %v3872, %v3883
    %v3896 = vadd.f32 %v3873, %v3883
    %v3897 = vadd.f32 %v3874, %v3883
    %v3898 = vadd.f32 %v3875, %v3883
    %v3899 = vadd.f32 %v3876, %v3883
    %v3900 = vadd.f32 %v3877, %v3883
    %s3901 = scalar_lea.vmem %s21, 1
    %v3902 = vld [vmem:[%s3901] sm:$0x1]
    %s3903 = scalar_lea.vmem %s23, 1
    %v3904 = vld [vmem:[%s3903] sm:$0x1]
    %v3905 = vsel %vm517, %v3885, 0.0
    %3906 = vadd.xlane.f32.xlu0 %v3905
    %v3907 = vpop.xlane.xlu0 %3906
    %v3908 = vsel %vm517, %v3886, 0.0
    %3909 = vadd.xlane.f32.xlu0 %v3908
    %v3910 = vpop.xlane.xlu0 %3909
    %v3911 = vsel %vm517, %v3887, 0.0
    %3912 = vadd.xlane.f32.xlu0 %v3911
    %v3913 = vpop.xlane.xlu0 %3912
    %v3914 = vsel %vm517, %v3888, 0.0
    %3915 = vadd.xlane.f32.xlu0 %v3914
    %v3916 = vpop.xlane.xlu0 %3915
    %v3917 = vsel %vm517, %v3889, 0.0
    %3918 = vadd.xlane.f32.xlu0 %v3917
    %v3919 = vpop.xlane.xlu0 %3918
    %v3920 = vsel %vm517, %v3890, 0.0
    %3921 = vadd.xlane.f32.xlu0 %v3920
    %v3922 = vpop.xlane.xlu0 %3921
    %v3923 = vsel %vm517, %v3891, 0.0
    %3924 = vadd.xlane.f32.xlu0 %v3923
    %v3925 = vpop.xlane.xlu0 %3924
    %v3926 = vsel %vm517, %v3892, 0.0
    %3927 = vadd.xlane.f32.xlu0 %v3926
    %v3928 = vpop.xlane.xlu0 %3927
    %v3929 = vsel %vm517, %v3893, 0.0
    %3930 = vadd.xlane.f32.xlu0 %v3929
    %v3931 = vpop.xlane.xlu0 %3930
    %v3932 = vsel %vm517, %v3894, 0.0
    %3933 = vadd.xlane.f32.xlu0 %v3932
    %v3934 = vpop.xlane.xlu0 %3933
    %v3935 = vsel %vm517, %v3895, 0.0
    %3936 = vadd.xlane.f32.xlu0 %v3935
    %v3937 = vpop.xlane.xlu0 %3936
    %v3938 = vsel %vm517, %v3896, 0.0
    %3939 = vadd.xlane.f32.xlu0 %v3938
    %v3940 = vpop.xlane.xlu0 %3939
    %v3941 = vsel %vm517, %v3897, 0.0
    %3942 = vadd.xlane.f32.xlu0 %v3941
    %v3943 = vpop.xlane.xlu0 %3942
    %v3944 = vsel %vm517, %v3898, 0.0
    %3945 = vadd.xlane.f32.xlu0 %v3944
    %v3946 = vpop.xlane.xlu0 %3945
    %v3947 = vsel %vm517, %v3899, 0.0
    %3948 = vadd.xlane.f32.xlu0 %v3947
    %v3949 = vpop.xlane.xlu0 %3948
    %v3950 = vsel %vm517, %v3900, 0.0
    %3951 = vadd.xlane.f32.xlu0 %v3950
    %v3952 = vpop.xlane.xlu0 %3951
    %v3953 = vmul.f32 %v3907, %v566
    %v3954 = vmul.f32 %v3910, %v566
    %v3955 = vmul.f32 %v3913, %v566
    %v3956 = vmul.f32 %v3916, %v566
    %v3957 = vmul.f32 %v3919, %v566
    %v3958 = vmul.f32 %v3922, %v566
    %v3959 = vmul.f32 %v3925, %v566
    %v3960 = vmul.f32 %v3928, %v566
    %v3961 = vmul.f32 %v3931, %v566
    %v3962 = vmul.f32 %v3934, %v566
    %v3963 = vmul.f32 %v3937, %v566
    %v3964 = vmul.f32 %v3940, %v566
    %v3965 = vmul.f32 %v3943, %v566
    %v3966 = vmul.f32 %v3946, %v566
    %v3967 = vmul.f32 %v3949, %v566
    %v3968 = vmul.f32 %v3952, %v566
    %v3969 = vsub.f32 %v3885, %v3953
    %v3970 = vsub.f32 %v3886, %v3954
    %v3971 = vsub.f32 %v3887, %v3955
    %v3972 = vsub.f32 %v3888, %v3956
    %v3973 = vsub.f32 %v3889, %v3957
    %v3974 = vsub.f32 %v3890, %v3958
    %v3975 = vsub.f32 %v3891, %v3959
    %v3976 = vsub.f32 %v3892, %v3960
    %v3977 = vsub.f32 %v3893, %v3961
    %v3978 = vsub.f32 %v3894, %v3962
    %v3979 = vsub.f32 %v3895, %v3963
    %v3980 = vsub.f32 %v3896, %v3964
    %v3981 = vsub.f32 %v3897, %v3965
    %v3982 = vsub.f32 %v3898, %v3966
    %v3983 = vsub.f32 %v3899, %v3967
    %v3984 = vsub.f32 %v3900, %v3968
    %v3985 = vmul.f32 %v3969, %v3969
    %v3986 = vmul.f32 %v3970, %v3970
    %v3987 = vmul.f32 %v3971, %v3971
    %v3988 = vmul.f32 %v3972, %v3972
    %v3989 = vmul.f32 %v3973, %v3973
    %v3990 = vmul.f32 %v3974, %v3974
    %v3991 = vmul.f32 %v3975, %v3975
    %v3992 = vmul.f32 %v3976, %v3976
    %v3993 = vmul.f32 %v3977, %v3977
    %v3994 = vmul.f32 %v3978, %v3978
    %v3995 = vmul.f32 %v3979, %v3979
    %v3996 = vmul.f32 %v3980, %v3980
    %v3997 = vmul.f32 %v3981, %v3981
    %v3998 = vmul.f32 %v3982, %v3982
    %v3999 = vmul.f32 %v3983, %v3983
    %v4000 = vmul.f32 %v3984, %v3984
    %v4001 = vsel %vm517, %v3985, 0.0
    %4002 = vadd.xlane.f32.xlu0 %v4001
    %v4003 = vpop.xlane.xlu0 %4002
    %v4004 = vsel %vm517, %v3986, 0.0
    %4005 = vadd.xlane.f32.xlu0 %v4004
    %v4006 = vpop.xlane.xlu0 %4005
    %v4007 = vsel %vm517, %v3987, 0.0
    %4008 = vadd.xlane.f32.xlu0 %v4007
    %v4009 = vpop.xlane.xlu0 %4008
    %v4010 = vsel %vm517, %v3988, 0.0
    %4011 = vadd.xlane.f32.xlu0 %v4010
    %v4012 = vpop.xlane.xlu0 %4011
    %v4013 = vsel %vm517, %v3989, 0.0
    %4014 = vadd.xlane.f32.xlu0 %v4013
    %v4015 = vpop.xlane.xlu0 %4014
    %v4016 = vsel %vm517, %v3990, 0.0
    %4017 = vadd.xlane.f32.xlu0 %v4016
    %v4018 = vpop.xlane.xlu0 %4017
    %v4019 = vsel %vm517, %v3991, 0.0
    %4020 = vadd.xlane.f32.xlu0 %v4019
    %v4021 = vpop.xlane.xlu0 %4020
    %v4022 = vsel %vm517, %v3992, 0.0
    %4023 = vadd.xlane.f32.xlu0 %v4022
    %v4024 = vpop.xlane.xlu0 %4023
    %v4025 = vsel %vm517, %v3993, 0.0
    %4026 = vadd.xlane.f32.xlu0 %v4025
    %v4027 = vpop.xlane.xlu0 %4026
    %v4028 = vsel %vm517, %v3994, 0.0
    %4029 = vadd.xlane.f32.xlu0 %v4028
    %v4030 = vpop.xlane.xlu0 %4029
    %v4031 = vsel %vm517, %v3995, 0.0
    %4032 = vadd.xlane.f32.xlu0 %v4031
    %v4033 = vpop.xlane.xlu0 %4032
    %v4034 = vsel %vm517, %v3996, 0.0
    %4035 = vadd.xlane.f32.xlu0 %v4034
    %v4036 = vpop.xlane.xlu0 %4035
    %v4037 = vsel %vm517, %v3997, 0.0
    %4038 = vadd.xlane.f32.xlu0 %v4037
    %v4039 = vpop.xlane.xlu0 %4038
    %v4040 = vsel %vm517, %v3998, 0.0
    %4041 = vadd.xlane.f32.xlu0 %v4040
    %v4042 = vpop.xlane.xlu0 %4041
    %v4043 = vsel %vm517, %v3999, 0.0
    %4044 = vadd.xlane.f32.xlu0 %v4043
    %v4045 = vpop.xlane.xlu0 %4044
    %v4046 = vsel %vm517, %v4000, 0.0
    %4047 = vadd.xlane.f32.xlu0 %v4046
    %v4048 = vpop.xlane.xlu0 %4047
    %v4049 = vmul.f32 %v4003, %v566
    %v4050 = vmul.f32 %v4006, %v566
    %v4051 = vmul.f32 %v4009, %v566
    %v4052 = vmul.f32 %v4012, %v566
    %v4053 = vmul.f32 %v4015, %v566
    %v4054 = vmul.f32 %v4018, %v566
    %v4055 = vmul.f32 %v4021, %v566
    %v4056 = vmul.f32 %v4024, %v566
    %v4057 = vmul.f32 %v4027, %v566
    %v4058 = vmul.f32 %v4030, %v566
    %v4059 = vmul.f32 %v4033, %v566
    %v4060 = vmul.f32 %v4036, %v566
    %v4061 = vmul.f32 %v4039, %v566
    %v4062 = vmul.f32 %v4042, %v566
    %v4063 = vmul.f32 %v4045, %v566
    %v4064 = vmul.f32 %v4048, %v566
    %v4065 = vadd.f32 %v4049, 1e-05
    %v4066 = vadd.f32 %v4050, 1e-05
    %v4067 = vadd.f32 %v4051, 1e-05
    %v4068 = vadd.f32 %v4052, 1e-05
    %v4069 = vadd.f32 %v4053, 1e-05
    %v4070 = vadd.f32 %v4054, 1e-05
    %v4071 = vadd.f32 %v4055, 1e-05
    %v4072 = vadd.f32 %v4056, 1e-05
    %v4073 = vadd.f32 %v4057, 1e-05
    %v4074 = vadd.f32 %v4058, 1e-05
    %v4075 = vadd.f32 %v4059, 1e-05
    %v4076 = vadd.f32 %v4060, 1e-05
    %v4077 = vadd.f32 %v4061, 1e-05
    %v4078 = vadd.f32 %v4062, 1e-05
    %v4079 = vadd.f32 %v4063, 1e-05
    %v4080 = vadd.f32 %v4064, 1e-05
    %v4081 = vrsqrt.pop %v4065
    %v4082 = vrsqrt.pop %v4066
    %v4083 = vrsqrt.pop %v4067
    %v4084 = vrsqrt.pop %v4068
    %v4085 = vrsqrt.pop %v4069
    %v4086 = vrsqrt.pop %v4070
    %v4087 = vrsqrt.pop %v4071
    %v4088 = vrsqrt.pop %v4072
    %v4089 = vrsqrt.pop %v4073
    %v4090 = vrsqrt.pop %v4074
    %v4091 = vrsqrt.pop %v4075
    %v4092 = vrsqrt.pop %v4076
    %v4093 = vrsqrt.pop %v4077
    %v4094 = vrsqrt.pop %v4078
    %v4095 = vrsqrt.pop %v4079
    %v4096 = vrsqrt.pop %v4080
    %v4097 = vmul.f32 %v3969, %v4081
    %v4098 = vmul.f32 %v3970, %v4082
    %v4099 = vmul.f32 %v3971, %v4083
    %v4100 = vmul.f32 %v3972, %v4084
    %v4101 = vmul.f32 %v3973, %v4085
    %v4102 = vmul.f32 %v3974, %v4086
    %v4103 = vmul.f32 %v3975, %v4087
    %v4104 = vmul.f32 %v3976, %v4088
    %v4105 = vmul.f32 %v3977, %v4089
    %v4106 = vmul.f32 %v3978, %v4090
    %v4107 = vmul.f32 %v3979, %v4091
    %v4108 = vmul.f32 %v3980, %v4092
    %v4109 = vmul.f32 %v3981, %v4093
    %v4110 = vmul.f32 %v3982, %v4094
    %v4111 = vmul.f32 %v3983, %v4095
    %v4112 = vmul.f32 %v3984, %v4096
    %v4114 = vlaneseq
    %v4115 = vshrl.u32 %v4114, 7
    %v4116 = vsub.s32 0, %v4115
    %v4117 = vrot.slane %v3902, %v4116
    %v4119 = vmul.f32 %v4097, %v4117
    %v4120 = vmul.f32 %v4098, %v4117
    %v4121 = vmul.f32 %v4099, %v4117
    %v4122 = vmul.f32 %v4100, %v4117
    %v4123 = vmul.f32 %v4101, %v4117
    %v4124 = vmul.f32 %v4102, %v4117
    %v4125 = vmul.f32 %v4103, %v4117
    %v4126 = vmul.f32 %v4104, %v4117
    %v4127 = vmul.f32 %v4105, %v4117
    %v4128 = vmul.f32 %v4106, %v4117
    %v4129 = vmul.f32 %v4107, %v4117
    %v4130 = vmul.f32 %v4108, %v4117
    %v4131 = vmul.f32 %v4109, %v4117
    %v4132 = vmul.f32 %v4110, %v4117
    %v4133 = vmul.f32 %v4111, %v4117
    %v4134 = vmul.f32 %v4112, %v4117
    %v4136 = vlaneseq
    %v4137 = vshrl.u32 %v4136, 7
    %v4138 = vsub.s32 0, %v4137
    %v4139 = vrot.slane %v3904, %v4138
    %v4141 = vadd.f32 %v4119, %v4139
    %v4142 = vadd.f32 %v4120, %v4139
    %v4143 = vadd.f32 %v4121, %v4139
    %v4144 = vadd.f32 %v4122, %v4139
    %v4145 = vadd.f32 %v4123, %v4139
    %v4146 = vadd.f32 %v4124, %v4139
    %v4147 = vadd.f32 %v4125, %v4139
    %v4148 = vadd.f32 %v4126, %v4139
    %v4149 = vadd.f32 %v4127, %v4139
    %v4150 = vadd.f32 %v4128, %v4139
    %v4151 = vadd.f32 %v4129, %v4139
    %v4152 = vadd.f32 %v4130, %v4139
    %v4153 = vadd.f32 %v4131, %v4139
    %v4154 = vadd.f32 %v4132, %v4139
    %v4155 = vadd.f32 %v4133, %v4139
    %v4156 = vadd.f32 %v4134, %v4139
    %v4157 = vpack.c.bf16 %v4142, %v4141
    %v4158 = vpack.c.bf16 %v4144, %v4143
    %v4159 = vpack.c.bf16 %v4146, %v4145
    %v4160 = vpack.c.bf16 %v4148, %v4147
    %v4161 = vpack.c.bf16 %v4150, %v4149
    %v4162 = vpack.c.bf16 %v4152, %v4151
    %v4163 = vpack.c.bf16 %v4154, %v4153
    %v4164 = vpack.c.bf16 %v4156, %v4155
    %s4165 = scalar_lea.vmem %s25, 16
    %v4166 = vld [vmem:[%s4165] sm:$0xf]
    %v4167 = vld [vmem:[%s4165 + $0x4] sm:$0xf]
    %v4168 = vld [vmem:[%s4165 + $0x8] sm:$0xf]
    %v4169 = vld [vmem:[%s4165 + $0xc] sm:$0xf]
    %s4170 = scalar_lea.vmem %s27, 1
    %v4171 = vld [vmem:[%s4170] sm:$0x1]
    %v4173 = vlaneseq
    %v4174 = vshrl.u32 %v4173, 7
    %v4175 = vsub.s32 0, %v4174
    %v4176 = vrot.slane %v4171, %v4175
    %v4182 = vunpack.c.l.b16 %v4166
    %v4183 = vunpack.c.l.b16 %v4167
    %v4184 = vunpack.c.l.b16 %v4168
    %v4185 = vunpack.c.l.b16 %v4169
    %v4186 = vpack.c.b16 %v4183, %v4182
    %v4187 = vpack.c.b16 %v4185, %v4184
    %v4191 = vsel %vm517, %v4157, 0
    %v4194 = vsel %vm517, %v4158, 0
    %v4197 = vsel %vm517, %v4159, 0
    %v4200 = vsel %vm517, %v4160, 0
    %v4203 = vsel %vm517, %v4161, 0
    %v4206 = vsel %vm517, %v4162, 0
    %v4209 = vsel %vm517, %v4163, 0
    %v4212 = vsel %vm517, %v4164, 0
    %4214 = vmatprep.subr.bf16.mxu0 0
    %4215 = vmatpush1.bf16.msra.mxu0 %v4186
    %4216 = vmatprep.subr.bf16.mxu0 0
    %4217 = vmatpush1.bf16.msra.mxu0 %v4187
    %4218 = vmatprep.subr.bf16.mxu0 0
    %4219 = vmatpush1.bf16.msra.mxu0 0
    %4220 = vmatprep.subr.bf16.mxu0 0
    %4221 = vmatpush1.bf16.msra.mxu0 0
    %4222 = vmatprep.subr.bf16.mxu0 0
    %4223 = vmatpush1.bf16.msra.mxu0 0
    %4224 = vmatprep.subr.bf16.mxu0 0
    %4225 = vmatpush1.bf16.msra.mxu0 0
    %4226 = vmatprep.subr.bf16.mxu0 0
    %4227 = vmatpush1.bf16.msra.mxu0 0
    %4228 = vmatprep.subr.bf16.mxu0 0
    %4229 = vmatpush1.bf16.msra.mxu0 0
    %4230 = vmatprep.subr.bf16.mxu0 0
    %4231 = vmatpush1.bf16.msra.mxu0 0
    %4232 = vmatprep.subr.bf16.mxu0 0
    %4233 = vmatpush1.bf16.msra.mxu0 0
    %4234 = vmatprep.subr.bf16.mxu0 0
    %4235 = vmatpush1.bf16.msra.mxu0 0
    %4236 = vmatprep.subr.bf16.mxu0 0
    %4237 = vmatpush1.bf16.msra.mxu0 0
    %4238 = vmatprep.subr.bf16.mxu0 0
    %4239 = vmatpush1.bf16.msra.mxu0 0
    %4240 = vmatprep.subr.bf16.mxu0 0
    %4241 = vmatpush1.bf16.msra.mxu0 0
    %4242 = vmatprep.subr.bf16.mxu0 0
    %4243 = vmatpush1.bf16.msra.mxu0 0
    %4244 = vmatprep.subr.bf16.mxu0 0
    %4245 = vmatpush1.bf16.msra.mxu0 0
    %4246 = vmatprep.mubr.bf16.mxu0 0
    %4247 = vmatmul.mubr.bf16.gmra.mrb[0].mxu0 %v4191
    %v4248 = vpop.f32.mrb[0].mxu0
    %v4249 = vadd.f32 %v4176, %v4248
    %v4250 = vpop.f32.mrb[0].mxu0
    %v4251 = vpop.f32.mrb[0].mxu0
    %v4252 = vadd.f32 %v4176, %v4251
    %v4253 = vpop.f32.mrb[0].mxu0
    %4254 = vmatprep.mubr.bf16.mxu0 0
    %4255 = vmatmul.mubr.bf16.gmra.mrb[0].mxu0 %v4194
    %v4256 = vpop.f32.mrb[0].mxu0
    %v4257 = vadd.f32 %v4176, %v4256
    %v4258 = vpop.f32.mrb[0].mxu0
    %v4259 = vpop.f32.mrb[0].mxu0
    %v4260 = vadd.f32 %v4176, %v4259
    %v4261 = vpop.f32.mrb[0].mxu0
    %4262 = vmatprep.mubr.bf16.mxu0 0
    %4263 = vmatmul.mubr.bf16.gmra.mrb[0].mxu0 %v4197
    %v4264 = vpop.f32.mrb[0].mxu0
    %v4265 = vadd.f32 %v4176, %v4264
    %v4266 = vpop.f32.mrb[0].mxu0
    %v4267 = vpop.f32.mrb[0].mxu0
    %v4268 = vadd.f32 %v4176, %v4267
    %v4269 = vpop.f32.mrb[0].mxu0
    %4270 = vmatprep.mubr.bf16.mxu0 0
    %4271 = vmatmul.mubr.bf16.gmra.mrb[0].mxu0 %v4200
    %v4272 = vpop.f32.mrb[0].mxu0
    %v4273 = vadd.f32 %v4176, %v4272
    %v4274 = vpop.f32.mrb[0].mxu0
    %v4275 = vpop.f32.mrb[0].mxu0
    %v4276 = vadd.f32 %v4176, %v4275
    %v4277 = vpop.f32.mrb[0].mxu0
    %4278 = vmatprep.mubr.bf16.mxu0 0
    %4279 = vmatmul.mubr.bf16.gmra.mrb[0].mxu0 %v4203
    %v4280 = vpop.f32.mrb[0].mxu0
    %v4281 = vadd.f32 %v4176, %v4280
    %v4282 = vpop.f32.mrb[0].mxu0
    %v4283 = vpop.f32.mrb[0].mxu0
    %v4284 = vadd.f32 %v4176, %v4283
    %v4285 = vpop.f32.mrb[0].mxu0
    %4286 = vmatprep.mubr.bf16.mxu0 0
    %4287 = vmatmul.mubr.bf16.gmra.mrb[0].mxu0 %v4206
    %v4288 = vpop.f32.mrb[0].mxu0
    %v4289 = vadd.f32 %v4176, %v4288
    %v4290 = vpop.f32.mrb[0].mxu0
    %v4291 = vpop.f32.mrb[0].mxu0
    %v4292 = vadd.f32 %v4176, %v4291
    %v4293 = vpop.f32.mrb[0].mxu0
    %4294 = vmatprep.mubr.bf16.mxu0 0
    %4295 = vmatmul.mubr.bf16.gmra.mrb[0].mxu0 %v4209
    %v4296 = vpop.f32.mrb[0].mxu0
    %v4297 = vadd.f32 %v4176, %v4296
    %v4298 = vpop.f32.mrb[0].mxu0
    %v4299 = vpop.f32.mrb[0].mxu0
    %v4300 = vadd.f32 %v4176, %v4299
    %v4301 = vpop.f32.mrb[0].mxu0
    %4302 = vmatprep.mubr.bf16.mxu0 0
    %4303 = vmatmul.mubr.bf16.gmra.mrb[0].mxu0 %v4212
    %v4304 = vpop.f32.mrb[0].mxu0
    %v4305 = vadd.f32 %v4176, %v4304
    %v4306 = vpop.f32.mrb[0].mxu0
    %v4307 = vpop.f32.mrb[0].mxu0
    %v4308 = vadd.f32 %v4176, %v4307
    %v4309 = vpop.f32.mrb[0].mxu0
    %4310 = vdwg.mxu0
    %s4311 = scalar_lea.vmem %s29, 16
    %v4312 = vld [vmem:[%s4311] sm:$0xf]
    %v4313 = vld [vmem:[%s4311 + $0x4] sm:$0xf]
    %v4314 = vld [vmem:[%s4311 + $0x8] sm:$0xf]
    %v4315 = vld [vmem:[%s4311 + $0xc] sm:$0xf]
    %s4316 = scalar_lea.vmem %s31, 1
    %v4317 = vld [vmem:[%s4316] sm:$0x1]
    %v4319 = vlaneseq
    %v4320 = vshrl.u32 %v4319, 7
    %v4321 = vsub.s32 0, %v4320
    %v4322 = vrot.slane %v4317, %v4321
    %v4328 = vunpack.c.l.b16 %v4312
    %v4329 = vunpack.c.l.b16 %v4313
    %v4330 = vunpack.c.l.b16 %v4314
    %v4331 = vunpack.c.l.b16 %v4315
    %v4332 = vpack.c.b16 %v4329, %v4328
    %v4333 = vpack.c.b16 %v4331, %v4330
    %4336 = vmatprep.subr.bf16.mxu0 0
    %4337 = vmatpush1.bf16.msra.mxu0 %v4332
    %4338 = vmatprep.subr.bf16.mxu0 0
    %4339 = vmatpush1.bf16.msra.mxu0 %v4333
    %4340 = vmatprep.subr.bf16.mxu0 0
    %4341 = vmatpush1.bf16.msra.mxu0 0
    %4342 = vmatprep.subr.bf16.mxu0 0
    %4343 = vmatpush1.bf16.msra.mxu0 0
    %4344 = vmatprep.subr.bf16.mxu0 0
    %4345 = vmatpush1.bf16.msra.mxu0 0
    %4346 = vmatprep.subr.bf16.mxu0 0
    %4347 = vmatpush1.bf16.msra.mxu0 0
    %4348 = vmatprep.subr.bf16.mxu0 0
    %4349 = vmatpush1.bf16.msra.mxu0 0
    %4350 = vmatprep.subr.bf16.mxu0 0
    %4351 = vmatpush1.bf16.msra.mxu0 0
    %4352 = vmatprep.subr.bf16.mxu0 0
    %4353 = vmatpush1.bf16.msra.mxu0 0
    %4354 = vmatprep.subr.bf16.mxu0 0
    %4355 = vmatpush1.bf16.msra.mxu0 0
    %4356 = vmatprep.subr.bf16.mxu0 0
    %4357 = vmatpush1.bf16.msra.mxu0 0
    %4358 = vmatprep.subr.bf16.mxu0 0
    %4359 = vmatpush1.bf16.msra.mxu0 0
    %4360 = vmatprep.subr.bf16.mxu0 0
    %4361 = vmatpush1.bf16.msra.mxu0 0
    %4362 = vmatprep.subr.bf16.mxu0 0
    %4363 = vmatpush1.bf16.msra.mxu0 0
    %4364 = vmatprep.subr.bf16.mxu0 0
    %4365 = vmatpush1.bf16.msra.mxu0 0
    %4366 = vmatprep.subr.bf16.mxu0 0
    %4367 = vmatpush1.bf16.msra.mxu0 0
    %4368 = vmatprep.mubr.bf16.mxu0 0
    %4369 = vmatmul.mubr.bf16.gmra.mrb[0].mxu0 %v4191
    %v4370 = vpop.f32.mrb[0].mxu0
    %v4371 = vadd.f32 %v4322, %v4370
    %v4372 = vpop.f32.mrb[0].mxu0
    %v4373 = vpop.f32.mrb[0].mxu0
    %v4374 = vadd.f32 %v4322, %v4373
    %v4375 = vpop.f32.mrb[0].mxu0
    %4376 = vmatprep.mubr.bf16.mxu0 0
    %4377 = vmatmul.mubr.bf16.gmra.mrb[0].mxu0 %v4194
    %v4378 = vpop.f32.mrb[0].mxu0
    %v4379 = vadd.f32 %v4322, %v4378
    %v4380 = vpop.f32.mrb[0].mxu0
    %v4381 = vpop.f32.mrb[0].mxu0
    %v4382 = vadd.f32 %v4322, %v4381
    %v4383 = vpop.f32.mrb[0].mxu0
    %4384 = vmatprep.mubr.bf16.mxu0 0
    %4385 = vmatmul.mubr.bf16.gmra.mrb[0].mxu0 %v4197
    %v4386 = vpop.f32.mrb[0].mxu0
    %v4387 = vadd.f32 %v4322, %v4386
    %v4388 = vpop.f32.mrb[0].mxu0
    %v4389 = vpop.f32.mrb[0].mxu0
    %v4390 = vadd.f32 %v4322, %v4389
    %v4391 = vpop.f32.mrb[0].mxu0
    %4392 = vmatprep.mubr.bf16.mxu0 0
    %4393 = vmatmul.mubr.bf16.gmra.mrb[0].mxu0 %v4200
    %v4394 = vpop.f32.mrb[0].mxu0
    %v4395 = vadd.f32 %v4322, %v4394
    %v4396 = vpop.f32.mrb[0].mxu0
    %v4397 = vpop.f32.mrb[0].mxu0
    %v4398 = vadd.f32 %v4322, %v4397
    %v4399 = vpop.f32.mrb[0].mxu0
    %4400 = vmatprep.mubr.bf16.mxu0 0
    %4401 = vmatmul.mubr.bf16.gmra.mrb[0].mxu0 %v4203
    %v4402 = vpop.f32.mrb[0].mxu0
    %v4403 = vadd.f32 %v4322, %v4402
    %v4404 = vpop.f32.mrb[0].mxu0
    %v4405 = vpop.f32.mrb[0].mxu0
    %v4406 = vadd.f32 %v4322, %v4405
    %v4407 = vpop.f32.mrb[0].mxu0
    %4408 = vmatprep.mubr.bf16.mxu0 0
    %4409 = vmatmul.mubr.bf16.gmra.mrb[0].mxu0 %v4206
    %v4410 = vpop.f32.mrb[0].mxu0
    %v4411 = vadd.f32 %v4322, %v4410
    %v4412 = vpop.f32.mrb[0].mxu0
    %v4413 = vpop.f32.mrb[0].mxu0
    %v4414 = vadd.f32 %v4322, %v4413
    %v4415 = vpop.f32.mrb[0].mxu0
    %4416 = vmatprep.mubr.bf16.mxu0 0
    %4417 = vmatmul.mubr.bf16.gmra.mrb[0].mxu0 %v4209
    %v4418 = vpop.f32.mrb[0].mxu0
    %v4419 = vadd.f32 %v4322, %v4418
    %v4420 = vpop.f32.mrb[0].mxu0
    %v4421 = vpop.f32.mrb[0].mxu0
    %v4422 = vadd.f32 %v4322, %v4421
    %v4423 = vpop.f32.mrb[0].mxu0
    %4424 = vmatprep.mubr.bf16.mxu0 0
    %4425 = vmatmul.mubr.bf16.gmra.mrb[0].mxu0 %v4212
    %v4426 = vpop.f32.mrb[0].mxu0
    %v4427 = vadd.f32 %v4322, %v4426
    %v4428 = vpop.f32.mrb[0].mxu0
    %v4429 = vpop.f32.mrb[0].mxu0
    %v4430 = vadd.f32 %v4322, %v4429
    %v4431 = vpop.f32.mrb[0].mxu0
    %4432 = vdwg.mxu0
    %s4433 = scalar_lea.vmem %s33, 16
    %v4434 = vld [vmem:[%s4433] sm:$0xf]
    %v4435 = vld [vmem:[%s4433 + $0x4] sm:$0xf]
    %v4436 = vld [vmem:[%s4433 + $0x8] sm:$0xf]
    %v4437 = vld [vmem:[%s4433 + $0xc] sm:$0xf]
    %s4438 = scalar_lea.vmem %s35, 1
    %v4439 = vld [vmem:[%s4438] sm:$0x1]
    %v4441 = vlaneseq
    %v4442 = vshrl.u32 %v4441, 7
    %v4443 = vsub.s32 0, %v4442
    %v4444 = vrot.slane %v4439, %v4443
    %v4450 = vunpack.c.l.b16 %v4434
    %v4451 = vunpack.c.l.b16 %v4435
    %v4452 = vunpack.c.l.b16 %v4436
    %v4453 = vunpack.c.l.b16 %v4437
    %v4454 = vpack.c.b16 %v4451, %v4450
    %v4455 = vpack.c.b16 %v4453, %v4452
    %4458 = vmatprep.subr.bf16.mxu0 0
    %4459 = vmatpush1.bf16.msra.mxu0 %v4454
    %4460 = vmatprep.subr.bf16.mxu0 0
    %4461 = vmatpush1.bf16.msra.mxu0 %v4455
    %4462 = vmatprep.subr.bf16.mxu0 0
    %4463 = vmatpush1.bf16.msra.mxu0 0
    %4464 = vmatprep.subr.bf16.mxu0 0
    %4465 = vmatpush1.bf16.msra.mxu0 0
    %4466 = vmatprep.subr.bf16.mxu0 0
    %4467 = vmatpush1.bf16.msra.mxu0 0
    %4468 = vmatprep.subr.bf16.mxu0 0
    %4469 = vmatpush1.bf16.msra.mxu0 0
    %4470 = vmatprep.subr.bf16.mxu0 0
    %4471 = vmatpush1.bf16.msra.mxu0 0
    %4472 = vmatprep.subr.bf16.mxu0 0
    %4473 = vmatpush1.bf16.msra.mxu0 0
    %4474 = vmatprep.subr.bf16.mxu0 0
    %4475 = vmatpush1.bf16.msra.mxu0 0
    %4476 = vmatprep.subr.bf16.mxu0 0
    %4477 = vmatpush1.bf16.msra.mxu0 0
    %4478 = vmatprep.subr.bf16.mxu0 0
    %4479 = vmatpush1.bf16.msra.mxu0 0
    %4480 = vmatprep.subr.bf16.mxu0 0
    %4481 = vmatpush1.bf16.msra.mxu0 0
    %4482 = vmatprep.subr.bf16.mxu0 0
    %4483 = vmatpush1.bf16.msra.mxu0 0
    %4484 = vmatprep.subr.bf16.mxu0 0
    %4485 = vmatpush1.bf16.msra.mxu0 0
    %4486 = vmatprep.subr.bf16.mxu0 0
    %4487 = vmatpush1.bf16.msra.mxu0 0
    %4488 = vmatprep.subr.bf16.mxu0 0
    %4489 = vmatpush1.bf16.msra.mxu0 0
    %4490 = vmatprep.mubr.bf16.mxu0 0
    %4491 = vmatmul.mubr.bf16.gmra.mrb[0].mxu0 %v4191
    %v4492 = vpop.f32.mrb[0].mxu0
    %v4493 = vadd.f32 %v4444, %v4492
    %v4494 = vpop.f32.mrb[0].mxu0
    %v4495 = vpop.f32.mrb[0].mxu0
    %v4496 = vadd.f32 %v4444, %v4495
    %v4497 = vpop.f32.mrb[0].mxu0
    %4498 = vmatprep.mubr.bf16.mxu0 0
    %4499 = vmatmul.mubr.bf16.gmra.mrb[0].mxu0 %v4194
    %v4500 = vpop.f32.mrb[0].mxu0
    %v4501 = vadd.f32 %v4444, %v4500
    %v4502 = vpop.f32.mrb[0].mxu0
    %v4503 = vpop.f32.mrb[0].mxu0
    %v4504 = vadd.f32 %v4444, %v4503
    %v4505 = vpop.f32.mrb[0].mxu0
    %4506 = vmatprep.mubr.bf16.mxu0 0
    %4507 = vmatmul.mubr.bf16.gmra.mrb[0].mxu0 %v4197
    %v4508 = vpop.f32.mrb[0].mxu0
    %v4509 = vadd.f32 %v4444, %v4508
    %v4510 = vpop.f32.mrb[0].mxu0
    %v4511 = vpop.f32.mrb[0].mxu0
    %v4512 = vadd.f32 %v4444, %v4511
    %v4513 = vpop.f32.mrb[0].mxu0
    %4514 = vmatprep.mubr.bf16.mxu0 0
    %4515 = vmatmul.mubr.bf16.gmra.mrb[0].mxu0 %v4200
    %v4516 = vpop.f32.mrb[0].mxu0
    %v4517 = vadd.f32 %v4444, %v4516
    %v4518 = vpop.f32.mrb[0].mxu0
    %v4519 = vpop.f32.mrb[0].mxu0
    %v4520 = vadd.f32 %v4444, %v4519
    %v4521 = vpop.f32.mrb[0].mxu0
    %4522 = vmatprep.mubr.bf16.mxu0 0
    %4523 = vmatmul.mubr.bf16.gmra.mrb[0].mxu0 %v4203
    %v4524 = vpop.f32.mrb[0].mxu0
    %v4525 = vadd.f32 %v4444, %v4524
    %v4526 = vpop.f32.mrb[0].mxu0
    %v4527 = vpop.f32.mrb[0].mxu0
    %v4528 = vadd.f32 %v4444, %v4527
    %v4529 = vpop.f32.mrb[0].mxu0
    %4530 = vmatprep.mubr.bf16.mxu0 0
    %4531 = vmatmul.mubr.bf16.gmra.mrb[0].mxu0 %v4206
    %v4532 = vpop.f32.mrb[0].mxu0
    %v4533 = vadd.f32 %v4444, %v4532
    %v4534 = vpop.f32.mrb[0].mxu0
    %v4535 = vpop.f32.mrb[0].mxu0
    %v4536 = vadd.f32 %v4444, %v4535
    %v4537 = vpop.f32.mrb[0].mxu0
    %4538 = vmatprep.mubr.bf16.mxu0 0
    %4539 = vmatmul.mubr.bf16.gmra.mrb[0].mxu0 %v4209
    %v4540 = vpop.f32.mrb[0].mxu0
    %v4541 = vadd.f32 %v4444, %v4540
    %v4542 = vpop.f32.mrb[0].mxu0
    %v4543 = vpop.f32.mrb[0].mxu0
    %v4544 = vadd.f32 %v4444, %v4543
    %v4545 = vpop.f32.mrb[0].mxu0
    %4546 = vmatprep.mubr.bf16.mxu0 0
    %4547 = vmatmul.mubr.bf16.gmra.mrb[0].mxu0 %v4212
    %v4548 = vpop.f32.mrb[0].mxu0
    %v4549 = vadd.f32 %v4444, %v4548
    %v4550 = vpop.f32.mrb[0].mxu0
    %v4551 = vpop.f32.mrb[0].mxu0
    %v4552 = vadd.f32 %v4444, %v4551
    %v4553 = vpop.f32.mrb[0].mxu0
    %4554 = vdwg.mxu0
    %v4555 = vmul.f32 %v4249, %v447
    %v4556 = vmul.f32 %v4252, %v448
    %v4557 = vmul.f32 %v4257, %v449
    %v4558 = vmul.f32 %v4260, %v450
    %v4559 = vmul.f32 %v4265, %v451
    %v4560 = vmul.f32 %v4268, %v452
    %v4561 = vmul.f32 %v4273, %v453
    %v4562 = vmul.f32 %v4276, %v454
    %v4563 = vmul.f32 %v4281, %v455
    %v4564 = vmul.f32 %v4284, %v456
    %v4565 = vmul.f32 %v4289, %v457
    %v4566 = vmul.f32 %v4292, %v458
    %v4567 = vmul.f32 %v4297, %v459
    %v4568 = vmul.f32 %v4300, %v460
    %v4569 = vmul.f32 %v4305, %v461
    %v4570 = vmul.f32 %v4308, %v462
    %v4571 = vpack.c.bf16 %v4252, %v4249
    %v4572 = vpack.c.bf16 %v4260, %v4257
    %v4573 = vpack.c.bf16 %v4268, %v4265
    %v4574 = vpack.c.bf16 %v4276, %v4273
    %v4575 = vpack.c.bf16 %v4284, %v4281
    %v4576 = vpack.c.bf16 %v4292, %v4289
    %v4577 = vpack.c.bf16 %v4300, %v4297
    %v4578 = vpack.c.bf16 %v4308, %v4305
    %v4580 = vsel %vm517, %v4571, 0
    %v4583 = vsel %vm517, %v4572, 0
    %v4586 = vsel %vm517, %v4573, 0
    %v4589 = vsel %vm517, %v4574, 0
    %v4592 = vsel %vm517, %v4575, 0
    %v4595 = vsel %vm517, %v4576, 0
    %v4598 = vsel %vm517, %v4577, 0
    %v4601 = vsel %vm517, %v4578, 0
    %4603 = vmatprep.subr.bf16.mxu0 0
    %4604 = vmatpush1.bf16.msra.mxu0 %v1195
    %4605 = vmatprep.subr.bf16.mxu0 0
    %4606 = vmatpush1.bf16.msra.mxu0 %v1196
    %4607 = vmatprep.subr.bf16.mxu0 0
    %4608 = vmatpush1.bf16.msra.mxu0 0
    %4609 = vmatprep.subr.bf16.mxu0 0
    %4610 = vmatpush1.bf16.msra.mxu0 0
    %4611 = vmatprep.subr.bf16.mxu0 0
    %4612 = vmatpush1.bf16.msra.mxu0 0
    %4613 = vmatprep.subr.bf16.mxu0 0
    %4614 = vmatpush1.bf16.msra.mxu0 0
    %4615 = vmatprep.subr.bf16.mxu0 0
    %4616 = vmatpush1.bf16.msra.mxu0 0
    %4617 = vmatprep.subr.bf16.mxu0 0
    %4618 = vmatpush1.bf16.msra.mxu0 0
    %4619 = vmatprep.subr.bf16.mxu0 0
    %4620 = vmatpush1.bf16.msra.mxu0 0
    %4621 = vmatprep.subr.bf16.mxu0 0
    %4622 = vmatpush1.bf16.msra.mxu0 0
    %4623 = vmatprep.subr.bf16.mxu0 0
    %4624 = vmatpush1.bf16.msra.mxu0 0
    %4625 = vmatprep.subr.bf16.mxu0 0
    %4626 = vmatpush1.bf16.msra.mxu0 0
    %4627 = vmatprep.subr.bf16.mxu0 0
    %4628 = vmatpush1.bf16.msra.mxu0 0
    %4629 = vmatprep.subr.bf16.mxu0 0
    %4630 = vmatpush1.bf16.msra.mxu0 0
    %4631 = vmatprep.subr.bf16.mxu0 0
    %4632 = vmatpush1.bf16.msra.mxu0 0
    %4633 = vmatprep.subr.bf16.mxu0 0
    %4634 = vmatpush1.bf16.msra.mxu0 0
    %4635 = vmatprep.mubr.bf16.mxu0 0
    %4636 = vmatmul.mubr.bf16.gmra.mrb[0].mxu0 %v4580
    %v4637 = vpop.f32.mrb[0].mxu0
    %v4638 = vadd.f32 0.0, %v4637
    %v4639 = vpop.f32.mrb[0].mxu0
    %v4640 = vpop.f32.mrb[0].mxu0
    %v4641 = vadd.f32 0.0, %v4640
    %v4642 = vpop.f32.mrb[0].mxu0
    %4643 = vmatprep.mubr.bf16.mxu0 0
    %4644 = vmatmul.mubr.bf16.gmra.mrb[0].mxu0 %v4583
    %v4645 = vpop.f32.mrb[0].mxu0
    %v4646 = vadd.f32 0.0, %v4645
    %v4647 = vpop.f32.mrb[0].mxu0
    %v4648 = vpop.f32.mrb[0].mxu0
    %v4649 = vadd.f32 0.0, %v4648
    %v4650 = vpop.f32.mrb[0].mxu0
    %4651 = vmatprep.mubr.bf16.mxu0 0
    %4652 = vmatmul.mubr.bf16.gmra.mrb[0].mxu0 %v4586
    %v4653 = vpop.f32.mrb[0].mxu0
    %v4654 = vadd.f32 0.0, %v4653
    %v4655 = vpop.f32.mrb[0].mxu0
    %v4656 = vpop.f32.mrb[0].mxu0
    %v4657 = vadd.f32 0.0, %v4656
    %v4658 = vpop.f32.mrb[0].mxu0
    %4659 = vmatprep.mubr.bf16.mxu0 0
    %4660 = vmatmul.mubr.bf16.gmra.mrb[0].mxu0 %v4589
    %v4661 = vpop.f32.mrb[0].mxu0
    %v4662 = vadd.f32 0.0, %v4661
    %v4663 = vpop.f32.mrb[0].mxu0
    %v4664 = vpop.f32.mrb[0].mxu0
    %v4665 = vadd.f32 0.0, %v4664
    %v4666 = vpop.f32.mrb[0].mxu0
    %4667 = vmatprep.mubr.bf16.mxu0 0
    %4668 = vmatmul.mubr.bf16.gmra.mrb[0].mxu0 %v4592
    %v4669 = vpop.f32.mrb[0].mxu0
    %v4670 = vadd.f32 0.0, %v4669
    %v4671 = vpop.f32.mrb[0].mxu0
    %v4672 = vpop.f32.mrb[0].mxu0
    %v4673 = vadd.f32 0.0, %v4672
    %v4674 = vpop.f32.mrb[0].mxu0
    %4675 = vmatprep.mubr.bf16.mxu0 0
    %4676 = vmatmul.mubr.bf16.gmra.mrb[0].mxu0 %v4595
    %v4677 = vpop.f32.mrb[0].mxu0
    %v4678 = vadd.f32 0.0, %v4677
    %v4679 = vpop.f32.mrb[0].mxu0
    %v4680 = vpop.f32.mrb[0].mxu0
    %v4681 = vadd.f32 0.0, %v4680
    %v4682 = vpop.f32.mrb[0].mxu0
    %4683 = vmatprep.mubr.bf16.mxu0 0
    %4684 = vmatmul.mubr.bf16.gmra.mrb[0].mxu0 %v4598
    %v4685 = vpop.f32.mrb[0].mxu0
    %v4686 = vadd.f32 0.0, %v4685
    %v4687 = vpop.f32.mrb[0].mxu0
    %v4688 = vpop.f32.mrb[0].mxu0
    %v4689 = vadd.f32 0.0, %v4688
    %v4690 = vpop.f32.mrb[0].mxu0
    %4691 = vmatprep.mubr.bf16.mxu0 0
    %4692 = vmatmul.mubr.bf16.gmra.mrb[0].mxu0 %v4601
    %v4693 = vpop.f32.mrb[0].mxu0
    %v4694 = vadd.f32 0.0, %v4693
    %v4695 = vpop.f32.mrb[0].mxu0
    %v4696 = vpop.f32.mrb[0].mxu0
    %v4697 = vadd.f32 0.0, %v4696
    %v4698 = vpop.f32.mrb[0].mxu0
    %4699 = vdwg.mxu0
    %v4700 = vmul.f32 %v4638, %v463
    %v4701 = vmul.f32 %v4641, %v464
    %v4702 = vmul.f32 %v4646, %v465
    %v4703 = vmul.f32 %v4649, %v466
    %v4704 = vmul.f32 %v4654, %v467
    %v4705 = vmul.f32 %v4657, %v468
    %v4706 = vmul.f32 %v4662, %v469
    %v4707 = vmul.f32 %v4665, %v470
    %v4708 = vmul.f32 %v4670, %v471
    %v4709 = vmul.f32 %v4673, %v472
    %v4710 = vmul.f32 %v4678, %v473
    %v4711 = vmul.f32 %v4681, %v474
    %v4712 = vmul.f32 %v4686, %v475
    %v4713 = vmul.f32 %v4689, %v476
    %v4714 = vmul.f32 %v4694, %v477
    %v4715 = vmul.f32 %v4697, %v478
    %v4716 = vadd.f32 %v4555, %v4700
    %v4717 = vadd.f32 %v4556, %v4701
    %v4718 = vadd.f32 %v4557, %v4702
    %v4719 = vadd.f32 %v4558, %v4703
    %v4720 = vadd.f32 %v4559, %v4704
    %v4721 = vadd.f32 %v4560, %v4705
    %v4722 = vadd.f32 %v4561, %v4706
    %v4723 = vadd.f32 %v4562, %v4707
    %v4724 = vadd.f32 %v4563, %v4708
    %v4725 = vadd.f32 %v4564, %v4709
    %v4726 = vadd.f32 %v4565, %v4710
    %v4727 = vadd.f32 %v4566, %v4711
    %v4728 = vadd.f32 %v4567, %v4712
    %v4729 = vadd.f32 %v4568, %v4713
    %v4730 = vadd.f32 %v4569, %v4714
    %v4731 = vadd.f32 %v4570, %v4715
    %v4732 = vmul.f32 %v4371, %v447
    %v4733 = vmul.f32 %v4374, %v448
    %v4734 = vmul.f32 %v4379, %v449
    %v4735 = vmul.f32 %v4382, %v450
    %v4736 = vmul.f32 %v4387, %v451
    %v4737 = vmul.f32 %v4390, %v452
    %v4738 = vmul.f32 %v4395, %v453
    %v4739 = vmul.f32 %v4398, %v454
    %v4740 = vmul.f32 %v4403, %v455
    %v4741 = vmul.f32 %v4406, %v456
    %v4742 = vmul.f32 %v4411, %v457
    %v4743 = vmul.f32 %v4414, %v458
    %v4744 = vmul.f32 %v4419, %v459
    %v4745 = vmul.f32 %v4422, %v460
    %v4746 = vmul.f32 %v4427, %v461
    %v4747 = vmul.f32 %v4430, %v462
    %v4748 = vpack.c.bf16 %v4374, %v4371
    %v4749 = vpack.c.bf16 %v4382, %v4379
    %v4750 = vpack.c.bf16 %v4390, %v4387
    %v4751 = vpack.c.bf16 %v4398, %v4395
    %v4752 = vpack.c.bf16 %v4406, %v4403
    %v4753 = vpack.c.bf16 %v4414, %v4411
    %v4754 = vpack.c.bf16 %v4422, %v4419
    %v4755 = vpack.c.bf16 %v4430, %v4427
    %v4757 = vsel %vm517, %v4748, 0
    %v4760 = vsel %vm517, %v4749, 0
    %v4763 = vsel %vm517, %v4750, 0
    %v4766 = vsel %vm517, %v4751, 0
    %v4769 = vsel %vm517, %v4752, 0
    %v4772 = vsel %vm517, %v4753, 0
    %v4775 = vsel %vm517, %v4754, 0
    %v4778 = vsel %vm517, %v4755, 0
    %4780 = vmatprep.subr.bf16.mxu0 0
    %4781 = vmatpush1.bf16.msra.mxu0 %v1195
    %4782 = vmatprep.subr.bf16.mxu0 0
    %4783 = vmatpush1.bf16.msra.mxu0 %v1196
    %4784 = vmatprep.subr.bf16.mxu0 0
    %4785 = vmatpush1.bf16.msra.mxu0 0
    %4786 = vmatprep.subr.bf16.mxu0 0
    %4787 = vmatpush1.bf16.msra.mxu0 0
    %4788 = vmatprep.subr.bf16.mxu0 0
    %4789 = vmatpush1.bf16.msra.mxu0 0
    %4790 = vmatprep.subr.bf16.mxu0 0
    %4791 = vmatpush1.bf16.msra.mxu0 0
    %4792 = vmatprep.subr.bf16.mxu0 0
    %4793 = vmatpush1.bf16.msra.mxu0 0
    %4794 = vmatprep.subr.bf16.mxu0 0
    %4795 = vmatpush1.bf16.msra.mxu0 0
    %4796 = vmatprep.subr.bf16.mxu0 0
    %4797 = vmatpush1.bf16.msra.mxu0 0
    %4798 = vmatprep.subr.bf16.mxu0 0
    %4799 = vmatpush1.bf16.msra.mxu0 0
    %4800 = vmatprep.subr.bf16.mxu0 0
    %4801 = vmatpush1.bf16.msra.mxu0 0
    %4802 = vmatprep.subr.bf16.mxu0 0
    %4803 = vmatpush1.bf16.msra.mxu0 0
    %4804 = vmatprep.subr.bf16.mxu0 0
    %4805 = vmatpush1.bf16.msra.mxu0 0
    %4806 = vmatprep.subr.bf16.mxu0 0
    %4807 = vmatpush1.bf16.msra.mxu0 0
    %4808 = vmatprep.subr.bf16.mxu0 0
    %4809 = vmatpush1.bf16.msra.mxu0 0
    %4810 = vmatprep.subr.bf16.mxu0 0
    %4811 = vmatpush1.bf16.msra.mxu0 0
    %4812 = vmatprep.mubr.bf16.mxu0 0
    %4813 = vmatmul.mubr.bf16.gmra.mrb[0].mxu0 %v4757
    %v4814 = vpop.f32.mrb[0].mxu0
    %v4815 = vadd.f32 0.0, %v4814
    %v4816 = vpop.f32.mrb[0].mxu0
    %v4817 = vpop.f32.mrb[0].mxu0
    %v4818 = vadd.f32 0.0, %v4817
    %v4819 = vpop.f32.mrb[0].mxu0
    %4820 = vmatprep.mubr.bf16.mxu0 0
    %4821 = vmatmul.mubr.bf16.gmra.mrb[0].mxu0 %v4760
    %v4822 = vpop.f32.mrb[0].mxu0
    %v4823 = vadd.f32 0.0, %v4822
    %v4824 = vpop.f32.mrb[0].mxu0
    %v4825 = vpop.f32.mrb[0].mxu0
    %v4826 = vadd.f32 0.0, %v4825
    %v4827 = vpop.f32.mrb[0].mxu0
    %4828 = vmatprep.mubr.bf16.mxu0 0
    %4829 = vmatmul.mubr.bf16.gmra.mrb[0].mxu0 %v4763
    %v4830 = vpop.f32.mrb[0].mxu0
    %v4831 = vadd.f32 0.0, %v4830
    %v4832 = vpop.f32.mrb[0].mxu0
    %v4833 = vpop.f32.mrb[0].mxu0
    %v4834 = vadd.f32 0.0, %v4833
    %v4835 = vpop.f32.mrb[0].mxu0
    %4836 = vmatprep.mubr.bf16.mxu0 0
    %4837 = vmatmul.mubr.bf16.gmra.mrb[0].mxu0 %v4766
    %v4838 = vpop.f32.mrb[0].mxu0
    %v4839 = vadd.f32 0.0, %v4838
    %v4840 = vpop.f32.mrb[0].mxu0
    %v4841 = vpop.f32.mrb[0].mxu0
    %v4842 = vadd.f32 0.0, %v4841
    %v4843 = vpop.f32.mrb[0].mxu0
    %4844 = vmatprep.mubr.bf16.mxu0 0
    %4845 = vmatmul.mubr.bf16.gmra.mrb[0].mxu0 %v4769
    %v4846 = vpop.f32.mrb[0].mxu0
    %v4847 = vadd.f32 0.0, %v4846
    %v4848 = vpop.f32.mrb[0].mxu0
    %v4849 = vpop.f32.mrb[0].mxu0
    %v4850 = vadd.f32 0.0, %v4849
    %v4851 = vpop.f32.mrb[0].mxu0
    %4852 = vmatprep.mubr.bf16.mxu0 0
    %4853 = vmatmul.mubr.bf16.gmra.mrb[0].mxu0 %v4772
    %v4854 = vpop.f32.mrb[0].mxu0
    %v4855 = vadd.f32 0.0, %v4854
    %v4856 = vpop.f32.mrb[0].mxu0
    %v4857 = vpop.f32.mrb[0].mxu0
    %v4858 = vadd.f32 0.0, %v4857
    %v4859 = vpop.f32.mrb[0].mxu0
    %4860 = vmatprep.mubr.bf16.mxu0 0
    %4861 = vmatmul.mubr.bf16.gmra.mrb[0].mxu0 %v4775
    %v4862 = vpop.f32.mrb[0].mxu0
    %v4863 = vadd.f32 0.0, %v4862
    %v4864 = vpop.f32.mrb[0].mxu0
    %v4865 = vpop.f32.mrb[0].mxu0
    %v4866 = vadd.f32 0.0, %v4865
    %v4867 = vpop.f32.mrb[0].mxu0
    %4868 = vmatprep.mubr.bf16.mxu0 0
    %4869 = vmatmul.mubr.bf16.gmra.mrb[0].mxu0 %v4778
    %v4870 = vpop.f32.mrb[0].mxu0
    %v4871 = vadd.f32 0.0, %v4870
    %v4872 = vpop.f32.mrb[0].mxu0
    %v4873 = vpop.f32.mrb[0].mxu0
    %v4874 = vadd.f32 0.0, %v4873
    %v4875 = vpop.f32.mrb[0].mxu0
    %4876 = vdwg.mxu0
    %v4877 = vmul.f32 %v4815, %v463
    %v4878 = vmul.f32 %v4818, %v464
    %v4879 = vmul.f32 %v4823, %v465
    %v4880 = vmul.f32 %v4826, %v466
    %v4881 = vmul.f32 %v4831, %v467
    %v4882 = vmul.f32 %v4834, %v468
    %v4883 = vmul.f32 %v4839, %v469
    %v4884 = vmul.f32 %v4842, %v470
    %v4885 = vmul.f32 %v4847, %v471
    %v4886 = vmul.f32 %v4850, %v472
    %v4887 = vmul.f32 %v4855, %v473
    %v4888 = vmul.f32 %v4858, %v474
    %v4889 = vmul.f32 %v4863, %v475
    %v4890 = vmul.f32 %v4866, %v476
    %v4891 = vmul.f32 %v4871, %v477
    %v4892 = vmul.f32 %v4874, %v478
    %v4893 = vadd.f32 %v4732, %v4877
    %v4894 = vadd.f32 %v4733, %v4878
    %v4895 = vadd.f32 %v4734, %v4879
    %v4896 = vadd.f32 %v4735, %v4880
    %v4897 = vadd.f32 %v4736, %v4881
    %v4898 = vadd.f32 %v4737, %v4882
    %v4899 = vadd.f32 %v4738, %v4883
    %v4900 = vadd.f32 %v4739, %v4884
    %v4901 = vadd.f32 %v4740, %v4885
    %v4902 = vadd.f32 %v4741, %v4886
    %v4903 = vadd.f32 %v4742, %v4887
    %v4904 = vadd.f32 %v4743, %v4888
    %v4905 = vadd.f32 %v4744, %v4889
    %v4906 = vadd.f32 %v4745, %v4890
    %v4907 = vadd.f32 %v4746, %v4891
    %v4908 = vadd.f32 %v4747, %v4892
    %v4909 = vpack.c.bf16 %v4717, %v4716
    %v4910 = vpack.c.bf16 %v4719, %v4718
    %v4911 = vpack.c.bf16 %v4721, %v4720
    %v4912 = vpack.c.bf16 %v4723, %v4722
    %v4913 = vpack.c.bf16 %v4725, %v4724
    %v4914 = vpack.c.bf16 %v4727, %v4726
    %v4915 = vpack.c.bf16 %v4729, %v4728
    %v4916 = vpack.c.bf16 %v4731, %v4730
    %v4917 = vpack.c.bf16 %v4894, %v4893
    %v4918 = vpack.c.bf16 %v4896, %v4895
    %v4919 = vpack.c.bf16 %v4898, %v4897
    %v4920 = vpack.c.bf16 %v4900, %v4899
    %v4921 = vpack.c.bf16 %v4902, %v4901
    %v4922 = vpack.c.bf16 %v4904, %v4903
    %v4923 = vpack.c.bf16 %v4906, %v4905
    %v4924 = vpack.c.bf16 %v4908, %v4907
    %v4925 = vpack.c.bf16 %v4496, %v4493
    %v4926 = vpack.c.bf16 %v4504, %v4501
    %v4927 = vpack.c.bf16 %v4512, %v4509
    %v4928 = vpack.c.bf16 %v4520, %v4517
    %v4929 = vpack.c.bf16 %v4528, %v4525
    %v4930 = vpack.c.bf16 %v4536, %v4533
    %v4931 = vpack.c.bf16 %v4544, %v4541
    %v4932 = vpack.c.bf16 %v4552, %v4549
    %v4933 = vmul.bf16 %v4917, %v1617
    %v4934 = vmul.bf16 %v4918, %v1618
    %v4935 = vmul.bf16 %v4919, %v1619
    %v4936 = vmul.bf16 %v4920, %v1620
    %v4937 = vmul.bf16 %v4917, %v1621
    %v4938 = vmul.bf16 %v4918, %v1622
    %v4939 = vmul.bf16 %v4919, %v1623
    %v4940 = vmul.bf16 %v4920, %v1624
    %v4941 = vmul.bf16 %v4917, %v1625
    %v4942 = vmul.bf16 %v4918, %v1626
    %v4943 = vmul.bf16 %v4919, %v1627
    %v4944 = vmul.bf16 %v4920, %v1628
    %v4945 = vmul.bf16 %v4917, %v1629
    %v4946 = vmul.bf16 %v4918, %v1630
    %v4947 = vmul.bf16 %v4919, %v1631
    %v4948 = vmul.bf16 %v4920, %v1632
    %v4949 = vmul.bf16 %v4925, %v1617
    %v4950 = vmul.bf16 %v4926, %v1618
    %v4951 = vmul.bf16 %v4927, %v1619
    %v4952 = vmul.bf16 %v4928, %v1620
    %v4953 = vmul.bf16 %v4925, %v1621
    %v4954 = vmul.bf16 %v4926, %v1622
    %v4955 = vmul.bf16 %v4927, %v1623
    %v4956 = vmul.bf16 %v4928, %v1624
    %v4957 = vmul.bf16 %v4925, %v1625
    %v4958 = vmul.bf16 %v4926, %v1626
    %v4959 = vmul.bf16 %v4927, %v1627
    %v4960 = vmul.bf16 %v4928, %v1628
    %v4961 = vmul.bf16 %v4925, %v1629
    %v4962 = vmul.bf16 %v4926, %v1630
    %v4963 = vmul.bf16 %v4927, %v1631
    %v4964 = vmul.bf16 %v4928, %v1632
    %v4966 = vsel %vm517, %v4909, 0
    %v4969 = vsel %vm517, %v4910, 0
    %v4972 = vsel %vm517, %v4911, 0
    %v4975 = vsel %vm517, %v4912, 0
    %v4978 = vsel %vm517, %v4933, 0
    %v4981 = vsel %vm517, %v4934, 0
    %v4984 = vsel %vm517, %v4935, 0
    %v4987 = vsel %vm517, %v4936, 0
    %v4990 = vsel %vm517, %v4937, 0
    %v4993 = vsel %vm517, %v4938, 0
    %v4996 = vsel %vm517, %v4939, 0
    %v4999 = vsel %vm517, %v4940, 0
    %v5002 = vsel %vm517, %v4941, 0
    %v5005 = vsel %vm517, %v4942, 0
    %v5008 = vsel %vm517, %v4943, 0
    %v5011 = vsel %vm517, %v4944, 0
    %v5014 = vsel %vm517, %v4945, 0
    %v5017 = vsel %vm517, %v4946, 0
    %v5020 = vsel %vm517, %v4947, 0
    %v5023 = vsel %vm517, %v4948, 0
    %5025 = vmatprep.subr.bf16.mxu0 0
    %5026 = vmatpush1.bf16.xpose.msra.mxu0 %v4978
    %5027 = vmatprep.subr.bf16.mxu0 0
    %5028 = vmatpush1.bf16.xpose.msra.mxu0 %v4981
    %5029 = vmatprep.subr.bf16.mxu0 0
    %5030 = vmatpush1.bf16.xpose.msra.mxu0 %v4984
    %5031 = vmatprep.subr.bf16.mxu0 0
    %5032 = vmatpush1.bf16.xpose.msra.mxu0 %v4987
    %5033 = vmatprep.subr.bf16.mxu0 0
    %5034 = vmatpush1.bf16.xpose.msra.mxu0 %v4990
    %5035 = vmatprep.subr.bf16.mxu0 0
    %5036 = vmatpush1.bf16.xpose.msra.mxu0 %v4993
    %5037 = vmatprep.subr.bf16.mxu0 0
    %5038 = vmatpush1.bf16.xpose.msra.mxu0 %v4996
    %5039 = vmatprep.subr.bf16.mxu0 0
    %5040 = vmatpush1.bf16.xpose.msra.mxu0 %v4999
    %5041 = vmatprep.subr.bf16.mxu0 0
    %5042 = vmatpush1.bf16.xpose.msra.mxu0 %v5002
    %5043 = vmatprep.subr.bf16.mxu0 0
    %5044 = vmatpush1.bf16.xpose.msra.mxu0 %v5005
    %5045 = vmatprep.subr.bf16.mxu0 0
    %5046 = vmatpush1.bf16.xpose.msra.mxu0 %v5008
    %5047 = vmatprep.subr.bf16.mxu0 0
    %5048 = vmatpush1.bf16.xpose.msra.mxu0 %v5011
    %5049 = vmatprep.subr.bf16.mxu0 0
    %5050 = vmatpush1.bf16.xpose.msra.mxu0 %v5014
    %5051 = vmatprep.subr.bf16.mxu0 0
    %5052 = vmatpush1.bf16.xpose.msra.mxu0 %v5017
    %5053 = vmatprep.subr.bf16.mxu0 0
    %5054 = vmatpush1.bf16.xpose.msra.mxu0 %v5020
    %5055 = vmatprep.subr.bf16.mxu0 0
    %5056 = vmatpush1.bf16.xpose.msra.mxu0 %v5023
    %5057 = vmatprep.mubr.bf16.mxu0 0
    %5058 = vmatmul.mubr.bf16.gmra.mrb[0].mxu0 %v4966
    %v5059 = vpop.f32.mrb[0].mxu0
    %v5060 = vadd.f32 0.0, %v5059
    %v5061 = vpop.f32.mrb[0].mxu0
    %v5062 = vadd.f32 0.0, %v5061
    %v5063 = vpop.f32.mrb[0].mxu0
    %v5064 = vadd.f32 0.0, %v5063
    %v5065 = vpop.f32.mrb[0].mxu0
    %v5066 = vadd.f32 0.0, %v5065
    %5067 = vmatprep.mubr.bf16.mxu0 0
    %5068 = vmatmul.mubr.bf16.gmra.mrb[0].mxu0 %v4969
    %v5069 = vpop.f32.mrb[0].mxu0
    %v5070 = vadd.f32 0.0, %v5069
    %v5071 = vpop.f32.mrb[0].mxu0
    %v5072 = vadd.f32 0.0, %v5071
    %v5073 = vpop.f32.mrb[0].mxu0
    %v5074 = vadd.f32 0.0, %v5073
    %v5075 = vpop.f32.mrb[0].mxu0
    %v5076 = vadd.f32 0.0, %v5075
    %5077 = vmatprep.mubr.bf16.mxu0 0
    %5078 = vmatmul.mubr.bf16.gmra.mrb[0].mxu0 %v4972
    %v5079 = vpop.f32.mrb[0].mxu0
    %v5080 = vadd.f32 0.0, %v5079
    %v5081 = vpop.f32.mrb[0].mxu0
    %v5082 = vadd.f32 0.0, %v5081
    %v5083 = vpop.f32.mrb[0].mxu0
    %v5084 = vadd.f32 0.0, %v5083
    %v5085 = vpop.f32.mrb[0].mxu0
    %v5086 = vadd.f32 0.0, %v5085
    %5087 = vmatprep.mubr.bf16.mxu0 0
    %5088 = vmatmul.mubr.bf16.gmra.mrb[0].mxu0 %v4975
    %v5089 = vpop.f32.mrb[0].mxu0
    %v5090 = vadd.f32 0.0, %v5089
    %v5091 = vpop.f32.mrb[0].mxu0
    %v5092 = vadd.f32 0.0, %v5091
    %v5093 = vpop.f32.mrb[0].mxu0
    %v5094 = vadd.f32 0.0, %v5093
    %v5095 = vpop.f32.mrb[0].mxu0
    %v5096 = vadd.f32 0.0, %v5095
    %5097 = vdwg.mxu0
    %v5098 = vsel %vm1814, %v5060, -inf
    %5099 = vmax.xlane.f32.xlu0 %v5098
    %v5100 = vpop.xlane.xlu0 %5099
    %v5101 = vsel %vm1814, %v5064, -inf
    %5102 = vmax.xlane.f32.xlu0 %v5101
    %v5103 = vpop.xlane.xlu0 %5102
    %v5104 = vsel %vm1814, %v5070, -inf
    %5105 = vmax.xlane.f32.xlu0 %v5104
    %v5106 = vpop.xlane.xlu0 %5105
    %v5107 = vsel %vm1814, %v5074, -inf
    %5108 = vmax.xlane.f32.xlu0 %v5107
    %v5109 = vpop.xlane.xlu0 %5108
    %v5110 = vsel %vm1814, %v5080, -inf
    %5111 = vmax.xlane.f32.xlu0 %v5110
    %v5112 = vpop.xlane.xlu0 %5111
    %v5113 = vsel %vm1814, %v5084, -inf
    %5114 = vmax.xlane.f32.xlu0 %v5113
    %v5115 = vpop.xlane.xlu0 %5114
    %v5116 = vsel %vm1814, %v5090, -inf
    %5117 = vmax.xlane.f32.xlu0 %v5116
    %v5118 = vpop.xlane.xlu0 %5117
    %v5119 = vsel %vm1814, %v5094, -inf
    %5120 = vmax.xlane.f32.xlu0 %v5119
    %v5121 = vpop.xlane.xlu0 %5120
    %v5122 = vsub.f32 %v5060, %v5100
    %v5123 = vsub.f32 %v5064, %v5103
    %v5124 = vsub.f32 %v5070, %v5106
    %v5125 = vsub.f32 %v5074, %v5109
    %v5126 = vsub.f32 %v5080, %v5112
    %v5127 = vsub.f32 %v5084, %v5115
    %v5128 = vsub.f32 %v5090, %v5118
    %v5129 = vsub.f32 %v5094, %v5121
    %v5130 = vmul.f32 %v5122, 1.442695
    %v5131 = vpow.pop %v5130
    %v5132 = vmul.f32 %v5123, 1.442695
    %v5133 = vpow.pop %v5132
    %v5134 = vmul.f32 %v5124, 1.442695
    %v5135 = vpow.pop %v5134
    %v5136 = vmul.f32 %v5125, 1.442695
    %v5137 = vpow.pop %v5136
    %v5138 = vmul.f32 %v5126, 1.442695
    %v5139 = vpow.pop %v5138
    %v5140 = vmul.f32 %v5127, 1.442695
    %v5141 = vpow.pop %v5140
    %v5142 = vmul.f32 %v5128, 1.442695
    %v5143 = vpow.pop %v5142
    %v5144 = vmul.f32 %v5129, 1.442695
    %v5145 = vpow.pop %v5144
    %v5146 = vsel %vm1814, %v5131, 0.0
    %5147 = vadd.xlane.f32.xlu0 %v5146
    %v5148 = vpop.xlane.xlu0 %5147
    %v5149 = vsel %vm1814, %v5133, 0.0
    %5150 = vadd.xlane.f32.xlu0 %v5149
    %v5151 = vpop.xlane.xlu0 %5150
    %v5152 = vsel %vm1814, %v5135, 0.0
    %5153 = vadd.xlane.f32.xlu0 %v5152
    %v5154 = vpop.xlane.xlu0 %5153
    %v5155 = vsel %vm1814, %v5137, 0.0
    %5156 = vadd.xlane.f32.xlu0 %v5155
    %v5157 = vpop.xlane.xlu0 %5156
    %v5158 = vsel %vm1814, %v5139, 0.0
    %5159 = vadd.xlane.f32.xlu0 %v5158
    %v5160 = vpop.xlane.xlu0 %5159
    %v5161 = vsel %vm1814, %v5141, 0.0
    %5162 = vadd.xlane.f32.xlu0 %v5161
    %v5163 = vpop.xlane.xlu0 %5162
    %v5164 = vsel %vm1814, %v5143, 0.0
    %5165 = vadd.xlane.f32.xlu0 %v5164
    %v5166 = vpop.xlane.xlu0 %5165
    %v5167 = vsel %vm1814, %v5145, 0.0
    %5168 = vadd.xlane.f32.xlu0 %v5167
    %v5169 = vpop.xlane.xlu0 %5168
    %v5170 = vrcp.pop %v5148
    %v5171 = vrcp.pop %v5151
    %v5172 = vrcp.pop %v5154
    %v5173 = vrcp.pop %v5157
    %v5174 = vrcp.pop %v5160
    %v5175 = vrcp.pop %v5163
    %v5176 = vrcp.pop %v5166
    %v5177 = vrcp.pop %v5169
    %v5178 = vmul.f32 %v5131, %v5170
    %v5179 = vmul.f32 %v5133, %v5171
    %v5180 = vmul.f32 %v5135, %v5172
    %v5181 = vmul.f32 %v5137, %v5173
    %v5182 = vmul.f32 %v5139, %v5174
    %v5183 = vmul.f32 %v5141, %v5175
    %v5184 = vmul.f32 %v5143, %v5176
    %v5185 = vmul.f32 %v5145, %v5177
    %v5186 = vsel %vm1903, %v5060, -inf
    %5187 = vmax.xlane.f32.xlu0 %v5186
    %v5188 = vpop.xlane.xlu0 %5187
    %v5189 = vsel %vm1903, %v5064, -inf
    %5190 = vmax.xlane.f32.xlu0 %v5189
    %v5191 = vpop.xlane.xlu0 %5190
    %v5192 = vsel %vm1903, %v5070, -inf
    %5193 = vmax.xlane.f32.xlu0 %v5192
    %v5194 = vpop.xlane.xlu0 %5193
    %v5195 = vsel %vm1903, %v5074, -inf
    %5196 = vmax.xlane.f32.xlu0 %v5195
    %v5197 = vpop.xlane.xlu0 %5196
    %v5198 = vsel %vm1903, %v5080, -inf
    %5199 = vmax.xlane.f32.xlu0 %v5198
    %v5200 = vpop.xlane.xlu0 %5199
    %v5201 = vsel %vm1903, %v5084, -inf
    %5202 = vmax.xlane.f32.xlu0 %v5201
    %v5203 = vpop.xlane.xlu0 %5202
    %v5204 = vsel %vm1903, %v5090, -inf
    %5205 = vmax.xlane.f32.xlu0 %v5204
    %v5206 = vpop.xlane.xlu0 %5205
    %v5207 = vsel %vm1903, %v5094, -inf
    %5208 = vmax.xlane.f32.xlu0 %v5207
    %v5209 = vpop.xlane.xlu0 %5208
    %v5210 = vsub.f32 %v5060, %v5188
    %v5211 = vsub.f32 %v5064, %v5191
    %v5212 = vsub.f32 %v5070, %v5194
    %v5213 = vsub.f32 %v5074, %v5197
    %v5214 = vsub.f32 %v5080, %v5200
    %v5215 = vsub.f32 %v5084, %v5203
    %v5216 = vsub.f32 %v5090, %v5206
    %v5217 = vsub.f32 %v5094, %v5209
    %v5218 = vmul.f32 %v5210, 1.442695
    %v5219 = vpow.pop %v5218
    %v5220 = vmul.f32 %v5211, 1.442695
    %v5221 = vpow.pop %v5220
    %v5222 = vmul.f32 %v5212, 1.442695
    %v5223 = vpow.pop %v5222
    %v5224 = vmul.f32 %v5213, 1.442695
    %v5225 = vpow.pop %v5224
    %v5226 = vmul.f32 %v5214, 1.442695
    %v5227 = vpow.pop %v5226
    %v5228 = vmul.f32 %v5215, 1.442695
    %v5229 = vpow.pop %v5228
    %v5230 = vmul.f32 %v5216, 1.442695
    %v5231 = vpow.pop %v5230
    %v5232 = vmul.f32 %v5217, 1.442695
    %v5233 = vpow.pop %v5232
    %5242 = vrot.lane.b32.xlu0 %v5219, 64
    %v5243 = vpop.permute.xlu0 %5242
    %5244 = vrot.lane.b32.xlu0 %v5221, 64
    %v5245 = vpop.permute.xlu0 %5244
    %5246 = vrot.lane.b32.xlu0 %v5223, 64
    %v5247 = vpop.permute.xlu0 %5246
    %5248 = vrot.lane.b32.xlu0 %v5225, 64
    %v5249 = vpop.permute.xlu0 %5248
    %5250 = vrot.lane.b32.xlu0 %v5227, 64
    %v5251 = vpop.permute.xlu0 %5250
    %5252 = vrot.lane.b32.xlu0 %v5229, 64
    %v5253 = vpop.permute.xlu0 %5252
    %5254 = vrot.lane.b32.xlu0 %v5231, 64
    %v5255 = vpop.permute.xlu0 %5254
    %5256 = vrot.lane.b32.xlu0 %v5233, 64
    %v5257 = vpop.permute.xlu0 %5256
    %v5266 = vsel %vm1814, %v5243, 0.0
    %5267 = vadd.xlane.f32.xlu0 %v5266
    %v5268 = vpop.xlane.xlu0 %5267
    %v5269 = vsel %vm1814, %v5245, 0.0
    %5270 = vadd.xlane.f32.xlu0 %v5269
    %v5271 = vpop.xlane.xlu0 %5270
    %v5272 = vsel %vm1814, %v5247, 0.0
    %5273 = vadd.xlane.f32.xlu0 %v5272
    %v5274 = vpop.xlane.xlu0 %5273
    %v5275 = vsel %vm1814, %v5249, 0.0
    %5276 = vadd.xlane.f32.xlu0 %v5275
    %v5277 = vpop.xlane.xlu0 %5276
    %v5278 = vsel %vm1814, %v5251, 0.0
    %5279 = vadd.xlane.f32.xlu0 %v5278
    %v5280 = vpop.xlane.xlu0 %5279
    %v5281 = vsel %vm1814, %v5253, 0.0
    %5282 = vadd.xlane.f32.xlu0 %v5281
    %v5283 = vpop.xlane.xlu0 %5282
    %v5284 = vsel %vm1814, %v5255, 0.0
    %5285 = vadd.xlane.f32.xlu0 %v5284
    %v5286 = vpop.xlane.xlu0 %5285
    %v5287 = vsel %vm1814, %v5257, 0.0
    %5288 = vadd.xlane.f32.xlu0 %v5287
    %v5289 = vpop.xlane.xlu0 %5288
    %v5290 = vrcp.pop %v5268
    %v5291 = vrcp.pop %v5271
    %v5292 = vrcp.pop %v5274
    %v5293 = vrcp.pop %v5277
    %v5294 = vrcp.pop %v5280
    %v5295 = vrcp.pop %v5283
    %v5296 = vrcp.pop %v5286
    %v5297 = vrcp.pop %v5289
    %v5298 = vmul.f32 %v5219, %v5290
    %v5299 = vmul.f32 %v5221, %v5291
    %v5300 = vmul.f32 %v5223, %v5292
    %v5301 = vmul.f32 %v5225, %v5293
    %v5302 = vmul.f32 %v5227, %v5294
    %v5303 = vmul.f32 %v5229, %v5295
    %v5304 = vmul.f32 %v5231, %v5296
    %v5305 = vmul.f32 %v5233, %v5297
    %v5306 = vsel %vm1814, %v5062, -inf
    %5307 = vmax.xlane.f32.xlu0 %v5306
    %v5308 = vpop.xlane.xlu0 %5307
    %v5309 = vsel %vm1814, %v5066, -inf
    %5310 = vmax.xlane.f32.xlu0 %v5309
    %v5311 = vpop.xlane.xlu0 %5310
    %v5312 = vsel %vm1814, %v5072, -inf
    %5313 = vmax.xlane.f32.xlu0 %v5312
    %v5314 = vpop.xlane.xlu0 %5313
    %v5315 = vsel %vm1814, %v5076, -inf
    %5316 = vmax.xlane.f32.xlu0 %v5315
    %v5317 = vpop.xlane.xlu0 %5316
    %v5318 = vsel %vm1814, %v5082, -inf
    %5319 = vmax.xlane.f32.xlu0 %v5318
    %v5320 = vpop.xlane.xlu0 %5319
    %v5321 = vsel %vm1814, %v5086, -inf
    %5322 = vmax.xlane.f32.xlu0 %v5321
    %v5323 = vpop.xlane.xlu0 %5322
    %v5324 = vsel %vm1814, %v5092, -inf
    %5325 = vmax.xlane.f32.xlu0 %v5324
    %v5326 = vpop.xlane.xlu0 %5325
    %v5327 = vsel %vm1814, %v5096, -inf
    %5328 = vmax.xlane.f32.xlu0 %v5327
    %v5329 = vpop.xlane.xlu0 %5328
    %v5330 = vsub.f32 %v5062, %v5308
    %v5331 = vsub.f32 %v5066, %v5311
    %v5332 = vsub.f32 %v5072, %v5314
    %v5333 = vsub.f32 %v5076, %v5317
    %v5334 = vsub.f32 %v5082, %v5320
    %v5335 = vsub.f32 %v5086, %v5323
    %v5336 = vsub.f32 %v5092, %v5326
    %v5337 = vsub.f32 %v5096, %v5329
    %v5338 = vmul.f32 %v5330, 1.442695
    %v5339 = vpow.pop %v5338
    %v5340 = vmul.f32 %v5331, 1.442695
    %v5341 = vpow.pop %v5340
    %v5342 = vmul.f32 %v5332, 1.442695
    %v5343 = vpow.pop %v5342
    %v5344 = vmul.f32 %v5333, 1.442695
    %v5345 = vpow.pop %v5344
    %v5346 = vmul.f32 %v5334, 1.442695
    %v5347 = vpow.pop %v5346
    %v5348 = vmul.f32 %v5335, 1.442695
    %v5349 = vpow.pop %v5348
    %v5350 = vmul.f32 %v5336, 1.442695
    %v5351 = vpow.pop %v5350
    %v5352 = vmul.f32 %v5337, 1.442695
    %v5353 = vpow.pop %v5352
    %v5354 = vsel %vm1814, %v5339, 0.0
    %5355 = vadd.xlane.f32.xlu0 %v5354
    %v5356 = vpop.xlane.xlu0 %5355
    %v5357 = vsel %vm1814, %v5341, 0.0
    %5358 = vadd.xlane.f32.xlu0 %v5357
    %v5359 = vpop.xlane.xlu0 %5358
    %v5360 = vsel %vm1814, %v5343, 0.0
    %5361 = vadd.xlane.f32.xlu0 %v5360
    %v5362 = vpop.xlane.xlu0 %5361
    %v5363 = vsel %vm1814, %v5345, 0.0
    %5364 = vadd.xlane.f32.xlu0 %v5363
    %v5365 = vpop.xlane.xlu0 %5364
    %v5366 = vsel %vm1814, %v5347, 0.0
    %5367 = vadd.xlane.f32.xlu0 %v5366
    %v5368 = vpop.xlane.xlu0 %5367
    %v5369 = vsel %vm1814, %v5349, 0.0
    %5370 = vadd.xlane.f32.xlu0 %v5369
    %v5371 = vpop.xlane.xlu0 %5370
    %v5372 = vsel %vm1814, %v5351, 0.0
    %5373 = vadd.xlane.f32.xlu0 %v5372
    %v5374 = vpop.xlane.xlu0 %5373
    %v5375 = vsel %vm1814, %v5353, 0.0
    %5376 = vadd.xlane.f32.xlu0 %v5375
    %v5377 = vpop.xlane.xlu0 %5376
    %v5378 = vrcp.pop %v5356
    %v5379 = vrcp.pop %v5359
    %v5380 = vrcp.pop %v5362
    %v5381 = vrcp.pop %v5365
    %v5382 = vrcp.pop %v5368
    %v5383 = vrcp.pop %v5371
    %v5384 = vrcp.pop %v5374
    %v5385 = vrcp.pop %v5377
    %v5386 = vmul.f32 %v5339, %v5378
    %v5387 = vmul.f32 %v5341, %v5379
    %v5388 = vmul.f32 %v5343, %v5380
    %v5389 = vmul.f32 %v5345, %v5381
    %v5390 = vmul.f32 %v5347, %v5382
    %v5391 = vmul.f32 %v5349, %v5383
    %v5392 = vmul.f32 %v5351, %v5384
    %v5393 = vmul.f32 %v5353, %v5385
    %v5394 = vsel %vm1903, %v5062, -inf
    %5395 = vmax.xlane.f32.xlu0 %v5394
    %v5396 = vpop.xlane.xlu0 %5395
    %v5397 = vsel %vm1903, %v5066, -inf
    %5398 = vmax.xlane.f32.xlu0 %v5397
    %v5399 = vpop.xlane.xlu0 %5398
    %v5400 = vsel %vm1903, %v5072, -inf
    %5401 = vmax.xlane.f32.xlu0 %v5400
    %v5402 = vpop.xlane.xlu0 %5401
    %v5403 = vsel %vm1903, %v5076, -inf
    %5404 = vmax.xlane.f32.xlu0 %v5403
    %v5405 = vpop.xlane.xlu0 %5404
    %v5406 = vsel %vm1903, %v5082, -inf
    %5407 = vmax.xlane.f32.xlu0 %v5406
    %v5408 = vpop.xlane.xlu0 %5407
    %v5409 = vsel %vm1903, %v5086, -inf
    %5410 = vmax.xlane.f32.xlu0 %v5409
    %v5411 = vpop.xlane.xlu0 %5410
    %v5412 = vsel %vm1903, %v5092, -inf
    %5413 = vmax.xlane.f32.xlu0 %v5412
    %v5414 = vpop.xlane.xlu0 %5413
    %v5415 = vsel %vm1903, %v5096, -inf
    %5416 = vmax.xlane.f32.xlu0 %v5415
    %v5417 = vpop.xlane.xlu0 %5416
    %v5418 = vsub.f32 %v5062, %v5396
    %v5419 = vsub.f32 %v5066, %v5399
    %v5420 = vsub.f32 %v5072, %v5402
    %v5421 = vsub.f32 %v5076, %v5405
    %v5422 = vsub.f32 %v5082, %v5408
    %v5423 = vsub.f32 %v5086, %v5411
    %v5424 = vsub.f32 %v5092, %v5414
    %v5425 = vsub.f32 %v5096, %v5417
    %v5426 = vmul.f32 %v5418, 1.442695
    %v5427 = vpow.pop %v5426
    %v5428 = vmul.f32 %v5419, 1.442695
    %v5429 = vpow.pop %v5428
    %v5430 = vmul.f32 %v5420, 1.442695
    %v5431 = vpow.pop %v5430
    %v5432 = vmul.f32 %v5421, 1.442695
    %v5433 = vpow.pop %v5432
    %v5434 = vmul.f32 %v5422, 1.442695
    %v5435 = vpow.pop %v5434
    %v5436 = vmul.f32 %v5423, 1.442695
    %v5437 = vpow.pop %v5436
    %v5438 = vmul.f32 %v5424, 1.442695
    %v5439 = vpow.pop %v5438
    %v5440 = vmul.f32 %v5425, 1.442695
    %v5441 = vpow.pop %v5440
    %5450 = vrot.lane.b32.xlu0 %v5427, 64
    %v5451 = vpop.permute.xlu0 %5450
    %5452 = vrot.lane.b32.xlu0 %v5429, 64
    %v5453 = vpop.permute.xlu0 %5452
    %5454 = vrot.lane.b32.xlu0 %v5431, 64
    %v5455 = vpop.permute.xlu0 %5454
    %5456 = vrot.lane.b32.xlu0 %v5433, 64
    %v5457 = vpop.permute.xlu0 %5456
    %5458 = vrot.lane.b32.xlu0 %v5435, 64
    %v5459 = vpop.permute.xlu0 %5458
    %5460 = vrot.lane.b32.xlu0 %v5437, 64
    %v5461 = vpop.permute.xlu0 %5460
    %5462 = vrot.lane.b32.xlu0 %v5439, 64
    %v5463 = vpop.permute.xlu0 %5462
    %5464 = vrot.lane.b32.xlu0 %v5441, 64
    %v5465 = vpop.permute.xlu0 %5464
    %v5474 = vsel %vm1814, %v5451, 0.0
    %5475 = vadd.xlane.f32.xlu0 %v5474
    %v5476 = vpop.xlane.xlu0 %5475
    %v5477 = vsel %vm1814, %v5453, 0.0
    %5478 = vadd.xlane.f32.xlu0 %v5477
    %v5479 = vpop.xlane.xlu0 %5478
    %v5480 = vsel %vm1814, %v5455, 0.0
    %5481 = vadd.xlane.f32.xlu0 %v5480
    %v5482 = vpop.xlane.xlu0 %5481
    %v5483 = vsel %vm1814, %v5457, 0.0
    %5484 = vadd.xlane.f32.xlu0 %v5483
    %v5485 = vpop.xlane.xlu0 %5484
    %v5486 = vsel %vm1814, %v5459, 0.0
    %5487 = vadd.xlane.f32.xlu0 %v5486
    %v5488 = vpop.xlane.xlu0 %5487
    %v5489 = vsel %vm1814, %v5461, 0.0
    %5490 = vadd.xlane.f32.xlu0 %v5489
    %v5491 = vpop.xlane.xlu0 %5490
    %v5492 = vsel %vm1814, %v5463, 0.0
    %5493 = vadd.xlane.f32.xlu0 %v5492
    %v5494 = vpop.xlane.xlu0 %5493
    %v5495 = vsel %vm1814, %v5465, 0.0
    %5496 = vadd.xlane.f32.xlu0 %v5495
    %v5497 = vpop.xlane.xlu0 %5496
    %v5498 = vrcp.pop %v5476
    %v5499 = vrcp.pop %v5479
    %v5500 = vrcp.pop %v5482
    %v5501 = vrcp.pop %v5485
    %v5502 = vrcp.pop %v5488
    %v5503 = vrcp.pop %v5491
    %v5504 = vrcp.pop %v5494
    %v5505 = vrcp.pop %v5497
    %v5506 = vmul.f32 %v5427, %v5498
    %v5507 = vmul.f32 %v5429, %v5499
    %v5508 = vmul.f32 %v5431, %v5500
    %v5509 = vmul.f32 %v5433, %v5501
    %v5510 = vmul.f32 %v5435, %v5502
    %v5511 = vmul.f32 %v5437, %v5503
    %v5512 = vmul.f32 %v5439, %v5504
    %v5513 = vmul.f32 %v5441, %v5505
    %v5514 = vsel %vm1814, %v5178, %v5298
    %v5515 = vsel %vm1814, %v5179, %v5299
    %v5516 = vsel %vm1814, %v5180, %v5300
    %v5517 = vsel %vm1814, %v5181, %v5301
    %v5518 = vsel %vm1814, %v5182, %v5302
    %v5519 = vsel %vm1814, %v5183, %v5303
    %v5520 = vsel %vm1814, %v5184, %v5304
    %v5521 = vsel %vm1814, %v5185, %v5305
    %v5522 = vsel %vm1814, %v5386, %v5506
    %v5523 = vsel %vm1814, %v5387, %v5507
    %v5524 = vsel %vm1814, %v5388, %v5508
    %v5525 = vsel %vm1814, %v5389, %v5509
    %v5526 = vsel %vm1814, %v5390, %v5510
    %v5527 = vsel %vm1814, %v5391, %v5511
    %v5528 = vsel %vm1814, %v5392, %v5512
    %v5529 = vsel %vm1814, %v5393, %v5513
    %v5530 = vpack.c.bf16 %v5515, %v5514
    %v5531 = vpack.c.bf16 %v5523, %v5522
    %v5532 = vpack.c.bf16 %v5517, %v5516
    %v5533 = vpack.c.bf16 %v5525, %v5524
    %v5534 = vpack.c.bf16 %v5519, %v5518
    %v5535 = vpack.c.bf16 %v5527, %v5526
    %v5536 = vpack.c.bf16 %v5521, %v5520
    %v5537 = vpack.c.bf16 %v5529, %v5528
    %5538 = vmatprep.subr.bf16.mxu0 0
    %5539 = vmatpush1.bf16.msra.mxu0 %v4949
    %5540 = vmatprep.subr.bf16.mxu0 0
    %5541 = vmatpush1.bf16.msra.mxu0 %v4950
    %5542 = vmatprep.subr.bf16.mxu0 0
    %5543 = vmatpush1.bf16.msra.mxu0 %v4951
    %5544 = vmatprep.subr.bf16.mxu0 0
    %5545 = vmatpush1.bf16.msra.mxu0 %v4952
    %5546 = vmatprep.subr.bf16.mxu0 0
    %5547 = vmatpush1.bf16.msra.mxu0 %v4953
    %5548 = vmatprep.subr.bf16.mxu0 0
    %5549 = vmatpush1.bf16.msra.mxu0 %v4954
    %5550 = vmatprep.subr.bf16.mxu0 0
    %5551 = vmatpush1.bf16.msra.mxu0 %v4955
    %5552 = vmatprep.subr.bf16.mxu0 0
    %5553 = vmatpush1.bf16.msra.mxu0 %v4956
    %5554 = vmatprep.subr.bf16.mxu0 0
    %5555 = vmatpush1.bf16.msra.mxu0 %v4957
    %5556 = vmatprep.subr.bf16.mxu0 0
    %5557 = vmatpush1.bf16.msra.mxu0 %v4958
    %5558 = vmatprep.subr.bf16.mxu0 0
    %5559 = vmatpush1.bf16.msra.mxu0 %v4959
    %5560 = vmatprep.subr.bf16.mxu0 0
    %5561 = vmatpush1.bf16.msra.mxu0 %v4960
    %5562 = vmatprep.subr.bf16.mxu0 0
    %5563 = vmatpush1.bf16.msra.mxu0 %v4961
    %5564 = vmatprep.subr.bf16.mxu0 0
    %5565 = vmatpush1.bf16.msra.mxu0 %v4962
    %5566 = vmatprep.subr.bf16.mxu0 0
    %5567 = vmatpush1.bf16.msra.mxu0 %v4963
    %5568 = vmatprep.subr.bf16.mxu0 0
    %5569 = vmatpush1.bf16.msra.mxu0 %v4964
    %5570 = vmatprep.mubr.bf16.mxu0 %v5531
    %5571 = vmatmul.mubr.bf16.gmra.mrb[0].mxu0 %v5530
    %v5572 = vpop.f32.mrb[0].mxu0
    %v5573 = vadd.f32 0.0, %v5572
    %v5574 = vpop.f32.mrb[0].mxu0
    %v5575 = vpop.f32.mrb[0].mxu0
    %v5576 = vadd.f32 0.0, %v5575
    %v5577 = vpop.f32.mrb[0].mxu0
    %5578 = vmatprep.mubr.bf16.mxu0 %v5533
    %5579 = vmatmul.mubr.bf16.gmra.mrb[0].mxu0 %v5532
    %v5580 = vpop.f32.mrb[0].mxu0
    %v5581 = vadd.f32 0.0, %v5580
    %v5582 = vpop.f32.mrb[0].mxu0
    %v5583 = vpop.f32.mrb[0].mxu0
    %v5584 = vadd.f32 0.0, %v5583
    %v5585 = vpop.f32.mrb[0].mxu0
    %5586 = vmatprep.mubr.bf16.mxu0 %v5535
    %5587 = vmatmul.mubr.bf16.gmra.mrb[0].mxu0 %v5534
    %v5588 = vpop.f32.mrb[0].mxu0
    %v5589 = vadd.f32 0.0, %v5588
    %v5590 = vpop.f32.mrb[0].mxu0
    %v5591 = vpop.f32.mrb[0].mxu0
    %v5592 = vadd.f32 0.0, %v5591
    %v5593 = vpop.f32.mrb[0].mxu0
    %5594 = vmatprep.mubr.bf16.mxu0 %v5537
    %5595 = vmatmul.mubr.bf16.gmra.mrb[0].mxu0 %v5536
    %v5596 = vpop.f32.mrb[0].mxu0
    %v5597 = vadd.f32 0.0, %v5596
    %v5598 = vpop.f32.mrb[0].mxu0
    %v5599 = vpop.f32.mrb[0].mxu0
    %v5600 = vadd.f32 0.0, %v5599
    %v5601 = vpop.f32.mrb[0].mxu0
    %5602 = vdwg.mxu0
    %v5603 = vmul.bf16 %v4921, %v1617
    %v5604 = vmul.bf16 %v4922, %v1618
    %v5605 = vmul.bf16 %v4923, %v1619
    %v5606 = vmul.bf16 %v4924, %v1620
    %v5607 = vmul.bf16 %v4921, %v1621
    %v5608 = vmul.bf16 %v4922, %v1622
    %v5609 = vmul.bf16 %v4923, %v1623
    %v5610 = vmul.bf16 %v4924, %v1624
    %v5611 = vmul.bf16 %v4921, %v1625
    %v5612 = vmul.bf16 %v4922, %v1626
    %v5613 = vmul.bf16 %v4923, %v1627
    %v5614 = vmul.bf16 %v4924, %v1628
    %v5615 = vmul.bf16 %v4921, %v1629
    %v5616 = vmul.bf16 %v4922, %v1630
    %v5617 = vmul.bf16 %v4923, %v1631
    %v5618 = vmul.bf16 %v4924, %v1632
    %v5619 = vmul.bf16 %v4929, %v1617
    %v5620 = vmul.bf16 %v4930, %v1618
    %v5621 = vmul.bf16 %v4931, %v1619
    %v5622 = vmul.bf16 %v4932, %v1620
    %v5623 = vmul.bf16 %v4929, %v1621
    %v5624 = vmul.bf16 %v4930, %v1622
    %v5625 = vmul.bf16 %v4931, %v1623
    %v5626 = vmul.bf16 %v4932, %v1624
    %v5627 = vmul.bf16 %v4929, %v1625
    %v5628 = vmul.bf16 %v4930, %v1626
    %v5629 = vmul.bf16 %v4931, %v1627
    %v5630 = vmul.bf16 %v4932, %v1628
    %v5631 = vmul.bf16 %v4929, %v1629
    %v5632 = vmul.bf16 %v4930, %v1630
    %v5633 = vmul.bf16 %v4931, %v1631
    %v5634 = vmul.bf16 %v4932, %v1632
    %v5636 = vsel %vm517, %v4913, 0
    %v5639 = vsel %vm517, %v4914, 0
    %v5642 = vsel %vm517, %v4915, 0
    %v5645 = vsel %vm517, %v4916, 0
    %v5648 = vsel %vm517, %v5603, 0
    %v5651 = vsel %vm517, %v5604, 0
    %v5654 = vsel %vm517, %v5605, 0
    %v5657 = vsel %vm517, %v5606, 0
    %v5660 = vsel %vm517, %v5607, 0
    %v5663 = vsel %vm517, %v5608, 0
    %v5666 = vsel %vm517, %v5609, 0
    %v5669 = vsel %vm517, %v5610, 0
    %v5672 = vsel %vm517, %v5611, 0
    %v5675 = vsel %vm517, %v5612, 0
    %v5678 = vsel %vm517, %v5613, 0
    %v5681 = vsel %vm517, %v5614, 0
    %v5684 = vsel %vm517, %v5615, 0
    %v5687 = vsel %vm517, %v5616, 0
    %v5690 = vsel %vm517, %v5617, 0
    %v5693 = vsel %vm517, %v5618, 0
    %5695 = vmatprep.subr.bf16.mxu0 0
    %5696 = vmatpush1.bf16.xpose.msra.mxu0 %v5648
    %5697 = vmatprep.subr.bf16.mxu0 0
    %5698 = vmatpush1.bf16.xpose.msra.mxu0 %v5651
    %5699 = vmatprep.subr.bf16.mxu0 0
    %5700 = vmatpush1.bf16.xpose.msra.mxu0 %v5654
    %5701 = vmatprep.subr.bf16.mxu0 0
    %5702 = vmatpush1.bf16.xpose.msra.mxu0 %v5657
    %5703 = vmatprep.subr.bf16.mxu0 0
    %5704 = vmatpush1.bf16.xpose.msra.mxu0 %v5660
    %5705 = vmatprep.subr.bf16.mxu0 0
    %5706 = vmatpush1.bf16.xpose.msra.mxu0 %v5663
    %5707 = vmatprep.subr.bf16.mxu0 0
    %5708 = vmatpush1.bf16.xpose.msra.mxu0 %v5666
    %5709 = vmatprep.subr.bf16.mxu0 0
    %5710 = vmatpush1.bf16.xpose.msra.mxu0 %v5669
    %5711 = vmatprep.subr.bf16.mxu0 0
    %5712 = vmatpush1.bf16.xpose.msra.mxu0 %v5672
    %5713 = vmatprep.subr.bf16.mxu0 0
    %5714 = vmatpush1.bf16.xpose.msra.mxu0 %v5675
    %5715 = vmatprep.subr.bf16.mxu0 0
    %5716 = vmatpush1.bf16.xpose.msra.mxu0 %v5678
    %5717 = vmatprep.subr.bf16.mxu0 0
    %5718 = vmatpush1.bf16.xpose.msra.mxu0 %v5681
    %5719 = vmatprep.subr.bf16.mxu0 0
    %5720 = vmatpush1.bf16.xpose.msra.mxu0 %v5684
    %5721 = vmatprep.subr.bf16.mxu0 0
    %5722 = vmatpush1.bf16.xpose.msra.mxu0 %v5687
    %5723 = vmatprep.subr.bf16.mxu0 0
    %5724 = vmatpush1.bf16.xpose.msra.mxu0 %v5690
    %5725 = vmatprep.subr.bf16.mxu0 0
    %5726 = vmatpush1.bf16.xpose.msra.mxu0 %v5693
    %5727 = vmatprep.mubr.bf16.mxu0 0
    %5728 = vmatmul.mubr.bf16.gmra.mrb[0].mxu0 %v5636
    %v5729 = vpop.f32.mrb[0].mxu0
    %v5730 = vadd.f32 0.0, %v5729
    %v5731 = vpop.f32.mrb[0].mxu0
    %v5732 = vadd.f32 0.0, %v5731
    %v5733 = vpop.f32.mrb[0].mxu0
    %v5734 = vadd.f32 0.0, %v5733
    %v5735 = vpop.f32.mrb[0].mxu0
    %v5736 = vadd.f32 0.0, %v5735
    %5737 = vmatprep.mubr.bf16.mxu0 0
    %5738 = vmatmul.mubr.bf16.gmra.mrb[0].mxu0 %v5639
    %v5739 = vpop.f32.mrb[0].mxu0
    %v5740 = vadd.f32 0.0, %v5739
    %v5741 = vpop.f32.mrb[0].mxu0
    %v5742 = vadd.f32 0.0, %v5741
    %v5743 = vpop.f32.mrb[0].mxu0
    %v5744 = vadd.f32 0.0, %v5743
    %v5745 = vpop.f32.mrb[0].mxu0
    %v5746 = vadd.f32 0.0, %v5745
    %5747 = vmatprep.mubr.bf16.mxu0 0
    %5748 = vmatmul.mubr.bf16.gmra.mrb[0].mxu0 %v5642
    %v5749 = vpop.f32.mrb[0].mxu0
    %v5750 = vadd.f32 0.0, %v5749
    %v5751 = vpop.f32.mrb[0].mxu0
    %v5752 = vadd.f32 0.0, %v5751
    %v5753 = vpop.f32.mrb[0].mxu0
    %v5754 = vadd.f32 0.0, %v5753
    %v5755 = vpop.f32.mrb[0].mxu0
    %v5756 = vadd.f32 0.0, %v5755
    %5757 = vmatprep.mubr.bf16.mxu0 0
    %5758 = vmatmul.mubr.bf16.gmra.mrb[0].mxu0 %v5645
    %v5759 = vpop.f32.mrb[0].mxu0
    %v5760 = vadd.f32 0.0, %v5759
    %v5761 = vpop.f32.mrb[0].mxu0
    %v5762 = vadd.f32 0.0, %v5761
    %v5763 = vpop.f32.mrb[0].mxu0
    %v5764 = vadd.f32 0.0, %v5763
    %v5765 = vpop.f32.mrb[0].mxu0
    %v5766 = vadd.f32 0.0, %v5765
    %5767 = vdwg.mxu0
    %v5768 = vsel %vm1814, %v5730, -inf
    %5769 = vmax.xlane.f32.xlu0 %v5768
    %v5770 = vpop.xlane.xlu0 %5769
    %v5771 = vsel %vm1814, %v5734, -inf
    %5772 = vmax.xlane.f32.xlu0 %v5771
    %v5773 = vpop.xlane.xlu0 %5772
    %v5774 = vsel %vm1814, %v5740, -inf
    %5775 = vmax.xlane.f32.xlu0 %v5774
    %v5776 = vpop.xlane.xlu0 %5775
    %v5777 = vsel %vm1814, %v5744, -inf
    %5778 = vmax.xlane.f32.xlu0 %v5777
    %v5779 = vpop.xlane.xlu0 %5778
    %v5780 = vsel %vm1814, %v5750, -inf
    %5781 = vmax.xlane.f32.xlu0 %v5780
    %v5782 = vpop.xlane.xlu0 %5781
    %v5783 = vsel %vm1814, %v5754, -inf
    %5784 = vmax.xlane.f32.xlu0 %v5783
    %v5785 = vpop.xlane.xlu0 %5784
    %v5786 = vsel %vm1814, %v5760, -inf
    %5787 = vmax.xlane.f32.xlu0 %v5786
    %v5788 = vpop.xlane.xlu0 %5787
    %v5789 = vsel %vm1814, %v5764, -inf
    %5790 = vmax.xlane.f32.xlu0 %v5789
    %v5791 = vpop.xlane.xlu0 %5790
    %v5792 = vsub.f32 %v5730, %v5770
    %v5793 = vsub.f32 %v5734, %v5773
    %v5794 = vsub.f32 %v5740, %v5776
    %v5795 = vsub.f32 %v5744, %v5779
    %v5796 = vsub.f32 %v5750, %v5782
    %v5797 = vsub.f32 %v5754, %v5785
    %v5798 = vsub.f32 %v5760, %v5788
    %v5799 = vsub.f32 %v5764, %v5791
    %v5800 = vmul.f32 %v5792, 1.442695
    %v5801 = vpow.pop %v5800
    %v5802 = vmul.f32 %v5793, 1.442695
    %v5803 = vpow.pop %v5802
    %v5804 = vmul.f32 %v5794, 1.442695
    %v5805 = vpow.pop %v5804
    %v5806 = vmul.f32 %v5795, 1.442695
    %v5807 = vpow.pop %v5806
    %v5808 = vmul.f32 %v5796, 1.442695
    %v5809 = vpow.pop %v5808
    %v5810 = vmul.f32 %v5797, 1.442695
    %v5811 = vpow.pop %v5810
    %v5812 = vmul.f32 %v5798, 1.442695
    %v5813 = vpow.pop %v5812
    %v5814 = vmul.f32 %v5799, 1.442695
    %v5815 = vpow.pop %v5814
    %v5816 = vsel %vm1814, %v5801, 0.0
    %5817 = vadd.xlane.f32.xlu0 %v5816
    %v5818 = vpop.xlane.xlu0 %5817
    %v5819 = vsel %vm1814, %v5803, 0.0
    %5820 = vadd.xlane.f32.xlu0 %v5819
    %v5821 = vpop.xlane.xlu0 %5820
    %v5822 = vsel %vm1814, %v5805, 0.0
    %5823 = vadd.xlane.f32.xlu0 %v5822
    %v5824 = vpop.xlane.xlu0 %5823
    %v5825 = vsel %vm1814, %v5807, 0.0
    %5826 = vadd.xlane.f32.xlu0 %v5825
    %v5827 = vpop.xlane.xlu0 %5826
    %v5828 = vsel %vm1814, %v5809, 0.0
    %5829 = vadd.xlane.f32.xlu0 %v5828
    %v5830 = vpop.xlane.xlu0 %5829
    %v5831 = vsel %vm1814, %v5811, 0.0
    %5832 = vadd.xlane.f32.xlu0 %v5831
    %v5833 = vpop.xlane.xlu0 %5832
    %v5834 = vsel %vm1814, %v5813, 0.0
    %5835 = vadd.xlane.f32.xlu0 %v5834
    %v5836 = vpop.xlane.xlu0 %5835
    %v5837 = vsel %vm1814, %v5815, 0.0
    %5838 = vadd.xlane.f32.xlu0 %v5837
    %v5839 = vpop.xlane.xlu0 %5838
    %v5840 = vrcp.pop %v5818
    %v5841 = vrcp.pop %v5821
    %v5842 = vrcp.pop %v5824
    %v5843 = vrcp.pop %v5827
    %v5844 = vrcp.pop %v5830
    %v5845 = vrcp.pop %v5833
    %v5846 = vrcp.pop %v5836
    %v5847 = vrcp.pop %v5839
    %v5848 = vmul.f32 %v5801, %v5840
    %v5849 = vmul.f32 %v5803, %v5841
    %v5850 = vmul.f32 %v5805, %v5842
    %v5851 = vmul.f32 %v5807, %v5843
    %v5852 = vmul.f32 %v5809, %v5844
    %v5853 = vmul.f32 %v5811, %v5845
    %v5854 = vmul.f32 %v5813, %v5846
    %v5855 = vmul.f32 %v5815, %v5847
    %v5856 = vsel %vm1903, %v5730, -inf
    %5857 = vmax.xlane.f32.xlu0 %v5856
    %v5858 = vpop.xlane.xlu0 %5857
    %v5859 = vsel %vm1903, %v5734, -inf
    %5860 = vmax.xlane.f32.xlu0 %v5859
    %v5861 = vpop.xlane.xlu0 %5860
    %v5862 = vsel %vm1903, %v5740, -inf
    %5863 = vmax.xlane.f32.xlu0 %v5862
    %v5864 = vpop.xlane.xlu0 %5863
    %v5865 = vsel %vm1903, %v5744, -inf
    %5866 = vmax.xlane.f32.xlu0 %v5865
    %v5867 = vpop.xlane.xlu0 %5866
    %v5868 = vsel %vm1903, %v5750, -inf
    %5869 = vmax.xlane.f32.xlu0 %v5868
    %v5870 = vpop.xlane.xlu0 %5869
    %v5871 = vsel %vm1903, %v5754, -inf
    %5872 = vmax.xlane.f32.xlu0 %v5871
    %v5873 = vpop.xlane.xlu0 %5872
    %v5874 = vsel %vm1903, %v5760, -inf
    %5875 = vmax.xlane.f32.xlu0 %v5874
    %v5876 = vpop.xlane.xlu0 %5875
    %v5877 = vsel %vm1903, %v5764, -inf
    %5878 = vmax.xlane.f32.xlu0 %v5877
    %v5879 = vpop.xlane.xlu0 %5878
    %v5880 = vsub.f32 %v5730, %v5858
    %v5881 = vsub.f32 %v5734, %v5861
    %v5882 = vsub.f32 %v5740, %v5864
    %v5883 = vsub.f32 %v5744, %v5867
    %v5884 = vsub.f32 %v5750, %v5870
    %v5885 = vsub.f32 %v5754, %v5873
    %v5886 = vsub.f32 %v5760, %v5876
    %v5887 = vsub.f32 %v5764, %v5879
    %v5888 = vmul.f32 %v5880, 1.442695
    %v5889 = vpow.pop %v5888
    %v5890 = vmul.f32 %v5881, 1.442695
    %v5891 = vpow.pop %v5890
    %v5892 = vmul.f32 %v5882, 1.442695
    %v5893 = vpow.pop %v5892
    %v5894 = vmul.f32 %v5883, 1.442695
    %v5895 = vpow.pop %v5894
    %v5896 = vmul.f32 %v5884, 1.442695
    %v5897 = vpow.pop %v5896
    %v5898 = vmul.f32 %v5885, 1.442695
    %v5899 = vpow.pop %v5898
    %v5900 = vmul.f32 %v5886, 1.442695
    %v5901 = vpow.pop %v5900
    %v5902 = vmul.f32 %v5887, 1.442695
    %v5903 = vpow.pop %v5902
    %5912 = vrot.lane.b32.xlu0 %v5889, 64
    %v5913 = vpop.permute.xlu0 %5912
    %5914 = vrot.lane.b32.xlu0 %v5891, 64
    %v5915 = vpop.permute.xlu0 %5914
    %5916 = vrot.lane.b32.xlu0 %v5893, 64
    %v5917 = vpop.permute.xlu0 %5916
    %5918 = vrot.lane.b32.xlu0 %v5895, 64
    %v5919 = vpop.permute.xlu0 %5918
    %5920 = vrot.lane.b32.xlu0 %v5897, 64
    %v5921 = vpop.permute.xlu0 %5920
    %5922 = vrot.lane.b32.xlu0 %v5899, 64
    %v5923 = vpop.permute.xlu0 %5922
    %5924 = vrot.lane.b32.xlu0 %v5901, 64
    %v5925 = vpop.permute.xlu0 %5924
    %5926 = vrot.lane.b32.xlu0 %v5903, 64
    %v5927 = vpop.permute.xlu0 %5926
    %v5936 = vsel %vm1814, %v5913, 0.0
    %5937 = vadd.xlane.f32.xlu0 %v5936
    %v5938 = vpop.xlane.xlu0 %5937
    %v5939 = vsel %vm1814, %v5915, 0.0
    %5940 = vadd.xlane.f32.xlu0 %v5939
    %v5941 = vpop.xlane.xlu0 %5940
    %v5942 = vsel %vm1814, %v5917, 0.0
    %5943 = vadd.xlane.f32.xlu0 %v5942
    %v5944 = vpop.xlane.xlu0 %5943
    %v5945 = vsel %vm1814, %v5919, 0.0
    %5946 = vadd.xlane.f32.xlu0 %v5945
    %v5947 = vpop.xlane.xlu0 %5946
    %v5948 = vsel %vm1814, %v5921, 0.0
    %5949 = vadd.xlane.f32.xlu0 %v5948
    %v5950 = vpop.xlane.xlu0 %5949
    %v5951 = vsel %vm1814, %v5923, 0.0
    %5952 = vadd.xlane.f32.xlu0 %v5951
    %v5953 = vpop.xlane.xlu0 %5952
    %v5954 = vsel %vm1814, %v5925, 0.0
    %5955 = vadd.xlane.f32.xlu0 %v5954
    %v5956 = vpop.xlane.xlu0 %5955
    %v5957 = vsel %vm1814, %v5927, 0.0
    %5958 = vadd.xlane.f32.xlu0 %v5957
    %v5959 = vpop.xlane.xlu0 %5958
    %v5960 = vrcp.pop %v5938
    %v5961 = vrcp.pop %v5941
    %v5962 = vrcp.pop %v5944
    %v5963 = vrcp.pop %v5947
    %v5964 = vrcp.pop %v5950
    %v5965 = vrcp.pop %v5953
    %v5966 = vrcp.pop %v5956
    %v5967 = vrcp.pop %v5959
    %v5968 = vmul.f32 %v5889, %v5960
    %v5969 = vmul.f32 %v5891, %v5961
    %v5970 = vmul.f32 %v5893, %v5962
    %v5971 = vmul.f32 %v5895, %v5963
    %v5972 = vmul.f32 %v5897, %v5964
    %v5973 = vmul.f32 %v5899, %v5965
    %v5974 = vmul.f32 %v5901, %v5966
    %v5975 = vmul.f32 %v5903, %v5967
    %v5976 = vsel %vm1814, %v5732, -inf
    %5977 = vmax.xlane.f32.xlu0 %v5976
    %v5978 = vpop.xlane.xlu0 %5977
    %v5979 = vsel %vm1814, %v5736, -inf
    %5980 = vmax.xlane.f32.xlu0 %v5979
    %v5981 = vpop.xlane.xlu0 %5980
    %v5982 = vsel %vm1814, %v5742, -inf
    %5983 = vmax.xlane.f32.xlu0 %v5982
    %v5984 = vpop.xlane.xlu0 %5983
    %v5985 = vsel %vm1814, %v5746, -inf
    %5986 = vmax.xlane.f32.xlu0 %v5985
    %v5987 = vpop.xlane.xlu0 %5986
    %v5988 = vsel %vm1814, %v5752, -inf
    %5989 = vmax.xlane.f32.xlu0 %v5988
    %v5990 = vpop.xlane.xlu0 %5989
    %v5991 = vsel %vm1814, %v5756, -inf
    %5992 = vmax.xlane.f32.xlu0 %v5991
    %v5993 = vpop.xlane.xlu0 %5992
    %v5994 = vsel %vm1814, %v5762, -inf
    %5995 = vmax.xlane.f32.xlu0 %v5994
    %v5996 = vpop.xlane.xlu0 %5995
    %v5997 = vsel %vm1814, %v5766, -inf
    %5998 = vmax.xlane.f32.xlu0 %v5997
    %v5999 = vpop.xlane.xlu0 %5998
    %v6000 = vsub.f32 %v5732, %v5978
    %v6001 = vsub.f32 %v5736, %v5981
    %v6002 = vsub.f32 %v5742, %v5984
    %v6003 = vsub.f32 %v5746, %v5987
    %v6004 = vsub.f32 %v5752, %v5990
    %v6005 = vsub.f32 %v5756, %v5993
    %v6006 = vsub.f32 %v5762, %v5996
    %v6007 = vsub.f32 %v5766, %v5999
    %v6008 = vmul.f32 %v6000, 1.442695
    %v6009 = vpow.pop %v6008
    %v6010 = vmul.f32 %v6001, 1.442695
    %v6011 = vpow.pop %v6010
    %v6012 = vmul.f32 %v6002, 1.442695
    %v6013 = vpow.pop %v6012
    %v6014 = vmul.f32 %v6003, 1.442695
    %v6015 = vpow.pop %v6014
    %v6016 = vmul.f32 %v6004, 1.442695
    %v6017 = vpow.pop %v6016
    %v6018 = vmul.f32 %v6005, 1.442695
    %v6019 = vpow.pop %v6018
    %v6020 = vmul.f32 %v6006, 1.442695
    %v6021 = vpow.pop %v6020
    %v6022 = vmul.f32 %v6007, 1.442695
    %v6023 = vpow.pop %v6022
    %v6024 = vsel %vm1814, %v6009, 0.0
    %6025 = vadd.xlane.f32.xlu0 %v6024
    %v6026 = vpop.xlane.xlu0 %6025
    %v6027 = vsel %vm1814, %v6011, 0.0
    %6028 = vadd.xlane.f32.xlu0 %v6027
    %v6029 = vpop.xlane.xlu0 %6028
    %v6030 = vsel %vm1814, %v6013, 0.0
    %6031 = vadd.xlane.f32.xlu0 %v6030
    %v6032 = vpop.xlane.xlu0 %6031
    %v6033 = vsel %vm1814, %v6015, 0.0
    %6034 = vadd.xlane.f32.xlu0 %v6033
    %v6035 = vpop.xlane.xlu0 %6034
    %v6036 = vsel %vm1814, %v6017, 0.0
    %6037 = vadd.xlane.f32.xlu0 %v6036
    %v6038 = vpop.xlane.xlu0 %6037
    %v6039 = vsel %vm1814, %v6019, 0.0
    %6040 = vadd.xlane.f32.xlu0 %v6039
    %v6041 = vpop.xlane.xlu0 %6040
    %v6042 = vsel %vm1814, %v6021, 0.0
    %6043 = vadd.xlane.f32.xlu0 %v6042
    %v6044 = vpop.xlane.xlu0 %6043
    %v6045 = vsel %vm1814, %v6023, 0.0
    %6046 = vadd.xlane.f32.xlu0 %v6045
    %v6047 = vpop.xlane.xlu0 %6046
    %v6048 = vrcp.pop %v6026
    %v6049 = vrcp.pop %v6029
    %v6050 = vrcp.pop %v6032
    %v6051 = vrcp.pop %v6035
    %v6052 = vrcp.pop %v6038
    %v6053 = vrcp.pop %v6041
    %v6054 = vrcp.pop %v6044
    %v6055 = vrcp.pop %v6047
    %v6056 = vmul.f32 %v6009, %v6048
    %v6057 = vmul.f32 %v6011, %v6049
    %v6058 = vmul.f32 %v6013, %v6050
    %v6059 = vmul.f32 %v6015, %v6051
    %v6060 = vmul.f32 %v6017, %v6052
    %v6061 = vmul.f32 %v6019, %v6053
    %v6062 = vmul.f32 %v6021, %v6054
    %v6063 = vmul.f32 %v6023, %v6055
    %v6064 = vsel %vm1903, %v5732, -inf
    %6065 = vmax.xlane.f32.xlu0 %v6064
    %v6066 = vpop.xlane.xlu0 %6065
    %v6067 = vsel %vm1903, %v5736, -inf
    %6068 = vmax.xlane.f32.xlu0 %v6067
    %v6069 = vpop.xlane.xlu0 %6068
    %v6070 = vsel %vm1903, %v5742, -inf
    %6071 = vmax.xlane.f32.xlu0 %v6070
    %v6072 = vpop.xlane.xlu0 %6071
    %v6073 = vsel %vm1903, %v5746, -inf
    %6074 = vmax.xlane.f32.xlu0 %v6073
    %v6075 = vpop.xlane.xlu0 %6074
    %v6076 = vsel %vm1903, %v5752, -inf
    %6077 = vmax.xlane.f32.xlu0 %v6076
    %v6078 = vpop.xlane.xlu0 %6077
    %v6079 = vsel %vm1903, %v5756, -inf
    %6080 = vmax.xlane.f32.xlu0 %v6079
    %v6081 = vpop.xlane.xlu0 %6080
    %v6082 = vsel %vm1903, %v5762, -inf
    %6083 = vmax.xlane.f32.xlu0 %v6082
    %v6084 = vpop.xlane.xlu0 %6083
    %v6085 = vsel %vm1903, %v5766, -inf
    %6086 = vmax.xlane.f32.xlu0 %v6085
    %v6087 = vpop.xlane.xlu0 %6086
    %v6088 = vsub.f32 %v5732, %v6066
    %v6089 = vsub.f32 %v5736, %v6069
    %v6090 = vsub.f32 %v5742, %v6072
    %v6091 = vsub.f32 %v5746, %v6075
    %v6092 = vsub.f32 %v5752, %v6078
    %v6093 = vsub.f32 %v5756, %v6081
    %v6094 = vsub.f32 %v5762, %v6084
    %v6095 = vsub.f32 %v5766, %v6087
    %v6096 = vmul.f32 %v6088, 1.442695
    %v6097 = vpow.pop %v6096
    %v6098 = vmul.f32 %v6089, 1.442695
    %v6099 = vpow.pop %v6098
    %v6100 = vmul.f32 %v6090, 1.442695
    %v6101 = vpow.pop %v6100
    %v6102 = vmul.f32 %v6091, 1.442695
    %v6103 = vpow.pop %v6102
    %v6104 = vmul.f32 %v6092, 1.442695
    %v6105 = vpow.pop %v6104
    %v6106 = vmul.f32 %v6093, 1.442695
    %v6107 = vpow.pop %v6106
    %v6108 = vmul.f32 %v6094, 1.442695
    %v6109 = vpow.pop %v6108
    %v6110 = vmul.f32 %v6095, 1.442695
    %v6111 = vpow.pop %v6110
    %6120 = vrot.lane.b32.xlu0 %v6097, 64
    %v6121 = vpop.permute.xlu0 %6120
    %6122 = vrot.lane.b32.xlu0 %v6099, 64
    %v6123 = vpop.permute.xlu0 %6122
    %6124 = vrot.lane.b32.xlu0 %v6101, 64
    %v6125 = vpop.permute.xlu0 %6124
    %6126 = vrot.lane.b32.xlu0 %v6103, 64
    %v6127 = vpop.permute.xlu0 %6126
    %6128 = vrot.lane.b32.xlu0 %v6105, 64
    %v6129 = vpop.permute.xlu0 %6128
    %6130 = vrot.lane.b32.xlu0 %v6107, 64
    %v6131 = vpop.permute.xlu0 %6130
    %6132 = vrot.lane.b32.xlu0 %v6109, 64
    %v6133 = vpop.permute.xlu0 %6132
    %6134 = vrot.lane.b32.xlu0 %v6111, 64
    %v6135 = vpop.permute.xlu0 %6134
    %v6144 = vsel %vm1814, %v6121, 0.0
    %6145 = vadd.xlane.f32.xlu0 %v6144
    %v6146 = vpop.xlane.xlu0 %6145
    %v6147 = vsel %vm1814, %v6123, 0.0
    %6148 = vadd.xlane.f32.xlu0 %v6147
    %v6149 = vpop.xlane.xlu0 %6148
    %v6150 = vsel %vm1814, %v6125, 0.0
    %6151 = vadd.xlane.f32.xlu0 %v6150
    %v6152 = vpop.xlane.xlu0 %6151
    %v6153 = vsel %vm1814, %v6127, 0.0
    %6154 = vadd.xlane.f32.xlu0 %v6153
    %v6155 = vpop.xlane.xlu0 %6154
    %v6156 = vsel %vm1814, %v6129, 0.0
    %6157 = vadd.xlane.f32.xlu0 %v6156
    %v6158 = vpop.xlane.xlu0 %6157
    %v6159 = vsel %vm1814, %v6131, 0.0
    %6160 = vadd.xlane.f32.xlu0 %v6159
    %v6161 = vpop.xlane.xlu0 %6160
    %v6162 = vsel %vm1814, %v6133, 0.0
    %6163 = vadd.xlane.f32.xlu0 %v6162
    %v6164 = vpop.xlane.xlu0 %6163
    %v6165 = vsel %vm1814, %v6135, 0.0
    %6166 = vadd.xlane.f32.xlu0 %v6165
    %v6167 = vpop.xlane.xlu0 %6166
    %v6168 = vrcp.pop %v6146
    %v6169 = vrcp.pop %v6149
    %v6170 = vrcp.pop %v6152
    %v6171 = vrcp.pop %v6155
    %v6172 = vrcp.pop %v6158
    %v6173 = vrcp.pop %v6161
    %v6174 = vrcp.pop %v6164
    %v6175 = vrcp.pop %v6167
    %v6176 = vmul.f32 %v6097, %v6168
    %v6177 = vmul.f32 %v6099, %v6169
    %v6178 = vmul.f32 %v6101, %v6170
    %v6179 = vmul.f32 %v6103, %v6171
    %v6180 = vmul.f32 %v6105, %v6172
    %v6181 = vmul.f32 %v6107, %v6173
    %v6182 = vmul.f32 %v6109, %v6174
    %v6183 = vmul.f32 %v6111, %v6175
    %v6184 = vsel %vm1814, %v5848, %v5968
    %v6185 = vsel %vm1814, %v5849, %v5969
    %v6186 = vsel %vm1814, %v5850, %v5970
    %v6187 = vsel %vm1814, %v5851, %v5971
    %v6188 = vsel %vm1814, %v5852, %v5972
    %v6189 = vsel %vm1814, %v5853, %v5973
    %v6190 = vsel %vm1814, %v5854, %v5974
    %v6191 = vsel %vm1814, %v5855, %v5975
    %v6192 = vsel %vm1814, %v6056, %v6176
    %v6193 = vsel %vm1814, %v6057, %v6177
    %v6194 = vsel %vm1814, %v6058, %v6178
    %v6195 = vsel %vm1814, %v6059, %v6179
    %v6196 = vsel %vm1814, %v6060, %v6180
    %v6197 = vsel %vm1814, %v6061, %v6181
    %v6198 = vsel %vm1814, %v6062, %v6182
    %v6199 = vsel %vm1814, %v6063, %v6183
    %v6200 = vpack.c.bf16 %v6185, %v6184
    %v6201 = vpack.c.bf16 %v6193, %v6192
    %v6202 = vpack.c.bf16 %v6187, %v6186
    %v6203 = vpack.c.bf16 %v6195, %v6194
    %v6204 = vpack.c.bf16 %v6189, %v6188
    %v6205 = vpack.c.bf16 %v6197, %v6196
    %v6206 = vpack.c.bf16 %v6191, %v6190
    %v6207 = vpack.c.bf16 %v6199, %v6198
    %6208 = vmatprep.subr.bf16.mxu0 0
    %6209 = vmatpush1.bf16.msra.mxu0 %v5619
    %6210 = vmatprep.subr.bf16.mxu0 0
    %6211 = vmatpush1.bf16.msra.mxu0 %v5620
    %6212 = vmatprep.subr.bf16.mxu0 0
    %6213 = vmatpush1.bf16.msra.mxu0 %v5621
    %6214 = vmatprep.subr.bf16.mxu0 0
    %6215 = vmatpush1.bf16.msra.mxu0 %v5622
    %6216 = vmatprep.subr.bf16.mxu0 0
    %6217 = vmatpush1.bf16.msra.mxu0 %v5623
    %6218 = vmatprep.subr.bf16.mxu0 0
    %6219 = vmatpush1.bf16.msra.mxu0 %v5624
    %6220 = vmatprep.subr.bf16.mxu0 0
    %6221 = vmatpush1.bf16.msra.mxu0 %v5625
    %6222 = vmatprep.subr.bf16.mxu0 0
    %6223 = vmatpush1.bf16.msra.mxu0 %v5626
    %6224 = vmatprep.subr.bf16.mxu0 0
    %6225 = vmatpush1.bf16.msra.mxu0 %v5627
    %6226 = vmatprep.subr.bf16.mxu0 0
    %6227 = vmatpush1.bf16.msra.mxu0 %v5628
    %6228 = vmatprep.subr.bf16.mxu0 0
    %6229 = vmatpush1.bf16.msra.mxu0 %v5629
    %6230 = vmatprep.subr.bf16.mxu0 0
    %6231 = vmatpush1.bf16.msra.mxu0 %v5630
    %6232 = vmatprep.subr.bf16.mxu0 0
    %6233 = vmatpush1.bf16.msra.mxu0 %v5631
    %6234 = vmatprep.subr.bf16.mxu0 0
    %6235 = vmatpush1.bf16.msra.mxu0 %v5632
    %6236 = vmatprep.subr.bf16.mxu0 0
    %6237 = vmatpush1.bf16.msra.mxu0 %v5633
    %6238 = vmatprep.subr.bf16.mxu0 0
    %6239 = vmatpush1.bf16.msra.mxu0 %v5634
    %6240 = vmatprep.mubr.bf16.mxu0 %v6201
    %6241 = vmatmul.mubr.bf16.gmra.mrb[0].mxu0 %v6200
    %v6242 = vpop.f32.mrb[0].mxu0
    %v6243 = vadd.f32 0.0, %v6242
    %v6244 = vpop.f32.mrb[0].mxu0
    %v6245 = vpop.f32.mrb[0].mxu0
    %v6246 = vadd.f32 0.0, %v6245
    %v6247 = vpop.f32.mrb[0].mxu0
    %6248 = vmatprep.mubr.bf16.mxu0 %v6203
    %6249 = vmatmul.mubr.bf16.gmra.mrb[0].mxu0 %v6202
    %v6250 = vpop.f32.mrb[0].mxu0
    %v6251 = vadd.f32 0.0, %v6250
    %v6252 = vpop.f32.mrb[0].mxu0
    %v6253 = vpop.f32.mrb[0].mxu0
    %v6254 = vadd.f32 0.0, %v6253
    %v6255 = vpop.f32.mrb[0].mxu0
    %6256 = vmatprep.mubr.bf16.mxu0 %v6205
    %6257 = vmatmul.mubr.bf16.gmra.mrb[0].mxu0 %v6204
    %v6258 = vpop.f32.mrb[0].mxu0
    %v6259 = vadd.f32 0.0, %v6258
    %v6260 = vpop.f32.mrb[0].mxu0
    %v6261 = vpop.f32.mrb[0].mxu0
    %v6262 = vadd.f32 0.0, %v6261
    %v6263 = vpop.f32.mrb[0].mxu0
    %6264 = vmatprep.mubr.bf16.mxu0 %v6207
    %6265 = vmatmul.mubr.bf16.gmra.mrb[0].mxu0 %v6206
    %v6266 = vpop.f32.mrb[0].mxu0
    %v6267 = vadd.f32 0.0, %v6266
    %v6268 = vpop.f32.mrb[0].mxu0
    %v6269 = vpop.f32.mrb[0].mxu0
    %v6270 = vadd.f32 0.0, %v6269
    %v6271 = vpop.f32.mrb[0].mxu0
    %6272 = vdwg.mxu0
    %v6273 = vpack.c.bf16 %v5576, %v5573
    %v6274 = vpack.c.bf16 %v5584, %v5581
    %v6275 = vpack.c.bf16 %v5592, %v5589
    %v6276 = vpack.c.bf16 %v5600, %v5597
    %v6277 = vpack.c.bf16 %v6246, %v6243
    %v6278 = vpack.c.bf16 %v6254, %v6251
    %v6279 = vpack.c.bf16 %v6262, %v6259
    %v6280 = vpack.c.bf16 %v6270, %v6267
    %s6281 = scalar_lea.vmem %s37, 16
    %v6282 = vld [vmem:[%s6281] sm:$0xf]
    %v6283 = vld [vmem:[%s6281 + $0x4] sm:$0xf]
    %v6284 = vld [vmem:[%s6281 + $0x8] sm:$0xf]
    %v6285 = vld [vmem:[%s6281 + $0xc] sm:$0xf]
    %v6290 = vunpack.c.l.b16 %v6282
    %v6291 = vunpack.c.l.b16 %v6283
    %v6292 = vunpack.c.l.b16 %v6284
    %v6293 = vunpack.c.l.b16 %v6285
    %v6294 = vpack.c.b16 %v6291, %v6290
    %v6295 = vpack.c.b16 %v6293, %v6292
    %v6299 = vsel %vm517, %v6273, 0
    %v6302 = vsel %vm517, %v6274, 0
    %v6305 = vsel %vm517, %v6275, 0
    %v6308 = vsel %vm517, %v6276, 0
    %v6311 = vsel %vm517, %v6277, 0
    %v6314 = vsel %vm517, %v6278, 0
    %v6317 = vsel %vm517, %v6279, 0
    %v6320 = vsel %vm517, %v6280, 0
    %6322 = vmatprep.subr.bf16.mxu0 0
    %6323 = vmatpush1.bf16.msra.mxu0 %v6294
    %6324 = vmatprep.subr.bf16.mxu0 0
    %6325 = vmatpush1.bf16.msra.mxu0 %v6295
    %6326 = vmatprep.subr.bf16.mxu0 0
    %6327 = vmatpush1.bf16.msra.mxu0 0
    %6328 = vmatprep.subr.bf16.mxu0 0
    %6329 = vmatpush1.bf16.msra.mxu0 0
    %6330 = vmatprep.subr.bf16.mxu0 0
    %6331 = vmatpush1.bf16.msra.mxu0 0
    %6332 = vmatprep.subr.bf16.mxu0 0
    %6333 = vmatpush1.bf16.msra.mxu0 0
    %6334 = vmatprep.subr.bf16.mxu0 0
    %6335 = vmatpush1.bf16.msra.mxu0 0
    %6336 = vmatprep.subr.bf16.mxu0 0
    %6337 = vmatpush1.bf16.msra.mxu0 0
    %6338 = vmatprep.subr.bf16.mxu0 0
    %6339 = vmatpush1.bf16.msra.mxu0 0
    %6340 = vmatprep.subr.bf16.mxu0 0
    %6341 = vmatpush1.bf16.msra.mxu0 0
    %6342 = vmatprep.subr.bf16.mxu0 0
    %6343 = vmatpush1.bf16.msra.mxu0 0
    %6344 = vmatprep.subr.bf16.mxu0 0
    %6345 = vmatpush1.bf16.msra.mxu0 0
    %6346 = vmatprep.subr.bf16.mxu0 0
    %6347 = vmatpush1.bf16.msra.mxu0 0
    %6348 = vmatprep.subr.bf16.mxu0 0
    %6349 = vmatpush1.bf16.msra.mxu0 0
    %6350 = vmatprep.subr.bf16.mxu0 0
    %6351 = vmatpush1.bf16.msra.mxu0 0
    %6352 = vmatprep.subr.bf16.mxu0 0
    %6353 = vmatpush1.bf16.msra.mxu0 0
    %6354 = vmatprep.mubr.bf16.mxu0 0
    %6355 = vmatmul.mubr.bf16.gmra.mrb[0].mxu0 %v6299
    %v6356 = vpop.f32.mrb[0].mxu0
    %v6357 = vadd.f32 0.0, %v6356
    %v6358 = vpop.f32.mrb[0].mxu0
    %v6359 = vpop.f32.mrb[0].mxu0
    %v6360 = vadd.f32 0.0, %v6359
    %v6361 = vpop.f32.mrb[0].mxu0
    %6362 = vmatprep.mubr.bf16.mxu0 0
    %6363 = vmatmul.mubr.bf16.gmra.mrb[0].mxu0 %v6302
    %v6364 = vpop.f32.mrb[0].mxu0
    %v6365 = vadd.f32 0.0, %v6364
    %v6366 = vpop.f32.mrb[0].mxu0
    %v6367 = vpop.f32.mrb[0].mxu0
    %v6368 = vadd.f32 0.0, %v6367
    %v6369 = vpop.f32.mrb[0].mxu0
    %6370 = vmatprep.mubr.bf16.mxu0 0
    %6371 = vmatmul.mubr.bf16.gmra.mrb[0].mxu0 %v6305
    %v6372 = vpop.f32.mrb[0].mxu0
    %v6373 = vadd.f32 0.0, %v6372
    %v6374 = vpop.f32.mrb[0].mxu0
    %v6375 = vpop.f32.mrb[0].mxu0
    %v6376 = vadd.f32 0.0, %v6375
    %v6377 = vpop.f32.mrb[0].mxu0
    %6378 = vmatprep.mubr.bf16.mxu0 0
    %6379 = vmatmul.mubr.bf16.gmra.mrb[0].mxu0 %v6308
    %v6380 = vpop.f32.mrb[0].mxu0
    %v6381 = vadd.f32 0.0, %v6380
    %v6382 = vpop.f32.mrb[0].mxu0
    %v6383 = vpop.f32.mrb[0].mxu0
    %v6384 = vadd.f32 0.0, %v6383
    %v6385 = vpop.f32.mrb[0].mxu0
    %6386 = vmatprep.mubr.bf16.mxu0 0
    %6387 = vmatmul.mubr.bf16.gmra.mrb[0].mxu0 %v6311
    %v6388 = vpop.f32.mrb[0].mxu0
    %v6389 = vadd.f32 0.0, %v6388
    %v6390 = vpop.f32.mrb[0].mxu0
    %v6391 = vpop.f32.mrb[0].mxu0
    %v6392 = vadd.f32 0.0, %v6391
    %v6393 = vpop.f32.mrb[0].mxu0
    %6394 = vmatprep.mubr.bf16.mxu0 0
    %6395 = vmatmul.mubr.bf16.gmra.mrb[0].mxu0 %v6314
    %v6396 = vpop.f32.mrb[0].mxu0
    %v6397 = vadd.f32 0.0, %v6396
    %v6398 = vpop.f32.mrb[0].mxu0
    %v6399 = vpop.f32.mrb[0].mxu0
    %v6400 = vadd.f32 0.0, %v6399
    %v6401 = vpop.f32.mrb[0].mxu0
    %6402 = vmatprep.mubr.bf16.mxu0 0
    %6403 = vmatmul.mubr.bf16.gmra.mrb[0].mxu0 %v6317
    %v6404 = vpop.f32.mrb[0].mxu0
    %v6405 = vadd.f32 0.0, %v6404
    %v6406 = vpop.f32.mrb[0].mxu0
    %v6407 = vpop.f32.mrb[0].mxu0
    %v6408 = vadd.f32 0.0, %v6407
    %v6409 = vpop.f32.mrb[0].mxu0
    %6410 = vmatprep.mubr.bf16.mxu0 0
    %6411 = vmatmul.mubr.bf16.gmra.mrb[0].mxu0 %v6320
    %v6412 = vpop.f32.mrb[0].mxu0
    %v6413 = vadd.f32 0.0, %v6412
    %v6414 = vpop.f32.mrb[0].mxu0
    %v6415 = vpop.f32.mrb[0].mxu0
    %v6416 = vadd.f32 0.0, %v6415
    %v6417 = vpop.f32.mrb[0].mxu0
    %6418 = vdwg.mxu0
    %v6419 = vadd.f32 %v3885, %v6357
    %v6420 = vadd.f32 %v3886, %v6360
    %v6421 = vadd.f32 %v3887, %v6365
    %v6422 = vadd.f32 %v3888, %v6368
    %v6423 = vadd.f32 %v3889, %v6373
    %v6424 = vadd.f32 %v3890, %v6376
    %v6425 = vadd.f32 %v3891, %v6381
    %v6426 = vadd.f32 %v3892, %v6384
    %v6427 = vadd.f32 %v3893, %v6389
    %v6428 = vadd.f32 %v3894, %v6392
    %v6429 = vadd.f32 %v3895, %v6397
    %v6430 = vadd.f32 %v3896, %v6400
    %v6431 = vadd.f32 %v3897, %v6405
    %v6432 = vadd.f32 %v3898, %v6408
    %v6433 = vadd.f32 %v3899, %v6413
    %v6434 = vadd.f32 %v3900, %v6416
    %s6435 = scalar_lea.vmem %s39, 1
    %v6436 = vld [vmem:[%s6435] sm:$0x1]
    %v6438 = vlaneseq
    %v6439 = vshrl.u32 %v6438, 7
    %v6440 = vsub.s32 0, %v6439
    %v6441 = vrot.slane %v6436, %v6440
    %v6443 = vadd.f32 %v6419, %v6441
    %v6444 = vadd.f32 %v6420, %v6441
    %v6445 = vadd.f32 %v6421, %v6441
    %v6446 = vadd.f32 %v6422, %v6441
    %v6447 = vadd.f32 %v6423, %v6441
    %v6448 = vadd.f32 %v6424, %v6441
    %v6449 = vadd.f32 %v6425, %v6441
    %v6450 = vadd.f32 %v6426, %v6441
    %v6451 = vadd.f32 %v6427, %v6441
    %v6452 = vadd.f32 %v6428, %v6441
    %v6453 = vadd.f32 %v6429, %v6441
    %v6454 = vadd.f32 %v6430, %v6441
    %v6455 = vadd.f32 %v6431, %v6441
    %v6456 = vadd.f32 %v6432, %v6441
    %v6457 = vadd.f32 %v6433, %v6441
    %v6458 = vadd.f32 %v6434, %v6441
    %s6459 = scalar_lea.vmem %s41, 1
    %v6460 = vld [vmem:[%s6459] sm:$0x1]
    %s6461 = scalar_lea.vmem %s43, 1
    %v6462 = vld [vmem:[%s6461] sm:$0x1]
    %v6463 = vsel %vm517, %v6443, 0.0
    %6464 = vadd.xlane.f32.xlu0 %v6463
    %v6465 = vpop.xlane.xlu0 %6464
    %v6466 = vsel %vm517, %v6444, 0.0
    %6467 = vadd.xlane.f32.xlu0 %v6466
    %v6468 = vpop.xlane.xlu0 %6467
    %v6469 = vsel %vm517, %v6445, 0.0
    %6470 = vadd.xlane.f32.xlu0 %v6469
    %v6471 = vpop.xlane.xlu0 %6470
    %v6472 = vsel %vm517, %v6446, 0.0
    %6473 = vadd.xlane.f32.xlu0 %v6472
    %v6474 = vpop.xlane.xlu0 %6473
    %v6475 = vsel %vm517, %v6447, 0.0
    %6476 = vadd.xlane.f32.xlu0 %v6475
    %v6477 = vpop.xlane.xlu0 %6476
    %v6478 = vsel %vm517, %v6448, 0.0
    %6479 = vadd.xlane.f32.xlu0 %v6478
    %v6480 = vpop.xlane.xlu0 %6479
    %v6481 = vsel %vm517, %v6449, 0.0
    %6482 = vadd.xlane.f32.xlu0 %v6481
    %v6483 = vpop.xlane.xlu0 %6482
    %v6484 = vsel %vm517, %v6450, 0.0
    %6485 = vadd.xlane.f32.xlu0 %v6484
    %v6486 = vpop.xlane.xlu0 %6485
    %v6487 = vsel %vm517, %v6451, 0.0
    %6488 = vadd.xlane.f32.xlu0 %v6487
    %v6489 = vpop.xlane.xlu0 %6488
    %v6490 = vsel %vm517, %v6452, 0.0
    %6491 = vadd.xlane.f32.xlu0 %v6490
    %v6492 = vpop.xlane.xlu0 %6491
    %v6493 = vsel %vm517, %v6453, 0.0
    %6494 = vadd.xlane.f32.xlu0 %v6493
    %v6495 = vpop.xlane.xlu0 %6494
    %v6496 = vsel %vm517, %v6454, 0.0
    %6497 = vadd.xlane.f32.xlu0 %v6496
    %v6498 = vpop.xlane.xlu0 %6497
    %v6499 = vsel %vm517, %v6455, 0.0
    %6500 = vadd.xlane.f32.xlu0 %v6499
    %v6501 = vpop.xlane.xlu0 %6500
    %v6502 = vsel %vm517, %v6456, 0.0
    %6503 = vadd.xlane.f32.xlu0 %v6502
    %v6504 = vpop.xlane.xlu0 %6503
    %v6505 = vsel %vm517, %v6457, 0.0
    %6506 = vadd.xlane.f32.xlu0 %v6505
    %v6507 = vpop.xlane.xlu0 %6506
    %v6508 = vsel %vm517, %v6458, 0.0
    %6509 = vadd.xlane.f32.xlu0 %v6508
    %v6510 = vpop.xlane.xlu0 %6509
    %v6511 = vmul.f32 %v6465, %v566
    %v6512 = vmul.f32 %v6468, %v566
    %v6513 = vmul.f32 %v6471, %v566
    %v6514 = vmul.f32 %v6474, %v566
    %v6515 = vmul.f32 %v6477, %v566
    %v6516 = vmul.f32 %v6480, %v566
    %v6517 = vmul.f32 %v6483, %v566
    %v6518 = vmul.f32 %v6486, %v566
    %v6519 = vmul.f32 %v6489, %v566
    %v6520 = vmul.f32 %v6492, %v566
    %v6521 = vmul.f32 %v6495, %v566
    %v6522 = vmul.f32 %v6498, %v566
    %v6523 = vmul.f32 %v6501, %v566
    %v6524 = vmul.f32 %v6504, %v566
    %v6525 = vmul.f32 %v6507, %v566
    %v6526 = vmul.f32 %v6510, %v566
    %v6527 = vsub.f32 %v6443, %v6511
    %v6528 = vsub.f32 %v6444, %v6512
    %v6529 = vsub.f32 %v6445, %v6513
    %v6530 = vsub.f32 %v6446, %v6514
    %v6531 = vsub.f32 %v6447, %v6515
    %v6532 = vsub.f32 %v6448, %v6516
    %v6533 = vsub.f32 %v6449, %v6517
    %v6534 = vsub.f32 %v6450, %v6518
    %v6535 = vsub.f32 %v6451, %v6519
    %v6536 = vsub.f32 %v6452, %v6520
    %v6537 = vsub.f32 %v6453, %v6521
    %v6538 = vsub.f32 %v6454, %v6522
    %v6539 = vsub.f32 %v6455, %v6523
    %v6540 = vsub.f32 %v6456, %v6524
    %v6541 = vsub.f32 %v6457, %v6525
    %v6542 = vsub.f32 %v6458, %v6526
    %v6543 = vmul.f32 %v6527, %v6527
    %v6544 = vmul.f32 %v6528, %v6528
    %v6545 = vmul.f32 %v6529, %v6529
    %v6546 = vmul.f32 %v6530, %v6530
    %v6547 = vmul.f32 %v6531, %v6531
    %v6548 = vmul.f32 %v6532, %v6532
    %v6549 = vmul.f32 %v6533, %v6533
    %v6550 = vmul.f32 %v6534, %v6534
    %v6551 = vmul.f32 %v6535, %v6535
    %v6552 = vmul.f32 %v6536, %v6536
    %v6553 = vmul.f32 %v6537, %v6537
    %v6554 = vmul.f32 %v6538, %v6538
    %v6555 = vmul.f32 %v6539, %v6539
    %v6556 = vmul.f32 %v6540, %v6540
    %v6557 = vmul.f32 %v6541, %v6541
    %v6558 = vmul.f32 %v6542, %v6542
    %v6559 = vsel %vm517, %v6543, 0.0
    %6560 = vadd.xlane.f32.xlu0 %v6559
    %v6561 = vpop.xlane.xlu0 %6560
    %v6562 = vsel %vm517, %v6544, 0.0
    %6563 = vadd.xlane.f32.xlu0 %v6562
    %v6564 = vpop.xlane.xlu0 %6563
    %v6565 = vsel %vm517, %v6545, 0.0
    %6566 = vadd.xlane.f32.xlu0 %v6565
    %v6567 = vpop.xlane.xlu0 %6566
    %v6568 = vsel %vm517, %v6546, 0.0
    %6569 = vadd.xlane.f32.xlu0 %v6568
    %v6570 = vpop.xlane.xlu0 %6569
    %v6571 = vsel %vm517, %v6547, 0.0
    %6572 = vadd.xlane.f32.xlu0 %v6571
    %v6573 = vpop.xlane.xlu0 %6572
    %v6574 = vsel %vm517, %v6548, 0.0
    %6575 = vadd.xlane.f32.xlu0 %v6574
    %v6576 = vpop.xlane.xlu0 %6575
    %v6577 = vsel %vm517, %v6549, 0.0
    %6578 = vadd.xlane.f32.xlu0 %v6577
    %v6579 = vpop.xlane.xlu0 %6578
    %v6580 = vsel %vm517, %v6550, 0.0
    %6581 = vadd.xlane.f32.xlu0 %v6580
    %v6582 = vpop.xlane.xlu0 %6581
    %v6583 = vsel %vm517, %v6551, 0.0
    %6584 = vadd.xlane.f32.xlu0 %v6583
    %v6585 = vpop.xlane.xlu0 %6584
    %v6586 = vsel %vm517, %v6552, 0.0
    %6587 = vadd.xlane.f32.xlu0 %v6586
    %v6588 = vpop.xlane.xlu0 %6587
    %v6589 = vsel %vm517, %v6553, 0.0
    %6590 = vadd.xlane.f32.xlu0 %v6589
    %v6591 = vpop.xlane.xlu0 %6590
    %v6592 = vsel %vm517, %v6554, 0.0
    %6593 = vadd.xlane.f32.xlu0 %v6592
    %v6594 = vpop.xlane.xlu0 %6593
    %v6595 = vsel %vm517, %v6555, 0.0
    %6596 = vadd.xlane.f32.xlu0 %v6595
    %v6597 = vpop.xlane.xlu0 %6596
    %v6598 = vsel %vm517, %v6556, 0.0
    %6599 = vadd.xlane.f32.xlu0 %v6598
    %v6600 = vpop.xlane.xlu0 %6599
    %v6601 = vsel %vm517, %v6557, 0.0
    %6602 = vadd.xlane.f32.xlu0 %v6601
    %v6603 = vpop.xlane.xlu0 %6602
    %v6604 = vsel %vm517, %v6558, 0.0
    %6605 = vadd.xlane.f32.xlu0 %v6604
    %v6606 = vpop.xlane.xlu0 %6605
    %v6607 = vmul.f32 %v6561, %v566
    %v6608 = vmul.f32 %v6564, %v566
    %v6609 = vmul.f32 %v6567, %v566
    %v6610 = vmul.f32 %v6570, %v566
    %v6611 = vmul.f32 %v6573, %v566
    %v6612 = vmul.f32 %v6576, %v566
    %v6613 = vmul.f32 %v6579, %v566
    %v6614 = vmul.f32 %v6582, %v566
    %v6615 = vmul.f32 %v6585, %v566
    %v6616 = vmul.f32 %v6588, %v566
    %v6617 = vmul.f32 %v6591, %v566
    %v6618 = vmul.f32 %v6594, %v566
    %v6619 = vmul.f32 %v6597, %v566
    %v6620 = vmul.f32 %v6600, %v566
    %v6621 = vmul.f32 %v6603, %v566
    %v6622 = vmul.f32 %v6606, %v566
    %v6623 = vadd.f32 %v6607, 1e-05
    %v6624 = vadd.f32 %v6608, 1e-05
    %v6625 = vadd.f32 %v6609, 1e-05
    %v6626 = vadd.f32 %v6610, 1e-05
    %v6627 = vadd.f32 %v6611, 1e-05
    %v6628 = vadd.f32 %v6612, 1e-05
    %v6629 = vadd.f32 %v6613, 1e-05
    %v6630 = vadd.f32 %v6614, 1e-05
    %v6631 = vadd.f32 %v6615, 1e-05
    %v6632 = vadd.f32 %v6616, 1e-05
    %v6633 = vadd.f32 %v6617, 1e-05
    %v6634 = vadd.f32 %v6618, 1e-05
    %v6635 = vadd.f32 %v6619, 1e-05
    %v6636 = vadd.f32 %v6620, 1e-05
    %v6637 = vadd.f32 %v6621, 1e-05
    %v6638 = vadd.f32 %v6622, 1e-05
    %v6639 = vrsqrt.pop %v6623
    %v6640 = vrsqrt.pop %v6624
    %v6641 = vrsqrt.pop %v6625
    %v6642 = vrsqrt.pop %v6626
    %v6643 = vrsqrt.pop %v6627
    %v6644 = vrsqrt.pop %v6628
    %v6645 = vrsqrt.pop %v6629
    %v6646 = vrsqrt.pop %v6630
    %v6647 = vrsqrt.pop %v6631
    %v6648 = vrsqrt.pop %v6632
    %v6649 = vrsqrt.pop %v6633
    %v6650 = vrsqrt.pop %v6634
    %v6651 = vrsqrt.pop %v6635
    %v6652 = vrsqrt.pop %v6636
    %v6653 = vrsqrt.pop %v6637
    %v6654 = vrsqrt.pop %v6638
    %v6655 = vmul.f32 %v6527, %v6639
    %v6656 = vmul.f32 %v6528, %v6640
    %v6657 = vmul.f32 %v6529, %v6641
    %v6658 = vmul.f32 %v6530, %v6642
    %v6659 = vmul.f32 %v6531, %v6643
    %v6660 = vmul.f32 %v6532, %v6644
    %v6661 = vmul.f32 %v6533, %v6645
    %v6662 = vmul.f32 %v6534, %v6646
    %v6663 = vmul.f32 %v6535, %v6647
    %v6664 = vmul.f32 %v6536, %v6648
    %v6665 = vmul.f32 %v6537, %v6649
    %v6666 = vmul.f32 %v6538, %v6650
    %v6667 = vmul.f32 %v6539, %v6651
    %v6668 = vmul.f32 %v6540, %v6652
    %v6669 = vmul.f32 %v6541, %v6653
    %v6670 = vmul.f32 %v6542, %v6654
    %v6672 = vlaneseq
    %v6673 = vshrl.u32 %v6672, 7
    %v6674 = vsub.s32 0, %v6673
    %v6675 = vrot.slane %v6460, %v6674
    %v6677 = vmul.f32 %v6655, %v6675
    %v6678 = vmul.f32 %v6656, %v6675
    %v6679 = vmul.f32 %v6657, %v6675
    %v6680 = vmul.f32 %v6658, %v6675
    %v6681 = vmul.f32 %v6659, %v6675
    %v6682 = vmul.f32 %v6660, %v6675
    %v6683 = vmul.f32 %v6661, %v6675
    %v6684 = vmul.f32 %v6662, %v6675
    %v6685 = vmul.f32 %v6663, %v6675
    %v6686 = vmul.f32 %v6664, %v6675
    %v6687 = vmul.f32 %v6665, %v6675
    %v6688 = vmul.f32 %v6666, %v6675
    %v6689 = vmul.f32 %v6667, %v6675
    %v6690 = vmul.f32 %v6668, %v6675
    %v6691 = vmul.f32 %v6669, %v6675
    %v6692 = vmul.f32 %v6670, %v6675
    %v6694 = vlaneseq
    %v6695 = vshrl.u32 %v6694, 7
    %v6696 = vsub.s32 0, %v6695
    %v6697 = vrot.slane %v6462, %v6696
    %v6699 = vadd.f32 %v6677, %v6697
    %v6700 = vadd.f32 %v6678, %v6697
    %v6701 = vadd.f32 %v6679, %v6697
    %v6702 = vadd.f32 %v6680, %v6697
    %v6703 = vadd.f32 %v6681, %v6697
    %v6704 = vadd.f32 %v6682, %v6697
    %v6705 = vadd.f32 %v6683, %v6697
    %v6706 = vadd.f32 %v6684, %v6697
    %v6707 = vadd.f32 %v6685, %v6697
    %v6708 = vadd.f32 %v6686, %v6697
    %v6709 = vadd.f32 %v6687, %v6697
    %v6710 = vadd.f32 %v6688, %v6697
    %v6711 = vadd.f32 %v6689, %v6697
    %v6712 = vadd.f32 %v6690, %v6697
    %v6713 = vadd.f32 %v6691, %v6697
    %v6714 = vadd.f32 %v6692, %v6697
    %v6715 = vpack.c.bf16 %v6700, %v6699
    %v6716 = vpack.c.bf16 %v6702, %v6701
    %v6717 = vpack.c.bf16 %v6704, %v6703
    %v6718 = vpack.c.bf16 %v6706, %v6705
    %v6719 = vpack.c.bf16 %v6708, %v6707
    %v6720 = vpack.c.bf16 %v6710, %v6709
    %v6721 = vpack.c.bf16 %v6712, %v6711
    %v6722 = vpack.c.bf16 %v6714, %v6713
    %s6723 = scalar_lea.vmem %s45, 16
    %v6724 = vld [vmem:[%s6723] sm:$0xf]
    %v6725 = vld [vmem:[%s6723 + $0x4] sm:$0xf]
    %v6726 = vld [vmem:[%s6723 + $0x8] sm:$0xf]
    %v6727 = vld [vmem:[%s6723 + $0xc] sm:$0xf]
    %s6728 = scalar_lea.vmem %s47, 1
    %v6729 = vld [vmem:[%s6728] sm:$0x1]
    %v6731 = vlaneseq
    %v6732 = vshrl.u32 %v6731, 7
    %v6733 = vsub.s32 0, %v6732
    %v6734 = vrot.slane %v6729, %v6733
    %v6740 = vunpack.c.l.b16 %v6724
    %v6741 = vunpack.c.l.b16 %v6725
    %v6742 = vunpack.c.l.b16 %v6726
    %v6743 = vunpack.c.l.b16 %v6727
    %v6744 = vpack.c.b16 %v6741, %v6740
    %v6745 = vpack.c.b16 %v6743, %v6742
    %v6749 = vsel %vm517, %v6715, 0
    %v6752 = vsel %vm517, %v6716, 0
    %v6755 = vsel %vm517, %v6717, 0
    %v6758 = vsel %vm517, %v6718, 0
    %v6761 = vsel %vm517, %v6719, 0
    %v6764 = vsel %vm517, %v6720, 0
    %v6767 = vsel %vm517, %v6721, 0
    %v6770 = vsel %vm517, %v6722, 0
    %6772 = vmatprep.subr.bf16.mxu0 0
    %6773 = vmatpush1.bf16.msra.mxu0 %v6744
    %6774 = vmatprep.subr.bf16.mxu0 0
    %6775 = vmatpush1.bf16.msra.mxu0 %v6745
    %6776 = vmatprep.subr.bf16.mxu0 0
    %6777 = vmatpush1.bf16.msra.mxu0 0
    %6778 = vmatprep.subr.bf16.mxu0 0
    %6779 = vmatpush1.bf16.msra.mxu0 0
    %6780 = vmatprep.subr.bf16.mxu0 0
    %6781 = vmatpush1.bf16.msra.mxu0 0
    %6782 = vmatprep.subr.bf16.mxu0 0
    %6783 = vmatpush1.bf16.msra.mxu0 0
    %6784 = vmatprep.subr.bf16.mxu0 0
    %6785 = vmatpush1.bf16.msra.mxu0 0
    %6786 = vmatprep.subr.bf16.mxu0 0
    %6787 = vmatpush1.bf16.msra.mxu0 0
    %6788 = vmatprep.subr.bf16.mxu0 0
    %6789 = vmatpush1.bf16.msra.mxu0 0
    %6790 = vmatprep.subr.bf16.mxu0 0
    %6791 = vmatpush1.bf16.msra.mxu0 0
    %6792 = vmatprep.subr.bf16.mxu0 0
    %6793 = vmatpush1.bf16.msra.mxu0 0
    %6794 = vmatprep.subr.bf16.mxu0 0
    %6795 = vmatpush1.bf16.msra.mxu0 0
    %6796 = vmatprep.subr.bf16.mxu0 0
    %6797 = vmatpush1.bf16.msra.mxu0 0
    %6798 = vmatprep.subr.bf16.mxu0 0
    %6799 = vmatpush1.bf16.msra.mxu0 0
    %6800 = vmatprep.subr.bf16.mxu0 0
    %6801 = vmatpush1.bf16.msra.mxu0 0
    %6802 = vmatprep.subr.bf16.mxu0 0
    %6803 = vmatpush1.bf16.msra.mxu0 0
    %6804 = vmatprep.mubr.bf16.mxu0 0
    %6805 = vmatmul.mubr.bf16.gmra.mrb[0].mxu0 %v6749
    %v6806 = vpop.f32.mrb[0].mxu0
    %v6807 = vadd.f32 %v6734, %v6806
    %v6808 = vpop.f32.mrb[0].mxu0
    %v6809 = vpop.f32.mrb[0].mxu0
    %v6810 = vadd.f32 %v6734, %v6809
    %v6811 = vpop.f32.mrb[0].mxu0
    %6812 = vmatprep.mubr.bf16.mxu0 0
    %6813 = vmatmul.mubr.bf16.gmra.mrb[0].mxu0 %v6752
    %v6814 = vpop.f32.mrb[0].mxu0
    %v6815 = vadd.f32 %v6734, %v6814
    %v6816 = vpop.f32.mrb[0].mxu0
    %v6817 = vpop.f32.mrb[0].mxu0
    %v6818 = vadd.f32 %v6734, %v6817
    %v6819 = vpop.f32.mrb[0].mxu0
    %6820 = vmatprep.mubr.bf16.mxu0 0
    %6821 = vmatmul.mubr.bf16.gmra.mrb[0].mxu0 %v6755
    %v6822 = vpop.f32.mrb[0].mxu0
    %v6823 = vadd.f32 %v6734, %v6822
    %v6824 = vpop.f32.mrb[0].mxu0
    %v6825 = vpop.f32.mrb[0].mxu0
    %v6826 = vadd.f32 %v6734, %v6825
    %v6827 = vpop.f32.mrb[0].mxu0
    %6828 = vmatprep.mubr.bf16.mxu0 0
    %6829 = vmatmul.mubr.bf16.gmra.mrb[0].mxu0 %v6758
    %v6830 = vpop.f32.mrb[0].mxu0
    %v6831 = vadd.f32 %v6734, %v6830
    %v6832 = vpop.f32.mrb[0].mxu0
    %v6833 = vpop.f32.mrb[0].mxu0
    %v6834 = vadd.f32 %v6734, %v6833
    %v6835 = vpop.f32.mrb[0].mxu0
    %6836 = vmatprep.mubr.bf16.mxu0 0
    %6837 = vmatmul.mubr.bf16.gmra.mrb[0].mxu0 %v6761
    %v6838 = vpop.f32.mrb[0].mxu0
    %v6839 = vadd.f32 %v6734, %v6838
    %v6840 = vpop.f32.mrb[0].mxu0
    %v6841 = vpop.f32.mrb[0].mxu0
    %v6842 = vadd.f32 %v6734, %v6841
    %v6843 = vpop.f32.mrb[0].mxu0
    %6844 = vmatprep.mubr.bf16.mxu0 0
    %6845 = vmatmul.mubr.bf16.gmra.mrb[0].mxu0 %v6764
    %v6846 = vpop.f32.mrb[0].mxu0
    %v6847 = vadd.f32 %v6734, %v6846
    %v6848 = vpop.f32.mrb[0].mxu0
    %v6849 = vpop.f32.mrb[0].mxu0
    %v6850 = vadd.f32 %v6734, %v6849
    %v6851 = vpop.f32.mrb[0].mxu0
    %6852 = vmatprep.mubr.bf16.mxu0 0
    %6853 = vmatmul.mubr.bf16.gmra.mrb[0].mxu0 %v6767
    %v6854 = vpop.f32.mrb[0].mxu0
    %v6855 = vadd.f32 %v6734, %v6854
    %v6856 = vpop.f32.mrb[0].mxu0
    %v6857 = vpop.f32.mrb[0].mxu0
    %v6858 = vadd.f32 %v6734, %v6857
    %v6859 = vpop.f32.mrb[0].mxu0
    %6860 = vmatprep.mubr.bf16.mxu0 0
    %6861 = vmatmul.mubr.bf16.gmra.mrb[0].mxu0 %v6770
    %v6862 = vpop.f32.mrb[0].mxu0
    %v6863 = vadd.f32 %v6734, %v6862
    %v6864 = vpop.f32.mrb[0].mxu0
    %v6865 = vpop.f32.mrb[0].mxu0
    %v6866 = vadd.f32 %v6734, %v6865
    %v6867 = vpop.f32.mrb[0].mxu0
    %6868 = vdwg.mxu0
    %v6869 = vxor.u32 %v6807, 2147483648
    %v6870 = vxor.u32 %v6810, 2147483648
    %v6871 = vxor.u32 %v6815, 2147483648
    %v6872 = vxor.u32 %v6818, 2147483648
    %v6873 = vxor.u32 %v6823, 2147483648
    %v6874 = vxor.u32 %v6826, 2147483648
    %v6875 = vxor.u32 %v6831, 2147483648
    %v6876 = vxor.u32 %v6834, 2147483648
    %v6877 = vxor.u32 %v6839, 2147483648
    %v6878 = vxor.u32 %v6842, 2147483648
    %v6879 = vxor.u32 %v6847, 2147483648
    %v6880 = vxor.u32 %v6850, 2147483648
    %v6881 = vxor.u32 %v6855, 2147483648
    %v6882 = vxor.u32 %v6858, 2147483648
    %v6883 = vxor.u32 %v6863, 2147483648
    %v6884 = vxor.u32 %v6866, 2147483648
    %v6885 = vmul.f32 %v6869, 1.442695
    %v6886 = vpow.pop %v6885
    %v6887 = vmul.f32 %v6870, 1.442695
    %v6888 = vpow.pop %v6887
    %v6889 = vmul.f32 %v6871, 1.442695
    %v6890 = vpow.pop %v6889
    %v6891 = vmul.f32 %v6872, 1.442695
    %v6892 = vpow.pop %v6891
    %v6893 = vmul.f32 %v6873, 1.442695
    %v6894 = vpow.pop %v6893
    %v6895 = vmul.f32 %v6874, 1.442695
    %v6896 = vpow.pop %v6895
    %v6897 = vmul.f32 %v6875, 1.442695
    %v6898 = vpow.pop %v6897
    %v6899 = vmul.f32 %v6876, 1.442695
    %v6900 = vpow.pop %v6899
    %v6901 = vmul.f32 %v6877, 1.442695
    %v6902 = vpow.pop %v6901
    %v6903 = vmul.f32 %v6878, 1.442695
    %v6904 = vpow.pop %v6903
    %v6905 = vmul.f32 %v6879, 1.442695
    %v6906 = vpow.pop %v6905
    %v6907 = vmul.f32 %v6880, 1.442695
    %v6908 = vpow.pop %v6907
    %v6909 = vmul.f32 %v6881, 1.442695
    %v6910 = vpow.pop %v6909
    %v6911 = vmul.f32 %v6882, 1.442695
    %v6912 = vpow.pop %v6911
    %v6913 = vmul.f32 %v6883, 1.442695
    %v6914 = vpow.pop %v6913
    %v6915 = vmul.f32 %v6884, 1.442695
    %v6916 = vpow.pop %v6915
    %v6917 = vadd.f32 %v6886, 1.0
    %v6918 = vadd.f32 %v6888, 1.0
    %v6919 = vadd.f32 %v6890, 1.0
    %v6920 = vadd.f32 %v6892, 1.0
    %v6921 = vadd.f32 %v6894, 1.0
    %v6922 = vadd.f32 %v6896, 1.0
    %v6923 = vadd.f32 %v6898, 1.0
    %v6924 = vadd.f32 %v6900, 1.0
    %v6925 = vadd.f32 %v6902, 1.0
    %v6926 = vadd.f32 %v6904, 1.0
    %v6927 = vadd.f32 %v6906, 1.0
    %v6928 = vadd.f32 %v6908, 1.0
    %v6929 = vadd.f32 %v6910, 1.0
    %v6930 = vadd.f32 %v6912, 1.0
    %v6931 = vadd.f32 %v6914, 1.0
    %v6932 = vadd.f32 %v6916, 1.0
    %v6933 = vrcp.pop %v6917
    %v6934 = vmul.f32 1.0, %v6933
    %v6935 = vrcp.pop %v6918
    %v6936 = vmul.f32 1.0, %v6935
    %v6937 = vrcp.pop %v6919
    %v6938 = vmul.f32 1.0, %v6937
    %v6939 = vrcp.pop %v6920
    %v6940 = vmul.f32 1.0, %v6939
    %v6941 = vrcp.pop %v6921
    %v6942 = vmul.f32 1.0, %v6941
    %v6943 = vrcp.pop %v6922
    %v6944 = vmul.f32 1.0, %v6943
    %v6945 = vrcp.pop %v6923
    %v6946 = vmul.f32 1.0, %v6945
    %v6947 = vrcp.pop %v6924
    %v6948 = vmul.f32 1.0, %v6947
    %v6949 = vrcp.pop %v6925
    %v6950 = vmul.f32 1.0, %v6949
    %v6951 = vrcp.pop %v6926
    %v6952 = vmul.f32 1.0, %v6951
    %v6953 = vrcp.pop %v6927
    %v6954 = vmul.f32 1.0, %v6953
    %v6955 = vrcp.pop %v6928
    %v6956 = vmul.f32 1.0, %v6955
    %v6957 = vrcp.pop %v6929
    %v6958 = vmul.f32 1.0, %v6957
    %v6959 = vrcp.pop %v6930
    %v6960 = vmul.f32 1.0, %v6959
    %v6961 = vrcp.pop %v6931
    %v6962 = vmul.f32 1.0, %v6961
    %v6963 = vrcp.pop %v6932
    %v6964 = vmul.f32 1.0, %v6963
    %v6965 = vmul.f32 %v6807, %v6934
    %v6966 = vmul.f32 %v6810, %v6936
    %v6967 = vmul.f32 %v6815, %v6938
    %v6968 = vmul.f32 %v6818, %v6940
    %v6969 = vmul.f32 %v6823, %v6942
    %v6970 = vmul.f32 %v6826, %v6944
    %v6971 = vmul.f32 %v6831, %v6946
    %v6972 = vmul.f32 %v6834, %v6948
    %v6973 = vmul.f32 %v6839, %v6950
    %v6974 = vmul.f32 %v6842, %v6952
    %v6975 = vmul.f32 %v6847, %v6954
    %v6976 = vmul.f32 %v6850, %v6956
    %v6977 = vmul.f32 %v6855, %v6958
    %v6978 = vmul.f32 %v6858, %v6960
    %v6979 = vmul.f32 %v6863, %v6962
    %v6980 = vmul.f32 %v6866, %v6964
    %v6981 = vpack.c.bf16 %v6966, %v6965
    %v6982 = vpack.c.bf16 %v6968, %v6967
    %v6983 = vpack.c.bf16 %v6970, %v6969
    %v6984 = vpack.c.bf16 %v6972, %v6971
    %v6985 = vpack.c.bf16 %v6974, %v6973
    %v6986 = vpack.c.bf16 %v6976, %v6975
    %v6987 = vpack.c.bf16 %v6978, %v6977
    %v6988 = vpack.c.bf16 %v6980, %v6979
    %s6989 = scalar_lea.vmem %s49, 64
    %v6990 = vld [vmem:[%s6989] sm:$0xf]
    %v6991 = vld [vmem:[%s6989 + $0x4] sm:$0xf]
    %v6992 = vld [vmem:[%s6989 + $0x8] sm:$0xf]
    %v6993 = vld [vmem:[%s6989 + $0xc] sm:$0xf]
    %v6994 = vld [vmem:[%s6989 + $0x10] sm:$0xf]
    %v6995 = vld [vmem:[%s6989 + $0x14] sm:$0xf]
    %v6996 = vld [vmem:[%s6989 + $0x18] sm:$0xf]
    %v6997 = vld [vmem:[%s6989 + $0x1c] sm:$0xf]
    %v6998 = vld [vmem:[%s6989 + $0x20] sm:$0xf]
    %v6999 = vld [vmem:[%s6989 + $0x24] sm:$0xf]
    %v7000 = vld [vmem:[%s6989 + $0x28] sm:$0xf]
    %v7001 = vld [vmem:[%s6989 + $0x2c] sm:$0xf]
    %v7002 = vld [vmem:[%s6989 + $0x30] sm:$0xf]
    %v7003 = vld [vmem:[%s6989 + $0x34] sm:$0xf]
    %v7004 = vld [vmem:[%s6989 + $0x38] sm:$0xf]
    %v7005 = vld [vmem:[%s6989 + $0x3c] sm:$0xf]
    %v7022 = vunpack.c.l.b16 %v6990
    %v7023 = vunpack.c.l.b16 %v6991
    %v7024 = vunpack.c.l.b16 %v6992
    %v7025 = vunpack.c.l.b16 %v6993
    %v7026 = vunpack.c.l.b16 %v6994
    %v7027 = vunpack.c.l.b16 %v6995
    %v7028 = vunpack.c.l.b16 %v6996
    %v7029 = vunpack.c.l.b16 %v6997
    %v7030 = vunpack.c.l.b16 %v6998
    %v7031 = vunpack.c.l.b16 %v6999
    %v7032 = vunpack.c.l.b16 %v7000
    %v7033 = vunpack.c.l.b16 %v7001
    %v7034 = vunpack.c.l.b16 %v7002
    %v7035 = vunpack.c.l.b16 %v7003
    %v7036 = vunpack.c.l.b16 %v7004
    %v7037 = vunpack.c.l.b16 %v7005
    %v7038 = vpack.c.b16 %v7023, %v7022
    %v7039 = vpack.c.b16 %v7025, %v7024
    %v7040 = vpack.c.b16 %v7027, %v7026
    %v7041 = vpack.c.b16 %v7029, %v7028
    %v7042 = vpack.c.b16 %v7031, %v7030
    %v7043 = vpack.c.b16 %v7033, %v7032
    %v7044 = vpack.c.b16 %v7035, %v7034
    %v7045 = vpack.c.b16 %v7037, %v7036
    %7054 = vmatprep.subr.bf16.mxu0 0
    %7055 = vmatpush1.bf16.msra.mxu0 %v7038
    %7056 = vmatprep.subr.bf16.mxu0 0
    %7057 = vmatpush1.bf16.msra.mxu0 %v7039
    %7058 = vmatprep.subr.bf16.mxu0 0
    %7059 = vmatpush1.bf16.msra.mxu0 %v7040
    %7060 = vmatprep.subr.bf16.mxu0 0
    %7061 = vmatpush1.bf16.msra.mxu0 %v7041
    %7062 = vmatprep.subr.bf16.mxu0 0
    %7063 = vmatpush1.bf16.msra.mxu0 %v7042
    %7064 = vmatprep.subr.bf16.mxu0 0
    %7065 = vmatpush1.bf16.msra.mxu0 %v7043
    %7066 = vmatprep.subr.bf16.mxu0 0
    %7067 = vmatpush1.bf16.msra.mxu0 %v7044
    %7068 = vmatprep.subr.bf16.mxu0 0
    %7069 = vmatpush1.bf16.msra.mxu0 %v7045
    %7070 = vmatprep.subr.bf16.mxu0 0
    %7071 = vmatpush1.bf16.msra.mxu0 0
    %7072 = vmatprep.subr.bf16.mxu0 0
    %7073 = vmatpush1.bf16.msra.mxu0 0
    %7074 = vmatprep.subr.bf16.mxu0 0
    %7075 = vmatpush1.bf16.msra.mxu0 0
    %7076 = vmatprep.subr.bf16.mxu0 0
    %7077 = vmatpush1.bf16.msra.mxu0 0
    %7078 = vmatprep.subr.bf16.mxu0 0
    %7079 = vmatpush1.bf16.msra.mxu0 0
    %7080 = vmatprep.subr.bf16.mxu0 0
    %7081 = vmatpush1.bf16.msra.mxu0 0
    %7082 = vmatprep.subr.bf16.mxu0 0
    %7083 = vmatpush1.bf16.msra.mxu0 0
    %7084 = vmatprep.subr.bf16.mxu0 0
    %7085 = vmatpush1.bf16.msra.mxu0 0
    %7086 = vmatprep.mubr.bf16.mxu0 0
    %7087 = vmatmul.mubr.bf16.gmra.mrb[0].mxu0 %v6981
    %v7088 = vpop.f32.mrb[0].mxu0
    %v7089 = vadd.f32 0.0, %v7088
    %v7090 = vpop.f32.mrb[0].mxu0
    %v7091 = vpop.f32.mrb[0].mxu0
    %v7092 = vadd.f32 0.0, %v7091
    %v7093 = vpop.f32.mrb[0].mxu0
    %7094 = vmatprep.mubr.bf16.mxu0 0
    %7095 = vmatmul.mubr.bf16.gmra.mrb[0].mxu0 %v6982
    %v7096 = vpop.f32.mrb[0].mxu0
    %v7097 = vadd.f32 0.0, %v7096
    %v7098 = vpop.f32.mrb[0].mxu0
    %v7099 = vpop.f32.mrb[0].mxu0
    %v7100 = vadd.f32 0.0, %v7099
    %v7101 = vpop.f32.mrb[0].mxu0
    %7102 = vmatprep.mubr.bf16.mxu0 0
    %7103 = vmatmul.mubr.bf16.gmra.mrb[0].mxu0 %v6983
    %v7104 = vpop.f32.mrb[0].mxu0
    %v7105 = vadd.f32 0.0, %v7104
    %v7106 = vpop.f32.mrb[0].mxu0
    %v7107 = vpop.f32.mrb[0].mxu0
    %v7108 = vadd.f32 0.0, %v7107
    %v7109 = vpop.f32.mrb[0].mxu0
    %7110 = vmatprep.mubr.bf16.mxu0 0
    %7111 = vmatmul.mubr.bf16.gmra.mrb[0].mxu0 %v6984
    %v7112 = vpop.f32.mrb[0].mxu0
    %v7113 = vadd.f32 0.0, %v7112
    %v7114 = vpop.f32.mrb[0].mxu0
    %v7115 = vpop.f32.mrb[0].mxu0
    %v7116 = vadd.f32 0.0, %v7115
    %v7117 = vpop.f32.mrb[0].mxu0
    %7118 = vmatprep.mubr.bf16.mxu0 0
    %7119 = vmatmul.mubr.bf16.gmra.mrb[0].mxu0 %v6985
    %v7120 = vpop.f32.mrb[0].mxu0
    %v7121 = vadd.f32 0.0, %v7120
    %v7122 = vpop.f32.mrb[0].mxu0
    %v7123 = vpop.f32.mrb[0].mxu0
    %v7124 = vadd.f32 0.0, %v7123
    %v7125 = vpop.f32.mrb[0].mxu0
    %7126 = vmatprep.mubr.bf16.mxu0 0
    %7127 = vmatmul.mubr.bf16.gmra.mrb[0].mxu0 %v6986
    %v7128 = vpop.f32.mrb[0].mxu0
    %v7129 = vadd.f32 0.0, %v7128
    %v7130 = vpop.f32.mrb[0].mxu0
    %v7131 = vpop.f32.mrb[0].mxu0
    %v7132 = vadd.f32 0.0, %v7131
    %v7133 = vpop.f32.mrb[0].mxu0
    %7134 = vmatprep.mubr.bf16.mxu0 0
    %7135 = vmatmul.mubr.bf16.gmra.mrb[0].mxu0 %v6987
    %v7136 = vpop.f32.mrb[0].mxu0
    %v7137 = vadd.f32 0.0, %v7136
    %v7138 = vpop.f32.mrb[0].mxu0
    %v7139 = vpop.f32.mrb[0].mxu0
    %v7140 = vadd.f32 0.0, %v7139
    %v7141 = vpop.f32.mrb[0].mxu0
    %7142 = vmatprep.mubr.bf16.mxu0 0
    %7143 = vmatmul.mubr.bf16.gmra.mrb[0].mxu0 %v6988
    %v7144 = vpop.f32.mrb[0].mxu0
    %v7145 = vadd.f32 0.0, %v7144
    %v7146 = vpop.f32.mrb[0].mxu0
    %v7147 = vpop.f32.mrb[0].mxu0
    %v7148 = vadd.f32 0.0, %v7147
    %v7149 = vpop.f32.mrb[0].mxu0
    %7150 = vdwg.mxu0
    %v7151 = vadd.f32 %v6443, %v7089
    %v7152 = vadd.f32 %v6444, %v7092
    %v7153 = vadd.f32 %v6445, %v7097
    %v7154 = vadd.f32 %v6446, %v7100
    %v7155 = vadd.f32 %v6447, %v7105
    %v7156 = vadd.f32 %v6448, %v7108
    %v7157 = vadd.f32 %v6449, %v7113
    %v7158 = vadd.f32 %v6450, %v7116
    %v7159 = vadd.f32 %v6451, %v7121
    %v7160 = vadd.f32 %v6452, %v7124
    %v7161 = vadd.f32 %v6453, %v7129
    %v7162 = vadd.f32 %v6454, %v7132
    %v7163 = vadd.f32 %v6455, %v7137
    %v7164 = vadd.f32 %v6456, %v7140
    %v7165 = vadd.f32 %v6457, %v7145
    %v7166 = vadd.f32 %v6458, %v7148
    %s7167 = scalar_lea.vmem %s51, 1
    %v7168 = vld [vmem:[%s7167] sm:$0x1]
    %v7170 = vlaneseq
    %v7171 = vshrl.u32 %v7170, 7
    %v7172 = vsub.s32 0, %v7171
    %v7173 = vrot.slane %v7168, %v7172
    %v7175 = vadd.f32 %v7151, %v7173
    %v7176 = vadd.f32 %v7152, %v7173
    %v7177 = vadd.f32 %v7153, %v7173
    %v7178 = vadd.f32 %v7154, %v7173
    %v7179 = vadd.f32 %v7155, %v7173
    %v7180 = vadd.f32 %v7156, %v7173
    %v7181 = vadd.f32 %v7157, %v7173
    %v7182 = vadd.f32 %v7158, %v7173
    %v7183 = vadd.f32 %v7159, %v7173
    %v7184 = vadd.f32 %v7160, %v7173
    %v7185 = vadd.f32 %v7161, %v7173
    %v7186 = vadd.f32 %v7162, %v7173
    %v7187 = vadd.f32 %v7163, %v7173
    %v7188 = vadd.f32 %v7164, %v7173
    %v7189 = vadd.f32 %v7165, %v7173
    %v7190 = vadd.f32 %v7166, %v7173
    %v7191 = vsel %vm517, %v7175, 0.0
    %v7192 = vsel %vm517, %v7176, 0.0
    %v7193 = vadd.f32 %v7191, %v7192
    %v7194 = vsel %vm517, %v7177, 0.0
    %v7195 = vadd.f32 %v7193, %v7194
    %v7196 = vsel %vm517, %v7178, 0.0
    %v7197 = vadd.f32 %v7195, %v7196
    %v7198 = vsel %vm517, %v7179, 0.0
    %v7199 = vadd.f32 %v7197, %v7198
    %v7200 = vsel %vm517, %v7180, 0.0
    %v7201 = vadd.f32 %v7199, %v7200
    %v7202 = vsel %vm517, %v7181, 0.0
    %v7203 = vadd.f32 %v7201, %v7202
    %v7204 = vsel %vm517, %v7182, 0.0
    %v7205 = vadd.f32 %v7203, %v7204
    %v7206 = vrot.slane %v7205, 4
    %v7207 = vadd.f32 %v7205, %v7206
    %v7208 = vrot.slane %v7207, 2
    %v7209 = vadd.f32 %v7207, %v7208
    %v7210 = vrot.slane %v7209, 1
    %v7211 = vadd.f32 %v7209, %v7210
    %v7212 = vsel %vm517, %v7183, 0.0
    %v7213 = vsel %vm517, %v7184, 0.0
    %v7214 = vadd.f32 %v7212, %v7213
    %v7215 = vsel %vm517, %v7185, 0.0
    %v7216 = vadd.f32 %v7214, %v7215
    %v7217 = vsel %vm517, %v7186, 0.0
    %v7218 = vadd.f32 %v7216, %v7217
    %v7219 = vsel %vm517, %v7187, 0.0
    %v7220 = vadd.f32 %v7218, %v7219
    %v7221 = vsel %vm517, %v7188, 0.0
    %v7222 = vadd.f32 %v7220, %v7221
    %v7223 = vsel %vm517, %v7189, 0.0
    %v7224 = vadd.f32 %v7222, %v7223
    %v7225 = vsel %vm517, %v7190, 0.0
    %v7226 = vadd.f32 %v7224, %v7225
    %v7227 = vrot.slane %v7226, 4
    %v7228 = vadd.f32 %v7226, %v7227
    %v7229 = vrot.slane %v7228, 2
    %v7230 = vadd.f32 %v7228, %v7229
    %v7231 = vrot.slane %v7230, 1
    %v7232 = vadd.f32 %v7230, %v7231
    %v7233 = vsel %vm185, %v7211, %v7232
    %v7234 = vmul.f32 %v7233, 0.015625
    %v7235 = vld [vmem:[%s3] sm:$0x3]
    %7237 = vrot.lane.b32.xlu0 %v7235, 32
    %v7238 = vpop.permute.xlu0 %7237
    %v7240 = vsel %vm517, %v7234, %v7238
    %v7241 = vpack.c.bf16 %v7240, %v7240
    %v7242 = vld [vmem:[%s53] sm:$0xff]
    %v7243 = vld [vmem:[%s53 + $0x8] sm:$0xff]
    %v7244 = vld [vmem:[%s53 + $0x10] sm:$0xff]
    %v7245 = vld [vmem:[%s53 + $0x18] sm:$0xff]
    %v7246 = vld [vmem:[%s53 + $0x20] sm:$0xff]
    %v7247 = vld [vmem:[%s55] sm:$0x3]
    %v7249 = vlaneseq
    %v7250 = vshrl.u32 %v7249, 7
    %v7251 = vsub.s32 0, %v7250
    %v7252 = vrot.slane %v7247, %v7251
    %v7253 = vlaneseq
    %v7254 = vshrl.u32 %v7253, 7
    %v7255 = vsub.s32 1, %v7254
    %v7256 = vrot.slane %v7247, %v7255
    %v7264 = vunpack.c.l.b16 %v7242
    %v7265 = vunpack.c.h.b16 %v7242
    %v7266 = vunpack.c.l.b16 %v7243
    %v7267 = vunpack.c.h.b16 %v7243
    %v7268 = vunpack.c.l.b16 %v7244
    %v7269 = vunpack.c.h.b16 %v7244
    %v7270 = vunpack.c.l.b16 %v7245
    %v7271 = vunpack.c.h.b16 %v7245
    %v7272 = vunpack.c.l.b16 %v7246
    %v7273 = vunpack.c.h.b16 %v7246
    %v7274 = vpack.c.b16 %v7266, %v7264
    %v7275 = vpack.c.b16 %v7267, %v7265
    %v7276 = vpack.c.b16 %v7270, %v7268
    %v7277 = vpack.c.b16 %v7271, %v7269
    %v7278 = vpack.c.b16 %v7272, %v7272
    %v7279 = vpack.c.b16 %v7273, %v7273
    %vm7284 = vcmask 318464
    %v7286 = vsel %vm7284, %v7241, 0
    %vm7288 = vcmask 1042432
    %vm7289 = vcmask 1043456
    %v7290 = vsel %vm7288, 4294967295, 65535
    %v7291 = vsel %vm7289, %v7290, 0
    %v7293 = vand.u32 %v7278, %v7291
    %v7296 = vand.u32 %v7279, %v7291
    %7298 = vmatprep.subr.bf16.mxu0 %v7275
    %7299 = vmatpush1.bf16.msra.mxu0 %v7274
    %7300 = vmatprep.subr.bf16.mxu0 %v7277
    %7301 = vmatpush1.bf16.msra.mxu0 %v7276
    %7302 = vmatprep.subr.bf16.mxu0 %v7296
    %7303 = vmatpush1.bf16.msra.mxu0 %v7293
    %7304 = vmatprep.subr.bf16.mxu0 0
    %7305 = vmatpush1.bf16.msra.mxu0 0
    %7306 = vmatprep.subr.bf16.mxu0 0
    %7307 = vmatpush1.bf16.msra.mxu0 0
    %7308 = vmatprep.subr.bf16.mxu0 0
    %7309 = vmatpush1.bf16.msra.mxu0 0
    %7310 = vmatprep.subr.bf16.mxu0 0
    %7311 = vmatpush1.bf16.msra.mxu0 0
    %7312 = vmatprep.subr.bf16.mxu0 0
    %7313 = vmatpush1.bf16.msra.mxu0 0
    %7314 = vmatprep.subr.bf16.mxu0 0
    %7315 = vmatpush1.bf16.msra.mxu0 0
    %7316 = vmatprep.subr.bf16.mxu0 0
    %7317 = vmatpush1.bf16.msra.mxu0 0
    %7318 = vmatprep.subr.bf16.mxu0 0
    %7319 = vmatpush1.bf16.msra.mxu0 0
    %7320 = vmatprep.subr.bf16.mxu0 0
    %7321 = vmatpush1.bf16.msra.mxu0 0
    %7322 = vmatprep.subr.bf16.mxu0 0
    %7323 = vmatpush1.bf16.msra.mxu0 0
    %7324 = vmatprep.subr.bf16.mxu0 0
    %7325 = vmatpush1.bf16.msra.mxu0 0
    %7326 = vmatprep.subr.bf16.mxu0 0
    %7327 = vmatpush1.bf16.msra.mxu0 0
    %7328 = vmatprep.subr.bf16.mxu0 0
    %7329 = vmatpush1.bf16.msra.mxu0 0
    %7330 = vmatprep.mubr.bf16.mxu0 0
    %7331 = vmatmul.mubr.bf16.gmra.mrb[0].mxu0 %v7286
    %v7332 = vpop.f32.mrb[0].mxu0
    %v7333 = vadd.f32 %v7252, %v7332
    %v7334 = vpop.f32.mrb[0].mxu0
    %v7335 = vadd.f32 %v7256, %v7334
    %v7336 = vpop.f32.mrb[0].mxu0
    %v7337 = vpop.f32.mrb[0].mxu0
    %7338 = vdwg.mxu0
    %v7339 = vmax.f32 %v7333, 0.0
    %v7340 = vmax.f32 %v7335, 0.0
    %v7341 = vpack.c.bf16 %v7339, %v7339
    %v7342 = vpack.c.bf16 %v7340, %v7340
    %v7343 = vld [vmem:[%s57] sm:$0xf]
    %v7344 = vld [vmem:[%s57 + $0x4] sm:$0xf]
    %v7345 = vld [vmem:[%s57 + $0x8] sm:$0xf]
    %v7346 = vld [vmem:[%s57 + $0xc] sm:$0xf]
    %v7347 = vld [vmem:[%s57 + $0x10] sm:$0xf]
    %v7348 = vld [vmem:[%s57 + $0x14] sm:$0xf]
    %v7349 = vld [vmem:[%s57 + $0x18] sm:$0xf]
    %v7350 = vld [vmem:[%s57 + $0x1c] sm:$0xf]
    %v7351 = vld [vmem:[%s57 + $0x20] sm:$0xf]
    %v7352 = vld [vmem:[%s57 + $0x24] sm:$0xf]
    %v7353 = vld [vmem:[%s57 + $0x28] sm:$0xf]
    %v7354 = vld [vmem:[%s57 + $0x2c] sm:$0xf]
    %v7355 = vld [vmem:[%s57 + $0x30] sm:$0xf]
    %v7356 = vld [vmem:[%s57 + $0x34] sm:$0xf]
    %v7357 = vld [vmem:[%s57 + $0x38] sm:$0xf]
    %v7358 = vld [vmem:[%s57 + $0x3c] sm:$0xf]
    %v7359 = vld [vmem:[%s57 + $0x40] sm:$0xf]
    %v7360 = vld [vmem:[%s57 + $0x44] sm:$0xf]
    %v7361 = vld [vmem:[%s57 + $0x48] sm:$0xf]
    %v7362 = vld [vmem:[%s57 + $0x4c] sm:$0xf]
    %v7363 = vld [vmem:[%s57 + $0x50] sm:$0xf]
    %v7364 = vld [vmem:[%s57 + $0x54] sm:$0xf]
    %v7365 = vld [vmem:[%s57 + $0x58] sm:$0xf]
    %v7366 = vld [vmem:[%s57 + $0x5c] sm:$0xf]
    %v7367 = vld [vmem:[%s57 + $0x60] sm:$0xf]
    %v7368 = vld [vmem:[%s57 + $0x64] sm:$0xf]
    %v7369 = vld [vmem:[%s57 + $0x68] sm:$0xf]
    %v7370 = vld [vmem:[%s57 + $0x6c] sm:$0xf]
    %v7371 = vld [vmem:[%s57 + $0x70] sm:$0xf]
    %v7372 = vld [vmem:[%s57 + $0x74] sm:$0xf]
    %v7373 = vld [vmem:[%s57 + $0x78] sm:$0xf]
    %v7374 = vld [vmem:[%s57 + $0x7c] sm:$0xf]
    %v7375 = vld [vmem:[%s59] sm:$0x1]
    %v7377 = vlaneseq
    %v7378 = vshrl.u32 %v7377, 7
    %v7379 = vsub.s32 0, %v7378
    %v7380 = vrot.slane %v7375, %v7379
    %v7414 = vunpack.c.l.b16 %v7343
    %v7415 = vunpack.c.l.b16 %v7344
    %v7416 = vunpack.c.l.b16 %v7345
    %v7417 = vunpack.c.l.b16 %v7346
    %v7418 = vunpack.c.l.b16 %v7347
    %v7419 = vunpack.c.l.b16 %v7348
    %v7420 = vunpack.c.l.b16 %v7349
    %v7421 = vunpack.c.l.b16 %v7350
    %v7422 = vunpack.c.l.b16 %v7351
    %v7423 = vunpack.c.l.b16 %v7352
    %v7424 = vunpack.c.l.b16 %v7353
    %v7425 = vunpack.c.l.b16 %v7354
    %v7426 = vunpack.c.l.b16 %v7355
    %v7427 = vunpack.c.l.b16 %v7356
    %v7428 = vunpack.c.l.b16 %v7357
    %v7429 = vunpack.c.l.b16 %v7358
    %v7430 = vunpack.c.l.b16 %v7359
    %v7431 = vunpack.c.l.b16 %v7360
    %v7432 = vunpack.c.l.b16 %v7361
    %v7433 = vunpack.c.l.b16 %v7362
    %v7434 = vunpack.c.l.b16 %v7363
    %v7435 = vunpack.c.l.b16 %v7364
    %v7436 = vunpack.c.l.b16 %v7365
    %v7437 = vunpack.c.l.b16 %v7366
    %v7438 = vunpack.c.l.b16 %v7367
    %v7439 = vunpack.c.l.b16 %v7368
    %v7440 = vunpack.c.l.b16 %v7369
    %v7441 = vunpack.c.l.b16 %v7370
    %v7442 = vunpack.c.l.b16 %v7371
    %v7443 = vunpack.c.l.b16 %v7372
    %v7444 = vunpack.c.l.b16 %v7373
    %v7445 = vunpack.c.l.b16 %v7374
    %v7446 = vpack.c.b16 %v7415, %v7414
    %v7447 = vpack.c.b16 %v7417, %v7416
    %v7448 = vpack.c.b16 %v7419, %v7418
    %v7449 = vpack.c.b16 %v7421, %v7420
    %v7450 = vpack.c.b16 %v7423, %v7422
    %v7451 = vpack.c.b16 %v7425, %v7424
    %v7452 = vpack.c.b16 %v7427, %v7426
    %v7453 = vpack.c.b16 %v7429, %v7428
    %v7454 = vpack.c.b16 %v7431, %v7430
    %v7455 = vpack.c.b16 %v7433, %v7432
    %v7456 = vpack.c.b16 %v7435, %v7434
    %v7457 = vpack.c.b16 %v7437, %v7436
    %v7458 = vpack.c.b16 %v7439, %v7438
    %v7459 = vpack.c.b16 %v7441, %v7440
    %v7460 = vpack.c.b16 %v7443, %v7442
    %v7461 = vpack.c.b16 %v7445, %v7444
    %7478 = vmatprep.subr.bf16.mxu0 0
    %7479 = vmatpush1.bf16.msra.mxu0 %v7446
    %7480 = vmatprep.subr.bf16.mxu0 0
    %7481 = vmatpush1.bf16.msra.mxu0 %v7447
    %7482 = vmatprep.subr.bf16.mxu0 0
    %7483 = vmatpush1.bf16.msra.mxu0 %v7448
    %7484 = vmatprep.subr.bf16.mxu0 0
    %7485 = vmatpush1.bf16.msra.mxu0 %v7449
    %7486 = vmatprep.subr.bf16.mxu0 0
    %7487 = vmatpush1.bf16.msra.mxu0 %v7450
    %7488 = vmatprep.subr.bf16.mxu0 0
    %7489 = vmatpush1.bf16.msra.mxu0 %v7451
    %7490 = vmatprep.subr.bf16.mxu0 0
    %7491 = vmatpush1.bf16.msra.mxu0 %v7452
    %7492 = vmatprep.subr.bf16.mxu0 0
    %7493 = vmatpush1.bf16.msra.mxu0 %v7453
    %7494 = vmatprep.subr.bf16.mxu0 0
    %7495 = vmatpush1.bf16.msra.mxu0 %v7454
    %7496 = vmatprep.subr.bf16.mxu0 0
    %7497 = vmatpush1.bf16.msra.mxu0 %v7455
    %7498 = vmatprep.subr.bf16.mxu0 0
    %7499 = vmatpush1.bf16.msra.mxu0 %v7456
    %7500 = vmatprep.subr.bf16.mxu0 0
    %7501 = vmatpush1.bf16.msra.mxu0 %v7457
    %7502 = vmatprep.subr.bf16.mxu0 0
    %7503 = vmatpush1.bf16.msra.mxu0 %v7458
    %7504 = vmatprep.subr.bf16.mxu0 0
    %7505 = vmatpush1.bf16.msra.mxu0 %v7459
    %7506 = vmatprep.subr.bf16.mxu0 0
    %7507 = vmatpush1.bf16.msra.mxu0 %v7460
    %7508 = vmatprep.subr.bf16.mxu0 0
    %7509 = vmatpush1.bf16.msra.mxu0 %v7461
    %7510 = vmatprep.mubr.bf16.mxu0 %v7342
    %7511 = vmatmul.mubr.bf16.gmra.mrb[0].mxu0 %v7341
    %v7512 = vpop.f32.mrb[0].mxu0
    %v7513 = vadd.f32 %v7380, %v7512
    %v7514 = vpop.f32.mrb[0].mxu0
    %v7515 = vpop.f32.mrb[0].mxu0
    %v7516 = vpop.f32.mrb[0].mxu0
    %7517 = vdwg.mxu0
    %7518 = vst [vmem:[#allocation2] sm:$0x3] %v7513
    // Predicated region
    $region122: #{tpu_custom_call.1} parent=1 // pred_check
      _
    $region123: #{tpu_custom_call.1} parent=1 // pred_check_branch
      %7520 = sbr.rel (0) target = $region125
    $region124: #{tpu_custom_call.1} parent=1 // pred_region
      %s7522 = ssub.s32 32, 32
      %7523 = vsyncadd [#allocation3], %s7522
      %s7525 = sshll.u32 [#allocation2], 4
      %s7526 = int_to_ptr.vmem [resolvable:$true] %s7525
      %7528 = dma.vmem_to_hbm [thread:$0]  %s7526, 32, %s61, [#allocation3]
    $region125: #{tpu_custom_call.1} parent=1 // pred_fallthru
      _
    // Predicated region
    $region126: #{tpu_custom_call.1} parent=1 // pred_check
      _
    $region127: #{tpu_custom_call.1} parent=1 // pred_check_branch
      %7530 = sbr.rel (0) target = $region129
    $region128: #{tpu_custom_call.1} parent=1 // pred_region
      %7531 = dma.done [#allocation3], 32
    $region129: #{tpu_custom_call.1} parent=1 // pred_fallthru
      _
    %7532 = vsyncpa [#allocation3], 1

</llo_original>
